<compile_context>
chip_gen: v6e
topology: v6e:2x2x1
jax: 0.10.0
libtpu: 0.0.40
codegen_flags: <defaults>
</compile_context>

<pallas_src>
import functools

import jax
import jax.numpy as jnp
from jax import lax
from jax.experimental import pallas as pl
from jax.experimental.pallas import tpu as pltpu

BN_EPS = 1e-5
NEG_SLOPE = 0.1
ENC_K, ENC_PAD = 15, 7
DEC_K, DEC_PAD = 5, 2

# v7x has 64 MiB physical VMEM (vs 128 MiB on v5e/v6e): keep the scoped limit and the tile
# budget comfortably below it so the same kernels run on all three generations.
VMEM_LIMIT_BYTES = 48 * 1024 * 1024
_TILE_BUDGET_BYTES = 6 * 1024 * 1024


def _pick_tile_l(l, c_in, c_out):
    """Largest L-tile (multiple of 128 dividing L) that fits the VMEM tile budget."""
    per_col = 4 * 2 * (c_in + c_out)  # f32 bytes per output column, double buffered
    if l <= 128 or l * per_col <= _TILE_BUDGET_BYTES:
        return l
    best = None
    cand = 128
    while cand <= l:
        if l % cand == 0 and cand * per_col <= _TILE_BUDGET_BYTES:
            best = cand
        cand += 128
    if best is None:
        # TODO(synk): ragged / remainder L tiling; fall back to the whole length.
        return l
    return best


# ----------------------------- Conv + BN + LeakyReLU kernels -----------------------------

def _conv_tile(w_ref, xc_ref, xl_ref, xr_ref, k_size):
    """Conv1d tile as K shifted-slice matmuls. Returns (C_out, TILE_L) float32."""
    c_out = w_ref.shape[1]
    c_in = w_ref.shape[2]
    tile_l = xc_ref.shape[2]
    # halo(p) | center(TILE_L) | halo(p)  ->  (C_in, TILE_L + 2p) window
    x_win = jnp.concatenate(
        [xl_ref[0, 0, :, :], xc_ref[0, :, :], xr_ref[0, 0, :, :]], axis=-1)
    acc = jnp.zeros((c_out, tile_l), jnp.float32)
    for k in range(k_size):
        xs = x_win[:, k:k + tile_l]
        wk = w_ref[k, :, :]
        if c_in == 1:
            # Degenerate contraction (first encoder layer): VPU broadcast multiply.
            acc = acc + wk[:, 0:1] * xs[0:1, :]
        else:
            acc = acc + jnp.dot(wk, xs, preferred_element_type=jnp.float32)
    return acc


def _stats_kernel(w_ref, xc_ref, xl_ref, xr_ref, g_ref, beta_ref,
                  scale_ref, shift_ref, mean_acc, m2_acc,
                  *, k_size, tile_l, count, eps):
    n_i = pl.program_id(0)
    t_i = pl.program_id(1)
    num_t = pl.num_programs(1)

    @pl.when(jnp.logical_and(n_i == 0, t_i == 0))
    def _():
        mean_acc[...] = jnp.zeros_like(mean_acc)
        m2_acc[...] = jnp.zeros_like(m2_acc)

    acc = _conv_tile(w_ref, xc_ref, xl_ref, xr_ref, k_size)      # (C_out, TILE_L) f32

    # Chan's parallel-variance update (robust one-sweep per-channel stats).
    tile_mean = jnp.sum(acc, axis=1, keepdims=True) * (1.0 / tile_l)
    centered = acc - tile_mean
    tile_m2 = jnp.sum(centered * centered, axis=1, keepdims=True)

    n_a = ((n_i * num_t + t_i) * tile_l).astype(jnp.float32)     # samples already folded
    n_b = jnp.float32(tile_l)
    n_ab = n_a + n_b
    delta = tile_mean - mean_acc[...]
    mean_acc[...] = mean_acc[...] + delta * (n_b / n_ab)
    m2_acc[...] = m2_acc[...] + tile_m2 + (delta * delta) * (n_a * n_b / n_ab)

    @pl.when(jnp.logical_and(n_i == pl.num_programs(0) - 1, t_i == num_t - 1))
    def _():
        mean = mean_acc[...]
        var = m2_acc[...] * (1.0 / count)        # biased variance (BN training-mode norm)
        inv = lax.rsqrt(var + eps)               # EUP
        scale = g_ref[...] * inv
        scale_ref[...] = scale
        shift_ref[...] = beta_ref[...] - mean * scale


def _apply_kernel(w_ref, xc_ref, xl_ref, xr_ref, scale_ref, shift_ref, o_ref,
                  *, k_size, neg_slope):
    acc = _conv_tile(w_ref, xc_ref, xl_ref, xr_ref, k_size)
    y = acc * scale_ref[...] + shift_ref[...]
    o_ref[0, :, :] = jnp.where(y >= 0, y, neg_slope * y).astype(o_ref.dtype)


def conv_bn_lrelu(x, w, gamma, beta, *, padding):
    """Conv1d(k, s=1, p=(k-1)/2; bias cancelled by BN) + BatchNorm1d(batch stats) + LeakyReLU."""
    n, c_in, l = x.shape
    c_out, c_in_w, k = w.shape
    assert c_in_w == c_in and 2 * padding == k - 1, (x.shape, w.shape, padding)
    p = padding
    tile_l = _pick_tile_l(l, c_in, c_out)
    t = l // tile_l

    # Tiny per-tile halos (2*p columns per tile) instead of im2col / a padded activation copy.
    zeros_halo = jnp.zeros((n, c_in, p), x.dtype)
    lefts = [zeros_halo] + [x[:, :, tt * tile_l - p: tt * tile_l] for tt in range(1, t)]
    rights = [x[:, :, (tt + 1) * tile_l: (tt + 1) * tile_l + p] for tt in range(t - 1)]
    rights = rights + [zeros_halo]
    xl = jnp.stack(lefts, axis=1)     # (N, T, C_in, p)
    xr = jnp.stack(rights, axis=1)    # (N, T, C_in, p)

    wt = jnp.transpose(w, (2, 0, 1))  # (K, C_out, C_in)
    g2 = gamma.reshape(c_out, 1).astype(jnp.float32)
    b2 = beta.reshape(c_out, 1).astype(jnp.float32)

    w_spec = pl.BlockSpec((k, c_out, c_in), lambda i, j: (0, 0, 0))
    xc_spec = pl.BlockSpec((1, c_in, tile_l), lambda i, j: (i, 0, j))
    halo_spec = pl.BlockSpec((1, 1, c_in, p), lambda i, j: (i, j, 0, 0))
    vec_spec = pl.BlockSpec((c_out, 1), lambda i, j: (0, 0))

    # ---- pass 1: per-channel batch statistics -> (scale, shift) ----
    scale, shift = pl.pallas_call(
        functools.partial(_stats_kernel, k_size=k, tile_l=tile_l,
                          count=float(n * l), eps=BN_EPS),
        grid=(n, t),
        in_specs=[w_spec, xc_spec, halo_spec, halo_spec, vec_spec, vec_spec],
        out_specs=(vec_spec, vec_spec),
        out_shape=(jax.ShapeDtypeStruct((c_out, 1), jnp.float32),
                   jax.ShapeDtypeStruct((c_out, 1), jnp.float32)),
        scratch_shapes=[pltpu.VMEM((c_out, 1), jnp.float32),
                        pltpu.VMEM((c_out, 1), jnp.float32)],
        compiler_params=pltpu.CompilerParams(
            dimension_semantics=("arbitrary", "arbitrary"),
            vmem_limit_bytes=VMEM_LIMIT_BYTES),
    )(wt, x, xl, xr, g2, b2)

    # ---- pass 2: conv (recomputed) + normalize/affine + LeakyReLU, NCL output directly ----
    y = pl.pallas_call(
        functools.partial(_apply_kernel, k_size=k, neg_slope=NEG_SLOPE),
        grid=(n, t),
        in_specs=[w_spec, xc_spec, halo_spec, halo_spec, vec_spec, vec_spec],
        out_specs=pl.BlockSpec((1, c_out, tile_l), lambda i, j: (i, 0, j)),
        out_shape=jax.ShapeDtypeStruct((n, c_out, l), x.dtype),
        compiler_params=pltpu.CompilerParams(
            dimension_semantics=("parallel", "parallel"),
            vmem_limit_bytes=VMEM_LIMIT_BYTES),
    )(wt, x, xl, xr, scale, shift)
    return y


# --------------------------------- 1x1 conv + Tanh head ----------------------------------

def _conv1x1_tanh_kernel(w_ref, b_ref, x_ref, o_ref):
    y = jnp.dot(w_ref[...], x_ref[0, :, :], preferred_element_type=jnp.float32)
    y = y + b_ref[...]
    o_ref[0, :, :] = jnp.tanh(y).astype(o_ref.dtype)


def conv1x1_tanh(x, w, b):
    n, c_in, l = x.shape
    c_out = w.shape[0]
    tile_l = _pick_tile_l(l, c_in, c_out)
    t = l // tile_l
    w2 = w.reshape(c_out, c_in)
    b2 = b.reshape(c_out, 1).astype(jnp.float32)
    return pl.pallas_call(
        _conv1x1_tanh_kernel,
        grid=(n, t),
        in_specs=[pl.BlockSpec((c_out, c_in), lambda i, j: (0, 0)),
                  pl.BlockSpec((c_out, 1), lambda i, j: (0, 0)),
                  pl.BlockSpec((1, c_in, tile_l), lambda i, j: (i, 0, j))],
        out_specs=pl.BlockSpec((1, c_out, tile_l), lambda i, j: (i, 0, j)),
        out_shape=jax.ShapeDtypeStruct((n, c_out, l), x.dtype),
        compiler_params=pltpu.CompilerParams(
            dimension_semantics=("parallel", "parallel"),
            vmem_limit_bytes=VMEM_LIMIT_BYTES),
    )(w2, b2, x)


# -------------------------------------- JAX glue ------------------------------------------

def interp_linear_x2(x):
    """F.interpolate(scale_factor=2, mode='linear', align_corners=True)."""
    n, c, lin = x.shape
    lout = 2 * lin
    if lin == 1:
        return jnp.broadcast_to(x, (n, c, lout))
    pos = jnp.arange(lout, dtype=jnp.float32) * ((lin - 1) / (lout - 1))
    i0 = jnp.clip(jnp.floor(pos).astype(jnp.int32), 0, lin - 2)
    frac = pos - i0.astype(jnp.float32)
    x0 = jnp.take(x, i0, axis=2)
    x1 = jnp.take(x, i0 + 1, axis=2)
    return x0 * (1.0 - frac) + x1 * frac


def wave_u_net_forward(x, params):
    n_layers = len(params["enc"])
    tmp = []
    o = x
    for i in range(n_layers):
        pe = params["enc"][i]
        o = conv_bn_lrelu(o, pe["w"], pe["gamma"], pe["beta"], padding=ENC_PAD)
        tmp.append(o)
        o = o[:, :, ::2]
    # TODO(synk): forward_latent() is abstract in WaveUNetEnhanceBase; identity is used here.
    for i in range(n_layers):
        o = interp_linear_x2(o)
        o = jnp.concatenate([o, tmp[n_layers - i - 1]], axis=1)
        pd = params["dec"][i]
        o = conv_bn_lrelu(o, pd["w"], pd["gamma"], pd["beta"], padding=DEC_PAD)
    o = jnp.concatenate([o, x], axis=1)
    return conv1x1_tanh(o, params["out"]["w"], params["out"]["b"])


# --------------------------------- pure-JAX reference --------------------------------------

def _conv1d_ref(x, w, b, padding):
    y = lax.conv_general_dilated(x, w, window_strides=(1,), padding=((padding, padding),),
                                 dimension_numbers=("NCH", "OIH", "NCH"))
    return y + b[None, :, None]


def _layer_ref(x, p, padding):
    y = _conv1d_ref(x, p["w"], p["b"], padding)   # conv bias kept here on purpose
    mean = jnp.mean(y, axis=(0, 2), keepdims=True)
    var = jnp.mean((y - mean) ** 2, axis=(0, 2), keepdims=True)
    y = (y - mean) * lax.rsqrt(var + BN_EPS)
    y = y * p["gamma"][None, :, None] + p["beta"][None, :, None]
    return jnp.where(y >= 0, y, NEG_SLOPE * y)


def wave_u_net_reference(x, params):
    n_layers = len(params["enc"])
    tmp = []
    o = x
    for i in range(n_layers):
        o = _layer_ref(o, params["enc"][i], ENC_PAD)
        tmp.append(o)
        o = o[:, :, ::2]
    for i in range(n_layers):
        o = interp_linear_x2(o)
        o = jnp.concatenate([o, tmp[n_layers - i - 1]], axis=1)
        o = _layer_ref(o, params["dec"][i], DEC_PAD)
    o = jnp.concatenate([o, x], axis=1)
    o = _conv1d_ref(o, params["out"]["w"], params["out"]["b"], 0)
    return jnp.tanh(o)


# ------------------------------------ parameters / main -----------------------------------

def init_params(key, n_layers, ci):
    enc_in = [1] + [i * ci for i in range(1, n_layers)]
    enc_out = [i * ci for i in range(1, n_layers + 1)]
    dec_in = ([(2 * i + 1) * ci for i in range(1, n_layers)] + [2 * n_layers * ci])[::-1]
    dec_out = enc_out[::-1]

    def conv_block(k_key, c_in, c_out, ksz):
        k1, k2, k3, k4 = jax.random.split(k_key, 4)
        scale = 1.0 / jnp.sqrt(float(c_in * ksz))
        return dict(
            w=scale * jax.random.normal(k1, (c_out, c_in, ksz), jnp.float32),
            b=0.1 * jax.random.normal(k2, (c_out,), jnp.float32),
            gamma=1.0 + 0.1 * jax.random.normal(k3, (c_out,), jnp.float32),
            beta=0.1 * jax.random.normal(k4, (c_out,), jnp.float32))

    keys = jax.random.split(key, 2 * n_layers + 1)
    params = dict(
        enc=[conv_block(keys[i], enc_in[i], enc_out[i], ENC_K) for i in range(n_layers)],
        dec=[conv_block(keys[n_layers + i], dec_in[i], dec_out[i], DEC_K)
             for i in range(n_layers)])
    ko1, ko2 = jax.random.split(keys[-1])
    params["out"] = dict(
        w=(1.0 / jnp.sqrt(float(1 + ci))) * jax.random.normal(ko1, (1, 1 + ci, 1), jnp.float32),
        b=0.1 * jax.random.normal(ko2, (1,), jnp.float32))
    return params


if __name__ == "__main__":
    N_LAYERS, CH_INTERVAL = 2, 4
    BATCH, LENGTH = 2, 16
    assert LENGTH % (2 ** N_LAYERS) == 0

    key = jax.random.PRNGKey(0)
    kx, kp = jax.random.split(key)
    x = jax.random.normal(kx, (BATCH, 1, LENGTH), dtype=jnp.float32)
    params = init_params(kp, N_LAYERS, CH_INTERVAL)

    out = jax.block_until_ready(jax.jit(wave_u_net_forward)(x, params))
    ref = jax.block_until_ready(jax.jit(wave_u_net_reference)(x, params))

    assert out.shape == (BATCH, 1, LENGTH), out.shape
    err = float(jnp.max(jnp.abs(out - ref)))
    assert jnp.allclose(out, ref, atol=5e-4, rtol=5e-4), err

    print("KERNEL_OK")
</pallas_src>

<mosaic_0001>
module attributes {stable_mosaic.version = 11 : i64} {
  func.func @_stats_kernel(%arg0: i32, %arg1: i32, %arg2: memref<15x4x1xf32, #tpu.memory_space<vmem>>, %arg3: memref<1x1x16xf32, #tpu.memory_space<vmem>>, %arg4: memref<1x1x1x7xf32, #tpu.memory_space<vmem>>, %arg5: memref<1x1x1x7xf32, #tpu.memory_space<vmem>>, %arg6: memref<4x1xf32, #tpu.memory_space<vmem>>, %arg7: memref<4x1xf32, #tpu.memory_space<vmem>>, %arg8: memref<4x1xf32, #tpu.memory_space<vmem>>, %arg9: memref<4x1xf32, #tpu.memory_space<vmem>>, %arg10: memref<4x1xf32, #tpu.memory_space<vmem>>, %arg11: memref<4x1xf32, #tpu.memory_space<vmem>>) attributes {dimension_semantics = [#tpu.dimension_semantics<arbitrary>, #tpu.dimension_semantics<arbitrary>], iteration_bounds = array<i64: 2, 1>, scalar_prefetch = 0 : i64, scratch_operands = 2 : i64, tpu.core_type = #tpu.core_type<tc>, window_params = [{pipeline_mode = #tpu.pipeline_mode<synchronous>, transform_indices = @transform_0, window_bounds = array<i64: 15, 4, 1>}, {transform_indices = @transform_1, window_bounds = array<i64: 1, 1, 16>}, {transform_indices = @transform_2, window_bounds = array<i64: 1, 1, 1, 7>}, {transform_indices = @transform_3, window_bounds = array<i64: 1, 1, 1, 7>}, {pipeline_mode = #tpu.pipeline_mode<synchronous>, transform_indices = @transform_4, window_bounds = array<i64: 4, 1>}, {pipeline_mode = #tpu.pipeline_mode<synchronous>, transform_indices = @transform_5, window_bounds = array<i64: 4, 1>}, {pipeline_mode = #tpu.pipeline_mode<synchronous>, transform_indices = @transform_6, window_bounds = array<i64: 4, 1>}, {pipeline_mode = #tpu.pipeline_mode<synchronous>, transform_indices = @transform_7, window_bounds = array<i64: 4, 1>}]} {
    %c0_i32 = arith.constant 0 : i32
    %0 = arith.cmpi eq, %arg0, %c0_i32 : i32
    %c0_i32_0 = arith.constant 0 : i32
    %1 = arith.cmpi eq, %arg1, %c0_i32_0 : i32
    %2 = arith.andi %0, %1 : i1
    %3 = arith.extui %2 : i1 to i32
    %c0_i32_1 = arith.constant 0 : i32
    %4 = arith.cmpi ne, %3, %c0_i32_1 : i32
    scf.if %4 {
      %cst_62 = arith.constant 0.000000e+00 : f32
      %154 = vector.broadcast %cst_62 : f32 to vector<4x1xf32>
      %c0_63 = arith.constant 0 : index
      %c0_64 = arith.constant 0 : index
      %155 = vector.load %arg10[%c0_63, %c0_64] : memref<4x1xf32, #tpu.memory_space<vmem>>, vector<4x1xf32>
      tpu.vector_store %arg10[%c0_63, %c0_64], %154 {strides = array<i32>} : memref<4x1xf32, #tpu.memory_space<vmem>>, vector<4x1xf32>,
      %cst_65 = arith.constant 0.000000e+00 : f32
      %156 = vector.broadcast %cst_65 : f32 to vector<4x1xf32>
      %c0_66 = arith.constant 0 : index
      %c0_67 = arith.constant 0 : index
      %157 = vector.load %arg11[%c0_66, %c0_67] : memref<4x1xf32, #tpu.memory_space<vmem>>, vector<4x1xf32>
      tpu.vector_store %arg11[%c0_66, %c0_67], %156 {strides = array<i32>} : memref<4x1xf32, #tpu.memory_space<vmem>>, vector<4x1xf32>,
    } else {
    }
    %c0 = arith.constant 0 : index
    %c0_2 = arith.constant 0 : index
    %c0_3 = arith.constant 0 : index
    %c0_4 = arith.constant 0 : index
    %5 = vector.load %arg4[%c0, %c0_2, %c0_3, %c0_4] : memref<1x1x1x7xf32, #tpu.memory_space<vmem>>, vector<1x1x1x7xf32>
    %6 = vector.shape_cast %5 : vector<1x1x1x7xf32> to vector<1x7xf32>
    %c0_5 = arith.constant 0 : index
    %c0_6 = arith.constant 0 : index
    %c0_7 = arith.constant 0 : index
    %7 = vector.load %arg3[%c0_5, %c0_6, %c0_7] : memref<1x1x16xf32, #tpu.memory_space<vmem>>, vector<1x1x16xf32>
    %8 = vector.shape_cast %7 : vector<1x1x16xf32> to vector<1x16xf32>
    %c0_8 = arith.constant 0 : index
    %c0_9 = arith.constant 0 : index
    %c0_10 = arith.constant 0 : index
    %c0_11 = arith.constant 0 : index
    %9 = vector.load %arg5[%c0_8, %c0_9, %c0_10, %c0_11] : memref<1x1x1x7xf32, #tpu.memory_space<vmem>>, vector<1x1x1x7xf32>
    %10 = vector.shape_cast %9 : vector<1x1x1x7xf32> to vector<1x7xf32>
    %11 = tpu.concatenate %6, %8, %10 in 1 : vector<1x7xf32>, vector<1x16xf32>, vector<1x7xf32> -> vector<1x30xf32>
    %cst = arith.constant 0.000000e+00 : f32
    %12 = vector.broadcast %cst : f32 to vector<4x16xf32>
    %13 = vector.extract_strided_slice %11 {offsets = [0, 0], sizes = [1, 16], strides = [1, 1]} : vector<1x30xf32> to vector<1x16xf32>
    %c0_12 = arith.constant 0 : index
    %c0_13 = arith.constant 0 : index
    %c0_14 = arith.constant 0 : index
    %14 = vector.load %arg2[%c0_12, %c0_13, %c0_14] : memref<15x4x1xf32, #tpu.memory_space<vmem>>, vector<1x4x1xf32>
    %15 = vector.shape_cast %14 : vector<1x4x1xf32> to vector<4x1xf32>
    %16 = vector.broadcast %15 : vector<4x1xf32> to vector<4x16xf32>
    %17 = vector.broadcast %13 : vector<1x16xf32> to vector<4x16xf32>
    %18 = arith.mulf %16, %17 : vector<4x16xf32>
    %19 = arith.addf %12, %18 : vector<4x16xf32>
    %20 = vector.extract_strided_slice %11 {offsets = [0, 1], sizes = [1, 16], strides = [1, 1]} : vector<1x30xf32> to vector<1x16xf32>
    %c1 = arith.constant 1 : index
    %c0_15 = arith.constant 0 : index
    %c0_16 = arith.constant 0 : index
    %21 = vector.load %arg2[%c1, %c0_15, %c0_16] : memref<15x4x1xf32, #tpu.memory_space<vmem>>, vector<1x4x1xf32>
    %22 = vector.shape_cast %21 : vector<1x4x1xf32> to vector<4x1xf32>
    %23 = vector.broadcast %22 : vector<4x1xf32> to vector<4x16xf32>
    %24 = vector.broadcast %20 : vector<1x16xf32> to vector<4x16xf32>
    %25 = arith.mulf %23, %24 : vector<4x16xf32>
    %26 = arith.addf %19, %25 : vector<4x16xf32>
    %27 = vector.extract_strided_slice %11 {offsets = [0, 2], sizes = [1, 16], strides = [1, 1]} : vector<1x30xf32> to vector<1x16xf32>
    %c2 = arith.constant 2 : index
    %c0_17 = arith.constant 0 : index
    %c0_18 = arith.constant 0 : index
    %28 = vector.load %arg2[%c2, %c0_17, %c0_18] : memref<15x4x1xf32, #tpu.memory_space<vmem>>, vector<1x4x1xf32>
    %29 = vector.shape_cast %28 : vector<1x4x1xf32> to vector<4x1xf32>
    %30 = vector.broadcast %29 : vector<4x1xf32> to vector<4x16xf32>
    %31 = vector.broadcast %27 : vector<1x16xf32> to vector<4x16xf32>
    %32 = arith.mulf %30, %31 : vector<4x16xf32>
    %33 = arith.addf %26, %32 : vector<4x16xf32>
    %34 = vector.extract_strided_slice %11 {offsets = [0, 3], sizes = [1, 16], strides = [1, 1]} : vector<1x30xf32> to vector<1x16xf32>
    %c3 = arith.constant 3 : index
    %c0_19 = arith.constant 0 : index
    %c0_20 = arith.constant 0 : index
    %35 = vector.load %arg2[%c3, %c0_19, %c0_20] : memref<15x4x1xf32, #tpu.memory_space<vmem>>, vector<1x4x1xf32>
    %36 = vector.shape_cast %35 : vector<1x4x1xf32> to vector<4x1xf32>
    %37 = vector.broadcast %36 : vector<4x1xf32> to vector<4x16xf32>
    %38 = vector.broadcast %34 : vector<1x16xf32> to vector<4x16xf32>
    %39 = arith.mulf %37, %38 : vector<4x16xf32>
    %40 = arith.addf %33, %39 : vector<4x16xf32>
    %41 = vector.extract_strided_slice %11 {offsets = [0, 4], sizes = [1, 16], strides = [1, 1]} : vector<1x30xf32> to vector<1x16xf32>
    %c4 = arith.constant 4 : index
    %c0_21 = arith.constant 0 : index
    %c0_22 = arith.constant 0 : index
    %42 = vector.load %arg2[%c4, %c0_21, %c0_22] : memref<15x4x1xf32, #tpu.memory_space<vmem>>, vector<1x4x1xf32>
    %43 = vector.shape_cast %42 : vector<1x4x1xf32> to vector<4x1xf32>
    %44 = vector.broadcast %43 : vector<4x1xf32> to vector<4x16xf32>
    %45 = vector.broadcast %41 : vector<1x16xf32> to vector<4x16xf32>
    %46 = arith.mulf %44, %45 : vector<4x16xf32>
    %47 = arith.addf %40, %46 : vector<4x16xf32>
    %48 = vector.extract_strided_slice %11 {offsets = [0, 5], sizes = [1, 16], strides = [1, 1]} : vector<1x30xf32> to vector<1x16xf32>
    %c5 = arith.constant 5 : index
    %c0_23 = arith.constant 0 : index
    %c0_24 = arith.constant 0 : index
    %49 = vector.load %arg2[%c5, %c0_23, %c0_24] : memref<15x4x1xf32, #tpu.memory_space<vmem>>, vector<1x4x1xf32>
    %50 = vector.shape_cast %49 : vector<1x4x1xf32> to vector<4x1xf32>
    %51 = vector.broadcast %50 : vector<4x1xf32> to vector<4x16xf32>
    %52 = vector.broadcast %48 : vector<1x16xf32> to vector<4x16xf32>
    %53 = arith.mulf %51, %52 : vector<4x16xf32>
    %54 = arith.addf %47, %53 : vector<4x16xf32>
    %55 = vector.extract_strided_slice %11 {offsets = [0, 6], sizes = [1, 16], strides = [1, 1]} : vector<1x30xf32> to vector<1x16xf32>
    %c6 = arith.constant 6 : index
    %c0_25 = arith.constant 0 : index
    %c0_26 = arith.constant 0 : index
    %56 = vector.load %arg2[%c6, %c0_25, %c0_26] : memref<15x4x1xf32, #tpu.memory_space<vmem>>, vector<1x4x1xf32>
    %57 = vector.shape_cast %56 : vector<1x4x1xf32> to vector<4x1xf32>
    %58 = vector.broadcast %57 : vector<4x1xf32> to vector<4x16xf32>
    %59 = vector.broadcast %55 : vector<1x16xf32> to vector<4x16xf32>
    %60 = arith.mulf %58, %59 : vector<4x16xf32>
    %61 = arith.addf %54, %60 : vector<4x16xf32>
    %62 = vector.extract_strided_slice %11 {offsets = [0, 7], sizes = [1, 16], strides = [1, 1]} : vector<1x30xf32> to vector<1x16xf32>
    %c7 = arith.constant 7 : index
    %c0_27 = arith.constant 0 : index
    %c0_28 = arith.constant 0 : index
    %63 = vector.load %arg2[%c7, %c0_27, %c0_28] : memref<15x4x1xf32, #tpu.memory_space<vmem>>, vector<1x4x1xf32>
    %64 = vector.shape_cast %63 : vector<1x4x1xf32> to vector<4x1xf32>
    %65 = vector.broadcast %64 : vector<4x1xf32> to vector<4x16xf32>
    %66 = vector.broadcast %62 : vector<1x16xf32> to vector<4x16xf32>
    %67 = arith.mulf %65, %66 : vector<4x16xf32>
    %68 = arith.addf %61, %67 : vector<4x16xf32>
    %69 = vector.extract_strided_slice %11 {offsets = [0, 8], sizes = [1, 16], strides = [1, 1]} : vector<1x30xf32> to vector<1x16xf32>
    %c8 = arith.constant 8 : index
    %c0_29 = arith.constant 0 : index
    %c0_30 = arith.constant 0 : index
    %70 = vector.load %arg2[%c8, %c0_29, %c0_30] : memref<15x4x1xf32, #tpu.memory_space<vmem>>, vector<1x4x1xf32>
    %71 = vector.shape_cast %70 : vector<1x4x1xf32> to vector<4x1xf32>
    %72 = vector.broadcast %71 : vector<4x1xf32> to vector<4x16xf32>
    %73 = vector.broadcast %69 : vector<1x16xf32> to vector<4x16xf32>
    %74 = arith.mulf %72, %73 : vector<4x16xf32>
    %75 = arith.addf %68, %74 : vector<4x16xf32>
    %76 = vector.extract_strided_slice %11 {offsets = [0, 9], sizes = [1, 16], strides = [1, 1]} : vector<1x30xf32> to vector<1x16xf32>
    %c9 = arith.constant 9 : index
    %c0_31 = arith.constant 0 : index
    %c0_32 = arith.constant 0 : index
    %77 = vector.load %arg2[%c9, %c0_31, %c0_32] : memref<15x4x1xf32, #tpu.memory_space<vmem>>, vector<1x4x1xf32>
    %78 = vector.shape_cast %77 : vector<1x4x1xf32> to vector<4x1xf32>
    %79 = vector.broadcast %78 : vector<4x1xf32> to vector<4x16xf32>
    %80 = vector.broadcast %76 : vector<1x16xf32> to vector<4x16xf32>
    %81 = arith.mulf %79, %80 : vector<4x16xf32>
    %82 = arith.addf %75, %81 : vector<4x16xf32>
    %83 = vector.extract_strided_slice %11 {offsets = [0, 10], sizes = [1, 16], strides = [1, 1]} : vector<1x30xf32> to vector<1x16xf32>
    %c10 = arith.constant 10 : index
    %c0_33 = arith.constant 0 : index
    %c0_34 = arith.constant 0 : index
    %84 = vector.load %arg2[%c10, %c0_33, %c0_34] : memref<15x4x1xf32, #tpu.memory_space<vmem>>, vector<1x4x1xf32>
    %85 = vector.shape_cast %84 : vector<1x4x1xf32> to vector<4x1xf32>
    %86 = vector.broadcast %85 : vector<4x1xf32> to vector<4x16xf32>
    %87 = vector.broadcast %83 : vector<1x16xf32> to vector<4x16xf32>
    %88 = arith.mulf %86, %87 : vector<4x16xf32>
    %89 = arith.addf %82, %88 : vector<4x16xf32>
    %90 = vector.extract_strided_slice %11 {offsets = [0, 11], sizes = [1, 16], strides = [1, 1]} : vector<1x30xf32> to vector<1x16xf32>
    %c11 = arith.constant 11 : index
    %c0_35 = arith.constant 0 : index
    %c0_36 = arith.constant 0 : index
    %91 = vector.load %arg2[%c11, %c0_35, %c0_36] : memref<15x4x1xf32, #tpu.memory_space<vmem>>, vector<1x4x1xf32>
    %92 = vector.shape_cast %91 : vector<1x4x1xf32> to vector<4x1xf32>
    %93 = vector.broadcast %92 : vector<4x1xf32> to vector<4x16xf32>
    %94 = vector.broadcast %90 : vector<1x16xf32> to vector<4x16xf32>
    %95 = arith.mulf %93, %94 : vector<4x16xf32>
    %96 = arith.addf %89, %95 : vector<4x16xf32>
    %97 = vector.extract_strided_slice %11 {offsets = [0, 12], sizes = [1, 16], strides = [1, 1]} : vector<1x30xf32> to vector<1x16xf32>
    %c12 = arith.constant 12 : index
    %c0_37 = arith.constant 0 : index
    %c0_38 = arith.constant 0 : index
    %98 = vector.load %arg2[%c12, %c0_37, %c0_38] : memref<15x4x1xf32, #tpu.memory_space<vmem>>, vector<1x4x1xf32>
    %99 = vector.shape_cast %98 : vector<1x4x1xf32> to vector<4x1xf32>
    %100 = vector.broadcast %99 : vector<4x1xf32> to vector<4x16xf32>
    %101 = vector.broadcast %97 : vector<1x16xf32> to vector<4x16xf32>
    %102 = arith.mulf %100, %101 : vector<4x16xf32>
    %103 = arith.addf %96, %102 : vector<4x16xf32>
    %104 = vector.extract_strided_slice %11 {offsets = [0, 13], sizes = [1, 16], strides = [1, 1]} : vector<1x30xf32> to vector<1x16xf32>
    %c13 = arith.constant 13 : index
    %c0_39 = arith.constant 0 : index
    %c0_40 = arith.constant 0 : index
    %105 = vector.load %arg2[%c13, %c0_39, %c0_40] : memref<15x4x1xf32, #tpu.memory_space<vmem>>, vector<1x4x1xf32>
    %106 = vector.shape_cast %105 : vector<1x4x1xf32> to vector<4x1xf32>
    %107 = vector.broadcast %106 : vector<4x1xf32> to vector<4x16xf32>
    %108 = vector.broadcast %104 : vector<1x16xf32> to vector<4x16xf32>
    %109 = arith.mulf %107, %108 : vector<4x16xf32>
    %110 = arith.addf %103, %109 : vector<4x16xf32>
    %111 = vector.extract_strided_slice %11 {offsets = [0, 14], sizes = [1, 16], strides = [1, 1]} : vector<1x30xf32> to vector<1x16xf32>
    %c14 = arith.constant 14 : index
    %c0_41 = arith.constant 0 : index
    %c0_42 = arith.constant 0 : index
    %112 = vector.load %arg2[%c14, %c0_41, %c0_42] : memref<15x4x1xf32, #tpu.memory_space<vmem>>, vector<1x4x1xf32>
    %113 = vector.shape_cast %112 : vector<1x4x1xf32> to vector<4x1xf32>
    %114 = vector.broadcast %113 : vector<4x1xf32> to vector<4x16xf32>
    %115 = vector.broadcast %111 : vector<1x16xf32> to vector<4x16xf32>
    %116 = arith.mulf %114, %115 : vector<4x16xf32>
    %117 = arith.addf %110, %116 : vector<4x16xf32>
    %cst_43 = arith.constant dense<0.000000e+00> : vector<4xf32>
    %118 = vector.multi_reduction <add>, %117, %cst_43 [1] : vector<4x16xf32> to vector<4xf32>
    %119 = vector.shape_cast %118 : vector<4xf32> to vector<4x1xf32>
    %cst_44 = arith.constant 6.250000e-02 : f32
    %120 = vector.broadcast %cst_44 : f32 to vector<4x1xf32>
    %121 = arith.mulf %119, %120 : vector<4x1xf32>
    %122 = vector.broadcast %121 : vector<4x1xf32> to vector<4x16xf32>
    %123 = arith.subf %117, %122 : vector<4x16xf32>
    %124 = arith.mulf %123, %123 : vector<4x16xf32>
    %cst_45 = arith.constant dense<0.000000e+00> : vector<4xf32>
    %125 = vector.multi_reduction <add>, %124, %cst_45 [1] : vector<4x16xf32> to vector<4xf32>
    %126 = vector.shape_cast %125 : vector<4xf32> to vector<4x1xf32>
    %c1_i32 = arith.constant 1 : i32
    %127 = arith.muli %arg0, %c1_i32 : i32
    %128 = arith.addi %127, %arg1 : i32
    %c16_i32 = arith.constant 16 : i32
    %129 = arith.muli %128, %c16_i32 : i32
    %130 = arith.sitofp %129 : i32 to f32
    %cst_46 = arith.constant 1.600000e+01 : f32
    %131 = arith.addf %130, %cst_46 : f32
    %c0_47 = arith.constant 0 : index
    %c0_48 = arith.constant 0 : index
    %132 = vector.load %arg10[%c0_47, %c0_48] : memref<4x1xf32, #tpu.memory_space<vmem>>, vector<4x1xf32>
    %133 = arith.subf %121, %132 : vector<4x1xf32>
    %c0_49 = arith.constant 0 : index
    %c0_50 = arith.constant 0 : index
    %134 = vector.load %arg10[%c0_49, %c0_50] : memref<4x1xf32, #tpu.memory_space<vmem>>, vector<4x1xf32>
    %cst_51 = arith.constant 1.600000e+01 : f32
    %135 = arith.divf %cst_51, %131 : f32
    %136 = vector.broadcast %135 : f32 to vector<4x1xf32>
    %137 = arith.mulf %133, %136 : vector<4x1xf32>
    %138 = arith.addf %134, %137 : vector<4x1xf32>
    %c0_52 = arith.constant 0 : index
    %c0_53 = arith.constant 0 : index
    %139 = vector.load %arg10[%c0_52, %c0_53] : memref<4x1xf32, #tpu.memory_space<vmem>>, vector<4x1xf32>
    tpu.vector_store %arg10[%c0_52, %c0_53], %138 {strides = array<i32>} : memref<4x1xf32, #tpu.memory_space<vmem>>, vector<4x1xf32>,
    %c0_54 = arith.constant 0 : index
    %c0_55 = arith.constant 0 : index
    %140 = vector.load %arg11[%c0_54, %c0_55] : memref<4x1xf32, #tpu.memory_space<vmem>>, vector<4x1xf32>
    %141 = arith.addf %140, %126 : vector<4x1xf32>
    %142 = arith.mulf %133, %133 : vector<4x1xf32>
    %cst_56 = arith.constant 1.600000e+01 : f32
    %143 = arith.mulf %130, %cst_56 : f32
    %144 = arith.divf %143, %131 : f32
    %145 = vector.broadcast %144 : f32 to vector<4x1xf32>
    %146 = arith.mulf %142, %145 : vector<4x1xf32>
    %147 = arith.addf %141, %146 : vector<4x1xf32>
    %c0_57 = arith.constant 0 : index
    %c0_58 = arith.constant 0 : index
    %148 = vector.load %arg11[%c0_57, %c0_58] : memref<4x1xf32, #tpu.memory_space<vmem>>, vector<4x1xf32>
    tpu.vector_store %arg11[%c0_57, %c0_58], %147 {strides = array<i32>} : memref<4x1xf32, #tpu.memory_space<vmem>>, vector<4x1xf32>,
    %c1_i32_59 = arith.constant 1 : i32
    %149 = arith.cmpi eq, %arg0, %c1_i32_59 : i32
    %c0_i32_60 = arith.constant 0 : i32
    %150 = arith.cmpi eq, %arg1, %c0_i32_60 : i32
    %151 = arith.andi %149, %150 : i1
    %152 = arith.extui %151 : i1 to i32
    %c0_i32_61 = arith.constant 0 : i32
    %153 = arith.cmpi ne, %152, %c0_i32_61 : i32
    scf.if %153 {
      %c0_62 = arith.constant 0 : index
      %c0_63 = arith.constant 0 : index
      %154 = vector.load %arg10[%c0_62, %c0_63] : memref<4x1xf32, #tpu.memory_space<vmem>>, vector<4x1xf32>
      %c0_64 = arith.constant 0 : index
      %c0_65 = arith.constant 0 : index
      %155 = vector.load %arg11[%c0_64, %c0_65] : memref<4x1xf32, #tpu.memory_space<vmem>>, vector<4x1xf32>
      %cst_66 = arith.constant 3.125000e-02 : f32
      %156 = vector.broadcast %cst_66 : f32 to vector<4x1xf32>
      %157 = arith.mulf %155, %156 : vector<4x1xf32>
      %cst_67 = arith.constant 9.99999974E-6 : f32
      %158 = vector.broadcast %cst_67 : f32 to vector<4x1xf32>
      %159 = arith.addf %157, %158 : vector<4x1xf32>
      %160 = math.rsqrt %159 : vector<4x1xf32>
      %c0_68 = arith.constant 0 : index
      %c0_69 = arith.constant 0 : index
      %161 = vector.load %arg6[%c0_68, %c0_69] : memref<4x1xf32, #tpu.memory_space<vmem>>, vector<4x1xf32>
      %162 = arith.mulf %161, %160 : vector<4x1xf32>
      %c0_70 = arith.constant 0 : index
      %c0_71 = arith.constant 0 : index
      %163 = vector.load %arg8[%c0_70, %c0_71] : memref<4x1xf32, #tpu.memory_space<vmem>>, vector<4x1xf32>
      tpu.vector_store %arg8[%c0_70, %c0_71], %162 {strides = array<i32>} : memref<4x1xf32, #tpu.memory_space<vmem>>, vector<4x1xf32>,
      %c0_72 = arith.constant 0 : index
      %c0_73 = arith.constant 0 : index
      %164 = vector.load %arg7[%c0_72, %c0_73] : memref<4x1xf32, #tpu.memory_space<vmem>>, vector<4x1xf32>
      %165 = arith.mulf %154, %162 : vector<4x1xf32>
      %166 = arith.subf %164, %165 : vector<4x1xf32>
      %c0_74 = arith.constant 0 : index
      %c0_75 = arith.constant 0 : index
      %167 = vector.load %arg9[%c0_74, %c0_75] : memref<4x1xf32, #tpu.memory_space<vmem>>, vector<4x1xf32>
      tpu.vector_store %arg9[%c0_74, %c0_75], %166 {strides = array<i32>} : memref<4x1xf32, #tpu.memory_space<vmem>>, vector<4x1xf32>,
    } else {
    }
    return
  }
  func.func @transform_0(%arg0: i32, %arg1: i32) -> (i32, i32, i32) {
    %c0_i32 = arith.constant 0 : i32
    %c0_i32_0 = arith.constant 0 : i32
    %c0_i32_1 = arith.constant 0 : i32
    %c0_i32_2 = arith.constant 0 : i32
    return %c0_i32, %c0_i32_0, %c0_i32_1 : i32, i32, i32
  }
  func.func @transform_1(%arg0: i32, %arg1: i32) -> (i32, i32, i32) {
    %c0_i32 = arith.constant 0 : i32
    %c0_i32_0 = arith.constant 0 : i32
    return %arg0, %c0_i32, %arg1 : i32, i32, i32
  }
  func.func @transform_2(%arg0: i32, %arg1: i32) -> (i32, i32, i32, i32) {
    %c0_i32 = arith.constant 0 : i32
    %c0_i32_0 = arith.constant 0 : i32
    %c0_i32_1 = arith.constant 0 : i32
    return %arg0, %arg1, %c0_i32, %c0_i32_0 : i32, i32, i32, i32
  }
  func.func @transform_3(%arg0: i32, %arg1: i32) -> (i32, i32, i32, i32) {
    %c0_i32 = arith.constant 0 : i32
    %c0_i32_0 = arith.constant 0 : i32
    %c0_i32_1 = arith.constant 0 : i32
    return %arg0, %arg1, %c0_i32, %c0_i32_0 : i32, i32, i32, i32
  }
  func.func @transform_4(%arg0: i32, %arg1: i32) -> (i32, i32) {
    %c0_i32 = arith.constant 0 : i32
    %c0_i32_0 = arith.constant 0 : i32
    %c0_i32_1 = arith.constant 0 : i32
    return %c0_i32, %c0_i32_0 : i32, i32
  }
  func.func @transform_5(%arg0: i32, %arg1: i32) -> (i32, i32) {
    %c0_i32 = arith.constant 0 : i32
    %c0_i32_0 = arith.constant 0 : i32
    %c0_i32_1 = arith.constant 0 : i32
    return %c0_i32, %c0_i32_0 : i32, i32
  }
  func.func @transform_6(%arg0: i32, %arg1: i32) -> (i32, i32) {
    %c0_i32 = arith.constant 0 : i32
    %c0_i32_0 = arith.constant 0 : i32
    %c0_i32_1 = arith.constant 0 : i32
    return %c0_i32, %c0_i32_0 : i32, i32
  }
  func.func @transform_7(%arg0: i32, %arg1: i32) -> (i32, i32) {
    %c0_i32 = arith.constant 0 : i32
    %c0_i32_0 = arith.constant 0 : i32
    %c0_i32_1 = arith.constant 0 : i32
    return %c0_i32, %c0_i32_0 : i32, i32
  }
}

module attributes {stable_mosaic.version = 11 : i64} {
  func.func @_apply_kernel(%arg0: i32, %arg1: i32, %arg2: memref<15x4x1xf32, #tpu.memory_space<vmem>>, %arg3: memref<1x1x16xf32, #tpu.memory_space<vmem>>, %arg4: memref<1x1x1x7xf32, #tpu.memory_space<vmem>>, %arg5: memref<1x1x1x7xf32, #tpu.memory_space<vmem>>, %arg6: memref<4x1xf32, #tpu.memory_space<vmem>>, %arg7: memref<4x1xf32, #tpu.memory_space<vmem>>, %arg8: memref<1x4x16xf32, #tpu.memory_space<vmem>>) attributes {dimension_semantics = [#tpu.dimension_semantics<parallel>, #tpu.dimension_semantics<parallel>], iteration_bounds = array<i64: 2, 1>, scalar_prefetch = 0 : i64, scratch_operands = 0 : i64, tpu.core_type = #tpu.core_type<tc>, window_params = [{pipeline_mode = #tpu.pipeline_mode<synchronous>, transform_indices = @transform_0, window_bounds = array<i64: 15, 4, 1>}, {transform_indices = @transform_1, window_bounds = array<i64: 1, 1, 16>}, {transform_indices = @transform_2, window_bounds = array<i64: 1, 1, 1, 7>}, {transform_indices = @transform_3, window_bounds = array<i64: 1, 1, 1, 7>}, {pipeline_mode = #tpu.pipeline_mode<synchronous>, transform_indices = @transform_4, window_bounds = array<i64: 4, 1>}, {pipeline_mode = #tpu.pipeline_mode<synchronous>, transform_indices = @transform_5, window_bounds = array<i64: 4, 1>}, {transform_indices = @transform_6, window_bounds = array<i64: 1, 4, 16>}]} {
    %c0 = arith.constant 0 : index
    %c0_0 = arith.constant 0 : index
    %c0_1 = arith.constant 0 : index
    %c0_2 = arith.constant 0 : index
    %0 = vector.load %arg4[%c0, %c0_0, %c0_1, %c0_2] : memref<1x1x1x7xf32, #tpu.memory_space<vmem>>, vector<1x1x1x7xf32>
    %1 = vector.shape_cast %0 : vector<1x1x1x7xf32> to vector<1x7xf32>
    %c0_3 = arith.constant 0 : index
    %c0_4 = arith.constant 0 : index
    %c0_5 = arith.constant 0 : index
    %2 = vector.load %arg3[%c0_3, %c0_4, %c0_5] : memref<1x1x16xf32, #tpu.memory_space<vmem>>, vector<1x1x16xf32>
    %3 = vector.shape_cast %2 : vector<1x1x16xf32> to vector<1x16xf32>
    %c0_6 = arith.constant 0 : index
    %c0_7 = arith.constant 0 : index
    %c0_8 = arith.constant 0 : index
    %c0_9 = arith.constant 0 : index
    %4 = vector.load %arg5[%c0_6, %c0_7, %c0_8, %c0_9] : memref<1x1x1x7xf32, #tpu.memory_space<vmem>>, vector<1x1x1x7xf32>
    %5 = vector.shape_cast %4 : vector<1x1x1x7xf32> to vector<1x7xf32>
    %6 = tpu.concatenate %1, %3, %5 in 1 : vector<1x7xf32>, vector<1x16xf32>, vector<1x7xf32> -> vector<1x30xf32>
    %cst = arith.constant 0.000000e+00 : f32
    %7 = vector.broadcast %cst : f32 to vector<4x16xf32>
    %8 = vector.extract_strided_slice %6 {offsets = [0, 0], sizes = [1, 16], strides = [1, 1]} : vector<1x30xf32> to vector<1x16xf32>
    %c0_10 = arith.constant 0 : index
    %c0_11 = arith.constant 0 : index
    %c0_12 = arith.constant 0 : index
    %9 = vector.load %arg2[%c0_10, %c0_11, %c0_12] : memref<15x4x1xf32, #tpu.memory_space<vmem>>, vector<1x4x1xf32>
    %10 = vector.shape_cast %9 : vector<1x4x1xf32> to vector<4x1xf32>
    %11 = vector.broadcast %10 : vector<4x1xf32> to vector<4x16xf32>
    %12 = vector.broadcast %8 : vector<1x16xf32> to vector<4x16xf32>
    %13 = arith.mulf %11, %12 : vector<4x16xf32>
    %14 = arith.addf %7, %13 : vector<4x16xf32>
    %15 = vector.extract_strided_slice %6 {offsets = [0, 1], sizes = [1, 16], strides = [1, 1]} : vector<1x30xf32> to vector<1x16xf32>
    %c1 = arith.constant 1 : index
    %c0_13 = arith.constant 0 : index
    %c0_14 = arith.constant 0 : index
    %16 = vector.load %arg2[%c1, %c0_13, %c0_14] : memref<15x4x1xf32, #tpu.memory_space<vmem>>, vector<1x4x1xf32>
    %17 = vector.shape_cast %16 : vector<1x4x1xf32> to vector<4x1xf32>
    %18 = vector.broadcast %17 : vector<4x1xf32> to vector<4x16xf32>
    %19 = vector.broadcast %15 : vector<1x16xf32> to vector<4x16xf32>
    %20 = arith.mulf %18, %19 : vector<4x16xf32>
    %21 = arith.addf %14, %20 : vector<4x16xf32>
    %22 = vector.extract_strided_slice %6 {offsets = [0, 2], sizes = [1, 16], strides = [1, 1]} : vector<1x30xf32> to vector<1x16xf32>
    %c2 = arith.constant 2 : index
    %c0_15 = arith.constant 0 : index
    %c0_16 = arith.constant 0 : index
    %23 = vector.load %arg2[%c2, %c0_15, %c0_16] : memref<15x4x1xf32, #tpu.memory_space<vmem>>, vector<1x4x1xf32>
    %24 = vector.shape_cast %23 : vector<1x4x1xf32> to vector<4x1xf32>
    %25 = vector.broadcast %24 : vector<4x1xf32> to vector<4x16xf32>
    %26 = vector.broadcast %22 : vector<1x16xf32> to vector<4x16xf32>
    %27 = arith.mulf %25, %26 : vector<4x16xf32>
    %28 = arith.addf %21, %27 : vector<4x16xf32>
    %29 = vector.extract_strided_slice %6 {offsets = [0, 3], sizes = [1, 16], strides = [1, 1]} : vector<1x30xf32> to vector<1x16xf32>
    %c3 = arith.constant 3 : index
    %c0_17 = arith.constant 0 : index
    %c0_18 = arith.constant 0 : index
    %30 = vector.load %arg2[%c3, %c0_17, %c0_18] : memref<15x4x1xf32, #tpu.memory_space<vmem>>, vector<1x4x1xf32>
    %31 = vector.shape_cast %30 : vector<1x4x1xf32> to vector<4x1xf32>
    %32 = vector.broadcast %31 : vector<4x1xf32> to vector<4x16xf32>
    %33 = vector.broadcast %29 : vector<1x16xf32> to vector<4x16xf32>
    %34 = arith.mulf %32, %33 : vector<4x16xf32>
    %35 = arith.addf %28, %34 : vector<4x16xf32>
    %36 = vector.extract_strided_slice %6 {offsets = [0, 4], sizes = [1, 16], strides = [1, 1]} : vector<1x30xf32> to vector<1x16xf32>
    %c4 = arith.constant 4 : index
    %c0_19 = arith.constant 0 : index
    %c0_20 = arith.constant 0 : index
    %37 = vector.load %arg2[%c4, %c0_19, %c0_20] : memref<15x4x1xf32, #tpu.memory_space<vmem>>, vector<1x4x1xf32>
    %38 = vector.shape_cast %37 : vector<1x4x1xf32> to vector<4x1xf32>
    %39 = vector.broadcast %38 : vector<4x1xf32> to vector<4x16xf32>
    %40 = vector.broadcast %36 : vector<1x16xf32> to vector<4x16xf32>
    %41 = arith.mulf %39, %40 : vector<4x16xf32>
    %42 = arith.addf %35, %41 : vector<4x16xf32>
    %43 = vector.extract_strided_slice %6 {offsets = [0, 5], sizes = [1, 16], strides = [1, 1]} : vector<1x30xf32> to vector<1x16xf32>
    %c5 = arith.constant 5 : index
    %c0_21 = arith.constant 0 : index
    %c0_22 = arith.constant 0 : index
    %44 = vector.load %arg2[%c5, %c0_21, %c0_22] : memref<15x4x1xf32, #tpu.memory_space<vmem>>, vector<1x4x1xf32>
    %45 = vector.shape_cast %44 : vector<1x4x1xf32> to vector<4x1xf32>
    %46 = vector.broadcast %45 : vector<4x1xf32> to vector<4x16xf32>
    %47 = vector.broadcast %43 : vector<1x16xf32> to vector<4x16xf32>
    %48 = arith.mulf %46, %47 : vector<4x16xf32>
    %49 = arith.addf %42, %48 : vector<4x16xf32>
    %50 = vector.extract_strided_slice %6 {offsets = [0, 6], sizes = [1, 16], strides = [1, 1]} : vector<1x30xf32> to vector<1x16xf32>
    %c6 = arith.constant 6 : index
    %c0_23 = arith.constant 0 : index
    %c0_24 = arith.constant 0 : index
    %51 = vector.load %arg2[%c6, %c0_23, %c0_24] : memref<15x4x1xf32, #tpu.memory_space<vmem>>, vector<1x4x1xf32>
    %52 = vector.shape_cast %51 : vector<1x4x1xf32> to vector<4x1xf32>
    %53 = vector.broadcast %52 : vector<4x1xf32> to vector<4x16xf32>
    %54 = vector.broadcast %50 : vector<1x16xf32> to vector<4x16xf32>
    %55 = arith.mulf %53, %54 : vector<4x16xf32>
    %56 = arith.addf %49, %55 : vector<4x16xf32>
    %57 = vector.extract_strided_slice %6 {offsets = [0, 7], sizes = [1, 16], strides = [1, 1]} : vector<1x30xf32> to vector<1x16xf32>
    %c7 = arith.constant 7 : index
    %c0_25 = arith.constant 0 : index
    %c0_26 = arith.constant 0 : index
    %58 = vector.load %arg2[%c7, %c0_25, %c0_26] : memref<15x4x1xf32, #tpu.memory_space<vmem>>, vector<1x4x1xf32>
    %59 = vector.shape_cast %58 : vector<1x4x1xf32> to vector<4x1xf32>
    %60 = vector.broadcast %59 : vector<4x1xf32> to vector<4x16xf32>
    %61 = vector.broadcast %57 : vector<1x16xf32> to vector<4x16xf32>
    %62 = arith.mulf %60, %61 : vector<4x16xf32>
    %63 = arith.addf %56, %62 : vector<4x16xf32>
    %64 = vector.extract_strided_slice %6 {offsets = [0, 8], sizes = [1, 16], strides = [1, 1]} : vector<1x30xf32> to vector<1x16xf32>
    %c8 = arith.constant 8 : index
    %c0_27 = arith.constant 0 : index
    %c0_28 = arith.constant 0 : index
    %65 = vector.load %arg2[%c8, %c0_27, %c0_28] : memref<15x4x1xf32, #tpu.memory_space<vmem>>, vector<1x4x1xf32>
    %66 = vector.shape_cast %65 : vector<1x4x1xf32> to vector<4x1xf32>
    %67 = vector.broadcast %66 : vector<4x1xf32> to vector<4x16xf32>
    %68 = vector.broadcast %64 : vector<1x16xf32> to vector<4x16xf32>
    %69 = arith.mulf %67, %68 : vector<4x16xf32>
    %70 = arith.addf %63, %69 : vector<4x16xf32>
    %71 = vector.extract_strided_slice %6 {offsets = [0, 9], sizes = [1, 16], strides = [1, 1]} : vector<1x30xf32> to vector<1x16xf32>
    %c9 = arith.constant 9 : index
    %c0_29 = arith.constant 0 : index
    %c0_30 = arith.constant 0 : index
    %72 = vector.load %arg2[%c9, %c0_29, %c0_30] : memref<15x4x1xf32, #tpu.memory_space<vmem>>, vector<1x4x1xf32>
    %73 = vector.shape_cast %72 : vector<1x4x1xf32> to vector<4x1xf32>
    %74 = vector.broadcast %73 : vector<4x1xf32> to vector<4x16xf32>
    %75 = vector.broadcast %71 : vector<1x16xf32> to vector<4x16xf32>
    %76 = arith.mulf %74, %75 : vector<4x16xf32>
    %77 = arith.addf %70, %76 : vector<4x16xf32>
    %78 = vector.extract_strided_slice %6 {offsets = [0, 10], sizes = [1, 16], strides = [1, 1]} : vector<1x30xf32> to vector<1x16xf32>
    %c10 = arith.constant 10 : index
    %c0_31 = arith.constant 0 : index
    %c0_32 = arith.constant 0 : index
    %79 = vector.load %arg2[%c10, %c0_31, %c0_32] : memref<15x4x1xf32, #tpu.memory_space<vmem>>, vector<1x4x1xf32>
    %80 = vector.shape_cast %79 : vector<1x4x1xf32> to vector<4x1xf32>
    %81 = vector.broadcast %80 : vector<4x1xf32> to vector<4x16xf32>
    %82 = vector.broadcast %78 : vector<1x16xf32> to vector<4x16xf32>
    %83 = arith.mulf %81, %82 : vector<4x16xf32>
    %84 = arith.addf %77, %83 : vector<4x16xf32>
    %85 = vector.extract_strided_slice %6 {offsets = [0, 11], sizes = [1, 16], strides = [1, 1]} : vector<1x30xf32> to vector<1x16xf32>
    %c11 = arith.constant 11 : index
    %c0_33 = arith.constant 0 : index
    %c0_34 = arith.constant 0 : index
    %86 = vector.load %arg2[%c11, %c0_33, %c0_34] : memref<15x4x1xf32, #tpu.memory_space<vmem>>, vector<1x4x1xf32>
    %87 = vector.shape_cast %86 : vector<1x4x1xf32> to vector<4x1xf32>
    %88 = vector.broadcast %87 : vector<4x1xf32> to vector<4x16xf32>
    %89 = vector.broadcast %85 : vector<1x16xf32> to vector<4x16xf32>
    %90 = arith.mulf %88, %89 : vector<4x16xf32>
    %91 = arith.addf %84, %90 : vector<4x16xf32>
    %92 = vector.extract_strided_slice %6 {offsets = [0, 12], sizes = [1, 16], strides = [1, 1]} : vector<1x30xf32> to vector<1x16xf32>
    %c12 = arith.constant 12 : index
    %c0_35 = arith.constant 0 : index
    %c0_36 = arith.constant 0 : index
    %93 = vector.load %arg2[%c12, %c0_35, %c0_36] : memref<15x4x1xf32, #tpu.memory_space<vmem>>, vector<1x4x1xf32>
    %94 = vector.shape_cast %93 : vector<1x4x1xf32> to vector<4x1xf32>
    %95 = vector.broadcast %94 : vector<4x1xf32> to vector<4x16xf32>
    %96 = vector.broadcast %92 : vector<1x16xf32> to vector<4x16xf32>
    %97 = arith.mulf %95, %96 : vector<4x16xf32>
    %98 = arith.addf %91, %97 : vector<4x16xf32>
    %99 = vector.extract_strided_slice %6 {offsets = [0, 13], sizes = [1, 16], strides = [1, 1]} : vector<1x30xf32> to vector<1x16xf32>
    %c13 = arith.constant 13 : index
    %c0_37 = arith.constant 0 : index
    %c0_38 = arith.constant 0 : index
    %100 = vector.load %arg2[%c13, %c0_37, %c0_38] : memref<15x4x1xf32, #tpu.memory_space<vmem>>, vector<1x4x1xf32>
    %101 = vector.shape_cast %100 : vector<1x4x1xf32> to vector<4x1xf32>
    %102 = vector.broadcast %101 : vector<4x1xf32> to vector<4x16xf32>
    %103 = vector.broadcast %99 : vector<1x16xf32> to vector<4x16xf32>
    %104 = arith.mulf %102, %103 : vector<4x16xf32>
    %105 = arith.addf %98, %104 : vector<4x16xf32>
    %106 = vector.extract_strided_slice %6 {offsets = [0, 14], sizes = [1, 16], strides = [1, 1]} : vector<1x30xf32> to vector<1x16xf32>
    %c14 = arith.constant 14 : index
    %c0_39 = arith.constant 0 : index
    %c0_40 = arith.constant 0 : index
    %107 = vector.load %arg2[%c14, %c0_39, %c0_40] : memref<15x4x1xf32, #tpu.memory_space<vmem>>, vector<1x4x1xf32>
    %108 = vector.shape_cast %107 : vector<1x4x1xf32> to vector<4x1xf32>
    %109 = vector.broadcast %108 : vector<4x1xf32> to vector<4x16xf32>
    %110 = vector.broadcast %106 : vector<1x16xf32> to vector<4x16xf32>
    %111 = arith.mulf %109, %110 : vector<4x16xf32>
    %112 = arith.addf %105, %111 : vector<4x16xf32>
    %c0_41 = arith.constant 0 : index
    %c0_42 = arith.constant 0 : index
    %113 = vector.load %arg6[%c0_41, %c0_42] : memref<4x1xf32, #tpu.memory_space<vmem>>, vector<4x1xf32>
    %114 = vector.broadcast %113 : vector<4x1xf32> to vector<4x16xf32>
    %115 = arith.mulf %112, %114 : vector<4x16xf32>
    %c0_43 = arith.constant 0 : index
    %c0_44 = arith.constant 0 : index
    %116 = vector.load %arg7[%c0_43, %c0_44] : memref<4x1xf32, #tpu.memory_space<vmem>>, vector<4x1xf32>
    %117 = vector.broadcast %116 : vector<4x1xf32> to vector<4x16xf32>
    %118 = arith.addf %115, %117 : vector<4x16xf32>
    %cst_45 = arith.constant 0.000000e+00 : f32
    %119 = vector.broadcast %cst_45 : f32 to vector<4x16xf32>
    %120 = arith.cmpf oge, %118, %119 : vector<4x16xf32>
    %cst_46 = arith.constant 1.000000e-01 : f32
    %121 = vector.broadcast %cst_46 : f32 to vector<4x16xf32>
    %122 = arith.mulf %121, %118 : vector<4x16xf32>
    %123 = arith.select %120, %118, %122 : vector<4x16xi1>, vector<4x16xf32>
    %c0_47 = arith.constant 0 : index
    %c0_48 = arith.constant 0 : index
    %c0_49 = arith.constant 0 : index
    %124 = vector.load %arg8[%c0_47, %c0_48, %c0_49] : memref<1x4x16xf32, #tpu.memory_space<vmem>>, vector<1x4x16xf32>
    %125 = vector.shape_cast %124 : vector<1x4x16xf32> to vector<4x16xf32>
    %126 = vector.shape_cast %123 : vector<4x16xf32> to vector<1x4x16xf32>
    tpu.vector_store %arg8[%c0_47, %c0_48, %c0_49], %126 {strides = array<i32>} : memref<1x4x16xf32, #tpu.memory_space<vmem>>, vector<1x4x16xf32>,
    return
  }
  func.func @transform_0(%arg0: i32, %arg1: i32) -> (i32, i32, i32) {
    %c0_i32 = arith.constant 0 : i32
    %c0_i32_0 = arith.constant 0 : i32
    %c0_i32_1 = arith.constant 0 : i32
    %c0_i32_2 = arith.constant 0 : i32
    return %c0_i32, %c0_i32_0, %c0_i32_1 : i32, i32, i32
  }
  func.func @transform_1(%arg0: i32, %arg1: i32) -> (i32, i32, i32) {
    %c0_i32 = arith.constant 0 : i32
    %c0_i32_0 = arith.constant 0 : i32
    return %arg0, %c0_i32, %arg1 : i32, i32, i32
  }
  func.func @transform_2(%arg0: i32, %arg1: i32) -> (i32, i32, i32, i32) {
    %c0_i32 = arith.constant 0 : i32
    %c0_i32_0 = arith.constant 0 : i32
    %c0_i32_1 = arith.constant 0 : i32
    return %arg0, %arg1, %c0_i32, %c0_i32_0 : i32, i32, i32, i32
  }
  func.func @transform_3(%arg0: i32, %arg1: i32) -> (i32, i32, i32, i32) {
    %c0_i32 = arith.constant 0 : i32
    %c0_i32_0 = arith.constant 0 : i32
    %c0_i32_1 = arith.constant 0 : i32
    return %arg0, %arg1, %c0_i32, %c0_i32_0 : i32, i32, i32, i32
  }
  func.func @transform_4(%arg0: i32, %arg1: i32) -> (i32, i32) {
    %c0_i32 = arith.constant 0 : i32
    %c0_i32_0 = arith.constant 0 : i32
    %c0_i32_1 = arith.constant 0 : i32
    return %c0_i32, %c0_i32_0 : i32, i32
  }
  func.func @transform_5(%arg0: i32, %arg1: i32) -> (i32, i32) {
    %c0_i32 = arith.constant 0 : i32
    %c0_i32_0 = arith.constant 0 : i32
    %c0_i32_1 = arith.constant 0 : i32
    return %c0_i32, %c0_i32_0 : i32, i32
  }
  func.func @transform_6(%arg0: i32, %arg1: i32) -> (i32, i32, i32) {
    %c0_i32 = arith.constant 0 : i32
    %c0_i32_0 = arith.constant 0 : i32
    return %arg0, %c0_i32, %arg1 : i32, i32, i32
  }
}

module attributes {stable_mosaic.version = 11 : i64} {
  func.func @_apply_kernel(%arg0: i32, %arg1: i32, %arg2: memref<15x8x4xf32, #tpu.memory_space<vmem>>, %arg3: memref<1x4x8xf32, #tpu.memory_space<vmem>>, %arg4: memref<1x1x4x7xf32, #tpu.memory_space<vmem>>, %arg5: memref<1x1x4x7xf32, #tpu.memory_space<vmem>>, %arg6: memref<8x1xf32, #tpu.memory_space<vmem>>, %arg7: memref<8x1xf32, #tpu.memory_space<vmem>>, %arg8: memref<1x8x8xf32, #tpu.memory_space<vmem>>) attributes {dimension_semantics = [#tpu.dimension_semantics<parallel>, #tpu.dimension_semantics<parallel>], iteration_bounds = array<i64: 2, 1>, scalar_prefetch = 0 : i64, scratch_operands = 0 : i64, tpu.core_type = #tpu.core_type<tc>, window_params = [{pipeline_mode = #tpu.pipeline_mode<synchronous>, transform_indices = @transform_0, window_bounds = array<i64: 15, 8, 4>}, {transform_indices = @transform_1, window_bounds = array<i64: 1, 4, 8>}, {transform_indices = @transform_2, window_bounds = array<i64: 1, 1, 4, 7>}, {transform_indices = @transform_3, window_bounds = array<i64: 1, 1, 4, 7>}, {pipeline_mode = #tpu.pipeline_mode<synchronous>, transform_indices = @transform_4, window_bounds = array<i64: 8, 1>}, {pipeline_mode = #tpu.pipeline_mode<synchronous>, transform_indices = @transform_5, window_bounds = array<i64: 8, 1>}, {transform_indices = @transform_6, window_bounds = array<i64: 1, 8, 8>}]} {
    %c0 = arith.constant 0 : index
    %c0_0 = arith.constant 0 : index
    %c0_1 = arith.constant 0 : index
    %c0_2 = arith.constant 0 : index
    %0 = vector.load %arg4[%c0, %c0_0, %c0_1, %c0_2] : memref<1x1x4x7xf32, #tpu.memory_space<vmem>>, vector<1x1x4x7xf32>
    %1 = vector.shape_cast %0 : vector<1x1x4x7xf32> to vector<4x7xf32>
    %c0_3 = arith.constant 0 : index
    %c0_4 = arith.constant 0 : index
    %c0_5 = arith.constant 0 : index
    %2 = vector.load %arg3[%c0_3, %c0_4, %c0_5] : memref<1x4x8xf32, #tpu.memory_space<vmem>>, vector<1x4x8xf32>
    %3 = vector.shape_cast %2 : vector<1x4x8xf32> to vector<4x8xf32>
    %c0_6 = arith.constant 0 : index
    %c0_7 = arith.constant 0 : index
    %c0_8 = arith.constant 0 : index
    %c0_9 = arith.constant 0 : index
    %4 = vector.load %arg5[%c0_6, %c0_7, %c0_8, %c0_9] : memref<1x1x4x7xf32, #tpu.memory_space<vmem>>, vector<1x1x4x7xf32>
    %5 = vector.shape_cast %4 : vector<1x1x4x7xf32> to vector<4x7xf32>
    %6 = tpu.concatenate %1, %3, %5 in 1 : vector<4x7xf32>, vector<4x8xf32>, vector<4x7xf32> -> vector<4x22xf32>
    %cst = arith.constant 0.000000e+00 : f32
    %7 = vector.broadcast %cst : f32 to vector<8x8xf32>
    %8 = vector.extract_strided_slice %6 {offsets = [0, 0], sizes = [4, 8], strides = [1, 1]} : vector<4x22xf32> to vector<4x8xf32>
    %c0_10 = arith.constant 0 : index
    %c0_11 = arith.constant 0 : index
    %c0_12 = arith.constant 0 : index
    %9 = vector.load %arg2[%c0_10, %c0_11, %c0_12] : memref<15x8x4xf32, #tpu.memory_space<vmem>>, vector<1x8x4xf32>
    %10 = vector.shape_cast %9 : vector<1x8x4xf32> to vector<8x4xf32>
    %cst_13 = arith.constant dense<0.000000e+00> : vector<8x8xf32>
    %11 = tpu.matmul %10, %8, %cst_13 {dimension_numbers = #tpu.dot_dimension_numbers<[1], [0], [0], [1], [0, 0, 1, 1], [], []>} : vector<8x4xf32>, vector<4x8xf32>, vector<8x8xf32> -> vector<8x8xf32>
    %12 = arith.addf %7, %11 : vector<8x8xf32>
    %13 = vector.extract_strided_slice %6 {offsets = [0, 1], sizes = [4, 8], strides = [1, 1]} : vector<4x22xf32> to vector<4x8xf32>
    %c1 = arith.constant 1 : index
    %c0_14 = arith.constant 0 : index
    %c0_15 = arith.constant 0 : index
    %14 = vector.load %arg2[%c1, %c0_14, %c0_15] : memref<15x8x4xf32, #tpu.memory_space<vmem>>, vector<1x8x4xf32>
    %15 = vector.shape_cast %14 : vector<1x8x4xf32> to vector<8x4xf32>
    %cst_16 = arith.constant dense<0.000000e+00> : vector<8x8xf32>
    %16 = tpu.matmul %15, %13, %cst_16 {dimension_numbers = #tpu.dot_dimension_numbers<[1], [0], [0], [1], [0, 0, 1, 1], [], []>} : vector<8x4xf32>, vector<4x8xf32>, vector<8x8xf32> -> vector<8x8xf32>
    %17 = arith.addf %12, %16 : vector<8x8xf32>
    %18 = vector.extract_strided_slice %6 {offsets = [0, 2], sizes = [4, 8], strides = [1, 1]} : vector<4x22xf32> to vector<4x8xf32>
    %c2 = arith.constant 2 : index
    %c0_17 = arith.constant 0 : index
    %c0_18 = arith.constant 0 : index
    %19 = vector.load %arg2[%c2, %c0_17, %c0_18] : memref<15x8x4xf32, #tpu.memory_space<vmem>>, vector<1x8x4xf32>
    %20 = vector.shape_cast %19 : vector<1x8x4xf32> to vector<8x4xf32>
    %cst_19 = arith.constant dense<0.000000e+00> : vector<8x8xf32>
    %21 = tpu.matmul %20, %18, %cst_19 {dimension_numbers = #tpu.dot_dimension_numbers<[1], [0], [0], [1], [0, 0, 1, 1], [], []>} : vector<8x4xf32>, vector<4x8xf32>, vector<8x8xf32> -> vector<8x8xf32>
    %22 = arith.addf %17, %21 : vector<8x8xf32>
    %23 = vector.extract_strided_slice %6 {offsets = [0, 3], sizes = [4, 8], strides = [1, 1]} : vector<4x22xf32> to vector<4x8xf32>
    %c3 = arith.constant 3 : index
    %c0_20 = arith.constant 0 : index
    %c0_21 = arith.constant 0 : index
    %24 = vector.load %arg2[%c3, %c0_20, %c0_21] : memref<15x8x4xf32, #tpu.memory_space<vmem>>, vector<1x8x4xf32>
    %25 = vector.shape_cast %24 : vector<1x8x4xf32> to vector<8x4xf32>
    %cst_22 = arith.constant dense<0.000000e+00> : vector<8x8xf32>
    %26 = tpu.matmul %25, %23, %cst_22 {dimension_numbers = #tpu.dot_dimension_numbers<[1], [0], [0], [1], [0, 0, 1, 1], [], []>} : vector<8x4xf32>, vector<4x8xf32>, vector<8x8xf32> -> vector<8x8xf32>
    %27 = arith.addf %22, %26 : vector<8x8xf32>
    %28 = vector.extract_strided_slice %6 {offsets = [0, 4], sizes = [4, 8], strides = [1, 1]} : vector<4x22xf32> to vector<4x8xf32>
    %c4 = arith.constant 4 : index
    %c0_23 = arith.constant 0 : index
    %c0_24 = arith.constant 0 : index
    %29 = vector.load %arg2[%c4, %c0_23, %c0_24] : memref<15x8x4xf32, #tpu.memory_space<vmem>>, vector<1x8x4xf32>
    %30 = vector.shape_cast %29 : vector<1x8x4xf32> to vector<8x4xf32>
    %cst_25 = arith.constant dense<0.000000e+00> : vector<8x8xf32>
    %31 = tpu.matmul %30, %28, %cst_25 {dimension_numbers = #tpu.dot_dimension_numbers<[1], [0], [0], [1], [0, 0, 1, 1], [], []>} : vector<8x4xf32>, vector<4x8xf32>, vector<8x8xf32> -> vector<8x8xf32>
    %32 = arith.addf %27, %31 : vector<8x8xf32>
    %33 = vector.extract_strided_slice %6 {offsets = [0, 5], sizes = [4, 8], strides = [1, 1]} : vector<4x22xf32> to vector<4x8xf32>
    %c5 = arith.constant 5 : index
    %c0_26 = arith.constant 0 : index
    %c0_27 = arith.constant 0 : index
    %34 = vector.load %arg2[%c5, %c0_26, %c0_27] : memref<15x8x4xf32, #tpu.memory_space<vmem>>, vector<1x8x4xf32>
    %35 = vector.shape_cast %34 : vector<1x8x4xf32> to vector<8x4xf32>
    %cst_28 = arith.constant dense<0.000000e+00> : vector<8x8xf32>
    %36 = tpu.matmul %35, %33, %cst_28 {dimension_numbers = #tpu.dot_dimension_numbers<[1], [0], [0], [1], [0, 0, 1, 1], [], []>} : vector<8x4xf32>, vector<4x8xf32>, vector<8x8xf32> -> vector<8x8xf32>
    %37 = arith.addf %32, %36 : vector<8x8xf32>
    %38 = vector.extract_strided_slice %6 {offsets = [0, 6], sizes = [4, 8], strides = [1, 1]} : vector<4x22xf32> to vector<4x8xf32>
    %c6 = arith.constant 6 : index
    %c0_29 = arith.constant 0 : index
    %c0_30 = arith.constant 0 : index
    %39 = vector.load %arg2[%c6, %c0_29, %c0_30] : memref<15x8x4xf32, #tpu.memory_space<vmem>>, vector<1x8x4xf32>
    %40 = vector.shape_cast %39 : vector<1x8x4xf32> to vector<8x4xf32>
    %cst_31 = arith.constant dense<0.000000e+00> : vector<8x8xf32>
    %41 = tpu.matmul %40, %38, %cst_31 {dimension_numbers = #tpu.dot_dimension_numbers<[1], [0], [0], [1], [0, 0, 1, 1], [], []>} : vector<8x4xf32>, vector<4x8xf32>, vector<8x8xf32> -> vector<8x8xf32>
    %42 = arith.addf %37, %41 : vector<8x8xf32>
    %43 = vector.extract_strided_slice %6 {offsets = [0, 7], sizes = [4, 8], strides = [1, 1]} : vector<4x22xf32> to vector<4x8xf32>
    %c7 = arith.constant 7 : index
    %c0_32 = arith.constant 0 : index
    %c0_33 = arith.constant 0 : index
    %44 = vector.load %arg2[%c7, %c0_32, %c0_33] : memref<15x8x4xf32, #tpu.memory_space<vmem>>, vector<1x8x4xf32>
    %45 = vector.shape_cast %44 : vector<1x8x4xf32> to vector<8x4xf32>
    %cst_34 = arith.constant dense<0.000000e+00> : vector<8x8xf32>
    %46 = tpu.matmul %45, %43, %cst_34 {dimension_numbers = #tpu.dot_dimension_numbers<[1], [0], [0], [1], [0, 0, 1, 1], [], []>} : vector<8x4xf32>, vector<4x8xf32>, vector<8x8xf32> -> vector<8x8xf32>
    %47 = arith.addf %42, %46 : vector<8x8xf32>
    %48 = vector.extract_strided_slice %6 {offsets = [0, 8], sizes = [4, 8], strides = [1, 1]} : vector<4x22xf32> to vector<4x8xf32>
    %c8 = arith.constant 8 : index
    %c0_35 = arith.constant 0 : index
    %c0_36 = arith.constant 0 : index
    %49 = vector.load %arg2[%c8, %c0_35, %c0_36] : memref<15x8x4xf32, #tpu.memory_space<vmem>>, vector<1x8x4xf32>
    %50 = vector.shape_cast %49 : vector<1x8x4xf32> to vector<8x4xf32>
    %cst_37 = arith.constant dense<0.000000e+00> : vector<8x8xf32>
    %51 = tpu.matmul %50, %48, %cst_37 {dimension_numbers = #tpu.dot_dimension_numbers<[1], [0], [0], [1], [0, 0, 1, 1], [], []>} : vector<8x4xf32>, vector<4x8xf32>, vector<8x8xf32> -> vector<8x8xf32>
    %52 = arith.addf %47, %51 : vector<8x8xf32>
    %53 = vector.extract_strided_slice %6 {offsets = [0, 9], sizes = [4, 8], strides = [1, 1]} : vector<4x22xf32> to vector<4x8xf32>
    %c9 = arith.constant 9 : index
    %c0_38 = arith.constant 0 : index
    %c0_39 = arith.constant 0 : index
    %54 = vector.load %arg2[%c9, %c0_38, %c0_39] : memref<15x8x4xf32, #tpu.memory_space<vmem>>, vector<1x8x4xf32>
    %55 = vector.shape_cast %54 : vector<1x8x4xf32> to vector<8x4xf32>
    %cst_40 = arith.constant dense<0.000000e+00> : vector<8x8xf32>
    %56 = tpu.matmul %55, %53, %cst_40 {dimension_numbers = #tpu.dot_dimension_numbers<[1], [0], [0], [1], [0, 0, 1, 1], [], []>} : vector<8x4xf32>, vector<4x8xf32>, vector<8x8xf32> -> vector<8x8xf32>
    %57 = arith.addf %52, %56 : vector<8x8xf32>
    %58 = vector.extract_strided_slice %6 {offsets = [0, 10], sizes = [4, 8], strides = [1, 1]} : vector<4x22xf32> to vector<4x8xf32>
    %c10 = arith.constant 10 : index
    %c0_41 = arith.constant 0 : index
    %c0_42 = arith.constant 0 : index
    %59 = vector.load %arg2[%c10, %c0_41, %c0_42] : memref<15x8x4xf32, #tpu.memory_space<vmem>>, vector<1x8x4xf32>
    %60 = vector.shape_cast %59 : vector<1x8x4xf32> to vector<8x4xf32>
    %cst_43 = arith.constant dense<0.000000e+00> : vector<8x8xf32>
    %61 = tpu.matmul %60, %58, %cst_43 {dimension_numbers = #tpu.dot_dimension_numbers<[1], [0], [0], [1], [0, 0, 1, 1], [], []>} : vector<8x4xf32>, vector<4x8xf32>, vector<8x8xf32> -> vector<8x8xf32>
    %62 = arith.addf %57, %61 : vector<8x8xf32>
    %63 = vector.extract_strided_slice %6 {offsets = [0, 11], sizes = [4, 8], strides = [1, 1]} : vector<4x22xf32> to vector<4x8xf32>
    %c11 = arith.constant 11 : index
    %c0_44 = arith.constant 0 : index
    %c0_45 = arith.constant 0 : index
    %64 = vector.load %arg2[%c11, %c0_44, %c0_45] : memref<15x8x4xf32, #tpu.memory_space<vmem>>, vector<1x8x4xf32>
    %65 = vector.shape_cast %64 : vector<1x8x4xf32> to vector<8x4xf32>
    %cst_46 = arith.constant dense<0.000000e+00> : vector<8x8xf32>
    %66 = tpu.matmul %65, %63, %cst_46 {dimension_numbers = #tpu.dot_dimension_numbers<[1], [0], [0], [1], [0, 0, 1, 1], [], []>} : vector<8x4xf32>, vector<4x8xf32>, vector<8x8xf32> -> vector<8x8xf32>
    %67 = arith.addf %62, %66 : vector<8x8xf32>
    %68 = vector.extract_strided_slice %6 {offsets = [0, 12], sizes = [4, 8], strides = [1, 1]} : vector<4x22xf32> to vector<4x8xf32>
    %c12 = arith.constant 12 : index
    %c0_47 = arith.constant 0 : index
    %c0_48 = arith.constant 0 : index
    %69 = vector.load %arg2[%c12, %c0_47, %c0_48] : memref<15x8x4xf32, #tpu.memory_space<vmem>>, vector<1x8x4xf32>
    %70 = vector.shape_cast %69 : vector<1x8x4xf32> to vector<8x4xf32>
    %cst_49 = arith.constant dense<0.000000e+00> : vector<8x8xf32>
    %71 = tpu.matmul %70, %68, %cst_49 {dimension_numbers = #tpu.dot_dimension_numbers<[1], [0], [0], [1], [0, 0, 1, 1], [], []>} : vector<8x4xf32>, vector<4x8xf32>, vector<8x8xf32> -> vector<8x8xf32>
    %72 = arith.addf %67, %71 : vector<8x8xf32>
    %73 = vector.extract_strided_slice %6 {offsets = [0, 13], sizes = [4, 8], strides = [1, 1]} : vector<4x22xf32> to vector<4x8xf32>
    %c13 = arith.constant 13 : index
    %c0_50 = arith.constant 0 : index
    %c0_51 = arith.constant 0 : index
    %74 = vector.load %arg2[%c13, %c0_50, %c0_51] : memref<15x8x4xf32, #tpu.memory_space<vmem>>, vector<1x8x4xf32>
    %75 = vector.shape_cast %74 : vector<1x8x4xf32> to vector<8x4xf32>
    %cst_52 = arith.constant dense<0.000000e+00> : vector<8x8xf32>
    %76 = tpu.matmul %75, %73, %cst_52 {dimension_numbers = #tpu.dot_dimension_numbers<[1], [0], [0], [1], [0, 0, 1, 1], [], []>} : vector<8x4xf32>, vector<4x8xf32>, vector<8x8xf32> -> vector<8x8xf32>
    %77 = arith.addf %72, %76 : vector<8x8xf32>
    %78 = vector.extract_strided_slice %6 {offsets = [0, 14], sizes = [4, 8], strides = [1, 1]} : vector<4x22xf32> to vector<4x8xf32>
    %c14 = arith.constant 14 : index
    %c0_53 = arith.constant 0 : index
    %c0_54 = arith.constant 0 : index
    %79 = vector.load %arg2[%c14, %c0_53, %c0_54] : memref<15x8x4xf32, #tpu.memory_space<vmem>>, vector<1x8x4xf32>
    %80 = vector.shape_cast %79 : vector<1x8x4xf32> to vector<8x4xf32>
    %cst_55 = arith.constant dense<0.000000e+00> : vector<8x8xf32>
    %81 = tpu.matmul %80, %78, %cst_55 {dimension_numbers = #tpu.dot_dimension_numbers<[1], [0], [0], [1], [0, 0, 1, 1], [], []>} : vector<8x4xf32>, vector<4x8xf32>, vector<8x8xf32> -> vector<8x8xf32>
    %82 = arith.addf %77, %81 : vector<8x8xf32>
    %c0_56 = arith.constant 0 : index
    %c0_57 = arith.constant 0 : index
    %83 = vector.load %arg6[%c0_56, %c0_57] : memref<8x1xf32, #tpu.memory_space<vmem>>, vector<8x1xf32>
    %84 = vector.broadcast %83 : vector<8x1xf32> to vector<8x8xf32>
    %85 = arith.mulf %82, %84 : vector<8x8xf32>
    %c0_58 = arith.constant 0 : index
    %c0_59 = arith.constant 0 : index
    %86 = vector.load %arg7[%c0_58, %c0_59] : memref<8x1xf32, #tpu.memory_space<vmem>>, vector<8x1xf32>
    %87 = vector.broadcast %86 : vector<8x1xf32> to vector<8x8xf32>
    %88 = arith.addf %85, %87 : vector<8x8xf32>
    %cst_60 = arith.constant 0.000000e+00 : f32
    %89 = vector.broadcast %cst_60 : f32 to vector<8x8xf32>
    %90 = arith.cmpf oge, %88, %89 : vector<8x8xf32>
    %cst_61 = arith.constant 1.000000e-01 : f32
    %91 = vector.broadcast %cst_61 : f32 to vector<8x8xf32>
    %92 = arith.mulf %91, %88 : vector<8x8xf32>
    %93 = arith.select %90, %88, %92 : vector<8x8xi1>, vector<8x8xf32>
    %c0_62 = arith.constant 0 : index
    %c0_63 = arith.constant 0 : index
    %c0_64 = arith.constant 0 : index
    %94 = vector.load %arg8[%c0_62, %c0_63, %c0_64] : memref<1x8x8xf32, #tpu.memory_space<vmem>>, vector<1x8x8xf32>
    %95 = vector.shape_cast %94 : vector<1x8x8xf32> to vector<8x8xf32>
    %96 = vector.shape_cast %93 : vector<8x8xf32> to vector<1x8x8xf32>
    tpu.vector_store %arg8[%c0_62, %c0_63, %c0_64], %96 {strides = array<i32>} : memref<1x8x8xf32, #tpu.memory_space<vmem>>, vector<1x8x8xf32>,
    return
  }
  func.func @transform_0(%arg0: i32, %arg1: i32) -> (i32, i32, i32) {
    %c0_i32 = arith.constant 0 : i32
    %c0_i32_0 = arith.constant 0 : i32
    %c0_i32_1 = arith.constant 0 : i32
    %c0_i32_2 = arith.constant 0 : i32
    return %c0_i32, %c0_i32_0, %c0_i32_1 : i32, i32, i32
  }
  func.func @transform_1(%arg0: i32, %arg1: i32) -> (i32, i32, i32) {
    %c0_i32 = arith.constant 0 : i32
    %c0_i32_0 = arith.constant 0 : i32
    return %arg0, %c0_i32, %arg1 : i32, i32, i32
  }
  func.func @transform_2(%arg0: i32, %arg1: i32) -> (i32, i32, i32, i32) {
    %c0_i32 = arith.constant 0 : i32
    %c0_i32_0 = arith.constant 0 : i32
    %c0_i32_1 = arith.constant 0 : i32
    return %arg0, %arg1, %c0_i32, %c0_i32_0 : i32, i32, i32, i32
  }
  func.func @transform_3(%arg0: i32, %arg1: i32) -> (i32, i32, i32, i32) {
    %c0_i32 = arith.constant 0 : i32
    %c0_i32_0 = arith.constant 0 : i32
    %c0_i32_1 = arith.constant 0 : i32
    return %arg0, %arg1, %c0_i32, %c0_i32_0 : i32, i32, i32, i32
  }
  func.func @transform_4(%arg0: i32, %arg1: i32) -> (i32, i32) {
    %c0_i32 = arith.constant 0 : i32
    %c0_i32_0 = arith.constant 0 : i32
    %c0_i32_1 = arith.constant 0 : i32
    return %c0_i32, %c0_i32_0 : i32, i32
  }
  func.func @transform_5(%arg0: i32, %arg1: i32) -> (i32, i32) {
    %c0_i32 = arith.constant 0 : i32
    %c0_i32_0 = arith.constant 0 : i32
    %c0_i32_1 = arith.constant 0 : i32
    return %c0_i32, %c0_i32_0 : i32, i32
  }
  func.func @transform_6(%arg0: i32, %arg1: i32) -> (i32, i32, i32) {
    %c0_i32 = arith.constant 0 : i32
    %c0_i32_0 = arith.constant 0 : i32
    return %arg0, %c0_i32, %arg1 : i32, i32, i32
  }
}

module attributes {stable_mosaic.version = 11 : i64} {
  func.func @_stats_kernel(%arg0: i32, %arg1: i32, %arg2: memref<15x8x4xf32, #tpu.memory_space<vmem>>, %arg3: memref<1x4x8xf32, #tpu.memory_space<vmem>>, %arg4: memref<1x1x4x7xf32, #tpu.memory_space<vmem>>, %arg5: memref<1x1x4x7xf32, #tpu.memory_space<vmem>>, %arg6: memref<8x1xf32, #tpu.memory_space<vmem>>, %arg7: memref<8x1xf32, #tpu.memory_space<vmem>>, %arg8: memref<8x1xf32, #tpu.memory_space<vmem>>, %arg9: memref<8x1xf32, #tpu.memory_space<vmem>>, %arg10: memref<8x1xf32, #tpu.memory_space<vmem>>, %arg11: memref<8x1xf32, #tpu.memory_space<vmem>>) attributes {dimension_semantics = [#tpu.dimension_semantics<arbitrary>, #tpu.dimension_semantics<arbitrary>], iteration_bounds = array<i64: 2, 1>, scalar_prefetch = 0 : i64, scratch_operands = 2 : i64, tpu.core_type = #tpu.core_type<tc>, window_params = [{pipeline_mode = #tpu.pipeline_mode<synchronous>, transform_indices = @transform_0, window_bounds = array<i64: 15, 8, 4>}, {transform_indices = @transform_1, window_bounds = array<i64: 1, 4, 8>}, {transform_indices = @transform_2, window_bounds = array<i64: 1, 1, 4, 7>}, {transform_indices = @transform_3, window_bounds = array<i64: 1, 1, 4, 7>}, {pipeline_mode = #tpu.pipeline_mode<synchronous>, transform_indices = @transform_4, window_bounds = array<i64: 8, 1>}, {pipeline_mode = #tpu.pipeline_mode<synchronous>, transform_indices = @transform_5, window_bounds = array<i64: 8, 1>}, {pipeline_mode = #tpu.pipeline_mode<synchronous>, transform_indices = @transform_6, window_bounds = array<i64: 8, 1>}, {pipeline_mode = #tpu.pipeline_mode<synchronous>, transform_indices = @transform_7, window_bounds = array<i64: 8, 1>}]} {
    %c0_i32 = arith.constant 0 : i32
    %0 = arith.cmpi eq, %arg0, %c0_i32 : i32
    %c0_i32_0 = arith.constant 0 : i32
    %1 = arith.cmpi eq, %arg1, %c0_i32_0 : i32
    %2 = arith.andi %0, %1 : i1
    %3 = arith.extui %2 : i1 to i32
    %c0_i32_1 = arith.constant 0 : i32
    %4 = arith.cmpi ne, %3, %c0_i32_1 : i32
    scf.if %4 {
      %cst_77 = arith.constant 0.000000e+00 : f32
      %124 = vector.broadcast %cst_77 : f32 to vector<8x1xf32>
      %c0_78 = arith.constant 0 : index
      %c0_79 = arith.constant 0 : index
      %125 = vector.load %arg10[%c0_78, %c0_79] : memref<8x1xf32, #tpu.memory_space<vmem>>, vector<8x1xf32>
      tpu.vector_store %arg10[%c0_78, %c0_79], %124 {strides = array<i32>} : memref<8x1xf32, #tpu.memory_space<vmem>>, vector<8x1xf32>,
      %cst_80 = arith.constant 0.000000e+00 : f32
      %126 = vector.broadcast %cst_80 : f32 to vector<8x1xf32>
      %c0_81 = arith.constant 0 : index
      %c0_82 = arith.constant 0 : index
      %127 = vector.load %arg11[%c0_81, %c0_82] : memref<8x1xf32, #tpu.memory_space<vmem>>, vector<8x1xf32>
      tpu.vector_store %arg11[%c0_81, %c0_82], %126 {strides = array<i32>} : memref<8x1xf32, #tpu.memory_space<vmem>>, vector<8x1xf32>,
    } else {
    }
    %c0 = arith.constant 0 : index
    %c0_2 = arith.constant 0 : index
    %c0_3 = arith.constant 0 : index
    %c0_4 = arith.constant 0 : index
    %5 = vector.load %arg4[%c0, %c0_2, %c0_3, %c0_4] : memref<1x1x4x7xf32, #tpu.memory_space<vmem>>, vector<1x1x4x7xf32>
    %6 = vector.shape_cast %5 : vector<1x1x4x7xf32> to vector<4x7xf32>
    %c0_5 = arith.constant 0 : index
    %c0_6 = arith.constant 0 : index
    %c0_7 = arith.constant 0 : index
    %7 = vector.load %arg3[%c0_5, %c0_6, %c0_7] : memref<1x4x8xf32, #tpu.memory_space<vmem>>, vector<1x4x8xf32>
    %8 = vector.shape_cast %7 : vector<1x4x8xf32> to vector<4x8xf32>
    %c0_8 = arith.constant 0 : index
    %c0_9 = arith.constant 0 : index
    %c0_10 = arith.constant 0 : index
    %c0_11 = arith.constant 0 : index
    %9 = vector.load %arg5[%c0_8, %c0_9, %c0_10, %c0_11] : memref<1x1x4x7xf32, #tpu.memory_space<vmem>>, vector<1x1x4x7xf32>
    %10 = vector.shape_cast %9 : vector<1x1x4x7xf32> to vector<4x7xf32>
    %11 = tpu.concatenate %6, %8, %10 in 1 : vector<4x7xf32>, vector<4x8xf32>, vector<4x7xf32> -> vector<4x22xf32>
    %cst = arith.constant 0.000000e+00 : f32
    %12 = vector.broadcast %cst : f32 to vector<8x8xf32>
    %13 = vector.extract_strided_slice %11 {offsets = [0, 0], sizes = [4, 8], strides = [1, 1]} : vector<4x22xf32> to vector<4x8xf32>
    %c0_12 = arith.constant 0 : index
    %c0_13 = arith.constant 0 : index
    %c0_14 = arith.constant 0 : index
    %14 = vector.load %arg2[%c0_12, %c0_13, %c0_14] : memref<15x8x4xf32, #tpu.memory_space<vmem>>, vector<1x8x4xf32>
    %15 = vector.shape_cast %14 : vector<1x8x4xf32> to vector<8x4xf32>
    %cst_15 = arith.constant dense<0.000000e+00> : vector<8x8xf32>
    %16 = tpu.matmul %15, %13, %cst_15 {dimension_numbers = #tpu.dot_dimension_numbers<[1], [0], [0], [1], [0, 0, 1, 1], [], []>} : vector<8x4xf32>, vector<4x8xf32>, vector<8x8xf32> -> vector<8x8xf32>
    %17 = arith.addf %12, %16 : vector<8x8xf32>
    %18 = vector.extract_strided_slice %11 {offsets = [0, 1], sizes = [4, 8], strides = [1, 1]} : vector<4x22xf32> to vector<4x8xf32>
    %c1 = arith.constant 1 : index
    %c0_16 = arith.constant 0 : index
    %c0_17 = arith.constant 0 : index
    %19 = vector.load %arg2[%c1, %c0_16, %c0_17] : memref<15x8x4xf32, #tpu.memory_space<vmem>>, vector<1x8x4xf32>
    %20 = vector.shape_cast %19 : vector<1x8x4xf32> to vector<8x4xf32>
    %cst_18 = arith.constant dense<0.000000e+00> : vector<8x8xf32>
    %21 = tpu.matmul %20, %18, %cst_18 {dimension_numbers = #tpu.dot_dimension_numbers<[1], [0], [0], [1], [0, 0, 1, 1], [], []>} : vector<8x4xf32>, vector<4x8xf32>, vector<8x8xf32> -> vector<8x8xf32>
    %22 = arith.addf %17, %21 : vector<8x8xf32>
    %23 = vector.extract_strided_slice %11 {offsets = [0, 2], sizes = [4, 8], strides = [1, 1]} : vector<4x22xf32> to vector<4x8xf32>
    %c2 = arith.constant 2 : index
    %c0_19 = arith.constant 0 : index
    %c0_20 = arith.constant 0 : index
    %24 = vector.load %arg2[%c2, %c0_19, %c0_20] : memref<15x8x4xf32, #tpu.memory_space<vmem>>, vector<1x8x4xf32>
    %25 = vector.shape_cast %24 : vector<1x8x4xf32> to vector<8x4xf32>
    %cst_21 = arith.constant dense<0.000000e+00> : vector<8x8xf32>
    %26 = tpu.matmul %25, %23, %cst_21 {dimension_numbers = #tpu.dot_dimension_numbers<[1], [0], [0], [1], [0, 0, 1, 1], [], []>} : vector<8x4xf32>, vector<4x8xf32>, vector<8x8xf32> -> vector<8x8xf32>
    %27 = arith.addf %22, %26 : vector<8x8xf32>
    %28 = vector.extract_strided_slice %11 {offsets = [0, 3], sizes = [4, 8], strides = [1, 1]} : vector<4x22xf32> to vector<4x8xf32>
    %c3 = arith.constant 3 : index
    %c0_22 = arith.constant 0 : index
    %c0_23 = arith.constant 0 : index
    %29 = vector.load %arg2[%c3, %c0_22, %c0_23] : memref<15x8x4xf32, #tpu.memory_space<vmem>>, vector<1x8x4xf32>
    %30 = vector.shape_cast %29 : vector<1x8x4xf32> to vector<8x4xf32>
    %cst_24 = arith.constant dense<0.000000e+00> : vector<8x8xf32>
    %31 = tpu.matmul %30, %28, %cst_24 {dimension_numbers = #tpu.dot_dimension_numbers<[1], [0], [0], [1], [0, 0, 1, 1], [], []>} : vector<8x4xf32>, vector<4x8xf32>, vector<8x8xf32> -> vector<8x8xf32>
    %32 = arith.addf %27, %31 : vector<8x8xf32>
    %33 = vector.extract_strided_slice %11 {offsets = [0, 4], sizes = [4, 8], strides = [1, 1]} : vector<4x22xf32> to vector<4x8xf32>
    %c4 = arith.constant 4 : index
    %c0_25 = arith.constant 0 : index
    %c0_26 = arith.constant 0 : index
    %34 = vector.load %arg2[%c4, %c0_25, %c0_26] : memref<15x8x4xf32, #tpu.memory_space<vmem>>, vector<1x8x4xf32>
    %35 = vector.shape_cast %34 : vector<1x8x4xf32> to vector<8x4xf32>
    %cst_27 = arith.constant dense<0.000000e+00> : vector<8x8xf32>
    %36 = tpu.matmul %35, %33, %cst_27 {dimension_numbers = #tpu.dot_dimension_numbers<[1], [0], [0], [1], [0, 0, 1, 1], [], []>} : vector<8x4xf32>, vector<4x8xf32>, vector<8x8xf32> -> vector<8x8xf32>
    %37 = arith.addf %32, %36 : vector<8x8xf32>
    %38 = vector.extract_strided_slice %11 {offsets = [0, 5], sizes = [4, 8], strides = [1, 1]} : vector<4x22xf32> to vector<4x8xf32>
    %c5 = arith.constant 5 : index
    %c0_28 = arith.constant 0 : index
    %c0_29 = arith.constant 0 : index
    %39 = vector.load %arg2[%c5, %c0_28, %c0_29] : memref<15x8x4xf32, #tpu.memory_space<vmem>>, vector<1x8x4xf32>
    %40 = vector.shape_cast %39 : vector<1x8x4xf32> to vector<8x4xf32>
    %cst_30 = arith.constant dense<0.000000e+00> : vector<8x8xf32>
    %41 = tpu.matmul %40, %38, %cst_30 {dimension_numbers = #tpu.dot_dimension_numbers<[1], [0], [0], [1], [0, 0, 1, 1], [], []>} : vector<8x4xf32>, vector<4x8xf32>, vector<8x8xf32> -> vector<8x8xf32>
    %42 = arith.addf %37, %41 : vector<8x8xf32>
    %43 = vector.extract_strided_slice %11 {offsets = [0, 6], sizes = [4, 8], strides = [1, 1]} : vector<4x22xf32> to vector<4x8xf32>
    %c6 = arith.constant 6 : index
    %c0_31 = arith.constant 0 : index
    %c0_32 = arith.constant 0 : index
    %44 = vector.load %arg2[%c6, %c0_31, %c0_32] : memref<15x8x4xf32, #tpu.memory_space<vmem>>, vector<1x8x4xf32>
    %45 = vector.shape_cast %44 : vector<1x8x4xf32> to vector<8x4xf32>
    %cst_33 = arith.constant dense<0.000000e+00> : vector<8x8xf32>
    %46 = tpu.matmul %45, %43, %cst_33 {dimension_numbers = #tpu.dot_dimension_numbers<[1], [0], [0], [1], [0, 0, 1, 1], [], []>} : vector<8x4xf32>, vector<4x8xf32>, vector<8x8xf32> -> vector<8x8xf32>
    %47 = arith.addf %42, %46 : vector<8x8xf32>
    %48 = vector.extract_strided_slice %11 {offsets = [0, 7], sizes = [4, 8], strides = [1, 1]} : vector<4x22xf32> to vector<4x8xf32>
    %c7 = arith.constant 7 : index
    %c0_34 = arith.constant 0 : index
    %c0_35 = arith.constant 0 : index
    %49 = vector.load %arg2[%c7, %c0_34, %c0_35] : memref<15x8x4xf32, #tpu.memory_space<vmem>>, vector<1x8x4xf32>
    %50 = vector.shape_cast %49 : vector<1x8x4xf32> to vector<8x4xf32>
    %cst_36 = arith.constant dense<0.000000e+00> : vector<8x8xf32>
    %51 = tpu.matmul %50, %48, %cst_36 {dimension_numbers = #tpu.dot_dimension_numbers<[1], [0], [0], [1], [0, 0, 1, 1], [], []>} : vector<8x4xf32>, vector<4x8xf32>, vector<8x8xf32> -> vector<8x8xf32>
    %52 = arith.addf %47, %51 : vector<8x8xf32>
    %53 = vector.extract_strided_slice %11 {offsets = [0, 8], sizes = [4, 8], strides = [1, 1]} : vector<4x22xf32> to vector<4x8xf32>
    %c8 = arith.constant 8 : index
    %c0_37 = arith.constant 0 : index
    %c0_38 = arith.constant 0 : index
    %54 = vector.load %arg2[%c8, %c0_37, %c0_38] : memref<15x8x4xf32, #tpu.memory_space<vmem>>, vector<1x8x4xf32>
    %55 = vector.shape_cast %54 : vector<1x8x4xf32> to vector<8x4xf32>
    %cst_39 = arith.constant dense<0.000000e+00> : vector<8x8xf32>
    %56 = tpu.matmul %55, %53, %cst_39 {dimension_numbers = #tpu.dot_dimension_numbers<[1], [0], [0], [1], [0, 0, 1, 1], [], []>} : vector<8x4xf32>, vector<4x8xf32>, vector<8x8xf32> -> vector<8x8xf32>
    %57 = arith.addf %52, %56 : vector<8x8xf32>
    %58 = vector.extract_strided_slice %11 {offsets = [0, 9], sizes = [4, 8], strides = [1, 1]} : vector<4x22xf32> to vector<4x8xf32>
    %c9 = arith.constant 9 : index
    %c0_40 = arith.constant 0 : index
    %c0_41 = arith.constant 0 : index
    %59 = vector.load %arg2[%c9, %c0_40, %c0_41] : memref<15x8x4xf32, #tpu.memory_space<vmem>>, vector<1x8x4xf32>
    %60 = vector.shape_cast %59 : vector<1x8x4xf32> to vector<8x4xf32>
    %cst_42 = arith.constant dense<0.000000e+00> : vector<8x8xf32>
    %61 = tpu.matmul %60, %58, %cst_42 {dimension_numbers = #tpu.dot_dimension_numbers<[1], [0], [0], [1], [0, 0, 1, 1], [], []>} : vector<8x4xf32>, vector<4x8xf32>, vector<8x8xf32> -> vector<8x8xf32>
    %62 = arith.addf %57, %61 : vector<8x8xf32>
    %63 = vector.extract_strided_slice %11 {offsets = [0, 10], sizes = [4, 8], strides = [1, 1]} : vector<4x22xf32> to vector<4x8xf32>
    %c10 = arith.constant 10 : index
    %c0_43 = arith.constant 0 : index
    %c0_44 = arith.constant 0 : index
    %64 = vector.load %arg2[%c10, %c0_43, %c0_44] : memref<15x8x4xf32, #tpu.memory_space<vmem>>, vector<1x8x4xf32>
    %65 = vector.shape_cast %64 : vector<1x8x4xf32> to vector<8x4xf32>
    %cst_45 = arith.constant dense<0.000000e+00> : vector<8x8xf32>
    %66 = tpu.matmul %65, %63, %cst_45 {dimension_numbers = #tpu.dot_dimension_numbers<[1], [0], [0], [1], [0, 0, 1, 1], [], []>} : vector<8x4xf32>, vector<4x8xf32>, vector<8x8xf32> -> vector<8x8xf32>
    %67 = arith.addf %62, %66 : vector<8x8xf32>
    %68 = vector.extract_strided_slice %11 {offsets = [0, 11], sizes = [4, 8], strides = [1, 1]} : vector<4x22xf32> to vector<4x8xf32>
    %c11 = arith.constant 11 : index
    %c0_46 = arith.constant 0 : index
    %c0_47 = arith.constant 0 : index
    %69 = vector.load %arg2[%c11, %c0_46, %c0_47] : memref<15x8x4xf32, #tpu.memory_space<vmem>>, vector<1x8x4xf32>
    %70 = vector.shape_cast %69 : vector<1x8x4xf32> to vector<8x4xf32>
    %cst_48 = arith.constant dense<0.000000e+00> : vector<8x8xf32>
    %71 = tpu.matmul %70, %68, %cst_48 {dimension_numbers = #tpu.dot_dimension_numbers<[1], [0], [0], [1], [0, 0, 1, 1], [], []>} : vector<8x4xf32>, vector<4x8xf32>, vector<8x8xf32> -> vector<8x8xf32>
    %72 = arith.addf %67, %71 : vector<8x8xf32>
    %73 = vector.extract_strided_slice %11 {offsets = [0, 12], sizes = [4, 8], strides = [1, 1]} : vector<4x22xf32> to vector<4x8xf32>
    %c12 = arith.constant 12 : index
    %c0_49 = arith.constant 0 : index
    %c0_50 = arith.constant 0 : index
    %74 = vector.load %arg2[%c12, %c0_49, %c0_50] : memref<15x8x4xf32, #tpu.memory_space<vmem>>, vector<1x8x4xf32>
    %75 = vector.shape_cast %74 : vector<1x8x4xf32> to vector<8x4xf32>
    %cst_51 = arith.constant dense<0.000000e+00> : vector<8x8xf32>
    %76 = tpu.matmul %75, %73, %cst_51 {dimension_numbers = #tpu.dot_dimension_numbers<[1], [0], [0], [1], [0, 0, 1, 1], [], []>} : vector<8x4xf32>, vector<4x8xf32>, vector<8x8xf32> -> vector<8x8xf32>
    %77 = arith.addf %72, %76 : vector<8x8xf32>
    %78 = vector.extract_strided_slice %11 {offsets = [0, 13], sizes = [4, 8], strides = [1, 1]} : vector<4x22xf32> to vector<4x8xf32>
    %c13 = arith.constant 13 : index
    %c0_52 = arith.constant 0 : index
    %c0_53 = arith.constant 0 : index
    %79 = vector.load %arg2[%c13, %c0_52, %c0_53] : memref<15x8x4xf32, #tpu.memory_space<vmem>>, vector<1x8x4xf32>
    %80 = vector.shape_cast %79 : vector<1x8x4xf32> to vector<8x4xf32>
    %cst_54 = arith.constant dense<0.000000e+00> : vector<8x8xf32>
    %81 = tpu.matmul %80, %78, %cst_54 {dimension_numbers = #tpu.dot_dimension_numbers<[1], [0], [0], [1], [0, 0, 1, 1], [], []>} : vector<8x4xf32>, vector<4x8xf32>, vector<8x8xf32> -> vector<8x8xf32>
    %82 = arith.addf %77, %81 : vector<8x8xf32>
    %83 = vector.extract_strided_slice %11 {offsets = [0, 14], sizes = [4, 8], strides = [1, 1]} : vector<4x22xf32> to vector<4x8xf32>
    %c14 = arith.constant 14 : index
    %c0_55 = arith.constant 0 : index
    %c0_56 = arith.constant 0 : index
    %84 = vector.load %arg2[%c14, %c0_55, %c0_56] : memref<15x8x4xf32, #tpu.memory_space<vmem>>, vector<1x8x4xf32>
    %85 = vector.shape_cast %84 : vector<1x8x4xf32> to vector<8x4xf32>
    %cst_57 = arith.constant dense<0.000000e+00> : vector<8x8xf32>
    %86 = tpu.matmul %85, %83, %cst_57 {dimension_numbers = #tpu.dot_dimension_numbers<[1], [0], [0], [1], [0, 0, 1, 1], [], []>} : vector<8x4xf32>, vector<4x8xf32>, vector<8x8xf32> -> vector<8x8xf32>
    %87 = arith.addf %82, %86 : vector<8x8xf32>
    %cst_58 = arith.constant dense<0.000000e+00> : vector<8xf32>
    %88 = vector.multi_reduction <add>, %87, %cst_58 [1] : vector<8x8xf32> to vector<8xf32>
    %89 = vector.shape_cast %88 : vector<8xf32> to vector<8x1xf32>
    %cst_59 = arith.constant 1.250000e-01 : f32
    %90 = vector.broadcast %cst_59 : f32 to vector<8x1xf32>
    %91 = arith.mulf %89, %90 : vector<8x1xf32>
    %92 = vector.broadcast %91 : vector<8x1xf32> to vector<8x8xf32>
    %93 = arith.subf %87, %92 : vector<8x8xf32>
    %94 = arith.mulf %93, %93 : vector<8x8xf32>
    %cst_60 = arith.constant dense<0.000000e+00> : vector<8xf32>
    %95 = vector.multi_reduction <add>, %94, %cst_60 [1] : vector<8x8xf32> to vector<8xf32>
    %96 = vector.shape_cast %95 : vector<8xf32> to vector<8x1xf32>
    %c1_i32 = arith.constant 1 : i32
    %97 = arith.muli %arg0, %c1_i32 : i32
    %98 = arith.addi %97, %arg1 : i32
    %c8_i32 = arith.constant 8 : i32
    %99 = arith.muli %98, %c8_i32 : i32
    %100 = arith.sitofp %99 : i32 to f32
    %cst_61 = arith.constant 8.000000e+00 : f32
    %101 = arith.addf %100, %cst_61 : f32
    %c0_62 = arith.constant 0 : index
    %c0_63 = arith.constant 0 : index
    %102 = vector.load %arg10[%c0_62, %c0_63] : memref<8x1xf32, #tpu.memory_space<vmem>>, vector<8x1xf32>
    %103 = arith.subf %91, %102 : vector<8x1xf32>
    %c0_64 = arith.constant 0 : index
    %c0_65 = arith.constant 0 : index
    %104 = vector.load %arg10[%c0_64, %c0_65] : memref<8x1xf32, #tpu.memory_space<vmem>>, vector<8x1xf32>
    %cst_66 = arith.constant 8.000000e+00 : f32
    %105 = arith.divf %cst_66, %101 : f32
    %106 = vector.broadcast %105 : f32 to vector<8x1xf32>
    %107 = arith.mulf %103, %106 : vector<8x1xf32>
    %108 = arith.addf %104, %107 : vector<8x1xf32>
    %c0_67 = arith.constant 0 : index
    %c0_68 = arith.constant 0 : index
    %109 = vector.load %arg10[%c0_67, %c0_68] : memref<8x1xf32, #tpu.memory_space<vmem>>, vector<8x1xf32>
    tpu.vector_store %arg10[%c0_67, %c0_68], %108 {strides = array<i32>} : memref<8x1xf32, #tpu.memory_space<vmem>>, vector<8x1xf32>,
    %c0_69 = arith.constant 0 : index
    %c0_70 = arith.constant 0 : index
    %110 = vector.load %arg11[%c0_69, %c0_70] : memref<8x1xf32, #tpu.memory_space<vmem>>, vector<8x1xf32>
    %111 = arith.addf %110, %96 : vector<8x1xf32>
    %112 = arith.mulf %103, %103 : vector<8x1xf32>
    %cst_71 = arith.constant 8.000000e+00 : f32
    %113 = arith.mulf %100, %cst_71 : f32
    %114 = arith.divf %113, %101 : f32
    %115 = vector.broadcast %114 : f32 to vector<8x1xf32>
    %116 = arith.mulf %112, %115 : vector<8x1xf32>
    %117 = arith.addf %111, %116 : vector<8x1xf32>
    %c0_72 = arith.constant 0 : index
    %c0_73 = arith.constant 0 : index
    %118 = vector.load %arg11[%c0_72, %c0_73] : memref<8x1xf32, #tpu.memory_space<vmem>>, vector<8x1xf32>
    tpu.vector_store %arg11[%c0_72, %c0_73], %117 {strides = array<i32>} : memref<8x1xf32, #tpu.memory_space<vmem>>, vector<8x1xf32>,
    %c1_i32_74 = arith.constant 1 : i32
    %119 = arith.cmpi eq, %arg0, %c1_i32_74 : i32
    %c0_i32_75 = arith.constant 0 : i32
    %120 = arith.cmpi eq, %arg1, %c0_i32_75 : i32
    %121 = arith.andi %119, %120 : i1
    %122 = arith.extui %121 : i1 to i32
    %c0_i32_76 = arith.constant 0 : i32
    %123 = arith.cmpi ne, %122, %c0_i32_76 : i32
    scf.if %123 {
      %c0_77 = arith.constant 0 : index
      %c0_78 = arith.constant 0 : index
      %124 = vector.load %arg10[%c0_77, %c0_78] : memref<8x1xf32, #tpu.memory_space<vmem>>, vector<8x1xf32>
      %c0_79 = arith.constant 0 : index
      %c0_80 = arith.constant 0 : index
      %125 = vector.load %arg11[%c0_79, %c0_80] : memref<8x1xf32, #tpu.memory_space<vmem>>, vector<8x1xf32>
      %cst_81 = arith.constant 6.250000e-02 : f32
      %126 = vector.broadcast %cst_81 : f32 to vector<8x1xf32>
      %127 = arith.mulf %125, %126 : vector<8x1xf32>
      %cst_82 = arith.constant 9.99999974E-6 : f32
      %128 = vector.broadcast %cst_82 : f32 to vector<8x1xf32>
      %129 = arith.addf %127, %128 : vector<8x1xf32>
      %130 = math.rsqrt %129 : vector<8x1xf32>
      %c0_83 = arith.constant 0 : index
      %c0_84 = arith.constant 0 : index
      %131 = vector.load %arg6[%c0_83, %c0_84] : memref<8x1xf32, #tpu.memory_space<vmem>>, vector<8x1xf32>
      %132 = arith.mulf %131, %130 : vector<8x1xf32>
      %c0_85 = arith.constant 0 : index
      %c0_86 = arith.constant 0 : index
      %133 = vector.load %arg8[%c0_85, %c0_86] : memref<8x1xf32, #tpu.memory_space<vmem>>, vector<8x1xf32>
      tpu.vector_store %arg8[%c0_85, %c0_86], %132 {strides = array<i32>} : memref<8x1xf32, #tpu.memory_space<vmem>>, vector<8x1xf32>,
      %c0_87 = arith.constant 0 : index
      %c0_88 = arith.constant 0 : index
      %134 = vector.load %arg7[%c0_87, %c0_88] : memref<8x1xf32, #tpu.memory_space<vmem>>, vector<8x1xf32>
      %135 = arith.mulf %124, %132 : vector<8x1xf32>
      %136 = arith.subf %134, %135 : vector<8x1xf32>
      %c0_89 = arith.constant 0 : index
      %c0_90 = arith.constant 0 : index
      %137 = vector.load %arg9[%c0_89, %c0_90] : memref<8x1xf32, #tpu.memory_space<vmem>>, vector<8x1xf32>
      tpu.vector_store %arg9[%c0_89, %c0_90], %136 {strides = array<i32>} : memref<8x1xf32, #tpu.memory_space<vmem>>, vector<8x1xf32>,
    } else {
    }
    return
  }
  func.func @transform_0(%arg0: i32, %arg1: i32) -> (i32, i32, i32) {
    %c0_i32 = arith.constant 0 : i32
    %c0_i32_0 = arith.constant 0 : i32
    %c0_i32_1 = arith.constant 0 : i32
    %c0_i32_2 = arith.constant 0 : i32
    return %c0_i32, %c0_i32_0, %c0_i32_1 : i32, i32, i32
  }
  func.func @transform_1(%arg0: i32, %arg1: i32) -> (i32, i32, i32) {
    %c0_i32 = arith.constant 0 : i32
    %c0_i32_0 = arith.constant 0 : i32
    return %arg0, %c0_i32, %arg1 : i32, i32, i32
  }
  func.func @transform_2(%arg0: i32, %arg1: i32) -> (i32, i32, i32, i32) {
    %c0_i32 = arith.constant 0 : i32
    %c0_i32_0 = arith.constant 0 : i32
    %c0_i32_1 = arith.constant 0 : i32
    return %arg0, %arg1, %c0_i32, %c0_i32_0 : i32, i32, i32, i32
  }
  func.func @transform_3(%arg0: i32, %arg1: i32) -> (i32, i32, i32, i32) {
    %c0_i32 = arith.constant 0 : i32
    %c0_i32_0 = arith.constant 0 : i32
    %c0_i32_1 = arith.constant 0 : i32
    return %arg0, %arg1, %c0_i32, %c0_i32_0 : i32, i32, i32, i32
  }
  func.func @transform_4(%arg0: i32, %arg1: i32) -> (i32, i32) {
    %c0_i32 = arith.constant 0 : i32
    %c0_i32_0 = arith.constant 0 : i32
    %c0_i32_1 = arith.constant 0 : i32
    return %c0_i32, %c0_i32_0 : i32, i32
  }
  func.func @transform_5(%arg0: i32, %arg1: i32) -> (i32, i32) {
    %c0_i32 = arith.constant 0 : i32
    %c0_i32_0 = arith.constant 0 : i32
    %c0_i32_1 = arith.constant 0 : i32
    return %c0_i32, %c0_i32_0 : i32, i32
  }
  func.func @transform_6(%arg0: i32, %arg1: i32) -> (i32, i32) {
    %c0_i32 = arith.constant 0 : i32
    %c0_i32_0 = arith.constant 0 : i32
    %c0_i32_1 = arith.constant 0 : i32
    return %c0_i32, %c0_i32_0 : i32, i32
  }
  func.func @transform_7(%arg0: i32, %arg1: i32) -> (i32, i32) {
    %c0_i32 = arith.constant 0 : i32
    %c0_i32_0 = arith.constant 0 : i32
    %c0_i32_1 = arith.constant 0 : i32
    return %c0_i32, %c0_i32_0 : i32, i32
  }
}

module attributes {stable_mosaic.version = 11 : i64} {
  func.func @_stats_kernel(%arg0: i32, %arg1: i32, %arg2: memref<5x8x16xf32, #tpu.memory_space<vmem>>, %arg3: memref<1x16x8xf32, #tpu.memory_space<vmem>>, %arg4: memref<1x1x16x2xf32, #tpu.memory_space<vmem>>, %arg5: memref<1x1x16x2xf32, #tpu.memory_space<vmem>>, %arg6: memref<8x1xf32, #tpu.memory_space<vmem>>, %arg7: memref<8x1xf32, #tpu.memory_space<vmem>>, %arg8: memref<8x1xf32, #tpu.memory_space<vmem>>, %arg9: memref<8x1xf32, #tpu.memory_space<vmem>>, %arg10: memref<8x1xf32, #tpu.memory_space<vmem>>, %arg11: memref<8x1xf32, #tpu.memory_space<vmem>>) attributes {dimension_semantics = [#tpu.dimension_semantics<arbitrary>, #tpu.dimension_semantics<arbitrary>], iteration_bounds = array<i64: 2, 1>, scalar_prefetch = 0 : i64, scratch_operands = 2 : i64, tpu.core_type = #tpu.core_type<tc>, window_params = [{pipeline_mode = #tpu.pipeline_mode<synchronous>, transform_indices = @transform_0, window_bounds = array<i64: 5, 8, 16>}, {transform_indices = @transform_1, window_bounds = array<i64: 1, 16, 8>}, {transform_indices = @transform_2, window_bounds = array<i64: 1, 1, 16, 2>}, {transform_indices = @transform_3, window_bounds = array<i64: 1, 1, 16, 2>}, {pipeline_mode = #tpu.pipeline_mode<synchronous>, transform_indices = @transform_4, window_bounds = array<i64: 8, 1>}, {pipeline_mode = #tpu.pipeline_mode<synchronous>, transform_indices = @transform_5, window_bounds = array<i64: 8, 1>}, {pipeline_mode = #tpu.pipeline_mode<synchronous>, transform_indices = @transform_6, window_bounds = array<i64: 8, 1>}, {pipeline_mode = #tpu.pipeline_mode<synchronous>, transform_indices = @transform_7, window_bounds = array<i64: 8, 1>}]} {
    %c0_i32 = arith.constant 0 : i32
    %0 = arith.cmpi eq, %arg0, %c0_i32 : i32
    %c0_i32_0 = arith.constant 0 : i32
    %1 = arith.cmpi eq, %arg1, %c0_i32_0 : i32
    %2 = arith.andi %0, %1 : i1
    %3 = arith.extui %2 : i1 to i32
    %c0_i32_1 = arith.constant 0 : i32
    %4 = arith.cmpi ne, %3, %c0_i32_1 : i32
    scf.if %4 {
      %cst_47 = arith.constant 0.000000e+00 : f32
      %74 = vector.broadcast %cst_47 : f32 to vector<8x1xf32>
      %c0_48 = arith.constant 0 : index
      %c0_49 = arith.constant 0 : index
      %75 = vector.load %arg10[%c0_48, %c0_49] : memref<8x1xf32, #tpu.memory_space<vmem>>, vector<8x1xf32>
      tpu.vector_store %arg10[%c0_48, %c0_49], %74 {strides = array<i32>} : memref<8x1xf32, #tpu.memory_space<vmem>>, vector<8x1xf32>,
      %cst_50 = arith.constant 0.000000e+00 : f32
      %76 = vector.broadcast %cst_50 : f32 to vector<8x1xf32>
      %c0_51 = arith.constant 0 : index
      %c0_52 = arith.constant 0 : index
      %77 = vector.load %arg11[%c0_51, %c0_52] : memref<8x1xf32, #tpu.memory_space<vmem>>, vector<8x1xf32>
      tpu.vector_store %arg11[%c0_51, %c0_52], %76 {strides = array<i32>} : memref<8x1xf32, #tpu.memory_space<vmem>>, vector<8x1xf32>,
    } else {
    }
    %c0 = arith.constant 0 : index
    %c0_2 = arith.constant 0 : index
    %c0_3 = arith.constant 0 : index
    %c0_4 = arith.constant 0 : index
    %5 = vector.load %arg4[%c0, %c0_2, %c0_3, %c0_4] : memref<1x1x16x2xf32, #tpu.memory_space<vmem>>, vector<1x1x16x2xf32>
    %6 = vector.shape_cast %5 : vector<1x1x16x2xf32> to vector<16x2xf32>
    %c0_5 = arith.constant 0 : index
    %c0_6 = arith.constant 0 : index
    %c0_7 = arith.constant 0 : index
    %7 = vector.load %arg3[%c0_5, %c0_6, %c0_7] : memref<1x16x8xf32, #tpu.memory_space<vmem>>, vector<1x16x8xf32>
    %8 = vector.shape_cast %7 : vector<1x16x8xf32> to vector<16x8xf32>
    %c0_8 = arith.constant 0 : index
    %c0_9 = arith.constant 0 : index
    %c0_10 = arith.constant 0 : index
    %c0_11 = arith.constant 0 : index
    %9 = vector.load %arg5[%c0_8, %c0_9, %c0_10, %c0_11] : memref<1x1x16x2xf32, #tpu.memory_space<vmem>>, vector<1x1x16x2xf32>
    %10 = vector.shape_cast %9 : vector<1x1x16x2xf32> to vector<16x2xf32>
    %11 = tpu.concatenate %6, %8, %10 in 1 : vector<16x2xf32>, vector<16x8xf32>, vector<16x2xf32> -> vector<16x12xf32>
    %cst = arith.constant 0.000000e+00 : f32
    %12 = vector.broadcast %cst : f32 to vector<8x8xf32>
    %13 = vector.extract_strided_slice %11 {offsets = [0, 0], sizes = [16, 8], strides = [1, 1]} : vector<16x12xf32> to vector<16x8xf32>
    %c0_12 = arith.constant 0 : index
    %c0_13 = arith.constant 0 : index
    %c0_14 = arith.constant 0 : index
    %14 = vector.load %arg2[%c0_12, %c0_13, %c0_14] : memref<5x8x16xf32, #tpu.memory_space<vmem>>, vector<1x8x16xf32>
    %15 = vector.shape_cast %14 : vector<1x8x16xf32> to vector<8x16xf32>
    %cst_15 = arith.constant dense<0.000000e+00> : vector<8x8xf32>
    %16 = tpu.matmul %15, %13, %cst_15 {dimension_numbers = #tpu.dot_dimension_numbers<[1], [0], [0], [1], [0, 0, 1, 1], [], []>} : vector<8x16xf32>, vector<16x8xf32>, vector<8x8xf32> -> vector<8x8xf32>
    %17 = arith.addf %12, %16 : vector<8x8xf32>
    %18 = vector.extract_strided_slice %11 {offsets = [0, 1], sizes = [16, 8], strides = [1, 1]} : vector<16x12xf32> to vector<16x8xf32>
    %c1 = arith.constant 1 : index
    %c0_16 = arith.constant 0 : index
    %c0_17 = arith.constant 0 : index
    %19 = vector.load %arg2[%c1, %c0_16, %c0_17] : memref<5x8x16xf32, #tpu.memory_space<vmem>>, vector<1x8x16xf32>
    %20 = vector.shape_cast %19 : vector<1x8x16xf32> to vector<8x16xf32>
    %cst_18 = arith.constant dense<0.000000e+00> : vector<8x8xf32>
    %21 = tpu.matmul %20, %18, %cst_18 {dimension_numbers = #tpu.dot_dimension_numbers<[1], [0], [0], [1], [0, 0, 1, 1], [], []>} : vector<8x16xf32>, vector<16x8xf32>, vector<8x8xf32> -> vector<8x8xf32>
    %22 = arith.addf %17, %21 : vector<8x8xf32>
    %23 = vector.extract_strided_slice %11 {offsets = [0, 2], sizes = [16, 8], strides = [1, 1]} : vector<16x12xf32> to vector<16x8xf32>
    %c2 = arith.constant 2 : index
    %c0_19 = arith.constant 0 : index
    %c0_20 = arith.constant 0 : index
    %24 = vector.load %arg2[%c2, %c0_19, %c0_20] : memref<5x8x16xf32, #tpu.memory_space<vmem>>, vector<1x8x16xf32>
    %25 = vector.shape_cast %24 : vector<1x8x16xf32> to vector<8x16xf32>
    %cst_21 = arith.constant dense<0.000000e+00> : vector<8x8xf32>
    %26 = tpu.matmul %25, %23, %cst_21 {dimension_numbers = #tpu.dot_dimension_numbers<[1], [0], [0], [1], [0, 0, 1, 1], [], []>} : vector<8x16xf32>, vector<16x8xf32>, vector<8x8xf32> -> vector<8x8xf32>
    %27 = arith.addf %22, %26 : vector<8x8xf32>
    %28 = vector.extract_strided_slice %11 {offsets = [0, 3], sizes = [16, 8], strides = [1, 1]} : vector<16x12xf32> to vector<16x8xf32>
    %c3 = arith.constant 3 : index
    %c0_22 = arith.constant 0 : index
    %c0_23 = arith.constant 0 : index
    %29 = vector.load %arg2[%c3, %c0_22, %c0_23] : memref<5x8x16xf32, #tpu.memory_space<vmem>>, vector<1x8x16xf32>
    %30 = vector.shape_cast %29 : vector<1x8x16xf32> to vector<8x16xf32>
    %cst_24 = arith.constant dense<0.000000e+00> : vector<8x8xf32>
    %31 = tpu.matmul %30, %28, %cst_24 {dimension_numbers = #tpu.dot_dimension_numbers<[1], [0], [0], [1], [0, 0, 1, 1], [], []>} : vector<8x16xf32>, vector<16x8xf32>, vector<8x8xf32> -> vector<8x8xf32>
    %32 = arith.addf %27, %31 : vector<8x8xf32>
    %33 = vector.extract_strided_slice %11 {offsets = [0, 4], sizes = [16, 8], strides = [1, 1]} : vector<16x12xf32> to vector<16x8xf32>
    %c4 = arith.constant 4 : index
    %c0_25 = arith.constant 0 : index
    %c0_26 = arith.constant 0 : index
    %34 = vector.load %arg2[%c4, %c0_25, %c0_26] : memref<5x8x16xf32, #tpu.memory_space<vmem>>, vector<1x8x16xf32>
    %35 = vector.shape_cast %34 : vector<1x8x16xf32> to vector<8x16xf32>
    %cst_27 = arith.constant dense<0.000000e+00> : vector<8x8xf32>
    %36 = tpu.matmul %35, %33, %cst_27 {dimension_numbers = #tpu.dot_dimension_numbers<[1], [0], [0], [1], [0, 0, 1, 1], [], []>} : vector<8x16xf32>, vector<16x8xf32>, vector<8x8xf32> -> vector<8x8xf32>
    %37 = arith.addf %32, %36 : vector<8x8xf32>
    %cst_28 = arith.constant dense<0.000000e+00> : vector<8xf32>
    %38 = vector.multi_reduction <add>, %37, %cst_28 [1] : vector<8x8xf32> to vector<8xf32>
    %39 = vector.shape_cast %38 : vector<8xf32> to vector<8x1xf32>
    %cst_29 = arith.constant 1.250000e-01 : f32
    %40 = vector.broadcast %cst_29 : f32 to vector<8x1xf32>
    %41 = arith.mulf %39, %40 : vector<8x1xf32>
    %42 = vector.broadcast %41 : vector<8x1xf32> to vector<8x8xf32>
    %43 = arith.subf %37, %42 : vector<8x8xf32>
    %44 = arith.mulf %43, %43 : vector<8x8xf32>
    %cst_30 = arith.constant dense<0.000000e+00> : vector<8xf32>
    %45 = vector.multi_reduction <add>, %44, %cst_30 [1] : vector<8x8xf32> to vector<8xf32>
    %46 = vector.shape_cast %45 : vector<8xf32> to vector<8x1xf32>
    %c1_i32 = arith.constant 1 : i32
    %47 = arith.muli %arg0, %c1_i32 : i32
    %48 = arith.addi %47, %arg1 : i32
    %c8_i32 = arith.constant 8 : i32
    %49 = arith.muli %48, %c8_i32 : i32
    %50 = arith.sitofp %49 : i32 to f32
    %cst_31 = arith.constant 8.000000e+00 : f32
    %51 = arith.addf %50, %cst_31 : f32
    %c0_32 = arith.constant 0 : index
    %c0_33 = arith.constant 0 : index
    %52 = vector.load %arg10[%c0_32, %c0_33] : memref<8x1xf32, #tpu.memory_space<vmem>>, vector<8x1xf32>
    %53 = arith.subf %41, %52 : vector<8x1xf32>
    %c0_34 = arith.constant 0 : index
    %c0_35 = arith.constant 0 : index
    %54 = vector.load %arg10[%c0_34, %c0_35] : memref<8x1xf32, #tpu.memory_space<vmem>>, vector<8x1xf32>
    %cst_36 = arith.constant 8.000000e+00 : f32
    %55 = arith.divf %cst_36, %51 : f32
    %56 = vector.broadcast %55 : f32 to vector<8x1xf32>
    %57 = arith.mulf %53, %56 : vector<8x1xf32>
    %58 = arith.addf %54, %57 : vector<8x1xf32>
    %c0_37 = arith.constant 0 : index
    %c0_38 = arith.constant 0 : index
    %59 = vector.load %arg10[%c0_37, %c0_38] : memref<8x1xf32, #tpu.memory_space<vmem>>, vector<8x1xf32>
    tpu.vector_store %arg10[%c0_37, %c0_38], %58 {strides = array<i32>} : memref<8x1xf32, #tpu.memory_space<vmem>>, vector<8x1xf32>,
    %c0_39 = arith.constant 0 : index
    %c0_40 = arith.constant 0 : index
    %60 = vector.load %arg11[%c0_39, %c0_40] : memref<8x1xf32, #tpu.memory_space<vmem>>, vector<8x1xf32>
    %61 = arith.addf %60, %46 : vector<8x1xf32>
    %62 = arith.mulf %53, %53 : vector<8x1xf32>
    %cst_41 = arith.constant 8.000000e+00 : f32
    %63 = arith.mulf %50, %cst_41 : f32
    %64 = arith.divf %63, %51 : f32
    %65 = vector.broadcast %64 : f32 to vector<8x1xf32>
    %66 = arith.mulf %62, %65 : vector<8x1xf32>
    %67 = arith.addf %61, %66 : vector<8x1xf32>
    %c0_42 = arith.constant 0 : index
    %c0_43 = arith.constant 0 : index
    %68 = vector.load %arg11[%c0_42, %c0_43] : memref<8x1xf32, #tpu.memory_space<vmem>>, vector<8x1xf32>
    tpu.vector_store %arg11[%c0_42, %c0_43], %67 {strides = array<i32>} : memref<8x1xf32, #tpu.memory_space<vmem>>, vector<8x1xf32>,
    %c1_i32_44 = arith.constant 1 : i32
    %69 = arith.cmpi eq, %arg0, %c1_i32_44 : i32
    %c0_i32_45 = arith.constant 0 : i32
    %70 = arith.cmpi eq, %arg1, %c0_i32_45 : i32
    %71 = arith.andi %69, %70 : i1
    %72 = arith.extui %71 : i1 to i32
    %c0_i32_46 = arith.constant 0 : i32
    %73 = arith.cmpi ne, %72, %c0_i32_46 : i32
    scf.if %73 {
      %c0_47 = arith.constant 0 : index
      %c0_48 = arith.constant 0 : index
      %74 = vector.load %arg10[%c0_47, %c0_48] : memref<8x1xf32, #tpu.memory_space<vmem>>, vector<8x1xf32>
      %c0_49 = arith.constant 0 : index
      %c0_50 = arith.constant 0 : index
      %75 = vector.load %arg11[%c0_49, %c0_50] : memref<8x1xf32, #tpu.memory_space<vmem>>, vector<8x1xf32>
      %cst_51 = arith.constant 6.250000e-02 : f32
      %76 = vector.broadcast %cst_51 : f32 to vector<8x1xf32>
      %77 = arith.mulf %75, %76 : vector<8x1xf32>
      %cst_52 = arith.constant 9.99999974E-6 : f32
      %78 = vector.broadcast %cst_52 : f32 to vector<8x1xf32>
      %79 = arith.addf %77, %78 : vector<8x1xf32>
      %80 = math.rsqrt %79 : vector<8x1xf32>
      %c0_53 = arith.constant 0 : index
      %c0_54 = arith.constant 0 : index
      %81 = vector.load %arg6[%c0_53, %c0_54] : memref<8x1xf32, #tpu.memory_space<vmem>>, vector<8x1xf32>
      %82 = arith.mulf %81, %80 : vector<8x1xf32>
      %c0_55 = arith.constant 0 : index
      %c0_56 = arith.constant 0 : index
      %83 = vector.load %arg8[%c0_55, %c0_56] : memref<8x1xf32, #tpu.memory_space<vmem>>, vector<8x1xf32>
      tpu.vector_store %arg8[%c0_55, %c0_56], %82 {strides = array<i32>} : memref<8x1xf32, #tpu.memory_space<vmem>>, vector<8x1xf32>,
      %c0_57 = arith.constant 0 : index
      %c0_58 = arith.constant 0 : index
      %84 = vector.load %arg7[%c0_57, %c0_58] : memref<8x1xf32, #tpu.memory_space<vmem>>, vector<8x1xf32>
      %85 = arith.mulf %74, %82 : vector<8x1xf32>
      %86 = arith.subf %84, %85 : vector<8x1xf32>
      %c0_59 = arith.constant 0 : index
      %c0_60 = arith.constant 0 : index
      %87 = vector.load %arg9[%c0_59, %c0_60] : memref<8x1xf32, #tpu.memory_space<vmem>>, vector<8x1xf32>
      tpu.vector_store %arg9[%c0_59, %c0_60], %86 {strides = array<i32>} : memref<8x1xf32, #tpu.memory_space<vmem>>, vector<8x1xf32>,
    } else {
    }
    return
  }
  func.func @transform_0(%arg0: i32, %arg1: i32) -> (i32, i32, i32) {
    %c0_i32 = arith.constant 0 : i32
    %c0_i32_0 = arith.constant 0 : i32
    %c0_i32_1 = arith.constant 0 : i32
    %c0_i32_2 = arith.constant 0 : i32
    return %c0_i32, %c0_i32_0, %c0_i32_1 : i32, i32, i32
  }
  func.func @transform_1(%arg0: i32, %arg1: i32) -> (i32, i32, i32) {
    %c0_i32 = arith.constant 0 : i32
    %c0_i32_0 = arith.constant 0 : i32
    return %arg0, %c0_i32, %arg1 : i32, i32, i32
  }
  func.func @transform_2(%arg0: i32, %arg1: i32) -> (i32, i32, i32, i32) {
    %c0_i32 = arith.constant 0 : i32
    %c0_i32_0 = arith.constant 0 : i32
    %c0_i32_1 = arith.constant 0 : i32
    return %arg0, %arg1, %c0_i32, %c0_i32_0 : i32, i32, i32, i32
  }
  func.func @transform_3(%arg0: i32, %arg1: i32) -> (i32, i32, i32, i32) {
    %c0_i32 = arith.constant 0 : i32
    %c0_i32_0 = arith.constant 0 : i32
    %c0_i32_1 = arith.constant 0 : i32
    return %arg0, %arg1, %c0_i32, %c0_i32_0 : i32, i32, i32, i32
  }
  func.func @transform_4(%arg0: i32, %arg1: i32) -> (i32, i32) {
    %c0_i32 = arith.constant 0 : i32
    %c0_i32_0 = arith.constant 0 : i32
    %c0_i32_1 = arith.constant 0 : i32
    return %c0_i32, %c0_i32_0 : i32, i32
  }
  func.func @transform_5(%arg0: i32, %arg1: i32) -> (i32, i32) {
    %c0_i32 = arith.constant 0 : i32
    %c0_i32_0 = arith.constant 0 : i32
    %c0_i32_1 = arith.constant 0 : i32
    return %c0_i32, %c0_i32_0 : i32, i32
  }
  func.func @transform_6(%arg0: i32, %arg1: i32) -> (i32, i32) {
    %c0_i32 = arith.constant 0 : i32
    %c0_i32_0 = arith.constant 0 : i32
    %c0_i32_1 = arith.constant 0 : i32
    return %c0_i32, %c0_i32_0 : i32, i32
  }
  func.func @transform_7(%arg0: i32, %arg1: i32) -> (i32, i32) {
    %c0_i32 = arith.constant 0 : i32
    %c0_i32_0 = arith.constant 0 : i32
    %c0_i32_1 = arith.constant 0 : i32
    return %c0_i32, %c0_i32_0 : i32, i32
  }
}

module attributes {stable_mosaic.version = 11 : i64} {
  func.func @_apply_kernel(%arg0: i32, %arg1: i32, %arg2: memref<5x8x16xf32, #tpu.memory_space<vmem>>, %arg3: memref<1x16x8xf32, #tpu.memory_space<vmem>>, %arg4: memref<1x1x16x2xf32, #tpu.memory_space<vmem>>, %arg5: memref<1x1x16x2xf32, #tpu.memory_space<vmem>>, %arg6: memref<8x1xf32, #tpu.memory_space<vmem>>, %arg7: memref<8x1xf32, #tpu.memory_space<vmem>>, %arg8: memref<1x8x8xf32, #tpu.memory_space<vmem>>) attributes {dimension_semantics = [#tpu.dimension_semantics<parallel>, #tpu.dimension_semantics<parallel>], iteration_bounds = array<i64: 2, 1>, scalar_prefetch = 0 : i64, scratch_operands = 0 : i64, tpu.core_type = #tpu.core_type<tc>, window_params = [{pipeline_mode = #tpu.pipeline_mode<synchronous>, transform_indices = @transform_0, window_bounds = array<i64: 5, 8, 16>}, {transform_indices = @transform_1, window_bounds = array<i64: 1, 16, 8>}, {transform_indices = @transform_2, window_bounds = array<i64: 1, 1, 16, 2>}, {transform_indices = @transform_3, window_bounds = array<i64: 1, 1, 16, 2>}, {pipeline_mode = #tpu.pipeline_mode<synchronous>, transform_indices = @transform_4, window_bounds = array<i64: 8, 1>}, {pipeline_mode = #tpu.pipeline_mode<synchronous>, transform_indices = @transform_5, window_bounds = array<i64: 8, 1>}, {transform_indices = @transform_6, window_bounds = array<i64: 1, 8, 8>}]} {
    %c0 = arith.constant 0 : index
    %c0_0 = arith.constant 0 : index
    %c0_1 = arith.constant 0 : index
    %c0_2 = arith.constant 0 : index
    %0 = vector.load %arg4[%c0, %c0_0, %c0_1, %c0_2] : memref<1x1x16x2xf32, #tpu.memory_space<vmem>>, vector<1x1x16x2xf32>
    %1 = vector.shape_cast %0 : vector<1x1x16x2xf32> to vector<16x2xf32>
    %c0_3 = arith.constant 0 : index
    %c0_4 = arith.constant 0 : index
    %c0_5 = arith.constant 0 : index
    %2 = vector.load %arg3[%c0_3, %c0_4, %c0_5] : memref<1x16x8xf32, #tpu.memory_space<vmem>>, vector<1x16x8xf32>
    %3 = vector.shape_cast %2 : vector<1x16x8xf32> to vector<16x8xf32>
    %c0_6 = arith.constant 0 : index
    %c0_7 = arith.constant 0 : index
    %c0_8 = arith.constant 0 : index
    %c0_9 = arith.constant 0 : index
    %4 = vector.load %arg5[%c0_6, %c0_7, %c0_8, %c0_9] : memref<1x1x16x2xf32, #tpu.memory_space<vmem>>, vector<1x1x16x2xf32>
    %5 = vector.shape_cast %4 : vector<1x1x16x2xf32> to vector<16x2xf32>
    %6 = tpu.concatenate %1, %3, %5 in 1 : vector<16x2xf32>, vector<16x8xf32>, vector<16x2xf32> -> vector<16x12xf32>
    %cst = arith.constant 0.000000e+00 : f32
    %7 = vector.broadcast %cst : f32 to vector<8x8xf32>
    %8 = vector.extract_strided_slice %6 {offsets = [0, 0], sizes = [16, 8], strides = [1, 1]} : vector<16x12xf32> to vector<16x8xf32>
    %c0_10 = arith.constant 0 : index
    %c0_11 = arith.constant 0 : index
    %c0_12 = arith.constant 0 : index
    %9 = vector.load %arg2[%c0_10, %c0_11, %c0_12] : memref<5x8x16xf32, #tpu.memory_space<vmem>>, vector<1x8x16xf32>
    %10 = vector.shape_cast %9 : vector<1x8x16xf32> to vector<8x16xf32>
    %cst_13 = arith.constant dense<0.000000e+00> : vector<8x8xf32>
    %11 = tpu.matmul %10, %8, %cst_13 {dimension_numbers = #tpu.dot_dimension_numbers<[1], [0], [0], [1], [0, 0, 1, 1], [], []>} : vector<8x16xf32>, vector<16x8xf32>, vector<8x8xf32> -> vector<8x8xf32>
    %12 = arith.addf %7, %11 : vector<8x8xf32>
    %13 = vector.extract_strided_slice %6 {offsets = [0, 1], sizes = [16, 8], strides = [1, 1]} : vector<16x12xf32> to vector<16x8xf32>
    %c1 = arith.constant 1 : index
    %c0_14 = arith.constant 0 : index
    %c0_15 = arith.constant 0 : index
    %14 = vector.load %arg2[%c1, %c0_14, %c0_15] : memref<5x8x16xf32, #tpu.memory_space<vmem>>, vector<1x8x16xf32>
    %15 = vector.shape_cast %14 : vector<1x8x16xf32> to vector<8x16xf32>
    %cst_16 = arith.constant dense<0.000000e+00> : vector<8x8xf32>
    %16 = tpu.matmul %15, %13, %cst_16 {dimension_numbers = #tpu.dot_dimension_numbers<[1], [0], [0], [1], [0, 0, 1, 1], [], []>} : vector<8x16xf32>, vector<16x8xf32>, vector<8x8xf32> -> vector<8x8xf32>
    %17 = arith.addf %12, %16 : vector<8x8xf32>
    %18 = vector.extract_strided_slice %6 {offsets = [0, 2], sizes = [16, 8], strides = [1, 1]} : vector<16x12xf32> to vector<16x8xf32>
    %c2 = arith.constant 2 : index
    %c0_17 = arith.constant 0 : index
    %c0_18 = arith.constant 0 : index
    %19 = vector.load %arg2[%c2, %c0_17, %c0_18] : memref<5x8x16xf32, #tpu.memory_space<vmem>>, vector<1x8x16xf32>
    %20 = vector.shape_cast %19 : vector<1x8x16xf32> to vector<8x16xf32>
    %cst_19 = arith.constant dense<0.000000e+00> : vector<8x8xf32>
    %21 = tpu.matmul %20, %18, %cst_19 {dimension_numbers = #tpu.dot_dimension_numbers<[1], [0], [0], [1], [0, 0, 1, 1], [], []>} : vector<8x16xf32>, vector<16x8xf32>, vector<8x8xf32> -> vector<8x8xf32>
    %22 = arith.addf %17, %21 : vector<8x8xf32>
    %23 = vector.extract_strided_slice %6 {offsets = [0, 3], sizes = [16, 8], strides = [1, 1]} : vector<16x12xf32> to vector<16x8xf32>
    %c3 = arith.constant 3 : index
    %c0_20 = arith.constant 0 : index
    %c0_21 = arith.constant 0 : index
    %24 = vector.load %arg2[%c3, %c0_20, %c0_21] : memref<5x8x16xf32, #tpu.memory_space<vmem>>, vector<1x8x16xf32>
    %25 = vector.shape_cast %24 : vector<1x8x16xf32> to vector<8x16xf32>
    %cst_22 = arith.constant dense<0.000000e+00> : vector<8x8xf32>
    %26 = tpu.matmul %25, %23, %cst_22 {dimension_numbers = #tpu.dot_dimension_numbers<[1], [0], [0], [1], [0, 0, 1, 1], [], []>} : vector<8x16xf32>, vector<16x8xf32>, vector<8x8xf32> -> vector<8x8xf32>
    %27 = arith.addf %22, %26 : vector<8x8xf32>
    %28 = vector.extract_strided_slice %6 {offsets = [0, 4], sizes = [16, 8], strides = [1, 1]} : vector<16x12xf32> to vector<16x8xf32>
    %c4 = arith.constant 4 : index
    %c0_23 = arith.constant 0 : index
    %c0_24 = arith.constant 0 : index
    %29 = vector.load %arg2[%c4, %c0_23, %c0_24] : memref<5x8x16xf32, #tpu.memory_space<vmem>>, vector<1x8x16xf32>
    %30 = vector.shape_cast %29 : vector<1x8x16xf32> to vector<8x16xf32>
    %cst_25 = arith.constant dense<0.000000e+00> : vector<8x8xf32>
    %31 = tpu.matmul %30, %28, %cst_25 {dimension_numbers = #tpu.dot_dimension_numbers<[1], [0], [0], [1], [0, 0, 1, 1], [], []>} : vector<8x16xf32>, vector<16x8xf32>, vector<8x8xf32> -> vector<8x8xf32>
    %32 = arith.addf %27, %31 : vector<8x8xf32>
    %c0_26 = arith.constant 0 : index
    %c0_27 = arith.constant 0 : index
    %33 = vector.load %arg6[%c0_26, %c0_27] : memref<8x1xf32, #tpu.memory_space<vmem>>, vector<8x1xf32>
    %34 = vector.broadcast %33 : vector<8x1xf32> to vector<8x8xf32>
    %35 = arith.mulf %32, %34 : vector<8x8xf32>
    %c0_28 = arith.constant 0 : index
    %c0_29 = arith.constant 0 : index
    %36 = vector.load %arg7[%c0_28, %c0_29] : memref<8x1xf32, #tpu.memory_space<vmem>>, vector<8x1xf32>
    %37 = vector.broadcast %36 : vector<8x1xf32> to vector<8x8xf32>
    %38 = arith.addf %35, %37 : vector<8x8xf32>
    %cst_30 = arith.constant 0.000000e+00 : f32
    %39 = vector.broadcast %cst_30 : f32 to vector<8x8xf32>
    %40 = arith.cmpf oge, %38, %39 : vector<8x8xf32>
    %cst_31 = arith.constant 1.000000e-01 : f32
    %41 = vector.broadcast %cst_31 : f32 to vector<8x8xf32>
    %42 = arith.mulf %41, %38 : vector<8x8xf32>
    %43 = arith.select %40, %38, %42 : vector<8x8xi1>, vector<8x8xf32>
    %c0_32 = arith.constant 0 : index
    %c0_33 = arith.constant 0 : index
    %c0_34 = arith.constant 0 : index
    %44 = vector.load %arg8[%c0_32, %c0_33, %c0_34] : memref<1x8x8xf32, #tpu.memory_space<vmem>>, vector<1x8x8xf32>
    %45 = vector.shape_cast %44 : vector<1x8x8xf32> to vector<8x8xf32>
    %46 = vector.shape_cast %43 : vector<8x8xf32> to vector<1x8x8xf32>
    tpu.vector_store %arg8[%c0_32, %c0_33, %c0_34], %46 {strides = array<i32>} : memref<1x8x8xf32, #tpu.memory_space<vmem>>, vector<1x8x8xf32>,
    return
  }
  func.func @transform_0(%arg0: i32, %arg1: i32) -> (i32, i32, i32) {
    %c0_i32 = arith.constant 0 : i32
    %c0_i32_0 = arith.constant 0 : i32
    %c0_i32_1 = arith.constant 0 : i32
    %c0_i32_2 = arith.constant 0 : i32
    return %c0_i32, %c0_i32_0, %c0_i32_1 : i32, i32, i32
  }
  func.func @transform_1(%arg0: i32, %arg1: i32) -> (i32, i32, i32) {
    %c0_i32 = arith.constant 0 : i32
    %c0_i32_0 = arith.constant 0 : i32
    return %arg0, %c0_i32, %arg1 : i32, i32, i32
  }
  func.func @transform_2(%arg0: i32, %arg1: i32) -> (i32, i32, i32, i32) {
    %c0_i32 = arith.constant 0 : i32
    %c0_i32_0 = arith.constant 0 : i32
    %c0_i32_1 = arith.constant 0 : i32
    return %arg0, %arg1, %c0_i32, %c0_i32_0 : i32, i32, i32, i32
  }
  func.func @transform_3(%arg0: i32, %arg1: i32) -> (i32, i32, i32, i32) {
    %c0_i32 = arith.constant 0 : i32
    %c0_i32_0 = arith.constant 0 : i32
    %c0_i32_1 = arith.constant 0 : i32
    return %arg0, %arg1, %c0_i32, %c0_i32_0 : i32, i32, i32, i32
  }
  func.func @transform_4(%arg0: i32, %arg1: i32) -> (i32, i32) {
    %c0_i32 = arith.constant 0 : i32
    %c0_i32_0 = arith.constant 0 : i32
    %c0_i32_1 = arith.constant 0 : i32
    return %c0_i32, %c0_i32_0 : i32, i32
  }
  func.func @transform_5(%arg0: i32, %arg1: i32) -> (i32, i32) {
    %c0_i32 = arith.constant 0 : i32
    %c0_i32_0 = arith.constant 0 : i32
    %c0_i32_1 = arith.constant 0 : i32
    return %c0_i32, %c0_i32_0 : i32, i32
  }
  func.func @transform_6(%arg0: i32, %arg1: i32) -> (i32, i32, i32) {
    %c0_i32 = arith.constant 0 : i32
    %c0_i32_0 = arith.constant 0 : i32
    return %arg0, %c0_i32, %arg1 : i32, i32, i32
  }
}

module attributes {stable_mosaic.version = 11 : i64} {
  func.func @_stats_kernel(%arg0: i32, %arg1: i32, %arg2: memref<5x4x12xf32, #tpu.memory_space<vmem>>, %arg3: memref<1x12x16xf32, #tpu.memory_space<vmem>>, %arg4: memref<1x1x12x2xf32, #tpu.memory_space<vmem>>, %arg5: memref<1x1x12x2xf32, #tpu.memory_space<vmem>>, %arg6: memref<4x1xf32, #tpu.memory_space<vmem>>, %arg7: memref<4x1xf32, #tpu.memory_space<vmem>>, %arg8: memref<4x1xf32, #tpu.memory_space<vmem>>, %arg9: memref<4x1xf32, #tpu.memory_space<vmem>>, %arg10: memref<4x1xf32, #tpu.memory_space<vmem>>, %arg11: memref<4x1xf32, #tpu.memory_space<vmem>>) attributes {dimension_semantics = [#tpu.dimension_semantics<arbitrary>, #tpu.dimension_semantics<arbitrary>], iteration_bounds = array<i64: 2, 1>, scalar_prefetch = 0 : i64, scratch_operands = 2 : i64, tpu.core_type = #tpu.core_type<tc>, window_params = [{pipeline_mode = #tpu.pipeline_mode<synchronous>, transform_indices = @transform_0, window_bounds = array<i64: 5, 4, 12>}, {transform_indices = @transform_1, window_bounds = array<i64: 1, 12, 16>}, {transform_indices = @transform_2, window_bounds = array<i64: 1, 1, 12, 2>}, {transform_indices = @transform_3, window_bounds = array<i64: 1, 1, 12, 2>}, {pipeline_mode = #tpu.pipeline_mode<synchronous>, transform_indices = @transform_4, window_bounds = array<i64: 4, 1>}, {pipeline_mode = #tpu.pipeline_mode<synchronous>, transform_indices = @transform_5, window_bounds = array<i64: 4, 1>}, {pipeline_mode = #tpu.pipeline_mode<synchronous>, transform_indices = @transform_6, window_bounds = array<i64: 4, 1>}, {pipeline_mode = #tpu.pipeline_mode<synchronous>, transform_indices = @transform_7, window_bounds = array<i64: 4, 1>}]} {
    %c0_i32 = arith.constant 0 : i32
    %0 = arith.cmpi eq, %arg0, %c0_i32 : i32
    %c0_i32_0 = arith.constant 0 : i32
    %1 = arith.cmpi eq, %arg1, %c0_i32_0 : i32
    %2 = arith.andi %0, %1 : i1
    %3 = arith.extui %2 : i1 to i32
    %c0_i32_1 = arith.constant 0 : i32
    %4 = arith.cmpi ne, %3, %c0_i32_1 : i32
    scf.if %4 {
      %cst_47 = arith.constant 0.000000e+00 : f32
      %74 = vector.broadcast %cst_47 : f32 to vector<4x1xf32>
      %c0_48 = arith.constant 0 : index
      %c0_49 = arith.constant 0 : index
      %75 = vector.load %arg10[%c0_48, %c0_49] : memref<4x1xf32, #tpu.memory_space<vmem>>, vector<4x1xf32>
      tpu.vector_store %arg10[%c0_48, %c0_49], %74 {strides = array<i32>} : memref<4x1xf32, #tpu.memory_space<vmem>>, vector<4x1xf32>,
      %cst_50 = arith.constant 0.000000e+00 : f32
      %76 = vector.broadcast %cst_50 : f32 to vector<4x1xf32>
      %c0_51 = arith.constant 0 : index
      %c0_52 = arith.constant 0 : index
      %77 = vector.load %arg11[%c0_51, %c0_52] : memref<4x1xf32, #tpu.memory_space<vmem>>, vector<4x1xf32>
      tpu.vector_store %arg11[%c0_51, %c0_52], %76 {strides = array<i32>} : memref<4x1xf32, #tpu.memory_space<vmem>>, vector<4x1xf32>,
    } else {
    }
    %c0 = arith.constant 0 : index
    %c0_2 = arith.constant 0 : index
    %c0_3 = arith.constant 0 : index
    %c0_4 = arith.constant 0 : index
    %5 = vector.load %arg4[%c0, %c0_2, %c0_3, %c0_4] : memref<1x1x12x2xf32, #tpu.memory_space<vmem>>, vector<1x1x12x2xf32>
    %6 = vector.shape_cast %5 : vector<1x1x12x2xf32> to vector<12x2xf32>
    %c0_5 = arith.constant 0 : index
    %c0_6 = arith.constant 0 : index
    %c0_7 = arith.constant 0 : index
    %7 = vector.load %arg3[%c0_5, %c0_6, %c0_7] : memref<1x12x16xf32, #tpu.memory_space<vmem>>, vector<1x12x16xf32>
    %8 = vector.shape_cast %7 : vector<1x12x16xf32> to vector<12x16xf32>
    %c0_8 = arith.constant 0 : index
    %c0_9 = arith.constant 0 : index
    %c0_10 = arith.constant 0 : index
    %c0_11 = arith.constant 0 : index
    %9 = vector.load %arg5[%c0_8, %c0_9, %c0_10, %c0_11] : memref<1x1x12x2xf32, #tpu.memory_space<vmem>>, vector<1x1x12x2xf32>
    %10 = vector.shape_cast %9 : vector<1x1x12x2xf32> to vector<12x2xf32>
    %11 = tpu.concatenate %6, %8, %10 in 1 : vector<12x2xf32>, vector<12x16xf32>, vector<12x2xf32> -> vector<12x20xf32>
    %cst = arith.constant 0.000000e+00 : f32
    %12 = vector.broadcast %cst : f32 to vector<4x16xf32>
    %13 = vector.extract_strided_slice %11 {offsets = [0, 0], sizes = [12, 16], strides = [1, 1]} : vector<12x20xf32> to vector<12x16xf32>
    %c0_12 = arith.constant 0 : index
    %c0_13 = arith.constant 0 : index
    %c0_14 = arith.constant 0 : index
    %14 = vector.load %arg2[%c0_12, %c0_13, %c0_14] : memref<5x4x12xf32, #tpu.memory_space<vmem>>, vector<1x4x12xf32>
    %15 = vector.shape_cast %14 : vector<1x4x12xf32> to vector<4x12xf32>
    %cst_15 = arith.constant dense<0.000000e+00> : vector<4x16xf32>
    %16 = tpu.matmul %15, %13, %cst_15 {dimension_numbers = #tpu.dot_dimension_numbers<[1], [0], [0], [1], [0, 0, 1, 1], [], []>} : vector<4x12xf32>, vector<12x16xf32>, vector<4x16xf32> -> vector<4x16xf32>
    %17 = arith.addf %12, %16 : vector<4x16xf32>
    %18 = vector.extract_strided_slice %11 {offsets = [0, 1], sizes = [12, 16], strides = [1, 1]} : vector<12x20xf32> to vector<12x16xf32>
    %c1 = arith.constant 1 : index
    %c0_16 = arith.constant 0 : index
    %c0_17 = arith.constant 0 : index
    %19 = vector.load %arg2[%c1, %c0_16, %c0_17] : memref<5x4x12xf32, #tpu.memory_space<vmem>>, vector<1x4x12xf32>
    %20 = vector.shape_cast %19 : vector<1x4x12xf32> to vector<4x12xf32>
    %cst_18 = arith.constant dense<0.000000e+00> : vector<4x16xf32>
    %21 = tpu.matmul %20, %18, %cst_18 {dimension_numbers = #tpu.dot_dimension_numbers<[1], [0], [0], [1], [0, 0, 1, 1], [], []>} : vector<4x12xf32>, vector<12x16xf32>, vector<4x16xf32> -> vector<4x16xf32>
    %22 = arith.addf %17, %21 : vector<4x16xf32>
    %23 = vector.extract_strided_slice %11 {offsets = [0, 2], sizes = [12, 16], strides = [1, 1]} : vector<12x20xf32> to vector<12x16xf32>
    %c2 = arith.constant 2 : index
    %c0_19 = arith.constant 0 : index
    %c0_20 = arith.constant 0 : index
    %24 = vector.load %arg2[%c2, %c0_19, %c0_20] : memref<5x4x12xf32, #tpu.memory_space<vmem>>, vector<1x4x12xf32>
    %25 = vector.shape_cast %24 : vector<1x4x12xf32> to vector<4x12xf32>
    %cst_21 = arith.constant dense<0.000000e+00> : vector<4x16xf32>
    %26 = tpu.matmul %25, %23, %cst_21 {dimension_numbers = #tpu.dot_dimension_numbers<[1], [0], [0], [1], [0, 0, 1, 1], [], []>} : vector<4x12xf32>, vector<12x16xf32>, vector<4x16xf32> -> vector<4x16xf32>
    %27 = arith.addf %22, %26 : vector<4x16xf32>
    %28 = vector.extract_strided_slice %11 {offsets = [0, 3], sizes = [12, 16], strides = [1, 1]} : vector<12x20xf32> to vector<12x16xf32>
    %c3 = arith.constant 3 : index
    %c0_22 = arith.constant 0 : index
    %c0_23 = arith.constant 0 : index
    %29 = vector.load %arg2[%c3, %c0_22, %c0_23] : memref<5x4x12xf32, #tpu.memory_space<vmem>>, vector<1x4x12xf32>
    %30 = vector.shape_cast %29 : vector<1x4x12xf32> to vector<4x12xf32>
    %cst_24 = arith.constant dense<0.000000e+00> : vector<4x16xf32>
    %31 = tpu.matmul %30, %28, %cst_24 {dimension_numbers = #tpu.dot_dimension_numbers<[1], [0], [0], [1], [0, 0, 1, 1], [], []>} : vector<4x12xf32>, vector<12x16xf32>, vector<4x16xf32> -> vector<4x16xf32>
    %32 = arith.addf %27, %31 : vector<4x16xf32>
    %33 = vector.extract_strided_slice %11 {offsets = [0, 4], sizes = [12, 16], strides = [1, 1]} : vector<12x20xf32> to vector<12x16xf32>
    %c4 = arith.constant 4 : index
    %c0_25 = arith.constant 0 : index
    %c0_26 = arith.constant 0 : index
    %34 = vector.load %arg2[%c4, %c0_25, %c0_26] : memref<5x4x12xf32, #tpu.memory_space<vmem>>, vector<1x4x12xf32>
    %35 = vector.shape_cast %34 : vector<1x4x12xf32> to vector<4x12xf32>
    %cst_27 = arith.constant dense<0.000000e+00> : vector<4x16xf32>
    %36 = tpu.matmul %35, %33, %cst_27 {dimension_numbers = #tpu.dot_dimension_numbers<[1], [0], [0], [1], [0, 0, 1, 1], [], []>} : vector<4x12xf32>, vector<12x16xf32>, vector<4x16xf32> -> vector<4x16xf32>
    %37 = arith.addf %32, %36 : vector<4x16xf32>
    %cst_28 = arith.constant dense<0.000000e+00> : vector<4xf32>
    %38 = vector.multi_reduction <add>, %37, %cst_28 [1] : vector<4x16xf32> to vector<4xf32>
    %39 = vector.shape_cast %38 : vector<4xf32> to vector<4x1xf32>
    %cst_29 = arith.constant 6.250000e-02 : f32
    %40 = vector.broadcast %cst_29 : f32 to vector<4x1xf32>
    %41 = arith.mulf %39, %40 : vector<4x1xf32>
    %42 = vector.broadcast %41 : vector<4x1xf32> to vector<4x16xf32>
    %43 = arith.subf %37, %42 : vector<4x16xf32>
    %44 = arith.mulf %43, %43 : vector<4x16xf32>
    %cst_30 = arith.constant dense<0.000000e+00> : vector<4xf32>
    %45 = vector.multi_reduction <add>, %44, %cst_30 [1] : vector<4x16xf32> to vector<4xf32>
    %46 = vector.shape_cast %45 : vector<4xf32> to vector<4x1xf32>
    %c1_i32 = arith.constant 1 : i32
    %47 = arith.muli %arg0, %c1_i32 : i32
    %48 = arith.addi %47, %arg1 : i32
    %c16_i32 = arith.constant 16 : i32
    %49 = arith.muli %48, %c16_i32 : i32
    %50 = arith.sitofp %49 : i32 to f32
    %cst_31 = arith.constant 1.600000e+01 : f32
    %51 = arith.addf %50, %cst_31 : f32
    %c0_32 = arith.constant 0 : index
    %c0_33 = arith.constant 0 : index
    %52 = vector.load %arg10[%c0_32, %c0_33] : memref<4x1xf32, #tpu.memory_space<vmem>>, vector<4x1xf32>
    %53 = arith.subf %41, %52 : vector<4x1xf32>
    %c0_34 = arith.constant 0 : index
    %c0_35 = arith.constant 0 : index
    %54 = vector.load %arg10[%c0_34, %c0_35] : memref<4x1xf32, #tpu.memory_space<vmem>>, vector<4x1xf32>
    %cst_36 = arith.constant 1.600000e+01 : f32
    %55 = arith.divf %cst_36, %51 : f32
    %56 = vector.broadcast %55 : f32 to vector<4x1xf32>
    %57 = arith.mulf %53, %56 : vector<4x1xf32>
    %58 = arith.addf %54, %57 : vector<4x1xf32>
    %c0_37 = arith.constant 0 : index
    %c0_38 = arith.constant 0 : index
    %59 = vector.load %arg10[%c0_37, %c0_38] : memref<4x1xf32, #tpu.memory_space<vmem>>, vector<4x1xf32>
    tpu.vector_store %arg10[%c0_37, %c0_38], %58 {strides = array<i32>} : memref<4x1xf32, #tpu.memory_space<vmem>>, vector<4x1xf32>,
    %c0_39 = arith.constant 0 : index
    %c0_40 = arith.constant 0 : index
    %60 = vector.load %arg11[%c0_39, %c0_40] : memref<4x1xf32, #tpu.memory_space<vmem>>, vector<4x1xf32>
    %61 = arith.addf %60, %46 : vector<4x1xf32>
    %62 = arith.mulf %53, %53 : vector<4x1xf32>
    %cst_41 = arith.constant 1.600000e+01 : f32
    %63 = arith.mulf %50, %cst_41 : f32
    %64 = arith.divf %63, %51 : f32
    %65 = vector.broadcast %64 : f32 to vector<4x1xf32>
    %66 = arith.mulf %62, %65 : vector<4x1xf32>
    %67 = arith.addf %61, %66 : vector<4x1xf32>
    %c0_42 = arith.constant 0 : index
    %c0_43 = arith.constant 0 : index
    %68 = vector.load %arg11[%c0_42, %c0_43] : memref<4x1xf32, #tpu.memory_space<vmem>>, vector<4x1xf32>
    tpu.vector_store %arg11[%c0_42, %c0_43], %67 {strides = array<i32>} : memref<4x1xf32, #tpu.memory_space<vmem>>, vector<4x1xf32>,
    %c1_i32_44 = arith.constant 1 : i32
    %69 = arith.cmpi eq, %arg0, %c1_i32_44 : i32
    %c0_i32_45 = arith.constant 0 : i32
    %70 = arith.cmpi eq, %arg1, %c0_i32_45 : i32
    %71 = arith.andi %69, %70 : i1
    %72 = arith.extui %71 : i1 to i32
    %c0_i32_46 = arith.constant 0 : i32
    %73 = arith.cmpi ne, %72, %c0_i32_46 : i32
    scf.if %73 {
      %c0_47 = arith.constant 0 : index
      %c0_48 = arith.constant 0 : index
      %74 = vector.load %arg10[%c0_47, %c0_48] : memref<4x1xf32, #tpu.memory_space<vmem>>, vector<4x1xf32>
      %c0_49 = arith.constant 0 : index
      %c0_50 = arith.constant 0 : index
      %75 = vector.load %arg11[%c0_49, %c0_50] : memref<4x1xf32, #tpu.memory_space<vmem>>, vector<4x1xf32>
      %cst_51 = arith.constant 3.125000e-02 : f32
      %76 = vector.broadcast %cst_51 : f32 to vector<4x1xf32>
      %77 = arith.mulf %75, %76 : vector<4x1xf32>
      %cst_52 = arith.constant 9.99999974E-6 : f32
      %78 = vector.broadcast %cst_52 : f32 to vector<4x1xf32>
      %79 = arith.addf %77, %78 : vector<4x1xf32>
      %80 = math.rsqrt %79 : vector<4x1xf32>
      %c0_53 = arith.constant 0 : index
      %c0_54 = arith.constant 0 : index
      %81 = vector.load %arg6[%c0_53, %c0_54] : memref<4x1xf32, #tpu.memory_space<vmem>>, vector<4x1xf32>
      %82 = arith.mulf %81, %80 : vector<4x1xf32>
      %c0_55 = arith.constant 0 : index
      %c0_56 = arith.constant 0 : index
      %83 = vector.load %arg8[%c0_55, %c0_56] : memref<4x1xf32, #tpu.memory_space<vmem>>, vector<4x1xf32>
      tpu.vector_store %arg8[%c0_55, %c0_56], %82 {strides = array<i32>} : memref<4x1xf32, #tpu.memory_space<vmem>>, vector<4x1xf32>,
      %c0_57 = arith.constant 0 : index
      %c0_58 = arith.constant 0 : index
      %84 = vector.load %arg7[%c0_57, %c0_58] : memref<4x1xf32, #tpu.memory_space<vmem>>, vector<4x1xf32>
      %85 = arith.mulf %74, %82 : vector<4x1xf32>
      %86 = arith.subf %84, %85 : vector<4x1xf32>
      %c0_59 = arith.constant 0 : index
      %c0_60 = arith.constant 0 : index
      %87 = vector.load %arg9[%c0_59, %c0_60] : memref<4x1xf32, #tpu.memory_space<vmem>>, vector<4x1xf32>
      tpu.vector_store %arg9[%c0_59, %c0_60], %86 {strides = array<i32>} : memref<4x1xf32, #tpu.memory_space<vmem>>, vector<4x1xf32>,
    } else {
    }
    return
  }
  func.func @transform_0(%arg0: i32, %arg1: i32) -> (i32, i32, i32) {
    %c0_i32 = arith.constant 0 : i32
    %c0_i32_0 = arith.constant 0 : i32
    %c0_i32_1 = arith.constant 0 : i32
    %c0_i32_2 = arith.constant 0 : i32
    return %c0_i32, %c0_i32_0, %c0_i32_1 : i32, i32, i32
  }
  func.func @transform_1(%arg0: i32, %arg1: i32) -> (i32, i32, i32) {
    %c0_i32 = arith.constant 0 : i32
    %c0_i32_0 = arith.constant 0 : i32
    return %arg0, %c0_i32, %arg1 : i32, i32, i32
  }
  func.func @transform_2(%arg0: i32, %arg1: i32) -> (i32, i32, i32, i32) {
    %c0_i32 = arith.constant 0 : i32
    %c0_i32_0 = arith.constant 0 : i32
    %c0_i32_1 = arith.constant 0 : i32
    return %arg0, %arg1, %c0_i32, %c0_i32_0 : i32, i32, i32, i32
  }
  func.func @transform_3(%arg0: i32, %arg1: i32) -> (i32, i32, i32, i32) {
    %c0_i32 = arith.constant 0 : i32
    %c0_i32_0 = arith.constant 0 : i32
    %c0_i32_1 = arith.constant 0 : i32
    return %arg0, %arg1, %c0_i32, %c0_i32_0 : i32, i32, i32, i32
  }
  func.func @transform_4(%arg0: i32, %arg1: i32) -> (i32, i32) {
    %c0_i32 = arith.constant 0 : i32
    %c0_i32_0 = arith.constant 0 : i32
    %c0_i32_1 = arith.constant 0 : i32
    return %c0_i32, %c0_i32_0 : i32, i32
  }
  func.func @transform_5(%arg0: i32, %arg1: i32) -> (i32, i32) {
    %c0_i32 = arith.constant 0 : i32
    %c0_i32_0 = arith.constant 0 : i32
    %c0_i32_1 = arith.constant 0 : i32
    return %c0_i32, %c0_i32_0 : i32, i32
  }
  func.func @transform_6(%arg0: i32, %arg1: i32) -> (i32, i32) {
    %c0_i32 = arith.constant 0 : i32
    %c0_i32_0 = arith.constant 0 : i32
    %c0_i32_1 = arith.constant 0 : i32
    return %c0_i32, %c0_i32_0 : i32, i32
  }
  func.func @transform_7(%arg0: i32, %arg1: i32) -> (i32, i32) {
    %c0_i32 = arith.constant 0 : i32
    %c0_i32_0 = arith.constant 0 : i32
    %c0_i32_1 = arith.constant 0 : i32
    return %c0_i32, %c0_i32_0 : i32, i32
  }
}

module attributes {stable_mosaic.version = 11 : i64} {
  func.func @_apply_kernel(%arg0: i32, %arg1: i32, %arg2: memref<5x4x12xf32, #tpu.memory_space<vmem>>, %arg3: memref<1x12x16xf32, #tpu.memory_space<vmem>>, %arg4: memref<1x1x12x2xf32, #tpu.memory_space<vmem>>, %arg5: memref<1x1x12x2xf32, #tpu.memory_space<vmem>>, %arg6: memref<4x1xf32, #tpu.memory_space<vmem>>, %arg7: memref<4x1xf32, #tpu.memory_space<vmem>>, %arg8: memref<1x4x16xf32, #tpu.memory_space<vmem>>) attributes {dimension_semantics = [#tpu.dimension_semantics<parallel>, #tpu.dimension_semantics<parallel>], iteration_bounds = array<i64: 2, 1>, scalar_prefetch = 0 : i64, scratch_operands = 0 : i64, tpu.core_type = #tpu.core_type<tc>, window_params = [{pipeline_mode = #tpu.pipeline_mode<synchronous>, transform_indices = @transform_0, window_bounds = array<i64: 5, 4, 12>}, {transform_indices = @transform_1, window_bounds = array<i64: 1, 12, 16>}, {transform_indices = @transform_2, window_bounds = array<i64: 1, 1, 12, 2>}, {transform_indices = @transform_3, window_bounds = array<i64: 1, 1, 12, 2>}, {pipeline_mode = #tpu.pipeline_mode<synchronous>, transform_indices = @transform_4, window_bounds = array<i64: 4, 1>}, {pipeline_mode = #tpu.pipeline_mode<synchronous>, transform_indices = @transform_5, window_bounds = array<i64: 4, 1>}, {transform_indices = @transform_6, window_bounds = array<i64: 1, 4, 16>}]} {
    %c0 = arith.constant 0 : index
    %c0_0 = arith.constant 0 : index
    %c0_1 = arith.constant 0 : index
    %c0_2 = arith.constant 0 : index
    %0 = vector.load %arg4[%c0, %c0_0, %c0_1, %c0_2] : memref<1x1x12x2xf32, #tpu.memory_space<vmem>>, vector<1x1x12x2xf32>
    %1 = vector.shape_cast %0 : vector<1x1x12x2xf32> to vector<12x2xf32>
    %c0_3 = arith.constant 0 : index
    %c0_4 = arith.constant 0 : index
    %c0_5 = arith.constant 0 : index
    %2 = vector.load %arg3[%c0_3, %c0_4, %c0_5] : memref<1x12x16xf32, #tpu.memory_space<vmem>>, vector<1x12x16xf32>
    %3 = vector.shape_cast %2 : vector<1x12x16xf32> to vector<12x16xf32>
    %c0_6 = arith.constant 0 : index
    %c0_7 = arith.constant 0 : index
    %c0_8 = arith.constant 0 : index
    %c0_9 = arith.constant 0 : index
    %4 = vector.load %arg5[%c0_6, %c0_7, %c0_8, %c0_9] : memref<1x1x12x2xf32, #tpu.memory_space<vmem>>, vector<1x1x12x2xf32>
    %5 = vector.shape_cast %4 : vector<1x1x12x2xf32> to vector<12x2xf32>
    %6 = tpu.concatenate %1, %3, %5 in 1 : vector<12x2xf32>, vector<12x16xf32>, vector<12x2xf32> -> vector<12x20xf32>
    %cst = arith.constant 0.000000e+00 : f32
    %7 = vector.broadcast %cst : f32 to vector<4x16xf32>
    %8 = vector.extract_strided_slice %6 {offsets = [0, 0], sizes = [12, 16], strides = [1, 1]} : vector<12x20xf32> to vector<12x16xf32>
    %c0_10 = arith.constant 0 : index
    %c0_11 = arith.constant 0 : index
    %c0_12 = arith.constant 0 : index
    %9 = vector.load %arg2[%c0_10, %c0_11, %c0_12] : memref<5x4x12xf32, #tpu.memory_space<vmem>>, vector<1x4x12xf32>
    %10 = vector.shape_cast %9 : vector<1x4x12xf32> to vector<4x12xf32>
    %cst_13 = arith.constant dense<0.000000e+00> : vector<4x16xf32>
    %11 = tpu.matmul %10, %8, %cst_13 {dimension_numbers = #tpu.dot_dimension_numbers<[1], [0], [0], [1], [0, 0, 1, 1], [], []>} : vector<4x12xf32>, vector<12x16xf32>, vector<4x16xf32> -> vector<4x16xf32>
    %12 = arith.addf %7, %11 : vector<4x16xf32>
    %13 = vector.extract_strided_slice %6 {offsets = [0, 1], sizes = [12, 16], strides = [1, 1]} : vector<12x20xf32> to vector<12x16xf32>
    %c1 = arith.constant 1 : index
    %c0_14 = arith.constant 0 : index
    %c0_15 = arith.constant 0 : index
    %14 = vector.load %arg2[%c1, %c0_14, %c0_15] : memref<5x4x12xf32, #tpu.memory_space<vmem>>, vector<1x4x12xf32>
    %15 = vector.shape_cast %14 : vector<1x4x12xf32> to vector<4x12xf32>
    %cst_16 = arith.constant dense<0.000000e+00> : vector<4x16xf32>
    %16 = tpu.matmul %15, %13, %cst_16 {dimension_numbers = #tpu.dot_dimension_numbers<[1], [0], [0], [1], [0, 0, 1, 1], [], []>} : vector<4x12xf32>, vector<12x16xf32>, vector<4x16xf32> -> vector<4x16xf32>
    %17 = arith.addf %12, %16 : vector<4x16xf32>
    %18 = vector.extract_strided_slice %6 {offsets = [0, 2], sizes = [12, 16], strides = [1, 1]} : vector<12x20xf32> to vector<12x16xf32>
    %c2 = arith.constant 2 : index
    %c0_17 = arith.constant 0 : index
    %c0_18 = arith.constant 0 : index
    %19 = vector.load %arg2[%c2, %c0_17, %c0_18] : memref<5x4x12xf32, #tpu.memory_space<vmem>>, vector<1x4x12xf32>
    %20 = vector.shape_cast %19 : vector<1x4x12xf32> to vector<4x12xf32>
    %cst_19 = arith.constant dense<0.000000e+00> : vector<4x16xf32>
    %21 = tpu.matmul %20, %18, %cst_19 {dimension_numbers = #tpu.dot_dimension_numbers<[1], [0], [0], [1], [0, 0, 1, 1], [], []>} : vector<4x12xf32>, vector<12x16xf32>, vector<4x16xf32> -> vector<4x16xf32>
    %22 = arith.addf %17, %21 : vector<4x16xf32>
    %23 = vector.extract_strided_slice %6 {offsets = [0, 3], sizes = [12, 16], strides = [1, 1]} : vector<12x20xf32> to vector<12x16xf32>
    %c3 = arith.constant 3 : index
    %c0_20 = arith.constant 0 : index
    %c0_21 = arith.constant 0 : index
    %24 = vector.load %arg2[%c3, %c0_20, %c0_21] : memref<5x4x12xf32, #tpu.memory_space<vmem>>, vector<1x4x12xf32>
    %25 = vector.shape_cast %24 : vector<1x4x12xf32> to vector<4x12xf32>
    %cst_22 = arith.constant dense<0.000000e+00> : vector<4x16xf32>
    %26 = tpu.matmul %25, %23, %cst_22 {dimension_numbers = #tpu.dot_dimension_numbers<[1], [0], [0], [1], [0, 0, 1, 1], [], []>} : vector<4x12xf32>, vector<12x16xf32>, vector<4x16xf32> -> vector<4x16xf32>
    %27 = arith.addf %22, %26 : vector<4x16xf32>
    %28 = vector.extract_strided_slice %6 {offsets = [0, 4], sizes = [12, 16], strides = [1, 1]} : vector<12x20xf32> to vector<12x16xf32>
    %c4 = arith.constant 4 : index
    %c0_23 = arith.constant 0 : index
    %c0_24 = arith.constant 0 : index
    %29 = vector.load %arg2[%c4, %c0_23, %c0_24] : memref<5x4x12xf32, #tpu.memory_space<vmem>>, vector<1x4x12xf32>
    %30 = vector.shape_cast %29 : vector<1x4x12xf32> to vector<4x12xf32>
    %cst_25 = arith.constant dense<0.000000e+00> : vector<4x16xf32>
    %31 = tpu.matmul %30, %28, %cst_25 {dimension_numbers = #tpu.dot_dimension_numbers<[1], [0], [0], [1], [0, 0, 1, 1], [], []>} : vector<4x12xf32>, vector<12x16xf32>, vector<4x16xf32> -> vector<4x16xf32>
    %32 = arith.addf %27, %31 : vector<4x16xf32>
    %c0_26 = arith.constant 0 : index
    %c0_27 = arith.constant 0 : index
    %33 = vector.load %arg6[%c0_26, %c0_27] : memref<4x1xf32, #tpu.memory_space<vmem>>, vector<4x1xf32>
    %34 = vector.broadcast %33 : vector<4x1xf32> to vector<4x16xf32>
    %35 = arith.mulf %32, %34 : vector<4x16xf32>
    %c0_28 = arith.constant 0 : index
    %c0_29 = arith.constant 0 : index
    %36 = vector.load %arg7[%c0_28, %c0_29] : memref<4x1xf32, #tpu.memory_space<vmem>>, vector<4x1xf32>
    %37 = vector.broadcast %36 : vector<4x1xf32> to vector<4x16xf32>
    %38 = arith.addf %35, %37 : vector<4x16xf32>
    %cst_30 = arith.constant 0.000000e+00 : f32
    %39 = vector.broadcast %cst_30 : f32 to vector<4x16xf32>
    %40 = arith.cmpf oge, %38, %39 : vector<4x16xf32>
    %cst_31 = arith.constant 1.000000e-01 : f32
    %41 = vector.broadcast %cst_31 : f32 to vector<4x16xf32>
    %42 = arith.mulf %41, %38 : vector<4x16xf32>
    %43 = arith.select %40, %38, %42 : vector<4x16xi1>, vector<4x16xf32>
    %c0_32 = arith.constant 0 : index
    %c0_33 = arith.constant 0 : index
    %c0_34 = arith.constant 0 : index
    %44 = vector.load %arg8[%c0_32, %c0_33, %c0_34] : memref<1x4x16xf32, #tpu.memory_space<vmem>>, vector<1x4x16xf32>
    %45 = vector.shape_cast %44 : vector<1x4x16xf32> to vector<4x16xf32>
    %46 = vector.shape_cast %43 : vector<4x16xf32> to vector<1x4x16xf32>
    tpu.vector_store %arg8[%c0_32, %c0_33, %c0_34], %46 {strides = array<i32>} : memref<1x4x16xf32, #tpu.memory_space<vmem>>, vector<1x4x16xf32>,
    return
  }
  func.func @transform_0(%arg0: i32, %arg1: i32) -> (i32, i32, i32) {
    %c0_i32 = arith.constant 0 : i32
    %c0_i32_0 = arith.constant 0 : i32
    %c0_i32_1 = arith.constant 0 : i32
    %c0_i32_2 = arith.constant 0 : i32
    return %c0_i32, %c0_i32_0, %c0_i32_1 : i32, i32, i32
  }
  func.func @transform_1(%arg0: i32, %arg1: i32) -> (i32, i32, i32) {
    %c0_i32 = arith.constant 0 : i32
    %c0_i32_0 = arith.constant 0 : i32
    return %arg0, %c0_i32, %arg1 : i32, i32, i32
  }
  func.func @transform_2(%arg0: i32, %arg1: i32) -> (i32, i32, i32, i32) {
    %c0_i32 = arith.constant 0 : i32
    %c0_i32_0 = arith.constant 0 : i32
    %c0_i32_1 = arith.constant 0 : i32
    return %arg0, %arg1, %c0_i32, %c0_i32_0 : i32, i32, i32, i32
  }
  func.func @transform_3(%arg0: i32, %arg1: i32) -> (i32, i32, i32, i32) {
    %c0_i32 = arith.constant 0 : i32
    %c0_i32_0 = arith.constant 0 : i32
    %c0_i32_1 = arith.constant 0 : i32
    return %arg0, %arg1, %c0_i32, %c0_i32_0 : i32, i32, i32, i32
  }
  func.func @transform_4(%arg0: i32, %arg1: i32) -> (i32, i32) {
    %c0_i32 = arith.constant 0 : i32
    %c0_i32_0 = arith.constant 0 : i32
    %c0_i32_1 = arith.constant 0 : i32
    return %c0_i32, %c0_i32_0 : i32, i32
  }
  func.func @transform_5(%arg0: i32, %arg1: i32) -> (i32, i32) {
    %c0_i32 = arith.constant 0 : i32
    %c0_i32_0 = arith.constant 0 : i32
    %c0_i32_1 = arith.constant 0 : i32
    return %c0_i32, %c0_i32_0 : i32, i32
  }
  func.func @transform_6(%arg0: i32, %arg1: i32) -> (i32, i32, i32) {
    %c0_i32 = arith.constant 0 : i32
    %c0_i32_0 = arith.constant 0 : i32
    return %arg0, %c0_i32, %arg1 : i32, i32, i32
  }
}

module attributes {stable_mosaic.version = 11 : i64} {
  func.func @_conv1x1_tanh_kernel(%arg0: i32, %arg1: i32, %arg2: memref<1x5xf32, #tpu.memory_space<vmem>>, %arg3: memref<1x1xf32, #tpu.memory_space<vmem>>, %arg4: memref<1x5x16xf32, #tpu.memory_space<vmem>>, %arg5: memref<1x1x16xf32, #tpu.memory_space<vmem>>) attributes {dimension_semantics = [#tpu.dimension_semantics<parallel>, #tpu.dimension_semantics<parallel>], iteration_bounds = array<i64: 2, 1>, scalar_prefetch = 0 : i64, scratch_operands = 0 : i64, tpu.core_type = #tpu.core_type<tc>, window_params = [{pipeline_mode = #tpu.pipeline_mode<synchronous>, transform_indices = @transform_0, window_bounds = array<i64: 1, 5>}, {pipeline_mode = #tpu.pipeline_mode<synchronous>, transform_indices = @transform_1, window_bounds = array<i64: 1, 1>}, {transform_indices = @transform_2, window_bounds = array<i64: 1, 5, 16>}, {transform_indices = @transform_3, window_bounds = array<i64: 1, 1, 16>}]} {
    %c0 = arith.constant 0 : index
    %c0_0 = arith.constant 0 : index
    %0 = vector.load %arg2[%c0, %c0_0] : memref<1x5xf32, #tpu.memory_space<vmem>>, vector<1x5xf32>
    %c0_1 = arith.constant 0 : index
    %c0_2 = arith.constant 0 : index
    %c0_3 = arith.constant 0 : index
    %1 = vector.load %arg4[%c0_1, %c0_2, %c0_3] : memref<1x5x16xf32, #tpu.memory_space<vmem>>, vector<1x5x16xf32>
    %2 = vector.shape_cast %1 : vector<1x5x16xf32> to vector<5x16xf32>
    %cst = arith.constant dense<0.000000e+00> : vector<1x16xf32>
    %3 = tpu.matmul %0, %2, %cst {dimension_numbers = #tpu.dot_dimension_numbers<[1], [0], [0], [1], [0, 0, 1, 1], [], []>} : vector<1x5xf32>, vector<5x16xf32>, vector<1x16xf32> -> vector<1x16xf32>
    %c0_4 = arith.constant 0 : index
    %c0_5 = arith.constant 0 : index
    %4 = vector.load %arg3[%c0_4, %c0_5] : memref<1x1xf32, #tpu.memory_space<vmem>>, vector<1x1xf32>
    %5 = vector.broadcast %4 : vector<1x1xf32> to vector<1x16xf32>
    %6 = arith.addf %3, %5 : vector<1x16xf32>
    %7 = math.tanh %6 : vector<1x16xf32>
    %c0_6 = arith.constant 0 : index
    %c0_7 = arith.constant 0 : index
    %c0_8 = arith.constant 0 : index
    %8 = vector.load %arg5[%c0_6, %c0_7, %c0_8] : memref<1x1x16xf32, #tpu.memory_space<vmem>>, vector<1x1x16xf32>
    %9 = vector.shape_cast %8 : vector<1x1x16xf32> to vector<1x16xf32>
    %10 = vector.shape_cast %7 : vector<1x16xf32> to vector<1x1x16xf32>
    tpu.vector_store %arg5[%c0_6, %c0_7, %c0_8], %10 {strides = array<i32>} : memref<1x1x16xf32, #tpu.memory_space<vmem>>, vector<1x1x16xf32>,
    return
  }
  func.func @transform_0(%arg0: i32, %arg1: i32) -> (i32, i32) {
    %c0_i32 = arith.constant 0 : i32
    %c0_i32_0 = arith.constant 0 : i32
    %c0_i32_1 = arith.constant 0 : i32
    return %c0_i32, %c0_i32_0 : i32, i32
  }
  func.func @transform_1(%arg0: i32, %arg1: i32) -> (i32, i32) {
    %c0_i32 = arith.constant 0 : i32
    %c0_i32_0 = arith.constant 0 : i32
    %c0_i32_1 = arith.constant 0 : i32
    return %c0_i32, %c0_i32_0 : i32, i32
  }
  func.func @transform_2(%arg0: i32, %arg1: i32) -> (i32, i32, i32) {
    %c0_i32 = arith.constant 0 : i32
    %c0_i32_0 = arith.constant 0 : i32
    return %arg0, %c0_i32, %arg1 : i32, i32, i32
  }
  func.func @transform_3(%arg0: i32, %arg1: i32) -> (i32, i32, i32) {
    %c0_i32 = arith.constant 0 : i32
    %c0_i32_0 = arith.constant 0 : i32
    return %arg0, %c0_i32, %arg1 : i32, i32, i32
  }
}

</mosaic_0001>

<llo_original>
// kernel: wave_u_net_forward.9
$region0: #{wave_u_net_forward.9}
  #allocation0 [shape = 'u32[]', space=smem, size = 0x4, offset = 0x4, fixed_abs, tag = 'smem constant byte address 0x4 - core index']
  #allocation1 [shape = 'u32[144,128]{1,0:T(1,128)}', space=vmem, size = 0x12000, scoped, tag = 'internal scratch']
  #allocation2 [shape = 'f32[4,1]{1,0:T(4,128)}', space=vmem, size = 0x800, scoped, tag = 'scratch operand']
  #allocation3 [shape = 'f32[4,1]{1,0:T(4,128)}', space=vmem, size = 0x800, scoped, tag = 'scratch operand']
  %s0 = inlined_call_operand.vmem [shape: f32[15,4,1], index: 0, kind: input, shape index: {}]
  %s1 = inlined_call_operand.vmem [shape: f32[2,1,16], index: 1, kind: input, shape index: {}]
  %s2 = inlined_call_operand.vmem [shape: f32[2,1,1,7], index: 2, kind: input, shape index: {}, may-alias: {2,3}]
  %s3 = inlined_call_operand.vmem [shape: f32[2,1,1,7], index: 3, kind: input, shape index: {}, may-alias: {2,3}]
  %s4 = inlined_call_operand.vmem [shape: f32[4,1], index: 4, kind: input, shape index: {}]
  %s5 = inlined_call_operand.vmem [shape: f32[4,1], index: 5, kind: input, shape index: {}]
  %s6 = inlined_call_operand.vmem [shape: f32[4,1], index: 6, kind: output, shape index: {0}]
  %s7 = inlined_call_operand.vmem [shape: f32[4,1], index: 7, kind: output, shape index: {1}]
  %8 = xla_tuple %s6, %s7
  %s9 = sld [smem:[#allocation0]]
  $region73: #{wave_u_net_forward.9} parent=0
    _
  %s11 = ssub.s32 1, %s9
  %s12 = scalar_select 0, %s11, %s9
  loop: start=0, step=1, limit=4
  $region2: #{wave_u_net_forward.9} parent=0 // loop_pre_header
    _
  $region3: #{wave_u_net_forward.9} parent=0 // loop_header
    %s14 = sphi 0, %s18
    %p15 = scmp.ge.s32.totalorder %s14, 4
    %s21 = sphi 0, %s33
    %s22 = sphi 0, %s29
    %s23 = sphi 0, %s21
    %s24 = sphi 0, %s22
    %s25 = sphi 0, %s23
    %s26 = sphi 0, %s24
    %s34 = sphi 0, %s34
    %s36 = sphi 0, %s34
    %s37 = sphi 0, %s36
    %s51 = sphi 0, %s37
    %s59 = sphi 0, %s61
    %s62 = sphi 0, %s59
    %s63 = sphi 0, %s62
    %s79 = sphi 0, %s63
    %s87 = sphi 0, %s89
    %s90 = sphi 0, %s87
    %s91 = sphi 0, %s90
    %s107 = sphi 0, %s91
    %s115 = sphi 0, %s117
    %s118 = sphi 0, %s115
    %s119 = sphi 0, %s118
    %s135 = sphi 0, %s119
    %s139 = sphi 0, %s139
    %s141 = sphi 0, %s139
    %s142 = sphi 0, %s141
    %s156 = sphi 0, %s142
    %s160 = sphi 0, %s160
    %s162 = sphi 0, %s160
    %s163 = sphi 0, %s162
    %s177 = sphi 0, %s163
    %s181 = sphi 0, %s181
    %s183 = sphi 0, %s181
    %s184 = sphi 0, %s183
    %s198 = sphi 0, %s184
    %s202 = sphi 0, %s202
    %s204 = sphi 0, %s202
    %s205 = sphi 0, %s204
    %s219 = sphi 0, %s205
  $region4: #{wave_u_net_forward.9} parent=0 // loop_header_branch
    %17 = sbr.rel (%p15) target = $region8
  $region5: #{wave_u_net_forward.9} parent=0 // loop_body
    %s19 = ssub.s32 %s14, 1
    %s20 = ssub.s32 %s14, 2
    %s27 = sadd.s32 1, %s22
    %p28 = scmp.ge.s32.totalorder %s27, 1
    %s29 = scalar_select %p28, 0, %s27
    %s30 = sadd.s32 1, %s21
    %s31 = scalar_select %p28, %s30, %s21
    %p32 = scmp.ge.s32.totalorder %s31, 2
    %s33 = scalar_select %p32, 0, %s31
    %s35 = sadd.s32 %s34, 1
    %p38 = scmp.eq.s32.totalorder %s14, 1
    %p39 = scmp.ne.s32.totalorder %s34, %s36
    %p40 = scmp.eq.s32.totalorder %s14, 0
    %p41 = por %p39, %p40
    %p42 = scmp.ne.s32.totalorder %s34, %s36
    %p43 = scmp.eq.s32.totalorder %s19, 1
    %p44 = por %p42, %p43
    %p45 = scmp.ne.s32.totalorder %s36, %s37
    %p46 = scmp.eq.s32.totalorder %s19, 0
    %p47 = por %p45, %p46
    %p48 = scmp.ne.s32.totalorder %s36, %s37
    %p49 = scmp.eq.s32.totalorder %s20, 1
    %p50 = por %p48, %p49
    %p52 = scmp.ne.s32.totalorder %s37, %s51
    %p53 = scmp.eq.s32.totalorder %s20, 0
    %p54 = por %p52, %p53
    %s55 = ssub.s32 %s21, %s33
    %s56 = ssub.s32 %s22, %s29
    %s57 = sor.u32 %s55, %s56
    %p58 = scmp.eq.s32.totalorder %s57, 0
    %s60 = sadd.s32 %s59, 1
    %s61 = scalar_select %p58, %s59, %s60
    %p64 = pneg %p58
    %p65 = scmp.eq.s32.totalorder %s14, 1
    %p66 = por %p64, %p65
    %p67 = scmp.ne.s32.totalorder %s59, %s62
    %p68 = scmp.eq.s32.totalorder %s14, 0
    %p69 = por %p67, %p68
    %p70 = scmp.ne.s32.totalorder %s59, %s62
    %p71 = scmp.eq.s32.totalorder %s19, 1
    %p72 = por %p70, %p71
    %p73 = scmp.ne.s32.totalorder %s62, %s63
    %p74 = scmp.eq.s32.totalorder %s19, 0
    %p75 = por %p73, %p74
    %p76 = scmp.ne.s32.totalorder %s62, %s63
    %p77 = scmp.eq.s32.totalorder %s20, 1
    %p78 = por %p76, %p77
    %p80 = scmp.ne.s32.totalorder %s63, %s79
    %p81 = scmp.eq.s32.totalorder %s20, 0
    %p82 = por %p80, %p81
    %s83 = ssub.s32 %s21, %s33
    %s84 = ssub.s32 %s22, %s29
    %s85 = sor.u32 %s83, %s84
    %p86 = scmp.eq.s32.totalorder %s85, 0
    %s88 = sadd.s32 %s87, 1
    %s89 = scalar_select %p86, %s87, %s88
    %p92 = pneg %p86
    %p93 = scmp.eq.s32.totalorder %s14, 1
    %p94 = por %p92, %p93
    %p95 = scmp.ne.s32.totalorder %s87, %s90
    %p96 = scmp.eq.s32.totalorder %s14, 0
    %p97 = por %p95, %p96
    %p98 = scmp.ne.s32.totalorder %s87, %s90
    %p99 = scmp.eq.s32.totalorder %s19, 1
    %p100 = por %p98, %p99
    %p101 = scmp.ne.s32.totalorder %s90, %s91
    %p102 = scmp.eq.s32.totalorder %s19, 0
    %p103 = por %p101, %p102
    %p104 = scmp.ne.s32.totalorder %s90, %s91
    %p105 = scmp.eq.s32.totalorder %s20, 1
    %p106 = por %p104, %p105
    %p108 = scmp.ne.s32.totalorder %s91, %s107
    %p109 = scmp.eq.s32.totalorder %s20, 0
    %p110 = por %p108, %p109
    %s111 = ssub.s32 %s21, %s33
    %s112 = ssub.s32 %s22, %s29
    %s113 = sor.u32 %s111, %s112
    %p114 = scmp.eq.s32.totalorder %s113, 0
    %s116 = sadd.s32 %s115, 1
    %s117 = scalar_select %p114, %s115, %s116
    %p120 = pneg %p114
    %p121 = scmp.eq.s32.totalorder %s14, 1
    %p122 = por %p120, %p121
    %p123 = scmp.ne.s32.totalorder %s115, %s118
    %p124 = scmp.eq.s32.totalorder %s14, 0
    %p125 = por %p123, %p124
    %p126 = scmp.ne.s32.totalorder %s115, %s118
    %p127 = scmp.eq.s32.totalorder %s19, 1
    %p128 = por %p126, %p127
    %p129 = scmp.ne.s32.totalorder %s118, %s119
    %p130 = scmp.eq.s32.totalorder %s19, 0
    %p131 = por %p129, %p130
    %p132 = scmp.ne.s32.totalorder %s118, %s119
    %p133 = scmp.eq.s32.totalorder %s20, 1
    %p134 = por %p132, %p133
    %p136 = scmp.ne.s32.totalorder %s119, %s135
    %p137 = scmp.eq.s32.totalorder %s20, 0
    %p138 = por %p136, %p137
    %s140 = sadd.s32 %s139, 1
    %p143 = scmp.eq.s32.totalorder %s14, 1
    %p144 = scmp.ne.s32.totalorder %s139, %s141
    %p145 = scmp.eq.s32.totalorder %s14, 0
    %p146 = por %p144, %p145
    %p147 = scmp.ne.s32.totalorder %s139, %s141
    %p148 = scmp.eq.s32.totalorder %s19, 1
    %p149 = por %p147, %p148
    %p150 = scmp.ne.s32.totalorder %s141, %s142
    %p151 = scmp.eq.s32.totalorder %s19, 0
    %p152 = por %p150, %p151
    %p153 = scmp.ne.s32.totalorder %s141, %s142
    %p154 = scmp.eq.s32.totalorder %s20, 1
    %p155 = por %p153, %p154
    %p157 = scmp.ne.s32.totalorder %s142, %s156
    %p158 = scmp.eq.s32.totalorder %s20, 0
    %p159 = por %p157, %p158
    %s161 = sadd.s32 %s160, 1
    %p164 = scmp.eq.s32.totalorder %s14, 1
    %p165 = scmp.ne.s32.totalorder %s160, %s162
    %p166 = scmp.eq.s32.totalorder %s14, 0
    %p167 = por %p165, %p166
    %p168 = scmp.ne.s32.totalorder %s160, %s162
    %p169 = scmp.eq.s32.totalorder %s19, 1
    %p170 = por %p168, %p169
    %p171 = scmp.ne.s32.totalorder %s162, %s163
    %p172 = scmp.eq.s32.totalorder %s19, 0
    %p173 = por %p171, %p172
    %p174 = scmp.ne.s32.totalorder %s162, %s163
    %p175 = scmp.eq.s32.totalorder %s20, 1
    %p176 = por %p174, %p175
    %p178 = scmp.ne.s32.totalorder %s163, %s177
    %p179 = scmp.eq.s32.totalorder %s20, 0
    %p180 = por %p178, %p179
    %s182 = sadd.s32 %s181, 1
    %p185 = scmp.eq.s32.totalorder %s14, 1
    %p186 = scmp.ne.s32.totalorder %s181, %s183
    %p187 = scmp.eq.s32.totalorder %s14, 0
    %p188 = por %p186, %p187
    %p189 = scmp.ne.s32.totalorder %s181, %s183
    %p190 = scmp.eq.s32.totalorder %s19, 1
    %p191 = por %p189, %p190
    %p192 = scmp.ne.s32.totalorder %s183, %s184
    %p193 = scmp.eq.s32.totalorder %s19, 0
    %p194 = por %p192, %p193
    %p195 = scmp.ne.s32.totalorder %s183, %s184
    %p196 = scmp.eq.s32.totalorder %s20, 1
    %p197 = por %p195, %p196
    %p199 = scmp.ne.s32.totalorder %s184, %s198
    %p200 = scmp.eq.s32.totalorder %s20, 0
    %p201 = por %p199, %p200
    %s203 = sadd.s32 %s202, 1
    %p206 = scmp.eq.s32.totalorder %s14, 1
    %p207 = scmp.ne.s32.totalorder %s202, %s204
    %p208 = scmp.eq.s32.totalorder %s14, 0
    %p209 = por %p207, %p208
    %p210 = scmp.ne.s32.totalorder %s202, %s204
    %p211 = scmp.eq.s32.totalorder %s19, 1
    %p212 = por %p210, %p211
    %p213 = scmp.ne.s32.totalorder %s204, %s205
    %p214 = scmp.eq.s32.totalorder %s19, 0
    %p215 = por %p213, %p214
    %p216 = scmp.ne.s32.totalorder %s204, %s205
    %p217 = scmp.eq.s32.totalorder %s20, 1
    %p218 = por %p216, %p217
    %p220 = scmp.ne.s32.totalorder %s205, %s219
    %p221 = scmp.eq.s32.totalorder %s20, 0
    %p222 = por %p220, %p221
    %p223 = scmp.le.s32.totalorder 1, %s14
    %p224 = scmp.lt.s32.totalorder %s14, 3
    %p225 = pnand %p223, %p224
    %p226 = pneg %p225
    // Predicated region
    $region9: #{wave_u_net_forward.9} parent=5 // pred_check
      _
    $region10: #{wave_u_net_forward.9} parent=5 // pred_check_branch
      %228 = sbr.rel (%p225) target = $region12
    $region11: #{wave_u_net_forward.9} parent=5 // pred_region
      %s229 = ssub.s32 %s14, 1
      // Predicated region
      $region13: #{wave_u_net_forward.9} parent=11 // pred_check
        %p230 = pneg %p47
      $region14: #{wave_u_net_forward.9} parent=11 // pred_check_branch
        %232 = sbr.rel (%p230) target = $region16
      $region15: #{wave_u_net_forward.9} parent=11 // pred_region
        _
      $region16: #{wave_u_net_forward.9} parent=11 // pred_fallthru
        _
      // Predicated region
      $region17: #{wave_u_net_forward.9} parent=11 // pred_check
        %p233 = pneg %p152
      $region18: #{wave_u_net_forward.9} parent=11 // pred_check_branch
        %235 = sbr.rel (%p233) target = $region20
      $region19: #{wave_u_net_forward.9} parent=11 // pred_region
        _
      $region20: #{wave_u_net_forward.9} parent=11 // pred_fallthru
        _
      // Predicated region
      $region21: #{wave_u_net_forward.9} parent=11 // pred_check
        %p236 = pneg %p173
      $region22: #{wave_u_net_forward.9} parent=11 // pred_check_branch
        %238 = sbr.rel (%p236) target = $region24
      $region23: #{wave_u_net_forward.9} parent=11 // pred_region
        _
      $region24: #{wave_u_net_forward.9} parent=11 // pred_fallthru
        _
    $region12: #{wave_u_net_forward.9} parent=5 // pred_fallthru
      _
    %p239 = scmp.lt.s32.totalorder %s14, 2
    // Predicated region
    $region25: #{wave_u_net_forward.9} parent=5 // pred_check
      %p240 = pneg %p239
    $region26: #{wave_u_net_forward.9} parent=5 // pred_check_branch
      %242 = sbr.rel (%p240) target = $region28
    $region27: #{wave_u_net_forward.9} parent=5 // pred_region
      // Predicated region
      $region29: #{wave_u_net_forward.9} parent=27 // pred_check
        %p243 = pneg %p69
      $region30: #{wave_u_net_forward.9} parent=27 // pred_check_branch
        %245 = sbr.rel (%p243) target = $region32
      $region31: #{wave_u_net_forward.9} parent=27 // pred_region
        %p246 = scmp.lt.s32.totalorder %s21, 1
        %s247 = scalar_select %p246, %s21, 1
        %p248 = scmp.lt.s32.totalorder %s22, 0
        %s249 = scalar_select %p248, %s22, 0
        %s250 = sadd.s32 %s249, %s247
        %s251 = scalar_lea.vmem %s1, %s250
      $region32: #{wave_u_net_forward.9} parent=27 // pred_fallthru
        _
      // Predicated region
      $region33: #{wave_u_net_forward.9} parent=27 // pred_check
        %p252 = pneg %p97
      $region34: #{wave_u_net_forward.9} parent=27 // pred_check_branch
        %254 = sbr.rel (%p252) target = $region36
      $region35: #{wave_u_net_forward.9} parent=27 // pred_region
        %p255 = scmp.lt.s32.totalorder %s21, 1
        %s256 = scalar_select %p255, %s21, 1
        %p257 = scmp.lt.s32.totalorder %s22, 0
        %s258 = scalar_select %p257, %s22, 0
        %s259 = sadd.s32 %s258, %s256
        %s260 = scalar_lea.vmem %s2, %s259
      $region36: #{wave_u_net_forward.9} parent=27 // pred_fallthru
        _
      // Predicated region
      $region37: #{wave_u_net_forward.9} parent=27 // pred_check
        %p261 = pneg %p125
      $region38: #{wave_u_net_forward.9} parent=27 // pred_check_branch
        %263 = sbr.rel (%p261) target = $region40
      $region39: #{wave_u_net_forward.9} parent=27 // pred_region
        %p264 = scmp.lt.s32.totalorder %s21, 1
        %s265 = scalar_select %p264, %s21, 1
        %p266 = scmp.lt.s32.totalorder %s22, 0
        %s267 = scalar_select %p266, %s22, 0
        %s268 = sadd.s32 %s267, %s265
        %s269 = scalar_lea.vmem %s3, %s268
      $region40: #{wave_u_net_forward.9} parent=27 // pred_fallthru
        _
    $region28: #{wave_u_net_forward.9} parent=5 // pred_fallthru
      _
    %p270 = scmp.le.s32.totalorder 1, %s14
    %p271 = scmp.lt.s32.totalorder %s14, 3
    %p272 = pnand %p270, %p271
    %p273 = pneg %p272
    // Predicated region
    $region41: #{wave_u_net_forward.9} parent=5 // pred_check
      _
    $region42: #{wave_u_net_forward.9} parent=5 // pred_check_branch
      %275 = sbr.rel (%p272) target = $region44
    $region43: #{wave_u_net_forward.9} parent=5 // pred_region
      %s276 = ssub.s32 %s14, 1
      %p277 = pneg %p47
      %p278 = pneg %p44
      %p279 = scmp.lt.s32.totalorder %s23, 1
      %s280 = scalar_select %p279, %s23, 1
      %p281 = scmp.lt.s32.totalorder %s24, 0
      %s282 = scalar_select %p281, %s24, 0
      %s283 = sadd.s32 %s282, %s280
      %s284 = scalar_lea.vmem %s1, %s283
      %p285 = pneg %p75
      %p286 = pneg %p72
      %p287 = scmp.lt.s32.totalorder %s23, 1
      %s288 = scalar_select %p287, %s23, 1
      %p289 = scmp.lt.s32.totalorder %s24, 0
      %s290 = scalar_select %p289, %s24, 0
      %s291 = sadd.s32 %s290, %s288
      %s292 = scalar_lea.vmem %s2, %s291
      %p293 = pneg %p103
      %p294 = pneg %p100
      %p295 = scmp.lt.s32.totalorder %s23, 1
      %s296 = scalar_select %p295, %s23, 1
      %p297 = scmp.lt.s32.totalorder %s24, 0
      %s298 = scalar_select %p297, %s24, 0
      %s299 = sadd.s32 %s298, %s296
      %s300 = scalar_lea.vmem %s3, %s299
      %p301 = pneg %p131
      %p302 = pneg %p128
      %p303 = pneg %p152
      %p304 = pneg %p149
      %p305 = pneg %p173
      %p306 = pneg %p170
      %p307 = pneg %p194
      %p308 = pneg %p191
      %p309 = pneg %p215
      %p310 = pneg %p212
      %p311 = scmp.lt.s32.totalorder %s23, 1
      %s312 = scalar_select %p311, %s23, 1
      %p313 = scmp.lt.s32.totalorder %s24, 0
      %s314 = scalar_select %p313, %s24, 0
      %s315 = sadd.s32 %s314, %s312
      %s316 = scalar_lea.vmem %s1, %s315
      %p317 = scmp.lt.s32.totalorder %s23, 1
      %s318 = scalar_select %p317, %s23, 1
      %p319 = scmp.lt.s32.totalorder %s24, 0
      %s320 = scalar_select %p319, %s24, 0
      %s321 = sadd.s32 %s320, %s318
      %s322 = scalar_lea.vmem %s2, %s321
      %p323 = scmp.lt.s32.totalorder %s23, 1
      %s324 = scalar_select %p323, %s23, 1
      %p325 = scmp.lt.s32.totalorder %s24, 0
      %s326 = scalar_select %p325, %s24, 0
      %s327 = sadd.s32 %s326, %s324
      %s328 = scalar_lea.vmem %s3, %s327
      %p329 = scmp.eq.s32.totalorder %s23, 0
      %p330 = scmp.eq.s32.totalorder %s24, 0
      %p331 = pnand %p329, %p330
      %p332 = pneg %p331
      // Predicated region
      $region45: #{wave_u_net_forward.9} parent=43 // pred_check
        _
      $region46: #{wave_u_net_forward.9} parent=43 // pred_check_branch
        %334 = sbr.rel (%p331) target = $region48
      $region47: #{wave_u_net_forward.9} parent=43 // pred_region
        %vm335 = vcmask 3072
        %336 = vst.msk [vmem:[#allocation2] sm:$0xf] %vm335, 0.0
        %337 = vst.msk [vmem:[#allocation3] sm:$0xf] %vm335, 0.0
      $region48: #{wave_u_net_forward.9} parent=43 // pred_fallthru
        _
      %v338 = vld [vmem:[%s322] sm:$0x1]
      %v339 = vld [vmem:[%s316] sm:$0x1]
      %v340 = vld [vmem:[%s328] sm:$0x1]
      %v342 = vlaneseq
      %v343 = vshrl.u32 %v342, 7
      %v344 = vsub.s32 0, %v343
      %v345 = vrot.slane %v339, %v344
      %346 = vrot.lane.b32.xlu0 %v345, 7
      %v347 = vpop.permute.xlu0 %346
      %v350 = vlaneseq
      %v351 = vshrl.u32 %v350, 7
      %v352 = vsub.s32 0, %v351
      %v353 = vrot.slane %v340, %v352
      %354 = vrot.lane.b32.xlu0 %v353, 23
      %v355 = vpop.permute.xlu0 %354
      %vm357 = vcmask 56320
      %v358 = vsel %vm357, %v338, %v347
      %vm359 = vcmask 187392
      %v360 = vsel %vm359, %v358, %v355
      %v361 = vld [vmem:[%s0] sm:$0xf]
      %363 = vset.pattern.permute.xlu0 0
      %364 = vperm.xlu0 %363, %v361
      %v365 = vpop.permute.xlu0 %364
      %v367 = vlaneseq
      %v368 = vshrl.u32 %v367, 7
      %v369 = vsub.s32 0, %v368
      %v370 = vrot.slane %v360, %v369
      %v371 = vmul.f32 %v365, %v370
      %v372 = vadd.f32 %v371, 0.0
      %s373 = scalar_lea.vmem %s0, 4
      %v374 = vld [vmem:[%s373] sm:$0xf]
      %376 = vset.pattern.permute.xlu0 0
      %377 = vperm.xlu0 %376, %v374
      %v378 = vpop.permute.xlu0 %377
      %v380 = vmul.f32 %v378, %v370
      %382 = vrot.lane.b32.xlu0 %v380, 127
      %v383 = vpop.permute.xlu0 %382
      %v385 = vadd.f32 %v372, %v383
      %s386 = scalar_lea.vmem %s0, 8
      %v387 = vld [vmem:[%s386] sm:$0xf]
      %389 = vset.pattern.permute.xlu0 0
      %390 = vperm.xlu0 %389, %v387
      %v391 = vpop.permute.xlu0 %390
      %v393 = vmul.f32 %v391, %v370
      %395 = vrot.lane.b32.xlu0 %v393, 126
      %v396 = vpop.permute.xlu0 %395
      %v398 = vadd.f32 %v385, %v396
      %s399 = scalar_lea.vmem %s0, 12
      %v400 = vld [vmem:[%s399] sm:$0xf]
      %402 = vset.pattern.permute.xlu0 0
      %403 = vperm.xlu0 %402, %v400
      %v404 = vpop.permute.xlu0 %403
      %v406 = vmul.f32 %v404, %v370
      %408 = vrot.lane.b32.xlu0 %v406, 125
      %v409 = vpop.permute.xlu0 %408
      %v411 = vadd.f32 %v398, %v409
      %s412 = scalar_lea.vmem %s0, 16
      %v413 = vld [vmem:[%s412] sm:$0xf]
      %415 = vset.pattern.permute.xlu0 0
      %416 = vperm.xlu0 %415, %v413
      %v417 = vpop.permute.xlu0 %416
      %v419 = vmul.f32 %v417, %v370
      %421 = vrot.lane.b32.xlu0 %v419, 124
      %v422 = vpop.permute.xlu0 %421
      %v424 = vadd.f32 %v411, %v422
      %s425 = scalar_lea.vmem %s0, 20
      %v426 = vld [vmem:[%s425] sm:$0xf]
      %428 = vset.pattern.permute.xlu0 0
      %429 = vperm.xlu0 %428, %v426
      %v430 = vpop.permute.xlu0 %429
      %v432 = vmul.f32 %v430, %v370
      %434 = vrot.lane.b32.xlu0 %v432, 123
      %v435 = vpop.permute.xlu0 %434
      %v437 = vadd.f32 %v424, %v435
      %s438 = scalar_lea.vmem %s0, 24
      %v439 = vld [vmem:[%s438] sm:$0xf]
      %441 = vset.pattern.permute.xlu0 0
      %442 = vperm.xlu0 %441, %v439
      %v443 = vpop.permute.xlu0 %442
      %v445 = vmul.f32 %v443, %v370
      %447 = vrot.lane.b32.xlu0 %v445, 122
      %v448 = vpop.permute.xlu0 %447
      %v450 = vadd.f32 %v437, %v448
      %s451 = scalar_lea.vmem %s0, 28
      %v452 = vld [vmem:[%s451] sm:$0xf]
      %454 = vset.pattern.permute.xlu0 0
      %455 = vperm.xlu0 %454, %v452
      %v456 = vpop.permute.xlu0 %455
      %v458 = vmul.f32 %v456, %v370
      %460 = vrot.lane.b32.xlu0 %v458, 121
      %v461 = vpop.permute.xlu0 %460
      %v463 = vadd.f32 %v450, %v461
      %s464 = scalar_lea.vmem %s0, 32
      %v465 = vld [vmem:[%s464] sm:$0xf]
      %467 = vset.pattern.permute.xlu0 0
      %468 = vperm.xlu0 %467, %v465
      %v469 = vpop.permute.xlu0 %468
      %v471 = vmul.f32 %v469, %v370
      %473 = vrot.lane.b32.xlu0 %v471, 120
      %v474 = vpop.permute.xlu0 %473
      %v476 = vadd.f32 %v463, %v474
      %s477 = scalar_lea.vmem %s0, 36
      %v478 = vld [vmem:[%s477] sm:$0xf]
      %480 = vset.pattern.permute.xlu0 0
      %481 = vperm.xlu0 %480, %v478
      %v482 = vpop.permute.xlu0 %481
      %v484 = vmul.f32 %v482, %v370
      %486 = vrot.lane.b32.xlu0 %v484, 119
      %v487 = vpop.permute.xlu0 %486
      %v489 = vadd.f32 %v476, %v487
      %s490 = scalar_lea.vmem %s0, 40
      %v491 = vld [vmem:[%s490] sm:$0xf]
      %493 = vset.pattern.permute.xlu0 0
      %494 = vperm.xlu0 %493, %v491
      %v495 = vpop.permute.xlu0 %494
      %v497 = vmul.f32 %v495, %v370
      %499 = vrot.lane.b32.xlu0 %v497, 118
      %v500 = vpop.permute.xlu0 %499
      %v502 = vadd.f32 %v489, %v500
      %s503 = scalar_lea.vmem %s0, 44
      %v504 = vld [vmem:[%s503] sm:$0xf]
      %506 = vset.pattern.permute.xlu0 0
      %507 = vperm.xlu0 %506, %v504
      %v508 = vpop.permute.xlu0 %507
      %v510 = vmul.f32 %v508, %v370
      %512 = vrot.lane.b32.xlu0 %v510, 117
      %v513 = vpop.permute.xlu0 %512
      %v515 = vadd.f32 %v502, %v513
      %s516 = scalar_lea.vmem %s0, 48
      %v517 = vld [vmem:[%s516] sm:$0xf]
      %519 = vset.pattern.permute.xlu0 0
      %520 = vperm.xlu0 %519, %v517
      %v521 = vpop.permute.xlu0 %520
      %v523 = vmul.f32 %v521, %v370
      %525 = vrot.lane.b32.xlu0 %v523, 116
      %v526 = vpop.permute.xlu0 %525
      %v528 = vadd.f32 %v515, %v526
      %s529 = scalar_lea.vmem %s0, 52
      %v530 = vld [vmem:[%s529] sm:$0xf]
      %532 = vset.pattern.permute.xlu0 0
      %533 = vperm.xlu0 %532, %v530
      %v534 = vpop.permute.xlu0 %533
      %v536 = vmul.f32 %v534, %v370
      %538 = vrot.lane.b32.xlu0 %v536, 115
      %v539 = vpop.permute.xlu0 %538
      %v541 = vadd.f32 %v528, %v539
      %s542 = scalar_lea.vmem %s0, 56
      %v543 = vld [vmem:[%s542] sm:$0xf]
      %545 = vset.pattern.permute.xlu0 0
      %546 = vperm.xlu0 %545, %v543
      %v547 = vpop.permute.xlu0 %546
      %v549 = vmul.f32 %v547, %v370
      %551 = vrot.lane.b32.xlu0 %v549, 114
      %v552 = vpop.permute.xlu0 %551
      %v554 = vadd.f32 %v541, %v552
      %vm555 = vcmask 125952
      %v556 = vsel %vm555, %v554, 0.0
      %557 = vadd.xlane.f32.xlu0 %v556
      %v558 = vpop.xlane.xlu0 %557
      %v559 = vmul.f32 %v558, 0.0625
      %v560 = vsub.f32 %v554, %v559
      %v561 = vmul.f32 %v560, %v560
      %v562 = vsel %vm555, %v561, 0.0
      %563 = vadd.xlane.f32.xlu0 %v562
      %v564 = vpop.xlane.xlu0 %563
      %s565 = sadd.s32 %s23, %s24
      %s566 = smul.u32 %s565, 16
      %s567 = scvt.s32.f32 %s566
      %s568 = sadd.f32 %s567, 16.0
      %v569 = vld [vmem:[#allocation2] sm:$0xf]
      %v570 = vsub.f32 %v559, %v569
      %v571 = vstv %s568
      %v572 = vrcp.pop %v571
      %s573 = vtos %v572
      %s574 = smul.f32 16.0, %s573
      %v575 = vstv %s574
      %v576 = vmul.f32 %v570, %v575
      %v577 = vadd.f32 %v569, %v576
      %vm578 = vcmask 3072
      %579 = vst.msk [vmem:[#allocation2] sm:$0xf] %vm578, %v577
      %v580 = vld [vmem:[#allocation3] sm:$0xf]
      %v581 = vadd.f32 %v580, %v564
      %v582 = vmul.f32 %v570, %v570
      %s583 = smul.f32 %s567, 16.0
      %v584 = vstv %s568
      %v585 = vrcp.pop %v584
      %s586 = vtos %v585
      %s587 = smul.f32 %s583, %s586
      %v588 = vstv %s587
      %v589 = vmul.f32 %v582, %v588
      %v590 = vadd.f32 %v581, %v589
      %591 = vst.msk [vmem:[#allocation3] sm:$0xf] %vm578, %v590
      %p592 = scmp.eq.s32.totalorder %s23, 1
      %p593 = pnand %p592, %p330
      %p594 = pneg %p593
      // Predicated region
      $region49: #{wave_u_net_forward.9} parent=43 // pred_check
        _
      $region50: #{wave_u_net_forward.9} parent=43 // pred_check_branch
        %596 = sbr.rel (%p593) target = $region52
      $region51: #{wave_u_net_forward.9} parent=43 // pred_region
        %v597 = vld [vmem:[#allocation2] sm:$0xf]
        %v598 = vld [vmem:[#allocation3] sm:$0xf]
        %v599 = vmul.f32 %v598, 0.03125
        %v600 = vadd.f32 %v599, 1e-05
        %v601 = vrsqrt.pop %v600
        %v602 = vld [vmem:[%s4] sm:$0xf]
        %v603 = vmul.f32 %v602, %v601
        %604 = vst.msk [vmem:[%s6] sm:$0xf] %vm578, %v603
        %v605 = vld [vmem:[%s5] sm:$0xf]
        %v606 = vmul.f32 %v597, %v603
        %v607 = vsub.f32 %v605, %v606
        %608 = vst.msk [vmem:[%s7] sm:$0xf] %vm578, %v607
      $region52: #{wave_u_net_forward.9} parent=43 // pred_fallthru
        _
      // Predicated region
      $region53: #{wave_u_net_forward.9} parent=43 // pred_check
        %p609 = pneg %p191
      $region54: #{wave_u_net_forward.9} parent=43 // pred_check_branch
        %611 = sbr.rel (%p609) target = $region56
      $region55: #{wave_u_net_forward.9} parent=43 // pred_region
        _
      $region56: #{wave_u_net_forward.9} parent=43 // pred_fallthru
        _
      // Predicated region
      $region57: #{wave_u_net_forward.9} parent=43 // pred_check
        %p612 = pneg %p212
      $region58: #{wave_u_net_forward.9} parent=43 // pred_check_branch
        %614 = sbr.rel (%p612) target = $region60
      $region59: #{wave_u_net_forward.9} parent=43 // pred_region
        _
      $region60: #{wave_u_net_forward.9} parent=43 // pred_fallthru
        _
      // Predicated region
      $region61: #{wave_u_net_forward.9} parent=43 // pred_check
        %p615 = pneg %p191
      $region62: #{wave_u_net_forward.9} parent=43 // pred_check_branch
        %617 = sbr.rel (%p615) target = $region64
      $region63: #{wave_u_net_forward.9} parent=43 // pred_region
        _
      $region64: #{wave_u_net_forward.9} parent=43 // pred_fallthru
        _
      // Predicated region
      $region65: #{wave_u_net_forward.9} parent=43 // pred_check
        %p618 = pneg %p212
      $region66: #{wave_u_net_forward.9} parent=43 // pred_check_branch
        %620 = sbr.rel (%p618) target = $region68
      $region67: #{wave_u_net_forward.9} parent=43 // pred_region
        _
      $region68: #{wave_u_net_forward.9} parent=43 // pred_fallthru
        _
    $region44: #{wave_u_net_forward.9} parent=5 // pred_fallthru
      _
    %p621 = scmp.le.s32.totalorder 2, %s14
    // Predicated region
    $region69: #{wave_u_net_forward.9} parent=5 // pred_check
      %p622 = pneg %p621
    $region70: #{wave_u_net_forward.9} parent=5 // pred_check_branch
      %624 = sbr.rel (%p622) target = $region72
    $region71: #{wave_u_net_forward.9} parent=5 // pred_region
      %s625 = ssub.s32 %s14, 2
    $region72: #{wave_u_net_forward.9} parent=5 // pred_fallthru
      _
  $region6: #{wave_u_net_forward.9} parent=0 // loop_footer
    %s18 = sadd.s32 1, %s14
  $region7: #{wave_u_net_forward.9} parent=0 // loop_footer_branch
    %13 = sbr.rel target = $region3
  $region8: #{wave_u_net_forward.9} parent=0 // loop_exit
    _

// kernel: wave_u_net_forward.10
$region0: #{wave_u_net_forward.10}
  #allocation0 [shape = 'u32[]', space=smem, size = 0x4, offset = 0x4, fixed_abs, tag = 'smem constant byte address 0x4 - core index']
  #allocation1 [shape = 'u32[144,128]{1,0:T(1,128)}', space=vmem, size = 0x12000, scoped, tag = 'internal scratch']
  %s0 = inlined_call_operand.vmem [shape: f32[15,4,1], index: 0, kind: input, shape index: {}]
  %s1 = inlined_call_operand.vmem [shape: f32[2,1,16], index: 1, kind: input, shape index: {}]
  %s2 = inlined_call_operand.vmem [shape: f32[2,1,1,7], index: 2, kind: input, shape index: {}, may-alias: {2,3}]
  %s3 = inlined_call_operand.vmem [shape: f32[2,1,1,7], index: 3, kind: input, shape index: {}, may-alias: {2,3}]
  %s4 = inlined_call_operand.vmem [shape: f32[4,1], index: 4, kind: input, shape index: {}]
  %s5 = inlined_call_operand.vmem [shape: f32[4,1], index: 5, kind: input, shape index: {}]
  %s6 = inlined_call_operand.vmem [shape: f32[2,4,16], index: 6, kind: output, shape index: {}]
  %s7 = sld [smem:[#allocation0]]
  $region57: #{wave_u_net_forward.10} parent=0
    _
  %s9 = ssub.s32 1, %s7
  %s10 = scalar_select 0, %s9, %s7
  loop: start=0, step=1, limit=4
  $region2: #{wave_u_net_forward.10} parent=0 // loop_pre_header
    _
  $region3: #{wave_u_net_forward.10} parent=0 // loop_header
    %s12 = sphi 0, %s16
    %p13 = scmp.ge.s32.totalorder %s12, 4
    %s19 = sphi 0, %s31
    %s20 = sphi 0, %s27
    %s21 = sphi 0, %s19
    %s22 = sphi 0, %s20
    %s23 = sphi 0, %s21
    %s24 = sphi 0, %s22
    %s32 = sphi 0, %s32
    %s34 = sphi 0, %s32
    %s35 = sphi 0, %s34
    %s49 = sphi 0, %s35
    %s57 = sphi 0, %s59
    %s60 = sphi 0, %s57
    %s61 = sphi 0, %s60
    %s77 = sphi 0, %s61
    %s85 = sphi 0, %s87
    %s88 = sphi 0, %s85
    %s89 = sphi 0, %s88
    %s105 = sphi 0, %s89
    %s113 = sphi 0, %s115
    %s116 = sphi 0, %s113
    %s117 = sphi 0, %s116
    %s133 = sphi 0, %s117
    %s137 = sphi 0, %s137
    %s139 = sphi 0, %s137
    %s140 = sphi 0, %s139
    %s154 = sphi 0, %s140
    %s158 = sphi 0, %s158
    %s160 = sphi 0, %s158
    %s161 = sphi 0, %s160
    %s175 = sphi 0, %s161
    %s183 = sphi 0, %s185
    %s186 = sphi 0, %s183
    %s187 = sphi 0, %s186
    %s203 = sphi 0, %s187
  $region4: #{wave_u_net_forward.10} parent=0 // loop_header_branch
    %15 = sbr.rel (%p13) target = $region8
  $region5: #{wave_u_net_forward.10} parent=0 // loop_body
    %s17 = ssub.s32 %s12, 1
    %s18 = ssub.s32 %s12, 2
    %s25 = sadd.s32 1, %s20
    %p26 = scmp.ge.s32.totalorder %s25, 1
    %s27 = scalar_select %p26, 0, %s25
    %s28 = sadd.s32 1, %s19
    %s29 = scalar_select %p26, %s28, %s19
    %p30 = scmp.ge.s32.totalorder %s29, 2
    %s31 = scalar_select %p30, 0, %s29
    %s33 = sadd.s32 %s32, 1
    %p36 = scmp.eq.s32.totalorder %s12, 1
    %p37 = scmp.ne.s32.totalorder %s32, %s34
    %p38 = scmp.eq.s32.totalorder %s12, 0
    %p39 = por %p37, %p38
    %p40 = scmp.ne.s32.totalorder %s32, %s34
    %p41 = scmp.eq.s32.totalorder %s17, 1
    %p42 = por %p40, %p41
    %p43 = scmp.ne.s32.totalorder %s34, %s35
    %p44 = scmp.eq.s32.totalorder %s17, 0
    %p45 = por %p43, %p44
    %p46 = scmp.ne.s32.totalorder %s34, %s35
    %p47 = scmp.eq.s32.totalorder %s18, 1
    %p48 = por %p46, %p47
    %p50 = scmp.ne.s32.totalorder %s35, %s49
    %p51 = scmp.eq.s32.totalorder %s18, 0
    %p52 = por %p50, %p51
    %s53 = ssub.s32 %s19, %s31
    %s54 = ssub.s32 %s20, %s27
    %s55 = sor.u32 %s53, %s54
    %p56 = scmp.eq.s32.totalorder %s55, 0
    %s58 = sadd.s32 %s57, 1
    %s59 = scalar_select %p56, %s57, %s58
    %p62 = pneg %p56
    %p63 = scmp.eq.s32.totalorder %s12, 1
    %p64 = por %p62, %p63
    %p65 = scmp.ne.s32.totalorder %s57, %s60
    %p66 = scmp.eq.s32.totalorder %s12, 0
    %p67 = por %p65, %p66
    %p68 = scmp.ne.s32.totalorder %s57, %s60
    %p69 = scmp.eq.s32.totalorder %s17, 1
    %p70 = por %p68, %p69
    %p71 = scmp.ne.s32.totalorder %s60, %s61
    %p72 = scmp.eq.s32.totalorder %s17, 0
    %p73 = por %p71, %p72
    %p74 = scmp.ne.s32.totalorder %s60, %s61
    %p75 = scmp.eq.s32.totalorder %s18, 1
    %p76 = por %p74, %p75
    %p78 = scmp.ne.s32.totalorder %s61, %s77
    %p79 = scmp.eq.s32.totalorder %s18, 0
    %p80 = por %p78, %p79
    %s81 = ssub.s32 %s19, %s31
    %s82 = ssub.s32 %s20, %s27
    %s83 = sor.u32 %s81, %s82
    %p84 = scmp.eq.s32.totalorder %s83, 0
    %s86 = sadd.s32 %s85, 1
    %s87 = scalar_select %p84, %s85, %s86
    %p90 = pneg %p84
    %p91 = scmp.eq.s32.totalorder %s12, 1
    %p92 = por %p90, %p91
    %p93 = scmp.ne.s32.totalorder %s85, %s88
    %p94 = scmp.eq.s32.totalorder %s12, 0
    %p95 = por %p93, %p94
    %p96 = scmp.ne.s32.totalorder %s85, %s88
    %p97 = scmp.eq.s32.totalorder %s17, 1
    %p98 = por %p96, %p97
    %p99 = scmp.ne.s32.totalorder %s88, %s89
    %p100 = scmp.eq.s32.totalorder %s17, 0
    %p101 = por %p99, %p100
    %p102 = scmp.ne.s32.totalorder %s88, %s89
    %p103 = scmp.eq.s32.totalorder %s18, 1
    %p104 = por %p102, %p103
    %p106 = scmp.ne.s32.totalorder %s89, %s105
    %p107 = scmp.eq.s32.totalorder %s18, 0
    %p108 = por %p106, %p107
    %s109 = ssub.s32 %s19, %s31
    %s110 = ssub.s32 %s20, %s27
    %s111 = sor.u32 %s109, %s110
    %p112 = scmp.eq.s32.totalorder %s111, 0
    %s114 = sadd.s32 %s113, 1
    %s115 = scalar_select %p112, %s113, %s114
    %p118 = pneg %p112
    %p119 = scmp.eq.s32.totalorder %s12, 1
    %p120 = por %p118, %p119
    %p121 = scmp.ne.s32.totalorder %s113, %s116
    %p122 = scmp.eq.s32.totalorder %s12, 0
    %p123 = por %p121, %p122
    %p124 = scmp.ne.s32.totalorder %s113, %s116
    %p125 = scmp.eq.s32.totalorder %s17, 1
    %p126 = por %p124, %p125
    %p127 = scmp.ne.s32.totalorder %s116, %s117
    %p128 = scmp.eq.s32.totalorder %s17, 0
    %p129 = por %p127, %p128
    %p130 = scmp.ne.s32.totalorder %s116, %s117
    %p131 = scmp.eq.s32.totalorder %s18, 1
    %p132 = por %p130, %p131
    %p134 = scmp.ne.s32.totalorder %s117, %s133
    %p135 = scmp.eq.s32.totalorder %s18, 0
    %p136 = por %p134, %p135
    %s138 = sadd.s32 %s137, 1
    %p141 = scmp.eq.s32.totalorder %s12, 1
    %p142 = scmp.ne.s32.totalorder %s137, %s139
    %p143 = scmp.eq.s32.totalorder %s12, 0
    %p144 = por %p142, %p143
    %p145 = scmp.ne.s32.totalorder %s137, %s139
    %p146 = scmp.eq.s32.totalorder %s17, 1
    %p147 = por %p145, %p146
    %p148 = scmp.ne.s32.totalorder %s139, %s140
    %p149 = scmp.eq.s32.totalorder %s17, 0
    %p150 = por %p148, %p149
    %p151 = scmp.ne.s32.totalorder %s139, %s140
    %p152 = scmp.eq.s32.totalorder %s18, 1
    %p153 = por %p151, %p152
    %p155 = scmp.ne.s32.totalorder %s140, %s154
    %p156 = scmp.eq.s32.totalorder %s18, 0
    %p157 = por %p155, %p156
    %s159 = sadd.s32 %s158, 1
    %p162 = scmp.eq.s32.totalorder %s12, 1
    %p163 = scmp.ne.s32.totalorder %s158, %s160
    %p164 = scmp.eq.s32.totalorder %s12, 0
    %p165 = por %p163, %p164
    %p166 = scmp.ne.s32.totalorder %s158, %s160
    %p167 = scmp.eq.s32.totalorder %s17, 1
    %p168 = por %p166, %p167
    %p169 = scmp.ne.s32.totalorder %s160, %s161
    %p170 = scmp.eq.s32.totalorder %s17, 0
    %p171 = por %p169, %p170
    %p172 = scmp.ne.s32.totalorder %s160, %s161
    %p173 = scmp.eq.s32.totalorder %s18, 1
    %p174 = por %p172, %p173
    %p176 = scmp.ne.s32.totalorder %s161, %s175
    %p177 = scmp.eq.s32.totalorder %s18, 0
    %p178 = por %p176, %p177
    %s179 = ssub.s32 %s19, %s31
    %s180 = ssub.s32 %s20, %s27
    %s181 = sor.u32 %s179, %s180
    %p182 = scmp.eq.s32.totalorder %s181, 0
    %s184 = sadd.s32 %s183, 1
    %s185 = scalar_select %p182, %s183, %s184
    %p188 = pneg %p182
    %p189 = scmp.eq.s32.totalorder %s12, 1
    %p190 = por %p188, %p189
    %p191 = scmp.ne.s32.totalorder %s183, %s186
    %p192 = scmp.eq.s32.totalorder %s12, 0
    %p193 = por %p191, %p192
    %p194 = scmp.ne.s32.totalorder %s183, %s186
    %p195 = scmp.eq.s32.totalorder %s17, 1
    %p196 = por %p194, %p195
    %p197 = scmp.ne.s32.totalorder %s186, %s187
    %p198 = scmp.eq.s32.totalorder %s17, 0
    %p199 = por %p197, %p198
    %p200 = scmp.ne.s32.totalorder %s186, %s187
    %p201 = scmp.eq.s32.totalorder %s18, 1
    %p202 = por %p200, %p201
    %p204 = scmp.ne.s32.totalorder %s187, %s203
    %p205 = scmp.eq.s32.totalorder %s18, 0
    %p206 = por %p204, %p205
    %p207 = scmp.le.s32.totalorder 1, %s12
    %p208 = scmp.lt.s32.totalorder %s12, 3
    %p209 = pnand %p207, %p208
    %p210 = pneg %p209
    // Predicated region
    $region9: #{wave_u_net_forward.10} parent=5 // pred_check
      _
    $region10: #{wave_u_net_forward.10} parent=5 // pred_check_branch
      %212 = sbr.rel (%p209) target = $region12
    $region11: #{wave_u_net_forward.10} parent=5 // pred_region
      %s213 = ssub.s32 %s12, 1
      // Predicated region
      $region13: #{wave_u_net_forward.10} parent=11 // pred_check
        %p214 = pneg %p45
      $region14: #{wave_u_net_forward.10} parent=11 // pred_check_branch
        %216 = sbr.rel (%p214) target = $region16
      $region15: #{wave_u_net_forward.10} parent=11 // pred_region
        _
      $region16: #{wave_u_net_forward.10} parent=11 // pred_fallthru
        _
      // Predicated region
      $region17: #{wave_u_net_forward.10} parent=11 // pred_check
        %p217 = pneg %p150
      $region18: #{wave_u_net_forward.10} parent=11 // pred_check_branch
        %219 = sbr.rel (%p217) target = $region20
      $region19: #{wave_u_net_forward.10} parent=11 // pred_region
        _
      $region20: #{wave_u_net_forward.10} parent=11 // pred_fallthru
        _
      // Predicated region
      $region21: #{wave_u_net_forward.10} parent=11 // pred_check
        %p220 = pneg %p171
      $region22: #{wave_u_net_forward.10} parent=11 // pred_check_branch
        %222 = sbr.rel (%p220) target = $region24
      $region23: #{wave_u_net_forward.10} parent=11 // pred_region
        _
      $region24: #{wave_u_net_forward.10} parent=11 // pred_fallthru
        _
    $region12: #{wave_u_net_forward.10} parent=5 // pred_fallthru
      _
    %p223 = scmp.lt.s32.totalorder %s12, 2
    // Predicated region
    $region25: #{wave_u_net_forward.10} parent=5 // pred_check
      %p224 = pneg %p223
    $region26: #{wave_u_net_forward.10} parent=5 // pred_check_branch
      %226 = sbr.rel (%p224) target = $region28
    $region27: #{wave_u_net_forward.10} parent=5 // pred_region
      // Predicated region
      $region29: #{wave_u_net_forward.10} parent=27 // pred_check
        %p227 = pneg %p67
      $region30: #{wave_u_net_forward.10} parent=27 // pred_check_branch
        %229 = sbr.rel (%p227) target = $region32
      $region31: #{wave_u_net_forward.10} parent=27 // pred_region
        %p230 = scmp.lt.s32.totalorder %s19, 1
        %s231 = scalar_select %p230, %s19, 1
        %p232 = scmp.lt.s32.totalorder %s20, 0
        %s233 = scalar_select %p232, %s20, 0
        %s234 = sadd.s32 %s233, %s231
        %s235 = scalar_lea.vmem %s1, %s234
      $region32: #{wave_u_net_forward.10} parent=27 // pred_fallthru
        _
      // Predicated region
      $region33: #{wave_u_net_forward.10} parent=27 // pred_check
        %p236 = pneg %p95
      $region34: #{wave_u_net_forward.10} parent=27 // pred_check_branch
        %238 = sbr.rel (%p236) target = $region36
      $region35: #{wave_u_net_forward.10} parent=27 // pred_region
        %p239 = scmp.lt.s32.totalorder %s19, 1
        %s240 = scalar_select %p239, %s19, 1
        %p241 = scmp.lt.s32.totalorder %s20, 0
        %s242 = scalar_select %p241, %s20, 0
        %s243 = sadd.s32 %s242, %s240
        %s244 = scalar_lea.vmem %s2, %s243
      $region36: #{wave_u_net_forward.10} parent=27 // pred_fallthru
        _
      // Predicated region
      $region37: #{wave_u_net_forward.10} parent=27 // pred_check
        %p245 = pneg %p123
      $region38: #{wave_u_net_forward.10} parent=27 // pred_check_branch
        %247 = sbr.rel (%p245) target = $region40
      $region39: #{wave_u_net_forward.10} parent=27 // pred_region
        %p248 = scmp.lt.s32.totalorder %s19, 1
        %s249 = scalar_select %p248, %s19, 1
        %p250 = scmp.lt.s32.totalorder %s20, 0
        %s251 = scalar_select %p250, %s20, 0
        %s252 = sadd.s32 %s251, %s249
        %s253 = scalar_lea.vmem %s3, %s252
      $region40: #{wave_u_net_forward.10} parent=27 // pred_fallthru
        _
    $region28: #{wave_u_net_forward.10} parent=5 // pred_fallthru
      _
    %p254 = scmp.le.s32.totalorder 1, %s12
    %p255 = scmp.lt.s32.totalorder %s12, 3
    %p256 = pnand %p254, %p255
    %p257 = pneg %p256
    // Predicated region
    $region41: #{wave_u_net_forward.10} parent=5 // pred_check
      _
    $region42: #{wave_u_net_forward.10} parent=5 // pred_check_branch
      %259 = sbr.rel (%p256) target = $region44
    $region43: #{wave_u_net_forward.10} parent=5 // pred_region
      %s260 = ssub.s32 %s12, 1
      %p261 = pneg %p45
      %p262 = pneg %p42
      %p263 = scmp.lt.s32.totalorder %s21, 1
      %s264 = scalar_select %p263, %s21, 1
      %p265 = scmp.lt.s32.totalorder %s22, 0
      %s266 = scalar_select %p265, %s22, 0
      %s267 = sadd.s32 %s266, %s264
      %s268 = scalar_lea.vmem %s1, %s267
      %p269 = pneg %p73
      %p270 = pneg %p70
      %p271 = scmp.lt.s32.totalorder %s21, 1
      %s272 = scalar_select %p271, %s21, 1
      %p273 = scmp.lt.s32.totalorder %s22, 0
      %s274 = scalar_select %p273, %s22, 0
      %s275 = sadd.s32 %s274, %s272
      %s276 = scalar_lea.vmem %s2, %s275
      %p277 = pneg %p101
      %p278 = pneg %p98
      %p279 = scmp.lt.s32.totalorder %s21, 1
      %s280 = scalar_select %p279, %s21, 1
      %p281 = scmp.lt.s32.totalorder %s22, 0
      %s282 = scalar_select %p281, %s22, 0
      %s283 = sadd.s32 %s282, %s280
      %s284 = scalar_lea.vmem %s3, %s283
      %p285 = pneg %p129
      %p286 = pneg %p126
      %p287 = pneg %p150
      %p288 = pneg %p147
      %p289 = pneg %p171
      %p290 = pneg %p168
      %p291 = pneg %p199
      %p292 = pneg %p196
      %p293 = scmp.lt.s32.totalorder %s21, 1
      %s294 = scalar_select %p293, %s21, 1
      %p295 = scmp.lt.s32.totalorder %s22, 0
      %s296 = scalar_select %p295, %s22, 0
      %s297 = sadd.s32 %s296, %s294
      %s298 = smul.addr %s297, 4
      %s299 = scalar_lea.vmem %s6, %s298
      %p300 = scmp.lt.s32.totalorder %s21, 1
      %s301 = scalar_select %p300, %s21, 1
      %p302 = scmp.lt.s32.totalorder %s22, 0
      %s303 = scalar_select %p302, %s22, 0
      %s304 = sadd.s32 %s303, %s301
      %s305 = scalar_lea.vmem %s1, %s304
      %p306 = scmp.lt.s32.totalorder %s21, 1
      %s307 = scalar_select %p306, %s21, 1
      %p308 = scmp.lt.s32.totalorder %s22, 0
      %s309 = scalar_select %p308, %s22, 0
      %s310 = sadd.s32 %s309, %s307
      %s311 = scalar_lea.vmem %s2, %s310
      %p312 = scmp.lt.s32.totalorder %s21, 1
      %s313 = scalar_select %p312, %s21, 1
      %p314 = scmp.lt.s32.totalorder %s22, 0
      %s315 = scalar_select %p314, %s22, 0
      %s316 = sadd.s32 %s315, %s313
      %s317 = scalar_lea.vmem %s3, %s316
      %p318 = scmp.lt.s32.totalorder %s21, 1
      %s319 = scalar_select %p318, %s21, 1
      %p320 = scmp.lt.s32.totalorder %s22, 0
      %s321 = scalar_select %p320, %s22, 0
      %s322 = sadd.s32 %s321, %s319
      %s323 = smul.addr %s322, 4
      %s324 = scalar_lea.vmem %s6, %s323
      %v325 = vld [vmem:[%s311] sm:$0x1]
      %v326 = vld [vmem:[%s305] sm:$0x1]
      %v327 = vld [vmem:[%s317] sm:$0x1]
      %v329 = vlaneseq
      %v330 = vshrl.u32 %v329, 7
      %v331 = vsub.s32 0, %v330
      %v332 = vrot.slane %v326, %v331
      %333 = vrot.lane.b32.xlu0 %v332, 7
      %v334 = vpop.permute.xlu0 %333
      %v337 = vlaneseq
      %v338 = vshrl.u32 %v337, 7
      %v339 = vsub.s32 0, %v338
      %v340 = vrot.slane %v327, %v339
      %341 = vrot.lane.b32.xlu0 %v340, 23
      %v342 = vpop.permute.xlu0 %341
      %vm344 = vcmask 56320
      %v345 = vsel %vm344, %v325, %v334
      %vm346 = vcmask 187392
      %v347 = vsel %vm346, %v345, %v342
      %v348 = vld [vmem:[%s0] sm:$0xf]
      %350 = vset.pattern.permute.xlu0 0
      %351 = vperm.xlu0 %350, %v348
      %v352 = vpop.permute.xlu0 %351
      %v354 = vlaneseq
      %v355 = vshrl.u32 %v354, 7
      %v356 = vsub.s32 0, %v355
      %v357 = vrot.slane %v347, %v356
      %v358 = vmul.f32 %v352, %v357
      %v359 = vadd.f32 %v358, 0.0
      %s360 = scalar_lea.vmem %s0, 4
      %v361 = vld [vmem:[%s360] sm:$0xf]
      %363 = vset.pattern.permute.xlu0 0
      %364 = vperm.xlu0 %363, %v361
      %v365 = vpop.permute.xlu0 %364
      %v367 = vmul.f32 %v365, %v357
      %369 = vrot.lane.b32.xlu0 %v367, 127
      %v370 = vpop.permute.xlu0 %369
      %v372 = vadd.f32 %v359, %v370
      %s373 = scalar_lea.vmem %s0, 8
      %v374 = vld [vmem:[%s373] sm:$0xf]
      %376 = vset.pattern.permute.xlu0 0
      %377 = vperm.xlu0 %376, %v374
      %v378 = vpop.permute.xlu0 %377
      %v380 = vmul.f32 %v378, %v357
      %382 = vrot.lane.b32.xlu0 %v380, 126
      %v383 = vpop.permute.xlu0 %382
      %v385 = vadd.f32 %v372, %v383
      %s386 = scalar_lea.vmem %s0, 12
      %v387 = vld [vmem:[%s386] sm:$0xf]
      %389 = vset.pattern.permute.xlu0 0
      %390 = vperm.xlu0 %389, %v387
      %v391 = vpop.permute.xlu0 %390
      %v393 = vmul.f32 %v391, %v357
      %395 = vrot.lane.b32.xlu0 %v393, 125
      %v396 = vpop.permute.xlu0 %395
      %v398 = vadd.f32 %v385, %v396
      %s399 = scalar_lea.vmem %s0, 16
      %v400 = vld [vmem:[%s399] sm:$0xf]
      %402 = vset.pattern.permute.xlu0 0
      %403 = vperm.xlu0 %402, %v400
      %v404 = vpop.permute.xlu0 %403
      %v406 = vmul.f32 %v404, %v357
      %408 = vrot.lane.b32.xlu0 %v406, 124
      %v409 = vpop.permute.xlu0 %408
      %v411 = vadd.f32 %v398, %v409
      %s412 = scalar_lea.vmem %s0, 20
      %v413 = vld [vmem:[%s412] sm:$0xf]
      %415 = vset.pattern.permute.xlu0 0
      %416 = vperm.xlu0 %415, %v413
      %v417 = vpop.permute.xlu0 %416
      %v419 = vmul.f32 %v417, %v357
      %421 = vrot.lane.b32.xlu0 %v419, 123
      %v422 = vpop.permute.xlu0 %421
      %v424 = vadd.f32 %v411, %v422
      %s425 = scalar_lea.vmem %s0, 24
      %v426 = vld [vmem:[%s425] sm:$0xf]
      %428 = vset.pattern.permute.xlu0 0
      %429 = vperm.xlu0 %428, %v426
      %v430 = vpop.permute.xlu0 %429
      %v432 = vmul.f32 %v430, %v357
      %434 = vrot.lane.b32.xlu0 %v432, 122
      %v435 = vpop.permute.xlu0 %434
      %v437 = vadd.f32 %v424, %v435
      %s438 = scalar_lea.vmem %s0, 28
      %v439 = vld [vmem:[%s438] sm:$0xf]
      %441 = vset.pattern.permute.xlu0 0
      %442 = vperm.xlu0 %441, %v439
      %v443 = vpop.permute.xlu0 %442
      %v445 = vmul.f32 %v443, %v357
      %447 = vrot.lane.b32.xlu0 %v445, 121
      %v448 = vpop.permute.xlu0 %447
      %v450 = vadd.f32 %v437, %v448
      %s451 = scalar_lea.vmem %s0, 32
      %v452 = vld [vmem:[%s451] sm:$0xf]
      %454 = vset.pattern.permute.xlu0 0
      %455 = vperm.xlu0 %454, %v452
      %v456 = vpop.permute.xlu0 %455
      %v458 = vmul.f32 %v456, %v357
      %460 = vrot.lane.b32.xlu0 %v458, 120
      %v461 = vpop.permute.xlu0 %460
      %v463 = vadd.f32 %v450, %v461
      %s464 = scalar_lea.vmem %s0, 36
      %v465 = vld [vmem:[%s464] sm:$0xf]
      %467 = vset.pattern.permute.xlu0 0
      %468 = vperm.xlu0 %467, %v465
      %v469 = vpop.permute.xlu0 %468
      %v471 = vmul.f32 %v469, %v357
      %473 = vrot.lane.b32.xlu0 %v471, 119
      %v474 = vpop.permute.xlu0 %473
      %v476 = vadd.f32 %v463, %v474
      %s477 = scalar_lea.vmem %s0, 40
      %v478 = vld [vmem:[%s477] sm:$0xf]
      %480 = vset.pattern.permute.xlu0 0
      %481 = vperm.xlu0 %480, %v478
      %v482 = vpop.permute.xlu0 %481
      %v484 = vmul.f32 %v482, %v357
      %486 = vrot.lane.b32.xlu0 %v484, 118
      %v487 = vpop.permute.xlu0 %486
      %v489 = vadd.f32 %v476, %v487
      %s490 = scalar_lea.vmem %s0, 44
      %v491 = vld [vmem:[%s490] sm:$0xf]
      %493 = vset.pattern.permute.xlu0 0
      %494 = vperm.xlu0 %493, %v491
      %v495 = vpop.permute.xlu0 %494
      %v497 = vmul.f32 %v495, %v357
      %499 = vrot.lane.b32.xlu0 %v497, 117
      %v500 = vpop.permute.xlu0 %499
      %v502 = vadd.f32 %v489, %v500
      %s503 = scalar_lea.vmem %s0, 48
      %v504 = vld [vmem:[%s503] sm:$0xf]
      %506 = vset.pattern.permute.xlu0 0
      %507 = vperm.xlu0 %506, %v504
      %v508 = vpop.permute.xlu0 %507
      %v510 = vmul.f32 %v508, %v357
      %512 = vrot.lane.b32.xlu0 %v510, 116
      %v513 = vpop.permute.xlu0 %512
      %v515 = vadd.f32 %v502, %v513
      %s516 = scalar_lea.vmem %s0, 52
      %v517 = vld [vmem:[%s516] sm:$0xf]
      %519 = vset.pattern.permute.xlu0 0
      %520 = vperm.xlu0 %519, %v517
      %v521 = vpop.permute.xlu0 %520
      %v523 = vmul.f32 %v521, %v357
      %525 = vrot.lane.b32.xlu0 %v523, 115
      %v526 = vpop.permute.xlu0 %525
      %v528 = vadd.f32 %v515, %v526
      %s529 = scalar_lea.vmem %s0, 56
      %v530 = vld [vmem:[%s529] sm:$0xf]
      %532 = vset.pattern.permute.xlu0 0
      %533 = vperm.xlu0 %532, %v530
      %v534 = vpop.permute.xlu0 %533
      %v536 = vmul.f32 %v534, %v357
      %538 = vrot.lane.b32.xlu0 %v536, 114
      %v539 = vpop.permute.xlu0 %538
      %v541 = vadd.f32 %v528, %v539
      %v542 = vld [vmem:[%s4] sm:$0xf]
      %544 = vset.pattern.permute.xlu0 0
      %545 = vperm.xlu0 %544, %v542
      %v546 = vpop.permute.xlu0 %545
      %v548 = vmul.f32 %v541, %v546
      %v549 = vld [vmem:[%s5] sm:$0xf]
      %551 = vset.pattern.permute.xlu0 0
      %552 = vperm.xlu0 %551, %v549
      %v553 = vpop.permute.xlu0 %552
      %v555 = vadd.f32 %v548, %v553
      %vm556 = vcmp.ge.f32.partialorder %v555, 0.0
      %v557 = vmul.f32 %v555, 0.1
      %v558 = vsel %vm556, %v555, %v557
      %vm559 = vcmask 125952
      %560 = vst.msk [vmem:[%s324] sm:$0xf] %vm559, %v558
      %p561 = scmp.lt.s32.totalorder %s21, 1
      %s562 = scalar_select %p561, %s21, 1
      %p563 = scmp.lt.s32.totalorder %s22, 0
      %s564 = scalar_select %p563, %s22, 0
      %s565 = sadd.s32 %s564, %s562
      %s566 = smul.addr %s565, 4
      %s567 = scalar_lea.vmem %s6, %s566
      // Predicated region
      $region45: #{wave_u_net_forward.10} parent=43 // pred_check
        %p568 = pneg %p196
      $region46: #{wave_u_net_forward.10} parent=43 // pred_check_branch
        %570 = sbr.rel (%p568) target = $region48
      $region47: #{wave_u_net_forward.10} parent=43 // pred_region
        _
      $region48: #{wave_u_net_forward.10} parent=43 // pred_fallthru
        _
    $region44: #{wave_u_net_forward.10} parent=5 // pred_fallthru
      _
    %p571 = scmp.le.s32.totalorder 2, %s12
    // Predicated region
    $region49: #{wave_u_net_forward.10} parent=5 // pred_check
      %p572 = pneg %p571
    $region50: #{wave_u_net_forward.10} parent=5 // pred_check_branch
      %574 = sbr.rel (%p572) target = $region52
    $region51: #{wave_u_net_forward.10} parent=5 // pred_region
      %s575 = ssub.s32 %s12, 2
      // Predicated region
      $region53: #{wave_u_net_forward.10} parent=51 // pred_check
        %p576 = pneg %p202
      $region54: #{wave_u_net_forward.10} parent=51 // pred_check_branch
        %578 = sbr.rel (%p576) target = $region56
      $region55: #{wave_u_net_forward.10} parent=51 // pred_region
        %p579 = scmp.lt.s32.totalorder %s23, 1
        %s580 = scalar_select %p579, %s23, 1
        %p581 = scmp.lt.s32.totalorder %s24, 0
        %s582 = scalar_select %p581, %s24, 0
        %s583 = sadd.s32 %s582, %s580
        %s584 = smul.addr %s583, 4
        %s585 = scalar_lea.vmem %s6, %s584
      $region56: #{wave_u_net_forward.10} parent=51 // pred_fallthru
        _
    $region52: #{wave_u_net_forward.10} parent=5 // pred_fallthru
      _
  $region6: #{wave_u_net_forward.10} parent=0 // loop_footer
    %s16 = sadd.s32 1, %s12
  $region7: #{wave_u_net_forward.10} parent=0 // loop_footer_branch
    %11 = sbr.rel target = $region3
  $region8: #{wave_u_net_forward.10} parent=0 // loop_exit
    _

// kernel: wave_u_net_forward.12
$region0: #{wave_u_net_forward.12}
  #allocation0 [shape = 'u32[]', space=smem, size = 0x4, offset = 0x4, fixed_abs, tag = 'smem constant byte address 0x4 - core index']
  #allocation1 [shape = 'u32[144,128]{1,0:T(1,128)}', space=vmem, size = 0x12000, scoped, tag = 'internal scratch']
  %s0 = inlined_call_operand.vmem [shape: f32[15,8,4], index: 0, kind: input, shape index: {}]
  %s1 = inlined_call_operand.vmem [shape: f32[2,4,8], index: 1, kind: input, shape index: {}]
  %s2 = inlined_call_operand.vmem [shape: f32[2,1,4,7], index: 2, kind: input, shape index: {}, may-alias: {2,3}]
  %s3 = inlined_call_operand.vmem [shape: f32[2,1,4,7], index: 3, kind: input, shape index: {}, may-alias: {2,3}]
  %s4 = inlined_call_operand.vmem [shape: f32[8,1], index: 4, kind: input, shape index: {}]
  %s5 = inlined_call_operand.vmem [shape: f32[8,1], index: 5, kind: input, shape index: {}]
  %s6 = inlined_call_operand.vmem [shape: f32[2,8,8], index: 6, kind: output, shape index: {}]
  %s7 = sld [smem:[#allocation0]]
  $region57: #{wave_u_net_forward.12} parent=0
    _
  %s9 = ssub.s32 1, %s7
  %s10 = scalar_select 0, %s9, %s7
  loop: start=0, step=1, limit=4
  $region2: #{wave_u_net_forward.12} parent=0 // loop_pre_header
    _
  $region3: #{wave_u_net_forward.12} parent=0 // loop_header
    %s12 = sphi 0, %s16
    %p13 = scmp.ge.s32.totalorder %s12, 4
    %s19 = sphi 0, %s31
    %s20 = sphi 0, %s27
    %s21 = sphi 0, %s19
    %s22 = sphi 0, %s20
    %s23 = sphi 0, %s21
    %s24 = sphi 0, %s22
    %s32 = sphi 0, %s32
    %s34 = sphi 0, %s32
    %s35 = sphi 0, %s34
    %s49 = sphi 0, %s35
    %s57 = sphi 0, %s59
    %s60 = sphi 0, %s57
    %s61 = sphi 0, %s60
    %s77 = sphi 0, %s61
    %s85 = sphi 0, %s87
    %s88 = sphi 0, %s85
    %s89 = sphi 0, %s88
    %s105 = sphi 0, %s89
    %s113 = sphi 0, %s115
    %s116 = sphi 0, %s113
    %s117 = sphi 0, %s116
    %s133 = sphi 0, %s117
    %s137 = sphi 0, %s137
    %s139 = sphi 0, %s137
    %s140 = sphi 0, %s139
    %s154 = sphi 0, %s140
    %s158 = sphi 0, %s158
    %s160 = sphi 0, %s158
    %s161 = sphi 0, %s160
    %s175 = sphi 0, %s161
    %s183 = sphi 0, %s185
    %s186 = sphi 0, %s183
    %s187 = sphi 0, %s186
    %s203 = sphi 0, %s187
  $region4: #{wave_u_net_forward.12} parent=0 // loop_header_branch
    %15 = sbr.rel (%p13) target = $region8
  $region5: #{wave_u_net_forward.12} parent=0 // loop_body
    %s17 = ssub.s32 %s12, 1
    %s18 = ssub.s32 %s12, 2
    %s25 = sadd.s32 1, %s20
    %p26 = scmp.ge.s32.totalorder %s25, 1
    %s27 = scalar_select %p26, 0, %s25
    %s28 = sadd.s32 1, %s19
    %s29 = scalar_select %p26, %s28, %s19
    %p30 = scmp.ge.s32.totalorder %s29, 2
    %s31 = scalar_select %p30, 0, %s29
    %s33 = sadd.s32 %s32, 1
    %p36 = scmp.eq.s32.totalorder %s12, 1
    %p37 = scmp.ne.s32.totalorder %s32, %s34
    %p38 = scmp.eq.s32.totalorder %s12, 0
    %p39 = por %p37, %p38
    %p40 = scmp.ne.s32.totalorder %s32, %s34
    %p41 = scmp.eq.s32.totalorder %s17, 1
    %p42 = por %p40, %p41
    %p43 = scmp.ne.s32.totalorder %s34, %s35
    %p44 = scmp.eq.s32.totalorder %s17, 0
    %p45 = por %p43, %p44
    %p46 = scmp.ne.s32.totalorder %s34, %s35
    %p47 = scmp.eq.s32.totalorder %s18, 1
    %p48 = por %p46, %p47
    %p50 = scmp.ne.s32.totalorder %s35, %s49
    %p51 = scmp.eq.s32.totalorder %s18, 0
    %p52 = por %p50, %p51
    %s53 = ssub.s32 %s19, %s31
    %s54 = ssub.s32 %s20, %s27
    %s55 = sor.u32 %s53, %s54
    %p56 = scmp.eq.s32.totalorder %s55, 0
    %s58 = sadd.s32 %s57, 1
    %s59 = scalar_select %p56, %s57, %s58
    %p62 = pneg %p56
    %p63 = scmp.eq.s32.totalorder %s12, 1
    %p64 = por %p62, %p63
    %p65 = scmp.ne.s32.totalorder %s57, %s60
    %p66 = scmp.eq.s32.totalorder %s12, 0
    %p67 = por %p65, %p66
    %p68 = scmp.ne.s32.totalorder %s57, %s60
    %p69 = scmp.eq.s32.totalorder %s17, 1
    %p70 = por %p68, %p69
    %p71 = scmp.ne.s32.totalorder %s60, %s61
    %p72 = scmp.eq.s32.totalorder %s17, 0
    %p73 = por %p71, %p72
    %p74 = scmp.ne.s32.totalorder %s60, %s61
    %p75 = scmp.eq.s32.totalorder %s18, 1
    %p76 = por %p74, %p75
    %p78 = scmp.ne.s32.totalorder %s61, %s77
    %p79 = scmp.eq.s32.totalorder %s18, 0
    %p80 = por %p78, %p79
    %s81 = ssub.s32 %s19, %s31
    %s82 = ssub.s32 %s20, %s27
    %s83 = sor.u32 %s81, %s82
    %p84 = scmp.eq.s32.totalorder %s83, 0
    %s86 = sadd.s32 %s85, 1
    %s87 = scalar_select %p84, %s85, %s86
    %p90 = pneg %p84
    %p91 = scmp.eq.s32.totalorder %s12, 1
    %p92 = por %p90, %p91
    %p93 = scmp.ne.s32.totalorder %s85, %s88
    %p94 = scmp.eq.s32.totalorder %s12, 0
    %p95 = por %p93, %p94
    %p96 = scmp.ne.s32.totalorder %s85, %s88
    %p97 = scmp.eq.s32.totalorder %s17, 1
    %p98 = por %p96, %p97
    %p99 = scmp.ne.s32.totalorder %s88, %s89
    %p100 = scmp.eq.s32.totalorder %s17, 0
    %p101 = por %p99, %p100
    %p102 = scmp.ne.s32.totalorder %s88, %s89
    %p103 = scmp.eq.s32.totalorder %s18, 1
    %p104 = por %p102, %p103
    %p106 = scmp.ne.s32.totalorder %s89, %s105
    %p107 = scmp.eq.s32.totalorder %s18, 0
    %p108 = por %p106, %p107
    %s109 = ssub.s32 %s19, %s31
    %s110 = ssub.s32 %s20, %s27
    %s111 = sor.u32 %s109, %s110
    %p112 = scmp.eq.s32.totalorder %s111, 0
    %s114 = sadd.s32 %s113, 1
    %s115 = scalar_select %p112, %s113, %s114
    %p118 = pneg %p112
    %p119 = scmp.eq.s32.totalorder %s12, 1
    %p120 = por %p118, %p119
    %p121 = scmp.ne.s32.totalorder %s113, %s116
    %p122 = scmp.eq.s32.totalorder %s12, 0
    %p123 = por %p121, %p122
    %p124 = scmp.ne.s32.totalorder %s113, %s116
    %p125 = scmp.eq.s32.totalorder %s17, 1
    %p126 = por %p124, %p125
    %p127 = scmp.ne.s32.totalorder %s116, %s117
    %p128 = scmp.eq.s32.totalorder %s17, 0
    %p129 = por %p127, %p128
    %p130 = scmp.ne.s32.totalorder %s116, %s117
    %p131 = scmp.eq.s32.totalorder %s18, 1
    %p132 = por %p130, %p131
    %p134 = scmp.ne.s32.totalorder %s117, %s133
    %p135 = scmp.eq.s32.totalorder %s18, 0
    %p136 = por %p134, %p135
    %s138 = sadd.s32 %s137, 1
    %p141 = scmp.eq.s32.totalorder %s12, 1
    %p142 = scmp.ne.s32.totalorder %s137, %s139
    %p143 = scmp.eq.s32.totalorder %s12, 0
    %p144 = por %p142, %p143
    %p145 = scmp.ne.s32.totalorder %s137, %s139
    %p146 = scmp.eq.s32.totalorder %s17, 1
    %p147 = por %p145, %p146
    %p148 = scmp.ne.s32.totalorder %s139, %s140
    %p149 = scmp.eq.s32.totalorder %s17, 0
    %p150 = por %p148, %p149
    %p151 = scmp.ne.s32.totalorder %s139, %s140
    %p152 = scmp.eq.s32.totalorder %s18, 1
    %p153 = por %p151, %p152
    %p155 = scmp.ne.s32.totalorder %s140, %s154
    %p156 = scmp.eq.s32.totalorder %s18, 0
    %p157 = por %p155, %p156
    %s159 = sadd.s32 %s158, 1
    %p162 = scmp.eq.s32.totalorder %s12, 1
    %p163 = scmp.ne.s32.totalorder %s158, %s160
    %p164 = scmp.eq.s32.totalorder %s12, 0
    %p165 = por %p163, %p164
    %p166 = scmp.ne.s32.totalorder %s158, %s160
    %p167 = scmp.eq.s32.totalorder %s17, 1
    %p168 = por %p166, %p167
    %p169 = scmp.ne.s32.totalorder %s160, %s161
    %p170 = scmp.eq.s32.totalorder %s17, 0
    %p171 = por %p169, %p170
    %p172 = scmp.ne.s32.totalorder %s160, %s161
    %p173 = scmp.eq.s32.totalorder %s18, 1
    %p174 = por %p172, %p173
    %p176 = scmp.ne.s32.totalorder %s161, %s175
    %p177 = scmp.eq.s32.totalorder %s18, 0
    %p178 = por %p176, %p177
    %s179 = ssub.s32 %s19, %s31
    %s180 = ssub.s32 %s20, %s27
    %s181 = sor.u32 %s179, %s180
    %p182 = scmp.eq.s32.totalorder %s181, 0
    %s184 = sadd.s32 %s183, 1
    %s185 = scalar_select %p182, %s183, %s184
    %p188 = pneg %p182
    %p189 = scmp.eq.s32.totalorder %s12, 1
    %p190 = por %p188, %p189
    %p191 = scmp.ne.s32.totalorder %s183, %s186
    %p192 = scmp.eq.s32.totalorder %s12, 0
    %p193 = por %p191, %p192
    %p194 = scmp.ne.s32.totalorder %s183, %s186
    %p195 = scmp.eq.s32.totalorder %s17, 1
    %p196 = por %p194, %p195
    %p197 = scmp.ne.s32.totalorder %s186, %s187
    %p198 = scmp.eq.s32.totalorder %s17, 0
    %p199 = por %p197, %p198
    %p200 = scmp.ne.s32.totalorder %s186, %s187
    %p201 = scmp.eq.s32.totalorder %s18, 1
    %p202 = por %p200, %p201
    %p204 = scmp.ne.s32.totalorder %s187, %s203
    %p205 = scmp.eq.s32.totalorder %s18, 0
    %p206 = por %p204, %p205
    %p207 = scmp.le.s32.totalorder 1, %s12
    %p208 = scmp.lt.s32.totalorder %s12, 3
    %p209 = pnand %p207, %p208
    %p210 = pneg %p209
    // Predicated region
    $region9: #{wave_u_net_forward.12} parent=5 // pred_check
      _
    $region10: #{wave_u_net_forward.12} parent=5 // pred_check_branch
      %212 = sbr.rel (%p209) target = $region12
    $region11: #{wave_u_net_forward.12} parent=5 // pred_region
      %s213 = ssub.s32 %s12, 1
      // Predicated region
      $region13: #{wave_u_net_forward.12} parent=11 // pred_check
        %p214 = pneg %p45
      $region14: #{wave_u_net_forward.12} parent=11 // pred_check_branch
        %216 = sbr.rel (%p214) target = $region16
      $region15: #{wave_u_net_forward.12} parent=11 // pred_region
        _
      $region16: #{wave_u_net_forward.12} parent=11 // pred_fallthru
        _
      // Predicated region
      $region17: #{wave_u_net_forward.12} parent=11 // pred_check
        %p217 = pneg %p150
      $region18: #{wave_u_net_forward.12} parent=11 // pred_check_branch
        %219 = sbr.rel (%p217) target = $region20
      $region19: #{wave_u_net_forward.12} parent=11 // pred_region
        _
      $region20: #{wave_u_net_forward.12} parent=11 // pred_fallthru
        _
      // Predicated region
      $region21: #{wave_u_net_forward.12} parent=11 // pred_check
        %p220 = pneg %p171
      $region22: #{wave_u_net_forward.12} parent=11 // pred_check_branch
        %222 = sbr.rel (%p220) target = $region24
      $region23: #{wave_u_net_forward.12} parent=11 // pred_region
        _
      $region24: #{wave_u_net_forward.12} parent=11 // pred_fallthru
        _
    $region12: #{wave_u_net_forward.12} parent=5 // pred_fallthru
      _
    %p223 = scmp.lt.s32.totalorder %s12, 2
    // Predicated region
    $region25: #{wave_u_net_forward.12} parent=5 // pred_check
      %p224 = pneg %p223
    $region26: #{wave_u_net_forward.12} parent=5 // pred_check_branch
      %226 = sbr.rel (%p224) target = $region28
    $region27: #{wave_u_net_forward.12} parent=5 // pred_region
      // Predicated region
      $region29: #{wave_u_net_forward.12} parent=27 // pred_check
        %p227 = pneg %p67
      $region30: #{wave_u_net_forward.12} parent=27 // pred_check_branch
        %229 = sbr.rel (%p227) target = $region32
      $region31: #{wave_u_net_forward.12} parent=27 // pred_region
        %p230 = scmp.lt.s32.totalorder %s19, 1
        %s231 = scalar_select %p230, %s19, 1
        %p232 = scmp.lt.s32.totalorder %s20, 0
        %s233 = scalar_select %p232, %s20, 0
        %s234 = sadd.s32 %s233, %s231
        %s235 = smul.addr %s234, 4
        %s236 = scalar_lea.vmem %s1, %s235
      $region32: #{wave_u_net_forward.12} parent=27 // pred_fallthru
        _
      // Predicated region
      $region33: #{wave_u_net_forward.12} parent=27 // pred_check
        %p237 = pneg %p95
      $region34: #{wave_u_net_forward.12} parent=27 // pred_check_branch
        %239 = sbr.rel (%p237) target = $region36
      $region35: #{wave_u_net_forward.12} parent=27 // pred_region
        %p240 = scmp.lt.s32.totalorder %s19, 1
        %s241 = scalar_select %p240, %s19, 1
        %p242 = scmp.lt.s32.totalorder %s20, 0
        %s243 = scalar_select %p242, %s20, 0
        %s244 = sadd.s32 %s243, %s241
        %s245 = smul.addr %s244, 4
        %s246 = scalar_lea.vmem %s2, %s245
      $region36: #{wave_u_net_forward.12} parent=27 // pred_fallthru
        _
      // Predicated region
      $region37: #{wave_u_net_forward.12} parent=27 // pred_check
        %p247 = pneg %p123
      $region38: #{wave_u_net_forward.12} parent=27 // pred_check_branch
        %249 = sbr.rel (%p247) target = $region40
      $region39: #{wave_u_net_forward.12} parent=27 // pred_region
        %p250 = scmp.lt.s32.totalorder %s19, 1
        %s251 = scalar_select %p250, %s19, 1
        %p252 = scmp.lt.s32.totalorder %s20, 0
        %s253 = scalar_select %p252, %s20, 0
        %s254 = sadd.s32 %s253, %s251
        %s255 = smul.addr %s254, 4
        %s256 = scalar_lea.vmem %s3, %s255
      $region40: #{wave_u_net_forward.12} parent=27 // pred_fallthru
        _
    $region28: #{wave_u_net_forward.12} parent=5 // pred_fallthru
      _
    %p257 = scmp.le.s32.totalorder 1, %s12
    %p258 = scmp.lt.s32.totalorder %s12, 3
    %p259 = pnand %p257, %p258
    %p260 = pneg %p259
    // Predicated region
    $region41: #{wave_u_net_forward.12} parent=5 // pred_check
      _
    $region42: #{wave_u_net_forward.12} parent=5 // pred_check_branch
      %262 = sbr.rel (%p259) target = $region44
    $region43: #{wave_u_net_forward.12} parent=5 // pred_region
      %s263 = ssub.s32 %s12, 1
      %p264 = pneg %p45
      %p265 = pneg %p42
      %p266 = scmp.lt.s32.totalorder %s21, 1
      %s267 = scalar_select %p266, %s21, 1
      %p268 = scmp.lt.s32.totalorder %s22, 0
      %s269 = scalar_select %p268, %s22, 0
      %s270 = sadd.s32 %s269, %s267
      %s271 = smul.addr %s270, 4
      %s272 = scalar_lea.vmem %s1, %s271
      %p273 = pneg %p73
      %p274 = pneg %p70
      %p275 = scmp.lt.s32.totalorder %s21, 1
      %s276 = scalar_select %p275, %s21, 1
      %p277 = scmp.lt.s32.totalorder %s22, 0
      %s278 = scalar_select %p277, %s22, 0
      %s279 = sadd.s32 %s278, %s276
      %s280 = smul.addr %s279, 4
      %s281 = scalar_lea.vmem %s2, %s280
      %p282 = pneg %p101
      %p283 = pneg %p98
      %p284 = scmp.lt.s32.totalorder %s21, 1
      %s285 = scalar_select %p284, %s21, 1
      %p286 = scmp.lt.s32.totalorder %s22, 0
      %s287 = scalar_select %p286, %s22, 0
      %s288 = sadd.s32 %s287, %s285
      %s289 = smul.addr %s288, 4
      %s290 = scalar_lea.vmem %s3, %s289
      %p291 = pneg %p129
      %p292 = pneg %p126
      %p293 = pneg %p150
      %p294 = pneg %p147
      %p295 = pneg %p171
      %p296 = pneg %p168
      %p297 = pneg %p199
      %p298 = pneg %p196
      %p299 = scmp.lt.s32.totalorder %s21, 1
      %s300 = scalar_select %p299, %s21, 1
      %p301 = scmp.lt.s32.totalorder %s22, 0
      %s302 = scalar_select %p301, %s22, 0
      %s303 = sadd.s32 %s302, %s300
      %s304 = smul.addr %s303, 8
      %s305 = scalar_lea.vmem %s6, %s304
      %p306 = scmp.lt.s32.totalorder %s21, 1
      %s307 = scalar_select %p306, %s21, 1
      %p308 = scmp.lt.s32.totalorder %s22, 0
      %s309 = scalar_select %p308, %s22, 0
      %s310 = sadd.s32 %s309, %s307
      %s311 = smul.addr %s310, 4
      %s312 = scalar_lea.vmem %s1, %s311
      %p313 = scmp.lt.s32.totalorder %s21, 1
      %s314 = scalar_select %p313, %s21, 1
      %p315 = scmp.lt.s32.totalorder %s22, 0
      %s316 = scalar_select %p315, %s22, 0
      %s317 = sadd.s32 %s316, %s314
      %s318 = smul.addr %s317, 4
      %s319 = scalar_lea.vmem %s2, %s318
      %p320 = scmp.lt.s32.totalorder %s21, 1
      %s321 = scalar_select %p320, %s21, 1
      %p322 = scmp.lt.s32.totalorder %s22, 0
      %s323 = scalar_select %p322, %s22, 0
      %s324 = sadd.s32 %s323, %s321
      %s325 = smul.addr %s324, 4
      %s326 = scalar_lea.vmem %s3, %s325
      %p327 = scmp.lt.s32.totalorder %s21, 1
      %s328 = scalar_select %p327, %s21, 1
      %p329 = scmp.lt.s32.totalorder %s22, 0
      %s330 = scalar_select %p329, %s22, 0
      %s331 = sadd.s32 %s330, %s328
      %s332 = smul.addr %s331, 8
      %s333 = scalar_lea.vmem %s6, %s332
      %v334 = vld [vmem:[%s319] sm:$0xf]
      %v335 = vld [vmem:[%s312] sm:$0xf]
      %v336 = vld [vmem:[%s326] sm:$0xf]
      %338 = vrot.lane.b32.xlu0 %v335, 7
      %v339 = vpop.permute.xlu0 %338
      %342 = vrot.lane.b32.xlu0 %v336, 15
      %v343 = vpop.permute.xlu0 %342
      %vm345 = vcmask 56320
      %v346 = vsel %vm345, %v334, %v339
      %vm347 = vcmask 121856
      %v348 = vsel %vm347, %v346, %v343
      %v349 = vld [vmem:[%s0] sm:$0xff]
      %s350 = scalar_lea.vmem %s0, 8
      %v351 = vld [vmem:[%s350] sm:$0xff]
      %353 = vrot.lane.b32.xlu0 %v348, 127
      %v354 = vpop.permute.xlu0 %353
      %vm355 = vcmask 31744
      %v357 = vsel %vm355, %v351, 0
      %vm359 = vcmask 1043456
      %v360 = vsel %vm359, %v354, 0
      %362 = vmatprep.subr.mxu0 0.0
      %363 = vmatpush1.msra.mxu0 0.0
      %364 = vmatprep.subr.mxu0 0.0
      %365 = vmatpush1.msra.mxu0 0.0
      %366 = vmatprep.subr.mxu0 0.0
      %367 = vmatpush1.msra.mxu0 0.0
      %368 = vmatprep.subr.mxu0 0.0
      %369 = vmatpush1.msra.mxu0 0.0
      %370 = vmatprep.subr.mxu0 0.0
      %371 = vmatpush1.msra.mxu0 0.0
      %372 = vmatprep.subr.mxu0 0.0
      %373 = vmatpush1.msra.mxu0 0.0
      %374 = vmatprep.subr.mxu0 0.0
      %375 = vmatpush1.msra.mxu0 0.0
      %376 = vmatprep.subr.mxu0 0.0
      %377 = vmatpush1.msra.mxu0 0.0
      %378 = vmatprep.subr.mxu0 0.0
      %379 = vmatpush1.msra.mxu0 0.0
      %380 = vmatprep.subr.mxu0 0.0
      %381 = vmatpush1.msra.mxu0 0.0
      %382 = vmatprep.subr.mxu0 0.0
      %383 = vmatpush1.msra.mxu0 0.0
      %384 = vmatprep.subr.mxu0 0.0
      %385 = vmatpush1.msra.mxu0 0.0
      %386 = vmatprep.subr.mxu0 0.0
      %387 = vmatpush1.msra.mxu0 0.0
      %388 = vmatprep.subr.mxu0 0.0
      %389 = vmatpush1.msra.mxu0 0.0
      %390 = vmatprep.subr.mxu0 0.0
      %391 = vmatpush1.msra.mxu0 0.0
      %392 = vmatprep.subr.mxu0 0.0
      %393 = vmatpush1.msra.mxu0 %v360
      %394 = vmatprep.subr.mxu0 0.0
      %395 = vmatpush2.msra.mxu0 0.0
      %396 = vmatprep.subr.mxu0 0.0
      %397 = vmatpush2.msra.mxu0 0.0
      %398 = vmatprep.subr.mxu0 0.0
      %399 = vmatpush2.msra.mxu0 0.0
      %400 = vmatprep.subr.mxu0 0.0
      %401 = vmatpush2.msra.mxu0 0.0
      %402 = vmatprep.subr.mxu0 0.0
      %403 = vmatpush2.msra.mxu0 0.0
      %404 = vmatprep.subr.mxu0 0.0
      %405 = vmatpush2.msra.mxu0 0.0
      %406 = vmatprep.subr.mxu0 0.0
      %407 = vmatpush2.msra.mxu0 0.0
      %408 = vmatprep.subr.mxu0 0.0
      %409 = vmatpush2.msra.mxu0 0.0
      %410 = vmatprep.subr.mxu0 0.0
      %411 = vmatpush2.msra.mxu0 0.0
      %412 = vmatprep.subr.mxu0 0.0
      %413 = vmatpush2.msra.mxu0 0.0
      %414 = vmatprep.subr.mxu0 0.0
      %415 = vmatpush2.msra.mxu0 0.0
      %416 = vmatprep.subr.mxu0 0.0
      %417 = vmatpush2.msra.mxu0 0.0
      %418 = vmatprep.subr.mxu0 0.0
      %419 = vmatpush2.msra.mxu0 0.0
      %420 = vmatprep.subr.mxu0 0.0
      %421 = vmatpush2.msra.mxu0 0.0
      %422 = vmatprep.subr.mxu0 0.0
      %423 = vmatpush2.msra.mxu0 0.0
      %424 = vmatprep.subr.mxu0 0.0
      %425 = vmatpush2.msra.mxu0 0.0
      %426 = vmatprep.mubr.f32.mxu0 0.0
      %427 = vmatmul.mubr.f32.gmra.mxu0 %v357
      %v428 = vpop.f32.mrf.mxu0
      %v429 = vadd.f32 0.0, %v428
      %v430 = vpop.f32.mrf.mxu0
      %431 = vdwg.mxu0
      %v433 = vsel %vm355, %v349, 0
      %v435 = vsel %vm359, %v348, 0
      %437 = vmatprep.subr.mxu0 0.0
      %438 = vmatpush1.msra.mxu0 0.0
      %439 = vmatprep.subr.mxu0 0.0
      %440 = vmatpush1.msra.mxu0 0.0
      %441 = vmatprep.subr.mxu0 0.0
      %442 = vmatpush1.msra.mxu0 0.0
      %443 = vmatprep.subr.mxu0 0.0
      %444 = vmatpush1.msra.mxu0 0.0
      %445 = vmatprep.subr.mxu0 0.0
      %446 = vmatpush1.msra.mxu0 0.0
      %447 = vmatprep.subr.mxu0 0.0
      %448 = vmatpush1.msra.mxu0 0.0
      %449 = vmatprep.subr.mxu0 0.0
      %450 = vmatpush1.msra.mxu0 0.0
      %451 = vmatprep.subr.mxu0 0.0
      %452 = vmatpush1.msra.mxu0 0.0
      %453 = vmatprep.subr.mxu0 0.0
      %454 = vmatpush1.msra.mxu0 0.0
      %455 = vmatprep.subr.mxu0 0.0
      %456 = vmatpush1.msra.mxu0 0.0
      %457 = vmatprep.subr.mxu0 0.0
      %458 = vmatpush1.msra.mxu0 0.0
      %459 = vmatprep.subr.mxu0 0.0
      %460 = vmatpush1.msra.mxu0 0.0
      %461 = vmatprep.subr.mxu0 0.0
      %462 = vmatpush1.msra.mxu0 0.0
      %463 = vmatprep.subr.mxu0 0.0
      %464 = vmatpush1.msra.mxu0 0.0
      %465 = vmatprep.subr.mxu0 0.0
      %466 = vmatpush1.msra.mxu0 0.0
      %467 = vmatprep.subr.mxu0 0.0
      %468 = vmatpush1.msra.mxu0 %v435
      %469 = vmatprep.subr.mxu0 0.0
      %470 = vmatpush2.msra.mxu0 0.0
      %471 = vmatprep.subr.mxu0 0.0
      %472 = vmatpush2.msra.mxu0 0.0
      %473 = vmatprep.subr.mxu0 0.0
      %474 = vmatpush2.msra.mxu0 0.0
      %475 = vmatprep.subr.mxu0 0.0
      %476 = vmatpush2.msra.mxu0 0.0
      %477 = vmatprep.subr.mxu0 0.0
      %478 = vmatpush2.msra.mxu0 0.0
      %479 = vmatprep.subr.mxu0 0.0
      %480 = vmatpush2.msra.mxu0 0.0
      %481 = vmatprep.subr.mxu0 0.0
      %482 = vmatpush2.msra.mxu0 0.0
      %483 = vmatprep.subr.mxu0 0.0
      %484 = vmatpush2.msra.mxu0 0.0
      %485 = vmatprep.subr.mxu0 0.0
      %486 = vmatpush2.msra.mxu0 0.0
      %487 = vmatprep.subr.mxu0 0.0
      %488 = vmatpush2.msra.mxu0 0.0
      %489 = vmatprep.subr.mxu0 0.0
      %490 = vmatpush2.msra.mxu0 0.0
      %491 = vmatprep.subr.mxu0 0.0
      %492 = vmatpush2.msra.mxu0 0.0
      %493 = vmatprep.subr.mxu0 0.0
      %494 = vmatpush2.msra.mxu0 0.0
      %495 = vmatprep.subr.mxu0 0.0
      %496 = vmatpush2.msra.mxu0 0.0
      %497 = vmatprep.subr.mxu0 0.0
      %498 = vmatpush2.msra.mxu0 0.0
      %499 = vmatprep.subr.mxu0 0.0
      %500 = vmatpush2.msra.mxu0 0.0
      %501 = vmatprep.mubr.f32.mxu0 0.0
      %502 = vmatmul.mubr.f32.gmra.mxu0 %v433
      %v503 = vpop.f32.mrf.mxu0
      %v504 = vadd.f32 %v429, %v503
      %v505 = vpop.f32.mrf.mxu0
      %506 = vdwg.mxu0
      %s507 = scalar_lea.vmem %s0, 16
      %v508 = vld [vmem:[%s507] sm:$0xff]
      %509 = vrot.lane.b32.xlu0 %v348, 126
      %v510 = vpop.permute.xlu0 %509
      %v512 = vsel %vm355, %v508, 0
      %v514 = vsel %vm359, %v510, 0
      %516 = vmatprep.subr.mxu0 0.0
      %517 = vmatpush1.msra.mxu0 0.0
      %518 = vmatprep.subr.mxu0 0.0
      %519 = vmatpush1.msra.mxu0 0.0
      %520 = vmatprep.subr.mxu0 0.0
      %521 = vmatpush1.msra.mxu0 0.0
      %522 = vmatprep.subr.mxu0 0.0
      %523 = vmatpush1.msra.mxu0 0.0
      %524 = vmatprep.subr.mxu0 0.0
      %525 = vmatpush1.msra.mxu0 0.0
      %526 = vmatprep.subr.mxu0 0.0
      %527 = vmatpush1.msra.mxu0 0.0
      %528 = vmatprep.subr.mxu0 0.0
      %529 = vmatpush1.msra.mxu0 0.0
      %530 = vmatprep.subr.mxu0 0.0
      %531 = vmatpush1.msra.mxu0 0.0
      %532 = vmatprep.subr.mxu0 0.0
      %533 = vmatpush1.msra.mxu0 0.0
      %534 = vmatprep.subr.mxu0 0.0
      %535 = vmatpush1.msra.mxu0 0.0
      %536 = vmatprep.subr.mxu0 0.0
      %537 = vmatpush1.msra.mxu0 0.0
      %538 = vmatprep.subr.mxu0 0.0
      %539 = vmatpush1.msra.mxu0 0.0
      %540 = vmatprep.subr.mxu0 0.0
      %541 = vmatpush1.msra.mxu0 0.0
      %542 = vmatprep.subr.mxu0 0.0
      %543 = vmatpush1.msra.mxu0 0.0
      %544 = vmatprep.subr.mxu0 0.0
      %545 = vmatpush1.msra.mxu0 0.0
      %546 = vmatprep.subr.mxu0 0.0
      %547 = vmatpush1.msra.mxu0 %v514
      %548 = vmatprep.subr.mxu0 0.0
      %549 = vmatpush2.msra.mxu0 0.0
      %550 = vmatprep.subr.mxu0 0.0
      %551 = vmatpush2.msra.mxu0 0.0
      %552 = vmatprep.subr.mxu0 0.0
      %553 = vmatpush2.msra.mxu0 0.0
      %554 = vmatprep.subr.mxu0 0.0
      %555 = vmatpush2.msra.mxu0 0.0
      %556 = vmatprep.subr.mxu0 0.0
      %557 = vmatpush2.msra.mxu0 0.0
      %558 = vmatprep.subr.mxu0 0.0
      %559 = vmatpush2.msra.mxu0 0.0
      %560 = vmatprep.subr.mxu0 0.0
      %561 = vmatpush2.msra.mxu0 0.0
      %562 = vmatprep.subr.mxu0 0.0
      %563 = vmatpush2.msra.mxu0 0.0
      %564 = vmatprep.subr.mxu0 0.0
      %565 = vmatpush2.msra.mxu0 0.0
      %566 = vmatprep.subr.mxu0 0.0
      %567 = vmatpush2.msra.mxu0 0.0
      %568 = vmatprep.subr.mxu0 0.0
      %569 = vmatpush2.msra.mxu0 0.0
      %570 = vmatprep.subr.mxu0 0.0
      %571 = vmatpush2.msra.mxu0 0.0
      %572 = vmatprep.subr.mxu0 0.0
      %573 = vmatpush2.msra.mxu0 0.0
      %574 = vmatprep.subr.mxu0 0.0
      %575 = vmatpush2.msra.mxu0 0.0
      %576 = vmatprep.subr.mxu0 0.0
      %577 = vmatpush2.msra.mxu0 0.0
      %578 = vmatprep.subr.mxu0 0.0
      %579 = vmatpush2.msra.mxu0 0.0
      %580 = vmatprep.mubr.f32.mxu0 0.0
      %581 = vmatmul.mubr.f32.gmra.mxu0 %v512
      %v582 = vpop.f32.mrf.mxu0
      %v583 = vadd.f32 0.0, %v582
      %v584 = vpop.f32.mrf.mxu0
      %585 = vdwg.mxu0
      %v586 = vadd.f32 %v504, %v583
      %s587 = scalar_lea.vmem %s0, 24
      %v588 = vld [vmem:[%s587] sm:$0xff]
      %589 = vrot.lane.b32.xlu0 %v348, 125
      %v590 = vpop.permute.xlu0 %589
      %v592 = vsel %vm355, %v588, 0
      %v594 = vsel %vm359, %v590, 0
      %596 = vmatprep.subr.mxu0 0.0
      %597 = vmatpush1.msra.mxu0 0.0
      %598 = vmatprep.subr.mxu0 0.0
      %599 = vmatpush1.msra.mxu0 0.0
      %600 = vmatprep.subr.mxu0 0.0
      %601 = vmatpush1.msra.mxu0 0.0
      %602 = vmatprep.subr.mxu0 0.0
      %603 = vmatpush1.msra.mxu0 0.0
      %604 = vmatprep.subr.mxu0 0.0
      %605 = vmatpush1.msra.mxu0 0.0
      %606 = vmatprep.subr.mxu0 0.0
      %607 = vmatpush1.msra.mxu0 0.0
      %608 = vmatprep.subr.mxu0 0.0
      %609 = vmatpush1.msra.mxu0 0.0
      %610 = vmatprep.subr.mxu0 0.0
      %611 = vmatpush1.msra.mxu0 0.0
      %612 = vmatprep.subr.mxu0 0.0
      %613 = vmatpush1.msra.mxu0 0.0
      %614 = vmatprep.subr.mxu0 0.0
      %615 = vmatpush1.msra.mxu0 0.0
      %616 = vmatprep.subr.mxu0 0.0
      %617 = vmatpush1.msra.mxu0 0.0
      %618 = vmatprep.subr.mxu0 0.0
      %619 = vmatpush1.msra.mxu0 0.0
      %620 = vmatprep.subr.mxu0 0.0
      %621 = vmatpush1.msra.mxu0 0.0
      %622 = vmatprep.subr.mxu0 0.0
      %623 = vmatpush1.msra.mxu0 0.0
      %624 = vmatprep.subr.mxu0 0.0
      %625 = vmatpush1.msra.mxu0 0.0
      %626 = vmatprep.subr.mxu0 0.0
      %627 = vmatpush1.msra.mxu0 %v594
      %628 = vmatprep.subr.mxu0 0.0
      %629 = vmatpush2.msra.mxu0 0.0
      %630 = vmatprep.subr.mxu0 0.0
      %631 = vmatpush2.msra.mxu0 0.0
      %632 = vmatprep.subr.mxu0 0.0
      %633 = vmatpush2.msra.mxu0 0.0
      %634 = vmatprep.subr.mxu0 0.0
      %635 = vmatpush2.msra.mxu0 0.0
      %636 = vmatprep.subr.mxu0 0.0
      %637 = vmatpush2.msra.mxu0 0.0
      %638 = vmatprep.subr.mxu0 0.0
      %639 = vmatpush2.msra.mxu0 0.0
      %640 = vmatprep.subr.mxu0 0.0
      %641 = vmatpush2.msra.mxu0 0.0
      %642 = vmatprep.subr.mxu0 0.0
      %643 = vmatpush2.msra.mxu0 0.0
      %644 = vmatprep.subr.mxu0 0.0
      %645 = vmatpush2.msra.mxu0 0.0
      %646 = vmatprep.subr.mxu0 0.0
      %647 = vmatpush2.msra.mxu0 0.0
      %648 = vmatprep.subr.mxu0 0.0
      %649 = vmatpush2.msra.mxu0 0.0
      %650 = vmatprep.subr.mxu0 0.0
      %651 = vmatpush2.msra.mxu0 0.0
      %652 = vmatprep.subr.mxu0 0.0
      %653 = vmatpush2.msra.mxu0 0.0
      %654 = vmatprep.subr.mxu0 0.0
      %655 = vmatpush2.msra.mxu0 0.0
      %656 = vmatprep.subr.mxu0 0.0
      %657 = vmatpush2.msra.mxu0 0.0
      %658 = vmatprep.subr.mxu0 0.0
      %659 = vmatpush2.msra.mxu0 0.0
      %660 = vmatprep.mubr.f32.mxu0 0.0
      %661 = vmatmul.mubr.f32.gmra.mxu0 %v592
      %v662 = vpop.f32.mrf.mxu0
      %v663 = vadd.f32 0.0, %v662
      %v664 = vpop.f32.mrf.mxu0
      %665 = vdwg.mxu0
      %v666 = vadd.f32 %v586, %v663
      %s667 = scalar_lea.vmem %s0, 32
      %v668 = vld [vmem:[%s667] sm:$0xff]
      %669 = vrot.lane.b32.xlu0 %v348, 124
      %v670 = vpop.permute.xlu0 %669
      %v672 = vsel %vm355, %v668, 0
      %v674 = vsel %vm359, %v670, 0
      %676 = vmatprep.subr.mxu0 0.0
      %677 = vmatpush1.msra.mxu0 0.0
      %678 = vmatprep.subr.mxu0 0.0
      %679 = vmatpush1.msra.mxu0 0.0
      %680 = vmatprep.subr.mxu0 0.0
      %681 = vmatpush1.msra.mxu0 0.0
      %682 = vmatprep.subr.mxu0 0.0
      %683 = vmatpush1.msra.mxu0 0.0
      %684 = vmatprep.subr.mxu0 0.0
      %685 = vmatpush1.msra.mxu0 0.0
      %686 = vmatprep.subr.mxu0 0.0
      %687 = vmatpush1.msra.mxu0 0.0
      %688 = vmatprep.subr.mxu0 0.0
      %689 = vmatpush1.msra.mxu0 0.0
      %690 = vmatprep.subr.mxu0 0.0
      %691 = vmatpush1.msra.mxu0 0.0
      %692 = vmatprep.subr.mxu0 0.0
      %693 = vmatpush1.msra.mxu0 0.0
      %694 = vmatprep.subr.mxu0 0.0
      %695 = vmatpush1.msra.mxu0 0.0
      %696 = vmatprep.subr.mxu0 0.0
      %697 = vmatpush1.msra.mxu0 0.0
      %698 = vmatprep.subr.mxu0 0.0
      %699 = vmatpush1.msra.mxu0 0.0
      %700 = vmatprep.subr.mxu0 0.0
      %701 = vmatpush1.msra.mxu0 0.0
      %702 = vmatprep.subr.mxu0 0.0
      %703 = vmatpush1.msra.mxu0 0.0
      %704 = vmatprep.subr.mxu0 0.0
      %705 = vmatpush1.msra.mxu0 0.0
      %706 = vmatprep.subr.mxu0 0.0
      %707 = vmatpush1.msra.mxu0 %v674
      %708 = vmatprep.subr.mxu0 0.0
      %709 = vmatpush2.msra.mxu0 0.0
      %710 = vmatprep.subr.mxu0 0.0
      %711 = vmatpush2.msra.mxu0 0.0
      %712 = vmatprep.subr.mxu0 0.0
      %713 = vmatpush2.msra.mxu0 0.0
      %714 = vmatprep.subr.mxu0 0.0
      %715 = vmatpush2.msra.mxu0 0.0
      %716 = vmatprep.subr.mxu0 0.0
      %717 = vmatpush2.msra.mxu0 0.0
      %718 = vmatprep.subr.mxu0 0.0
      %719 = vmatpush2.msra.mxu0 0.0
      %720 = vmatprep.subr.mxu0 0.0
      %721 = vmatpush2.msra.mxu0 0.0
      %722 = vmatprep.subr.mxu0 0.0
      %723 = vmatpush2.msra.mxu0 0.0
      %724 = vmatprep.subr.mxu0 0.0
      %725 = vmatpush2.msra.mxu0 0.0
      %726 = vmatprep.subr.mxu0 0.0
      %727 = vmatpush2.msra.mxu0 0.0
      %728 = vmatprep.subr.mxu0 0.0
      %729 = vmatpush2.msra.mxu0 0.0
      %730 = vmatprep.subr.mxu0 0.0
      %731 = vmatpush2.msra.mxu0 0.0
      %732 = vmatprep.subr.mxu0 0.0
      %733 = vmatpush2.msra.mxu0 0.0
      %734 = vmatprep.subr.mxu0 0.0
      %735 = vmatpush2.msra.mxu0 0.0
      %736 = vmatprep.subr.mxu0 0.0
      %737 = vmatpush2.msra.mxu0 0.0
      %738 = vmatprep.subr.mxu0 0.0
      %739 = vmatpush2.msra.mxu0 0.0
      %740 = vmatprep.mubr.f32.mxu0 0.0
      %741 = vmatmul.mubr.f32.gmra.mxu0 %v672
      %v742 = vpop.f32.mrf.mxu0
      %v743 = vadd.f32 0.0, %v742
      %v744 = vpop.f32.mrf.mxu0
      %745 = vdwg.mxu0
      %v746 = vadd.f32 %v666, %v743
      %s747 = scalar_lea.vmem %s0, 40
      %v748 = vld [vmem:[%s747] sm:$0xff]
      %749 = vrot.lane.b32.xlu0 %v348, 123
      %v750 = vpop.permute.xlu0 %749
      %v752 = vsel %vm355, %v748, 0
      %v754 = vsel %vm359, %v750, 0
      %756 = vmatprep.subr.mxu0 0.0
      %757 = vmatpush1.msra.mxu0 0.0
      %758 = vmatprep.subr.mxu0 0.0
      %759 = vmatpush1.msra.mxu0 0.0
      %760 = vmatprep.subr.mxu0 0.0
      %761 = vmatpush1.msra.mxu0 0.0
      %762 = vmatprep.subr.mxu0 0.0
      %763 = vmatpush1.msra.mxu0 0.0
      %764 = vmatprep.subr.mxu0 0.0
      %765 = vmatpush1.msra.mxu0 0.0
      %766 = vmatprep.subr.mxu0 0.0
      %767 = vmatpush1.msra.mxu0 0.0
      %768 = vmatprep.subr.mxu0 0.0
      %769 = vmatpush1.msra.mxu0 0.0
      %770 = vmatprep.subr.mxu0 0.0
      %771 = vmatpush1.msra.mxu0 0.0
      %772 = vmatprep.subr.mxu0 0.0
      %773 = vmatpush1.msra.mxu0 0.0
      %774 = vmatprep.subr.mxu0 0.0
      %775 = vmatpush1.msra.mxu0 0.0
      %776 = vmatprep.subr.mxu0 0.0
      %777 = vmatpush1.msra.mxu0 0.0
      %778 = vmatprep.subr.mxu0 0.0
      %779 = vmatpush1.msra.mxu0 0.0
      %780 = vmatprep.subr.mxu0 0.0
      %781 = vmatpush1.msra.mxu0 0.0
      %782 = vmatprep.subr.mxu0 0.0
      %783 = vmatpush1.msra.mxu0 0.0
      %784 = vmatprep.subr.mxu0 0.0
      %785 = vmatpush1.msra.mxu0 0.0
      %786 = vmatprep.subr.mxu0 0.0
      %787 = vmatpush1.msra.mxu0 %v754
      %788 = vmatprep.subr.mxu0 0.0
      %789 = vmatpush2.msra.mxu0 0.0
      %790 = vmatprep.subr.mxu0 0.0
      %791 = vmatpush2.msra.mxu0 0.0
      %792 = vmatprep.subr.mxu0 0.0
      %793 = vmatpush2.msra.mxu0 0.0
      %794 = vmatprep.subr.mxu0 0.0
      %795 = vmatpush2.msra.mxu0 0.0
      %796 = vmatprep.subr.mxu0 0.0
      %797 = vmatpush2.msra.mxu0 0.0
      %798 = vmatprep.subr.mxu0 0.0
      %799 = vmatpush2.msra.mxu0 0.0
      %800 = vmatprep.subr.mxu0 0.0
      %801 = vmatpush2.msra.mxu0 0.0
      %802 = vmatprep.subr.mxu0 0.0
      %803 = vmatpush2.msra.mxu0 0.0
      %804 = vmatprep.subr.mxu0 0.0
      %805 = vmatpush2.msra.mxu0 0.0
      %806 = vmatprep.subr.mxu0 0.0
      %807 = vmatpush2.msra.mxu0 0.0
      %808 = vmatprep.subr.mxu0 0.0
      %809 = vmatpush2.msra.mxu0 0.0
      %810 = vmatprep.subr.mxu0 0.0
      %811 = vmatpush2.msra.mxu0 0.0
      %812 = vmatprep.subr.mxu0 0.0
      %813 = vmatpush2.msra.mxu0 0.0
      %814 = vmatprep.subr.mxu0 0.0
      %815 = vmatpush2.msra.mxu0 0.0
      %816 = vmatprep.subr.mxu0 0.0
      %817 = vmatpush2.msra.mxu0 0.0
      %818 = vmatprep.subr.mxu0 0.0
      %819 = vmatpush2.msra.mxu0 0.0
      %820 = vmatprep.mubr.f32.mxu0 0.0
      %821 = vmatmul.mubr.f32.gmra.mxu0 %v752
      %v822 = vpop.f32.mrf.mxu0
      %v823 = vadd.f32 0.0, %v822
      %v824 = vpop.f32.mrf.mxu0
      %825 = vdwg.mxu0
      %v826 = vadd.f32 %v746, %v823
      %s827 = scalar_lea.vmem %s0, 48
      %v828 = vld [vmem:[%s827] sm:$0xff]
      %829 = vrot.lane.b32.xlu0 %v348, 122
      %v830 = vpop.permute.xlu0 %829
      %v832 = vsel %vm355, %v828, 0
      %v834 = vsel %vm359, %v830, 0
      %836 = vmatprep.subr.mxu0 0.0
      %837 = vmatpush1.msra.mxu0 0.0
      %838 = vmatprep.subr.mxu0 0.0
      %839 = vmatpush1.msra.mxu0 0.0
      %840 = vmatprep.subr.mxu0 0.0
      %841 = vmatpush1.msra.mxu0 0.0
      %842 = vmatprep.subr.mxu0 0.0
      %843 = vmatpush1.msra.mxu0 0.0
      %844 = vmatprep.subr.mxu0 0.0
      %845 = vmatpush1.msra.mxu0 0.0
      %846 = vmatprep.subr.mxu0 0.0
      %847 = vmatpush1.msra.mxu0 0.0
      %848 = vmatprep.subr.mxu0 0.0
      %849 = vmatpush1.msra.mxu0 0.0
      %850 = vmatprep.subr.mxu0 0.0
      %851 = vmatpush1.msra.mxu0 0.0
      %852 = vmatprep.subr.mxu0 0.0
      %853 = vmatpush1.msra.mxu0 0.0
      %854 = vmatprep.subr.mxu0 0.0
      %855 = vmatpush1.msra.mxu0 0.0
      %856 = vmatprep.subr.mxu0 0.0
      %857 = vmatpush1.msra.mxu0 0.0
      %858 = vmatprep.subr.mxu0 0.0
      %859 = vmatpush1.msra.mxu0 0.0
      %860 = vmatprep.subr.mxu0 0.0
      %861 = vmatpush1.msra.mxu0 0.0
      %862 = vmatprep.subr.mxu0 0.0
      %863 = vmatpush1.msra.mxu0 0.0
      %864 = vmatprep.subr.mxu0 0.0
      %865 = vmatpush1.msra.mxu0 0.0
      %866 = vmatprep.subr.mxu0 0.0
      %867 = vmatpush1.msra.mxu0 %v834
      %868 = vmatprep.subr.mxu0 0.0
      %869 = vmatpush2.msra.mxu0 0.0
      %870 = vmatprep.subr.mxu0 0.0
      %871 = vmatpush2.msra.mxu0 0.0
      %872 = vmatprep.subr.mxu0 0.0
      %873 = vmatpush2.msra.mxu0 0.0
      %874 = vmatprep.subr.mxu0 0.0
      %875 = vmatpush2.msra.mxu0 0.0
      %876 = vmatprep.subr.mxu0 0.0
      %877 = vmatpush2.msra.mxu0 0.0
      %878 = vmatprep.subr.mxu0 0.0
      %879 = vmatpush2.msra.mxu0 0.0
      %880 = vmatprep.subr.mxu0 0.0
      %881 = vmatpush2.msra.mxu0 0.0
      %882 = vmatprep.subr.mxu0 0.0
      %883 = vmatpush2.msra.mxu0 0.0
      %884 = vmatprep.subr.mxu0 0.0
      %885 = vmatpush2.msra.mxu0 0.0
      %886 = vmatprep.subr.mxu0 0.0
      %887 = vmatpush2.msra.mxu0 0.0
      %888 = vmatprep.subr.mxu0 0.0
      %889 = vmatpush2.msra.mxu0 0.0
      %890 = vmatprep.subr.mxu0 0.0
      %891 = vmatpush2.msra.mxu0 0.0
      %892 = vmatprep.subr.mxu0 0.0
      %893 = vmatpush2.msra.mxu0 0.0
      %894 = vmatprep.subr.mxu0 0.0
      %895 = vmatpush2.msra.mxu0 0.0
      %896 = vmatprep.subr.mxu0 0.0
      %897 = vmatpush2.msra.mxu0 0.0
      %898 = vmatprep.subr.mxu0 0.0
      %899 = vmatpush2.msra.mxu0 0.0
      %900 = vmatprep.mubr.f32.mxu0 0.0
      %901 = vmatmul.mubr.f32.gmra.mxu0 %v832
      %v902 = vpop.f32.mrf.mxu0
      %v903 = vadd.f32 0.0, %v902
      %v904 = vpop.f32.mrf.mxu0
      %905 = vdwg.mxu0
      %v906 = vadd.f32 %v826, %v903
      %s907 = scalar_lea.vmem %s0, 56
      %v908 = vld [vmem:[%s907] sm:$0xff]
      %909 = vrot.lane.b32.xlu0 %v348, 121
      %v910 = vpop.permute.xlu0 %909
      %v912 = vsel %vm355, %v908, 0
      %v914 = vsel %vm359, %v910, 0
      %916 = vmatprep.subr.mxu0 0.0
      %917 = vmatpush1.msra.mxu0 0.0
      %918 = vmatprep.subr.mxu0 0.0
      %919 = vmatpush1.msra.mxu0 0.0
      %920 = vmatprep.subr.mxu0 0.0
      %921 = vmatpush1.msra.mxu0 0.0
      %922 = vmatprep.subr.mxu0 0.0
      %923 = vmatpush1.msra.mxu0 0.0
      %924 = vmatprep.subr.mxu0 0.0
      %925 = vmatpush1.msra.mxu0 0.0
      %926 = vmatprep.subr.mxu0 0.0
      %927 = vmatpush1.msra.mxu0 0.0
      %928 = vmatprep.subr.mxu0 0.0
      %929 = vmatpush1.msra.mxu0 0.0
      %930 = vmatprep.subr.mxu0 0.0
      %931 = vmatpush1.msra.mxu0 0.0
      %932 = vmatprep.subr.mxu0 0.0
      %933 = vmatpush1.msra.mxu0 0.0
      %934 = vmatprep.subr.mxu0 0.0
      %935 = vmatpush1.msra.mxu0 0.0
      %936 = vmatprep.subr.mxu0 0.0
      %937 = vmatpush1.msra.mxu0 0.0
      %938 = vmatprep.subr.mxu0 0.0
      %939 = vmatpush1.msra.mxu0 0.0
      %940 = vmatprep.subr.mxu0 0.0
      %941 = vmatpush1.msra.mxu0 0.0
      %942 = vmatprep.subr.mxu0 0.0
      %943 = vmatpush1.msra.mxu0 0.0
      %944 = vmatprep.subr.mxu0 0.0
      %945 = vmatpush1.msra.mxu0 0.0
      %946 = vmatprep.subr.mxu0 0.0
      %947 = vmatpush1.msra.mxu0 %v914
      %948 = vmatprep.subr.mxu0 0.0
      %949 = vmatpush2.msra.mxu0 0.0
      %950 = vmatprep.subr.mxu0 0.0
      %951 = vmatpush2.msra.mxu0 0.0
      %952 = vmatprep.subr.mxu0 0.0
      %953 = vmatpush2.msra.mxu0 0.0
      %954 = vmatprep.subr.mxu0 0.0
      %955 = vmatpush2.msra.mxu0 0.0
      %956 = vmatprep.subr.mxu0 0.0
      %957 = vmatpush2.msra.mxu0 0.0
      %958 = vmatprep.subr.mxu0 0.0
      %959 = vmatpush2.msra.mxu0 0.0
      %960 = vmatprep.subr.mxu0 0.0
      %961 = vmatpush2.msra.mxu0 0.0
      %962 = vmatprep.subr.mxu0 0.0
      %963 = vmatpush2.msra.mxu0 0.0
      %964 = vmatprep.subr.mxu0 0.0
      %965 = vmatpush2.msra.mxu0 0.0
      %966 = vmatprep.subr.mxu0 0.0
      %967 = vmatpush2.msra.mxu0 0.0
      %968 = vmatprep.subr.mxu0 0.0
      %969 = vmatpush2.msra.mxu0 0.0
      %970 = vmatprep.subr.mxu0 0.0
      %971 = vmatpush2.msra.mxu0 0.0
      %972 = vmatprep.subr.mxu0 0.0
      %973 = vmatpush2.msra.mxu0 0.0
      %974 = vmatprep.subr.mxu0 0.0
      %975 = vmatpush2.msra.mxu0 0.0
      %976 = vmatprep.subr.mxu0 0.0
      %977 = vmatpush2.msra.mxu0 0.0
      %978 = vmatprep.subr.mxu0 0.0
      %979 = vmatpush2.msra.mxu0 0.0
      %980 = vmatprep.mubr.f32.mxu0 0.0
      %981 = vmatmul.mubr.f32.gmra.mxu0 %v912
      %v982 = vpop.f32.mrf.mxu0
      %v983 = vadd.f32 0.0, %v982
      %v984 = vpop.f32.mrf.mxu0
      %985 = vdwg.mxu0
      %v986 = vadd.f32 %v906, %v983
      %s987 = scalar_lea.vmem %s0, 64
      %v988 = vld [vmem:[%s987] sm:$0xff]
      %989 = vrot.lane.b32.xlu0 %v348, 120
      %v990 = vpop.permute.xlu0 %989
      %v992 = vsel %vm355, %v988, 0
      %v994 = vsel %vm359, %v990, 0
      %996 = vmatprep.subr.mxu0 0.0
      %997 = vmatpush1.msra.mxu0 0.0
      %998 = vmatprep.subr.mxu0 0.0
      %999 = vmatpush1.msra.mxu0 0.0
      %1000 = vmatprep.subr.mxu0 0.0
      %1001 = vmatpush1.msra.mxu0 0.0
      %1002 = vmatprep.subr.mxu0 0.0
      %1003 = vmatpush1.msra.mxu0 0.0
      %1004 = vmatprep.subr.mxu0 0.0
      %1005 = vmatpush1.msra.mxu0 0.0
      %1006 = vmatprep.subr.mxu0 0.0
      %1007 = vmatpush1.msra.mxu0 0.0
      %1008 = vmatprep.subr.mxu0 0.0
      %1009 = vmatpush1.msra.mxu0 0.0
      %1010 = vmatprep.subr.mxu0 0.0
      %1011 = vmatpush1.msra.mxu0 0.0
      %1012 = vmatprep.subr.mxu0 0.0
      %1013 = vmatpush1.msra.mxu0 0.0
      %1014 = vmatprep.subr.mxu0 0.0
      %1015 = vmatpush1.msra.mxu0 0.0
      %1016 = vmatprep.subr.mxu0 0.0
      %1017 = vmatpush1.msra.mxu0 0.0
      %1018 = vmatprep.subr.mxu0 0.0
      %1019 = vmatpush1.msra.mxu0 0.0
      %1020 = vmatprep.subr.mxu0 0.0
      %1021 = vmatpush1.msra.mxu0 0.0
      %1022 = vmatprep.subr.mxu0 0.0
      %1023 = vmatpush1.msra.mxu0 0.0
      %1024 = vmatprep.subr.mxu0 0.0
      %1025 = vmatpush1.msra.mxu0 0.0
      %1026 = vmatprep.subr.mxu0 0.0
      %1027 = vmatpush1.msra.mxu0 %v994
      %1028 = vmatprep.subr.mxu0 0.0
      %1029 = vmatpush2.msra.mxu0 0.0
      %1030 = vmatprep.subr.mxu0 0.0
      %1031 = vmatpush2.msra.mxu0 0.0
      %1032 = vmatprep.subr.mxu0 0.0
      %1033 = vmatpush2.msra.mxu0 0.0
      %1034 = vmatprep.subr.mxu0 0.0
      %1035 = vmatpush2.msra.mxu0 0.0
      %1036 = vmatprep.subr.mxu0 0.0
      %1037 = vmatpush2.msra.mxu0 0.0
      %1038 = vmatprep.subr.mxu0 0.0
      %1039 = vmatpush2.msra.mxu0 0.0
      %1040 = vmatprep.subr.mxu0 0.0
      %1041 = vmatpush2.msra.mxu0 0.0
      %1042 = vmatprep.subr.mxu0 0.0
      %1043 = vmatpush2.msra.mxu0 0.0
      %1044 = vmatprep.subr.mxu0 0.0
      %1045 = vmatpush2.msra.mxu0 0.0
      %1046 = vmatprep.subr.mxu0 0.0
      %1047 = vmatpush2.msra.mxu0 0.0
      %1048 = vmatprep.subr.mxu0 0.0
      %1049 = vmatpush2.msra.mxu0 0.0
      %1050 = vmatprep.subr.mxu0 0.0
      %1051 = vmatpush2.msra.mxu0 0.0
      %1052 = vmatprep.subr.mxu0 0.0
      %1053 = vmatpush2.msra.mxu0 0.0
      %1054 = vmatprep.subr.mxu0 0.0
      %1055 = vmatpush2.msra.mxu0 0.0
      %1056 = vmatprep.subr.mxu0 0.0
      %1057 = vmatpush2.msra.mxu0 0.0
      %1058 = vmatprep.subr.mxu0 0.0
      %1059 = vmatpush2.msra.mxu0 0.0
      %1060 = vmatprep.mubr.f32.mxu0 0.0
      %1061 = vmatmul.mubr.f32.gmra.mxu0 %v992
      %v1062 = vpop.f32.mrf.mxu0
      %v1063 = vadd.f32 0.0, %v1062
      %v1064 = vpop.f32.mrf.mxu0
      %1065 = vdwg.mxu0
      %v1066 = vadd.f32 %v986, %v1063
      %s1067 = scalar_lea.vmem %s0, 72
      %v1068 = vld [vmem:[%s1067] sm:$0xff]
      %1069 = vrot.lane.b32.xlu0 %v348, 119
      %v1070 = vpop.permute.xlu0 %1069
      %v1072 = vsel %vm355, %v1068, 0
      %v1074 = vsel %vm359, %v1070, 0
      %1076 = vmatprep.subr.mxu0 0.0
      %1077 = vmatpush1.msra.mxu0 0.0
      %1078 = vmatprep.subr.mxu0 0.0
      %1079 = vmatpush1.msra.mxu0 0.0
      %1080 = vmatprep.subr.mxu0 0.0
      %1081 = vmatpush1.msra.mxu0 0.0
      %1082 = vmatprep.subr.mxu0 0.0
      %1083 = vmatpush1.msra.mxu0 0.0
      %1084 = vmatprep.subr.mxu0 0.0
      %1085 = vmatpush1.msra.mxu0 0.0
      %1086 = vmatprep.subr.mxu0 0.0
      %1087 = vmatpush1.msra.mxu0 0.0
      %1088 = vmatprep.subr.mxu0 0.0
      %1089 = vmatpush1.msra.mxu0 0.0
      %1090 = vmatprep.subr.mxu0 0.0
      %1091 = vmatpush1.msra.mxu0 0.0
      %1092 = vmatprep.subr.mxu0 0.0
      %1093 = vmatpush1.msra.mxu0 0.0
      %1094 = vmatprep.subr.mxu0 0.0
      %1095 = vmatpush1.msra.mxu0 0.0
      %1096 = vmatprep.subr.mxu0 0.0
      %1097 = vmatpush1.msra.mxu0 0.0
      %1098 = vmatprep.subr.mxu0 0.0
      %1099 = vmatpush1.msra.mxu0 0.0
      %1100 = vmatprep.subr.mxu0 0.0
      %1101 = vmatpush1.msra.mxu0 0.0
      %1102 = vmatprep.subr.mxu0 0.0
      %1103 = vmatpush1.msra.mxu0 0.0
      %1104 = vmatprep.subr.mxu0 0.0
      %1105 = vmatpush1.msra.mxu0 0.0
      %1106 = vmatprep.subr.mxu0 0.0
      %1107 = vmatpush1.msra.mxu0 %v1074
      %1108 = vmatprep.subr.mxu0 0.0
      %1109 = vmatpush2.msra.mxu0 0.0
      %1110 = vmatprep.subr.mxu0 0.0
      %1111 = vmatpush2.msra.mxu0 0.0
      %1112 = vmatprep.subr.mxu0 0.0
      %1113 = vmatpush2.msra.mxu0 0.0
      %1114 = vmatprep.subr.mxu0 0.0
      %1115 = vmatpush2.msra.mxu0 0.0
      %1116 = vmatprep.subr.mxu0 0.0
      %1117 = vmatpush2.msra.mxu0 0.0
      %1118 = vmatprep.subr.mxu0 0.0
      %1119 = vmatpush2.msra.mxu0 0.0
      %1120 = vmatprep.subr.mxu0 0.0
      %1121 = vmatpush2.msra.mxu0 0.0
      %1122 = vmatprep.subr.mxu0 0.0
      %1123 = vmatpush2.msra.mxu0 0.0
      %1124 = vmatprep.subr.mxu0 0.0
      %1125 = vmatpush2.msra.mxu0 0.0
      %1126 = vmatprep.subr.mxu0 0.0
      %1127 = vmatpush2.msra.mxu0 0.0
      %1128 = vmatprep.subr.mxu0 0.0
      %1129 = vmatpush2.msra.mxu0 0.0
      %1130 = vmatprep.subr.mxu0 0.0
      %1131 = vmatpush2.msra.mxu0 0.0
      %1132 = vmatprep.subr.mxu0 0.0
      %1133 = vmatpush2.msra.mxu0 0.0
      %1134 = vmatprep.subr.mxu0 0.0
      %1135 = vmatpush2.msra.mxu0 0.0
      %1136 = vmatprep.subr.mxu0 0.0
      %1137 = vmatpush2.msra.mxu0 0.0
      %1138 = vmatprep.subr.mxu0 0.0
      %1139 = vmatpush2.msra.mxu0 0.0
      %1140 = vmatprep.mubr.f32.mxu0 0.0
      %1141 = vmatmul.mubr.f32.gmra.mxu0 %v1072
      %v1142 = vpop.f32.mrf.mxu0
      %v1143 = vadd.f32 0.0, %v1142
      %v1144 = vpop.f32.mrf.mxu0
      %1145 = vdwg.mxu0
      %v1146 = vadd.f32 %v1066, %v1143
      %s1147 = scalar_lea.vmem %s0, 80
      %v1148 = vld [vmem:[%s1147] sm:$0xff]
      %1149 = vrot.lane.b32.xlu0 %v348, 118
      %v1150 = vpop.permute.xlu0 %1149
      %v1152 = vsel %vm355, %v1148, 0
      %v1154 = vsel %vm359, %v1150, 0
      %1156 = vmatprep.subr.mxu0 0.0
      %1157 = vmatpush1.msra.mxu0 0.0
      %1158 = vmatprep.subr.mxu0 0.0
      %1159 = vmatpush1.msra.mxu0 0.0
      %1160 = vmatprep.subr.mxu0 0.0
      %1161 = vmatpush1.msra.mxu0 0.0
      %1162 = vmatprep.subr.mxu0 0.0
      %1163 = vmatpush1.msra.mxu0 0.0
      %1164 = vmatprep.subr.mxu0 0.0
      %1165 = vmatpush1.msra.mxu0 0.0
      %1166 = vmatprep.subr.mxu0 0.0
      %1167 = vmatpush1.msra.mxu0 0.0
      %1168 = vmatprep.subr.mxu0 0.0
      %1169 = vmatpush1.msra.mxu0 0.0
      %1170 = vmatprep.subr.mxu0 0.0
      %1171 = vmatpush1.msra.mxu0 0.0
      %1172 = vmatprep.subr.mxu0 0.0
      %1173 = vmatpush1.msra.mxu0 0.0
      %1174 = vmatprep.subr.mxu0 0.0
      %1175 = vmatpush1.msra.mxu0 0.0
      %1176 = vmatprep.subr.mxu0 0.0
      %1177 = vmatpush1.msra.mxu0 0.0
      %1178 = vmatprep.subr.mxu0 0.0
      %1179 = vmatpush1.msra.mxu0 0.0
      %1180 = vmatprep.subr.mxu0 0.0
      %1181 = vmatpush1.msra.mxu0 0.0
      %1182 = vmatprep.subr.mxu0 0.0
      %1183 = vmatpush1.msra.mxu0 0.0
      %1184 = vmatprep.subr.mxu0 0.0
      %1185 = vmatpush1.msra.mxu0 0.0
      %1186 = vmatprep.subr.mxu0 0.0
      %1187 = vmatpush1.msra.mxu0 %v1154
      %1188 = vmatprep.subr.mxu0 0.0
      %1189 = vmatpush2.msra.mxu0 0.0
      %1190 = vmatprep.subr.mxu0 0.0
      %1191 = vmatpush2.msra.mxu0 0.0
      %1192 = vmatprep.subr.mxu0 0.0
      %1193 = vmatpush2.msra.mxu0 0.0
      %1194 = vmatprep.subr.mxu0 0.0
      %1195 = vmatpush2.msra.mxu0 0.0
      %1196 = vmatprep.subr.mxu0 0.0
      %1197 = vmatpush2.msra.mxu0 0.0
      %1198 = vmatprep.subr.mxu0 0.0
      %1199 = vmatpush2.msra.mxu0 0.0
      %1200 = vmatprep.subr.mxu0 0.0
      %1201 = vmatpush2.msra.mxu0 0.0
      %1202 = vmatprep.subr.mxu0 0.0
      %1203 = vmatpush2.msra.mxu0 0.0
      %1204 = vmatprep.subr.mxu0 0.0
      %1205 = vmatpush2.msra.mxu0 0.0
      %1206 = vmatprep.subr.mxu0 0.0
      %1207 = vmatpush2.msra.mxu0 0.0
      %1208 = vmatprep.subr.mxu0 0.0
      %1209 = vmatpush2.msra.mxu0 0.0
      %1210 = vmatprep.subr.mxu0 0.0
      %1211 = vmatpush2.msra.mxu0 0.0
      %1212 = vmatprep.subr.mxu0 0.0
      %1213 = vmatpush2.msra.mxu0 0.0
      %1214 = vmatprep.subr.mxu0 0.0
      %1215 = vmatpush2.msra.mxu0 0.0
      %1216 = vmatprep.subr.mxu0 0.0
      %1217 = vmatpush2.msra.mxu0 0.0
      %1218 = vmatprep.subr.mxu0 0.0
      %1219 = vmatpush2.msra.mxu0 0.0
      %1220 = vmatprep.mubr.f32.mxu0 0.0
      %1221 = vmatmul.mubr.f32.gmra.mxu0 %v1152
      %v1222 = vpop.f32.mrf.mxu0
      %v1223 = vadd.f32 0.0, %v1222
      %v1224 = vpop.f32.mrf.mxu0
      %1225 = vdwg.mxu0
      %v1226 = vadd.f32 %v1146, %v1223
      %s1227 = scalar_lea.vmem %s0, 88
      %v1228 = vld [vmem:[%s1227] sm:$0xff]
      %1229 = vrot.lane.b32.xlu0 %v348, 117
      %v1230 = vpop.permute.xlu0 %1229
      %v1232 = vsel %vm355, %v1228, 0
      %v1234 = vsel %vm359, %v1230, 0
      %1236 = vmatprep.subr.mxu0 0.0
      %1237 = vmatpush1.msra.mxu0 0.0
      %1238 = vmatprep.subr.mxu0 0.0
      %1239 = vmatpush1.msra.mxu0 0.0
      %1240 = vmatprep.subr.mxu0 0.0
      %1241 = vmatpush1.msra.mxu0 0.0
      %1242 = vmatprep.subr.mxu0 0.0
      %1243 = vmatpush1.msra.mxu0 0.0
      %1244 = vmatprep.subr.mxu0 0.0
      %1245 = vmatpush1.msra.mxu0 0.0
      %1246 = vmatprep.subr.mxu0 0.0
      %1247 = vmatpush1.msra.mxu0 0.0
      %1248 = vmatprep.subr.mxu0 0.0
      %1249 = vmatpush1.msra.mxu0 0.0
      %1250 = vmatprep.subr.mxu0 0.0
      %1251 = vmatpush1.msra.mxu0 0.0
      %1252 = vmatprep.subr.mxu0 0.0
      %1253 = vmatpush1.msra.mxu0 0.0
      %1254 = vmatprep.subr.mxu0 0.0
      %1255 = vmatpush1.msra.mxu0 0.0
      %1256 = vmatprep.subr.mxu0 0.0
      %1257 = vmatpush1.msra.mxu0 0.0
      %1258 = vmatprep.subr.mxu0 0.0
      %1259 = vmatpush1.msra.mxu0 0.0
      %1260 = vmatprep.subr.mxu0 0.0
      %1261 = vmatpush1.msra.mxu0 0.0
      %1262 = vmatprep.subr.mxu0 0.0
      %1263 = vmatpush1.msra.mxu0 0.0
      %1264 = vmatprep.subr.mxu0 0.0
      %1265 = vmatpush1.msra.mxu0 0.0
      %1266 = vmatprep.subr.mxu0 0.0
      %1267 = vmatpush1.msra.mxu0 %v1234
      %1268 = vmatprep.subr.mxu0 0.0
      %1269 = vmatpush2.msra.mxu0 0.0
      %1270 = vmatprep.subr.mxu0 0.0
      %1271 = vmatpush2.msra.mxu0 0.0
      %1272 = vmatprep.subr.mxu0 0.0
      %1273 = vmatpush2.msra.mxu0 0.0
      %1274 = vmatprep.subr.mxu0 0.0
      %1275 = vmatpush2.msra.mxu0 0.0
      %1276 = vmatprep.subr.mxu0 0.0
      %1277 = vmatpush2.msra.mxu0 0.0
      %1278 = vmatprep.subr.mxu0 0.0
      %1279 = vmatpush2.msra.mxu0 0.0
      %1280 = vmatprep.subr.mxu0 0.0
      %1281 = vmatpush2.msra.mxu0 0.0
      %1282 = vmatprep.subr.mxu0 0.0
      %1283 = vmatpush2.msra.mxu0 0.0
      %1284 = vmatprep.subr.mxu0 0.0
      %1285 = vmatpush2.msra.mxu0 0.0
      %1286 = vmatprep.subr.mxu0 0.0
      %1287 = vmatpush2.msra.mxu0 0.0
      %1288 = vmatprep.subr.mxu0 0.0
      %1289 = vmatpush2.msra.mxu0 0.0
      %1290 = vmatprep.subr.mxu0 0.0
      %1291 = vmatpush2.msra.mxu0 0.0
      %1292 = vmatprep.subr.mxu0 0.0
      %1293 = vmatpush2.msra.mxu0 0.0
      %1294 = vmatprep.subr.mxu0 0.0
      %1295 = vmatpush2.msra.mxu0 0.0
      %1296 = vmatprep.subr.mxu0 0.0
      %1297 = vmatpush2.msra.mxu0 0.0
      %1298 = vmatprep.subr.mxu0 0.0
      %1299 = vmatpush2.msra.mxu0 0.0
      %1300 = vmatprep.mubr.f32.mxu0 0.0
      %1301 = vmatmul.mubr.f32.gmra.mxu0 %v1232
      %v1302 = vpop.f32.mrf.mxu0
      %v1303 = vadd.f32 0.0, %v1302
      %v1304 = vpop.f32.mrf.mxu0
      %1305 = vdwg.mxu0
      %v1306 = vadd.f32 %v1226, %v1303
      %s1307 = scalar_lea.vmem %s0, 96
      %v1308 = vld [vmem:[%s1307] sm:$0xff]
      %1309 = vrot.lane.b32.xlu0 %v348, 116
      %v1310 = vpop.permute.xlu0 %1309
      %v1312 = vsel %vm355, %v1308, 0
      %v1314 = vsel %vm359, %v1310, 0
      %1316 = vmatprep.subr.mxu0 0.0
      %1317 = vmatpush1.msra.mxu0 0.0
      %1318 = vmatprep.subr.mxu0 0.0
      %1319 = vmatpush1.msra.mxu0 0.0
      %1320 = vmatprep.subr.mxu0 0.0
      %1321 = vmatpush1.msra.mxu0 0.0
      %1322 = vmatprep.subr.mxu0 0.0
      %1323 = vmatpush1.msra.mxu0 0.0
      %1324 = vmatprep.subr.mxu0 0.0
      %1325 = vmatpush1.msra.mxu0 0.0
      %1326 = vmatprep.subr.mxu0 0.0
      %1327 = vmatpush1.msra.mxu0 0.0
      %1328 = vmatprep.subr.mxu0 0.0
      %1329 = vmatpush1.msra.mxu0 0.0
      %1330 = vmatprep.subr.mxu0 0.0
      %1331 = vmatpush1.msra.mxu0 0.0
      %1332 = vmatprep.subr.mxu0 0.0
      %1333 = vmatpush1.msra.mxu0 0.0
      %1334 = vmatprep.subr.mxu0 0.0
      %1335 = vmatpush1.msra.mxu0 0.0
      %1336 = vmatprep.subr.mxu0 0.0
      %1337 = vmatpush1.msra.mxu0 0.0
      %1338 = vmatprep.subr.mxu0 0.0
      %1339 = vmatpush1.msra.mxu0 0.0
      %1340 = vmatprep.subr.mxu0 0.0
      %1341 = vmatpush1.msra.mxu0 0.0
      %1342 = vmatprep.subr.mxu0 0.0
      %1343 = vmatpush1.msra.mxu0 0.0
      %1344 = vmatprep.subr.mxu0 0.0
      %1345 = vmatpush1.msra.mxu0 0.0
      %1346 = vmatprep.subr.mxu0 0.0
      %1347 = vmatpush1.msra.mxu0 %v1314
      %1348 = vmatprep.subr.mxu0 0.0
      %1349 = vmatpush2.msra.mxu0 0.0
      %1350 = vmatprep.subr.mxu0 0.0
      %1351 = vmatpush2.msra.mxu0 0.0
      %1352 = vmatprep.subr.mxu0 0.0
      %1353 = vmatpush2.msra.mxu0 0.0
      %1354 = vmatprep.subr.mxu0 0.0
      %1355 = vmatpush2.msra.mxu0 0.0
      %1356 = vmatprep.subr.mxu0 0.0
      %1357 = vmatpush2.msra.mxu0 0.0
      %1358 = vmatprep.subr.mxu0 0.0
      %1359 = vmatpush2.msra.mxu0 0.0
      %1360 = vmatprep.subr.mxu0 0.0
      %1361 = vmatpush2.msra.mxu0 0.0
      %1362 = vmatprep.subr.mxu0 0.0
      %1363 = vmatpush2.msra.mxu0 0.0
      %1364 = vmatprep.subr.mxu0 0.0
      %1365 = vmatpush2.msra.mxu0 0.0
      %1366 = vmatprep.subr.mxu0 0.0
      %1367 = vmatpush2.msra.mxu0 0.0
      %1368 = vmatprep.subr.mxu0 0.0
      %1369 = vmatpush2.msra.mxu0 0.0
      %1370 = vmatprep.subr.mxu0 0.0
      %1371 = vmatpush2.msra.mxu0 0.0
      %1372 = vmatprep.subr.mxu0 0.0
      %1373 = vmatpush2.msra.mxu0 0.0
      %1374 = vmatprep.subr.mxu0 0.0
      %1375 = vmatpush2.msra.mxu0 0.0
      %1376 = vmatprep.subr.mxu0 0.0
      %1377 = vmatpush2.msra.mxu0 0.0
      %1378 = vmatprep.subr.mxu0 0.0
      %1379 = vmatpush2.msra.mxu0 0.0
      %1380 = vmatprep.mubr.f32.mxu0 0.0
      %1381 = vmatmul.mubr.f32.gmra.mxu0 %v1312
      %v1382 = vpop.f32.mrf.mxu0
      %v1383 = vadd.f32 0.0, %v1382
      %v1384 = vpop.f32.mrf.mxu0
      %1385 = vdwg.mxu0
      %v1386 = vadd.f32 %v1306, %v1383
      %s1387 = scalar_lea.vmem %s0, 104
      %v1388 = vld [vmem:[%s1387] sm:$0xff]
      %1389 = vrot.lane.b32.xlu0 %v348, 115
      %v1390 = vpop.permute.xlu0 %1389
      %v1392 = vsel %vm355, %v1388, 0
      %v1394 = vsel %vm359, %v1390, 0
      %1396 = vmatprep.subr.mxu0 0.0
      %1397 = vmatpush1.msra.mxu0 0.0
      %1398 = vmatprep.subr.mxu0 0.0
      %1399 = vmatpush1.msra.mxu0 0.0
      %1400 = vmatprep.subr.mxu0 0.0
      %1401 = vmatpush1.msra.mxu0 0.0
      %1402 = vmatprep.subr.mxu0 0.0
      %1403 = vmatpush1.msra.mxu0 0.0
      %1404 = vmatprep.subr.mxu0 0.0
      %1405 = vmatpush1.msra.mxu0 0.0
      %1406 = vmatprep.subr.mxu0 0.0
      %1407 = vmatpush1.msra.mxu0 0.0
      %1408 = vmatprep.subr.mxu0 0.0
      %1409 = vmatpush1.msra.mxu0 0.0
      %1410 = vmatprep.subr.mxu0 0.0
      %1411 = vmatpush1.msra.mxu0 0.0
      %1412 = vmatprep.subr.mxu0 0.0
      %1413 = vmatpush1.msra.mxu0 0.0
      %1414 = vmatprep.subr.mxu0 0.0
      %1415 = vmatpush1.msra.mxu0 0.0
      %1416 = vmatprep.subr.mxu0 0.0
      %1417 = vmatpush1.msra.mxu0 0.0
      %1418 = vmatprep.subr.mxu0 0.0
      %1419 = vmatpush1.msra.mxu0 0.0
      %1420 = vmatprep.subr.mxu0 0.0
      %1421 = vmatpush1.msra.mxu0 0.0
      %1422 = vmatprep.subr.mxu0 0.0
      %1423 = vmatpush1.msra.mxu0 0.0
      %1424 = vmatprep.subr.mxu0 0.0
      %1425 = vmatpush1.msra.mxu0 0.0
      %1426 = vmatprep.subr.mxu0 0.0
      %1427 = vmatpush1.msra.mxu0 %v1394
      %1428 = vmatprep.subr.mxu0 0.0
      %1429 = vmatpush2.msra.mxu0 0.0
      %1430 = vmatprep.subr.mxu0 0.0
      %1431 = vmatpush2.msra.mxu0 0.0
      %1432 = vmatprep.subr.mxu0 0.0
      %1433 = vmatpush2.msra.mxu0 0.0
      %1434 = vmatprep.subr.mxu0 0.0
      %1435 = vmatpush2.msra.mxu0 0.0
      %1436 = vmatprep.subr.mxu0 0.0
      %1437 = vmatpush2.msra.mxu0 0.0
      %1438 = vmatprep.subr.mxu0 0.0
      %1439 = vmatpush2.msra.mxu0 0.0
      %1440 = vmatprep.subr.mxu0 0.0
      %1441 = vmatpush2.msra.mxu0 0.0
      %1442 = vmatprep.subr.mxu0 0.0
      %1443 = vmatpush2.msra.mxu0 0.0
      %1444 = vmatprep.subr.mxu0 0.0
      %1445 = vmatpush2.msra.mxu0 0.0
      %1446 = vmatprep.subr.mxu0 0.0
      %1447 = vmatpush2.msra.mxu0 0.0
      %1448 = vmatprep.subr.mxu0 0.0
      %1449 = vmatpush2.msra.mxu0 0.0
      %1450 = vmatprep.subr.mxu0 0.0
      %1451 = vmatpush2.msra.mxu0 0.0
      %1452 = vmatprep.subr.mxu0 0.0
      %1453 = vmatpush2.msra.mxu0 0.0
      %1454 = vmatprep.subr.mxu0 0.0
      %1455 = vmatpush2.msra.mxu0 0.0
      %1456 = vmatprep.subr.mxu0 0.0
      %1457 = vmatpush2.msra.mxu0 0.0
      %1458 = vmatprep.subr.mxu0 0.0
      %1459 = vmatpush2.msra.mxu0 0.0
      %1460 = vmatprep.mubr.f32.mxu0 0.0
      %1461 = vmatmul.mubr.f32.gmra.mxu0 %v1392
      %v1462 = vpop.f32.mrf.mxu0
      %v1463 = vadd.f32 0.0, %v1462
      %v1464 = vpop.f32.mrf.mxu0
      %1465 = vdwg.mxu0
      %v1466 = vadd.f32 %v1386, %v1463
      %s1467 = scalar_lea.vmem %s0, 112
      %v1468 = vld [vmem:[%s1467] sm:$0xff]
      %1469 = vrot.lane.b32.xlu0 %v348, 114
      %v1470 = vpop.permute.xlu0 %1469
      %v1472 = vsel %vm355, %v1468, 0
      %v1474 = vsel %vm359, %v1470, 0
      %1476 = vmatprep.subr.mxu0 0.0
      %1477 = vmatpush1.msra.mxu0 0.0
      %1478 = vmatprep.subr.mxu0 0.0
      %1479 = vmatpush1.msra.mxu0 0.0
      %1480 = vmatprep.subr.mxu0 0.0
      %1481 = vmatpush1.msra.mxu0 0.0
      %1482 = vmatprep.subr.mxu0 0.0
      %1483 = vmatpush1.msra.mxu0 0.0
      %1484 = vmatprep.subr.mxu0 0.0
      %1485 = vmatpush1.msra.mxu0 0.0
      %1486 = vmatprep.subr.mxu0 0.0
      %1487 = vmatpush1.msra.mxu0 0.0
      %1488 = vmatprep.subr.mxu0 0.0
      %1489 = vmatpush1.msra.mxu0 0.0
      %1490 = vmatprep.subr.mxu0 0.0
      %1491 = vmatpush1.msra.mxu0 0.0
      %1492 = vmatprep.subr.mxu0 0.0
      %1493 = vmatpush1.msra.mxu0 0.0
      %1494 = vmatprep.subr.mxu0 0.0
      %1495 = vmatpush1.msra.mxu0 0.0
      %1496 = vmatprep.subr.mxu0 0.0
      %1497 = vmatpush1.msra.mxu0 0.0
      %1498 = vmatprep.subr.mxu0 0.0
      %1499 = vmatpush1.msra.mxu0 0.0
      %1500 = vmatprep.subr.mxu0 0.0
      %1501 = vmatpush1.msra.mxu0 0.0
      %1502 = vmatprep.subr.mxu0 0.0
      %1503 = vmatpush1.msra.mxu0 0.0
      %1504 = vmatprep.subr.mxu0 0.0
      %1505 = vmatpush1.msra.mxu0 0.0
      %1506 = vmatprep.subr.mxu0 0.0
      %1507 = vmatpush1.msra.mxu0 %v1474
      %1508 = vmatprep.subr.mxu0 0.0
      %1509 = vmatpush2.msra.mxu0 0.0
      %1510 = vmatprep.subr.mxu0 0.0
      %1511 = vmatpush2.msra.mxu0 0.0
      %1512 = vmatprep.subr.mxu0 0.0
      %1513 = vmatpush2.msra.mxu0 0.0
      %1514 = vmatprep.subr.mxu0 0.0
      %1515 = vmatpush2.msra.mxu0 0.0
      %1516 = vmatprep.subr.mxu0 0.0
      %1517 = vmatpush2.msra.mxu0 0.0
      %1518 = vmatprep.subr.mxu0 0.0
      %1519 = vmatpush2.msra.mxu0 0.0
      %1520 = vmatprep.subr.mxu0 0.0
      %1521 = vmatpush2.msra.mxu0 0.0
      %1522 = vmatprep.subr.mxu0 0.0
      %1523 = vmatpush2.msra.mxu0 0.0
      %1524 = vmatprep.subr.mxu0 0.0
      %1525 = vmatpush2.msra.mxu0 0.0
      %1526 = vmatprep.subr.mxu0 0.0
      %1527 = vmatpush2.msra.mxu0 0.0
      %1528 = vmatprep.subr.mxu0 0.0
      %1529 = vmatpush2.msra.mxu0 0.0
      %1530 = vmatprep.subr.mxu0 0.0
      %1531 = vmatpush2.msra.mxu0 0.0
      %1532 = vmatprep.subr.mxu0 0.0
      %1533 = vmatpush2.msra.mxu0 0.0
      %1534 = vmatprep.subr.mxu0 0.0
      %1535 = vmatpush2.msra.mxu0 0.0
      %1536 = vmatprep.subr.mxu0 0.0
      %1537 = vmatpush2.msra.mxu0 0.0
      %1538 = vmatprep.subr.mxu0 0.0
      %1539 = vmatpush2.msra.mxu0 0.0
      %1540 = vmatprep.mubr.f32.mxu0 0.0
      %1541 = vmatmul.mubr.f32.gmra.mxu0 %v1472
      %v1542 = vpop.f32.mrf.mxu0
      %v1543 = vadd.f32 0.0, %v1542
      %v1544 = vpop.f32.mrf.mxu0
      %1545 = vdwg.mxu0
      %v1546 = vadd.f32 %v1466, %v1543
      %v1547 = vld [vmem:[%s4] sm:$0xff]
      %1549 = vset.pattern.permute.xlu0 0
      %1550 = vperm.xlu0 %1549, %v1547
      %v1551 = vpop.permute.xlu0 %1550
      %v1553 = vmul.f32 %v1546, %v1551
      %v1554 = vld [vmem:[%s5] sm:$0xff]
      %1556 = vset.pattern.permute.xlu0 0
      %1557 = vperm.xlu0 %1556, %v1554
      %v1558 = vpop.permute.xlu0 %1557
      %v1560 = vadd.f32 %v1553, %v1558
      %vm1561 = vcmp.ge.f32.partialorder %v1560, 0.0
      %v1562 = vmul.f32 %v1560, 0.1
      %v1563 = vsel %vm1561, %v1560, %v1562
      %vm1564 = vcmask 64512
      %1565 = vst.msk [vmem:[%s333] sm:$0xff] %vm1564, %v1563
      %p1566 = scmp.lt.s32.totalorder %s21, 1
      %s1567 = scalar_select %p1566, %s21, 1
      %p1568 = scmp.lt.s32.totalorder %s22, 0
      %s1569 = scalar_select %p1568, %s22, 0
      %s1570 = sadd.s32 %s1569, %s1567
      %s1571 = smul.addr %s1570, 8
      %s1572 = scalar_lea.vmem %s6, %s1571
      // Predicated region
      $region45: #{wave_u_net_forward.12} parent=43 // pred_check
        %p1573 = pneg %p196
      $region46: #{wave_u_net_forward.12} parent=43 // pred_check_branch
        %1575 = sbr.rel (%p1573) target = $region48
      $region47: #{wave_u_net_forward.12} parent=43 // pred_region
        _
      $region48: #{wave_u_net_forward.12} parent=43 // pred_fallthru
        _
    $region44: #{wave_u_net_forward.12} parent=5 // pred_fallthru
      _
    %p1576 = scmp.le.s32.totalorder 2, %s12
    // Predicated region
    $region49: #{wave_u_net_forward.12} parent=5 // pred_check
      %p1577 = pneg %p1576
    $region50: #{wave_u_net_forward.12} parent=5 // pred_check_branch
      %1579 = sbr.rel (%p1577) target = $region52
    $region51: #{wave_u_net_forward.12} parent=5 // pred_region
      %s1580 = ssub.s32 %s12, 2
      // Predicated region
      $region53: #{wave_u_net_forward.12} parent=51 // pred_check
        %p1581 = pneg %p202
      $region54: #{wave_u_net_forward.12} parent=51 // pred_check_branch
        %1583 = sbr.rel (%p1581) target = $region56
      $region55: #{wave_u_net_forward.12} parent=51 // pred_region
        %p1584 = scmp.lt.s32.totalorder %s23, 1
        %s1585 = scalar_select %p1584, %s23, 1
        %p1586 = scmp.lt.s32.totalorder %s24, 0
        %s1587 = scalar_select %p1586, %s24, 0
        %s1588 = sadd.s32 %s1587, %s1585
        %s1589 = smul.addr %s1588, 8
        %s1590 = scalar_lea.vmem %s6, %s1589
      $region56: #{wave_u_net_forward.12} parent=51 // pred_fallthru
        _
    $region52: #{wave_u_net_forward.12} parent=5 // pred_fallthru
      _
  $region6: #{wave_u_net_forward.12} parent=0 // loop_footer
    %s16 = sadd.s32 1, %s12
  $region7: #{wave_u_net_forward.12} parent=0 // loop_footer_branch
    %11 = sbr.rel target = $region3
  $region8: #{wave_u_net_forward.12} parent=0 // loop_exit
    _

// kernel: wave_u_net_forward.11
$region0: #{wave_u_net_forward.11}
  #allocation0 [shape = 'u32[]', space=smem, size = 0x4, offset = 0x4, fixed_abs, tag = 'smem constant byte address 0x4 - core index']
  #allocation1 [shape = 'u32[144,128]{1,0:T(1,128)}', space=vmem, size = 0x12000, scoped, tag = 'internal scratch']
  #allocation2 [shape = 'f32[8,1]{1,0:T(8,128)}', space=vmem, size = 0x1000, scoped, tag = 'scratch operand']
  #allocation3 [shape = 'f32[8,1]{1,0:T(8,128)}', space=vmem, size = 0x1000, scoped, tag = 'scratch operand']
  %s0 = inlined_call_operand.vmem [shape: f32[15,8,4], index: 0, kind: input, shape index: {}]
  %s1 = inlined_call_operand.vmem [shape: f32[2,4,8], index: 1, kind: input, shape index: {}]
  %s2 = inlined_call_operand.vmem [shape: f32[2,1,4,7], index: 2, kind: input, shape index: {}, may-alias: {2,3}]
  %s3 = inlined_call_operand.vmem [shape: f32[2,1,4,7], index: 3, kind: input, shape index: {}, may-alias: {2,3}]
  %s4 = inlined_call_operand.vmem [shape: f32[8,1], index: 4, kind: input, shape index: {}]
  %s5 = inlined_call_operand.vmem [shape: f32[8,1], index: 5, kind: input, shape index: {}]
  %s6 = inlined_call_operand.vmem [shape: f32[8,1], index: 6, kind: output, shape index: {0}]
  %s7 = inlined_call_operand.vmem [shape: f32[8,1], index: 7, kind: output, shape index: {1}]
  %8 = xla_tuple %s6, %s7
  %s9 = sld [smem:[#allocation0]]
  $region73: #{wave_u_net_forward.11} parent=0
    _
  %s11 = ssub.s32 1, %s9
  %s12 = scalar_select 0, %s11, %s9
  loop: start=0, step=1, limit=4
  $region2: #{wave_u_net_forward.11} parent=0 // loop_pre_header
    _
  $region3: #{wave_u_net_forward.11} parent=0 // loop_header
    %s14 = sphi 0, %s18
    %p15 = scmp.ge.s32.totalorder %s14, 4
    %s21 = sphi 0, %s33
    %s22 = sphi 0, %s29
    %s23 = sphi 0, %s21
    %s24 = sphi 0, %s22
    %s25 = sphi 0, %s23
    %s26 = sphi 0, %s24
    %s34 = sphi 0, %s34
    %s36 = sphi 0, %s34
    %s37 = sphi 0, %s36
    %s51 = sphi 0, %s37
    %s59 = sphi 0, %s61
    %s62 = sphi 0, %s59
    %s63 = sphi 0, %s62
    %s79 = sphi 0, %s63
    %s87 = sphi 0, %s89
    %s90 = sphi 0, %s87
    %s91 = sphi 0, %s90
    %s107 = sphi 0, %s91
    %s115 = sphi 0, %s117
    %s118 = sphi 0, %s115
    %s119 = sphi 0, %s118
    %s135 = sphi 0, %s119
    %s139 = sphi 0, %s139
    %s141 = sphi 0, %s139
    %s142 = sphi 0, %s141
    %s156 = sphi 0, %s142
    %s160 = sphi 0, %s160
    %s162 = sphi 0, %s160
    %s163 = sphi 0, %s162
    %s177 = sphi 0, %s163
    %s181 = sphi 0, %s181
    %s183 = sphi 0, %s181
    %s184 = sphi 0, %s183
    %s198 = sphi 0, %s184
    %s202 = sphi 0, %s202
    %s204 = sphi 0, %s202
    %s205 = sphi 0, %s204
    %s219 = sphi 0, %s205
  $region4: #{wave_u_net_forward.11} parent=0 // loop_header_branch
    %17 = sbr.rel (%p15) target = $region8
  $region5: #{wave_u_net_forward.11} parent=0 // loop_body
    %s19 = ssub.s32 %s14, 1
    %s20 = ssub.s32 %s14, 2
    %s27 = sadd.s32 1, %s22
    %p28 = scmp.ge.s32.totalorder %s27, 1
    %s29 = scalar_select %p28, 0, %s27
    %s30 = sadd.s32 1, %s21
    %s31 = scalar_select %p28, %s30, %s21
    %p32 = scmp.ge.s32.totalorder %s31, 2
    %s33 = scalar_select %p32, 0, %s31
    %s35 = sadd.s32 %s34, 1
    %p38 = scmp.eq.s32.totalorder %s14, 1
    %p39 = scmp.ne.s32.totalorder %s34, %s36
    %p40 = scmp.eq.s32.totalorder %s14, 0
    %p41 = por %p39, %p40
    %p42 = scmp.ne.s32.totalorder %s34, %s36
    %p43 = scmp.eq.s32.totalorder %s19, 1
    %p44 = por %p42, %p43
    %p45 = scmp.ne.s32.totalorder %s36, %s37
    %p46 = scmp.eq.s32.totalorder %s19, 0
    %p47 = por %p45, %p46
    %p48 = scmp.ne.s32.totalorder %s36, %s37
    %p49 = scmp.eq.s32.totalorder %s20, 1
    %p50 = por %p48, %p49
    %p52 = scmp.ne.s32.totalorder %s37, %s51
    %p53 = scmp.eq.s32.totalorder %s20, 0
    %p54 = por %p52, %p53
    %s55 = ssub.s32 %s21, %s33
    %s56 = ssub.s32 %s22, %s29
    %s57 = sor.u32 %s55, %s56
    %p58 = scmp.eq.s32.totalorder %s57, 0
    %s60 = sadd.s32 %s59, 1
    %s61 = scalar_select %p58, %s59, %s60
    %p64 = pneg %p58
    %p65 = scmp.eq.s32.totalorder %s14, 1
    %p66 = por %p64, %p65
    %p67 = scmp.ne.s32.totalorder %s59, %s62
    %p68 = scmp.eq.s32.totalorder %s14, 0
    %p69 = por %p67, %p68
    %p70 = scmp.ne.s32.totalorder %s59, %s62
    %p71 = scmp.eq.s32.totalorder %s19, 1
    %p72 = por %p70, %p71
    %p73 = scmp.ne.s32.totalorder %s62, %s63
    %p74 = scmp.eq.s32.totalorder %s19, 0
    %p75 = por %p73, %p74
    %p76 = scmp.ne.s32.totalorder %s62, %s63
    %p77 = scmp.eq.s32.totalorder %s20, 1
    %p78 = por %p76, %p77
    %p80 = scmp.ne.s32.totalorder %s63, %s79
    %p81 = scmp.eq.s32.totalorder %s20, 0
    %p82 = por %p80, %p81
    %s83 = ssub.s32 %s21, %s33
    %s84 = ssub.s32 %s22, %s29
    %s85 = sor.u32 %s83, %s84
    %p86 = scmp.eq.s32.totalorder %s85, 0
    %s88 = sadd.s32 %s87, 1
    %s89 = scalar_select %p86, %s87, %s88
    %p92 = pneg %p86
    %p93 = scmp.eq.s32.totalorder %s14, 1
    %p94 = por %p92, %p93
    %p95 = scmp.ne.s32.totalorder %s87, %s90
    %p96 = scmp.eq.s32.totalorder %s14, 0
    %p97 = por %p95, %p96
    %p98 = scmp.ne.s32.totalorder %s87, %s90
    %p99 = scmp.eq.s32.totalorder %s19, 1
    %p100 = por %p98, %p99
    %p101 = scmp.ne.s32.totalorder %s90, %s91
    %p102 = scmp.eq.s32.totalorder %s19, 0
    %p103 = por %p101, %p102
    %p104 = scmp.ne.s32.totalorder %s90, %s91
    %p105 = scmp.eq.s32.totalorder %s20, 1
    %p106 = por %p104, %p105
    %p108 = scmp.ne.s32.totalorder %s91, %s107
    %p109 = scmp.eq.s32.totalorder %s20, 0
    %p110 = por %p108, %p109
    %s111 = ssub.s32 %s21, %s33
    %s112 = ssub.s32 %s22, %s29
    %s113 = sor.u32 %s111, %s112
    %p114 = scmp.eq.s32.totalorder %s113, 0
    %s116 = sadd.s32 %s115, 1
    %s117 = scalar_select %p114, %s115, %s116
    %p120 = pneg %p114
    %p121 = scmp.eq.s32.totalorder %s14, 1
    %p122 = por %p120, %p121
    %p123 = scmp.ne.s32.totalorder %s115, %s118
    %p124 = scmp.eq.s32.totalorder %s14, 0
    %p125 = por %p123, %p124
    %p126 = scmp.ne.s32.totalorder %s115, %s118
    %p127 = scmp.eq.s32.totalorder %s19, 1
    %p128 = por %p126, %p127
    %p129 = scmp.ne.s32.totalorder %s118, %s119
    %p130 = scmp.eq.s32.totalorder %s19, 0
    %p131 = por %p129, %p130
    %p132 = scmp.ne.s32.totalorder %s118, %s119
    %p133 = scmp.eq.s32.totalorder %s20, 1
    %p134 = por %p132, %p133
    %p136 = scmp.ne.s32.totalorder %s119, %s135
    %p137 = scmp.eq.s32.totalorder %s20, 0
    %p138 = por %p136, %p137
    %s140 = sadd.s32 %s139, 1
    %p143 = scmp.eq.s32.totalorder %s14, 1
    %p144 = scmp.ne.s32.totalorder %s139, %s141
    %p145 = scmp.eq.s32.totalorder %s14, 0
    %p146 = por %p144, %p145
    %p147 = scmp.ne.s32.totalorder %s139, %s141
    %p148 = scmp.eq.s32.totalorder %s19, 1
    %p149 = por %p147, %p148
    %p150 = scmp.ne.s32.totalorder %s141, %s142
    %p151 = scmp.eq.s32.totalorder %s19, 0
    %p152 = por %p150, %p151
    %p153 = scmp.ne.s32.totalorder %s141, %s142
    %p154 = scmp.eq.s32.totalorder %s20, 1
    %p155 = por %p153, %p154
    %p157 = scmp.ne.s32.totalorder %s142, %s156
    %p158 = scmp.eq.s32.totalorder %s20, 0
    %p159 = por %p157, %p158
    %s161 = sadd.s32 %s160, 1
    %p164 = scmp.eq.s32.totalorder %s14, 1
    %p165 = scmp.ne.s32.totalorder %s160, %s162
    %p166 = scmp.eq.s32.totalorder %s14, 0
    %p167 = por %p165, %p166
    %p168 = scmp.ne.s32.totalorder %s160, %s162
    %p169 = scmp.eq.s32.totalorder %s19, 1
    %p170 = por %p168, %p169
    %p171 = scmp.ne.s32.totalorder %s162, %s163
    %p172 = scmp.eq.s32.totalorder %s19, 0
    %p173 = por %p171, %p172
    %p174 = scmp.ne.s32.totalorder %s162, %s163
    %p175 = scmp.eq.s32.totalorder %s20, 1
    %p176 = por %p174, %p175
    %p178 = scmp.ne.s32.totalorder %s163, %s177
    %p179 = scmp.eq.s32.totalorder %s20, 0
    %p180 = por %p178, %p179
    %s182 = sadd.s32 %s181, 1
    %p185 = scmp.eq.s32.totalorder %s14, 1
    %p186 = scmp.ne.s32.totalorder %s181, %s183
    %p187 = scmp.eq.s32.totalorder %s14, 0
    %p188 = por %p186, %p187
    %p189 = scmp.ne.s32.totalorder %s181, %s183
    %p190 = scmp.eq.s32.totalorder %s19, 1
    %p191 = por %p189, %p190
    %p192 = scmp.ne.s32.totalorder %s183, %s184
    %p193 = scmp.eq.s32.totalorder %s19, 0
    %p194 = por %p192, %p193
    %p195 = scmp.ne.s32.totalorder %s183, %s184
    %p196 = scmp.eq.s32.totalorder %s20, 1
    %p197 = por %p195, %p196
    %p199 = scmp.ne.s32.totalorder %s184, %s198
    %p200 = scmp.eq.s32.totalorder %s20, 0
    %p201 = por %p199, %p200
    %s203 = sadd.s32 %s202, 1
    %p206 = scmp.eq.s32.totalorder %s14, 1
    %p207 = scmp.ne.s32.totalorder %s202, %s204
    %p208 = scmp.eq.s32.totalorder %s14, 0
    %p209 = por %p207, %p208
    %p210 = scmp.ne.s32.totalorder %s202, %s204
    %p211 = scmp.eq.s32.totalorder %s19, 1
    %p212 = por %p210, %p211
    %p213 = scmp.ne.s32.totalorder %s204, %s205
    %p214 = scmp.eq.s32.totalorder %s19, 0
    %p215 = por %p213, %p214
    %p216 = scmp.ne.s32.totalorder %s204, %s205
    %p217 = scmp.eq.s32.totalorder %s20, 1
    %p218 = por %p216, %p217
    %p220 = scmp.ne.s32.totalorder %s205, %s219
    %p221 = scmp.eq.s32.totalorder %s20, 0
    %p222 = por %p220, %p221
    %p223 = scmp.le.s32.totalorder 1, %s14
    %p224 = scmp.lt.s32.totalorder %s14, 3
    %p225 = pnand %p223, %p224
    %p226 = pneg %p225
    // Predicated region
    $region9: #{wave_u_net_forward.11} parent=5 // pred_check
      _
    $region10: #{wave_u_net_forward.11} parent=5 // pred_check_branch
      %228 = sbr.rel (%p225) target = $region12
    $region11: #{wave_u_net_forward.11} parent=5 // pred_region
      %s229 = ssub.s32 %s14, 1
      // Predicated region
      $region13: #{wave_u_net_forward.11} parent=11 // pred_check
        %p230 = pneg %p47
      $region14: #{wave_u_net_forward.11} parent=11 // pred_check_branch
        %232 = sbr.rel (%p230) target = $region16
      $region15: #{wave_u_net_forward.11} parent=11 // pred_region
        _
      $region16: #{wave_u_net_forward.11} parent=11 // pred_fallthru
        _
      // Predicated region
      $region17: #{wave_u_net_forward.11} parent=11 // pred_check
        %p233 = pneg %p152
      $region18: #{wave_u_net_forward.11} parent=11 // pred_check_branch
        %235 = sbr.rel (%p233) target = $region20
      $region19: #{wave_u_net_forward.11} parent=11 // pred_region
        _
      $region20: #{wave_u_net_forward.11} parent=11 // pred_fallthru
        _
      // Predicated region
      $region21: #{wave_u_net_forward.11} parent=11 // pred_check
        %p236 = pneg %p173
      $region22: #{wave_u_net_forward.11} parent=11 // pred_check_branch
        %238 = sbr.rel (%p236) target = $region24
      $region23: #{wave_u_net_forward.11} parent=11 // pred_region
        _
      $region24: #{wave_u_net_forward.11} parent=11 // pred_fallthru
        _
    $region12: #{wave_u_net_forward.11} parent=5 // pred_fallthru
      _
    %p239 = scmp.lt.s32.totalorder %s14, 2
    // Predicated region
    $region25: #{wave_u_net_forward.11} parent=5 // pred_check
      %p240 = pneg %p239
    $region26: #{wave_u_net_forward.11} parent=5 // pred_check_branch
      %242 = sbr.rel (%p240) target = $region28
    $region27: #{wave_u_net_forward.11} parent=5 // pred_region
      // Predicated region
      $region29: #{wave_u_net_forward.11} parent=27 // pred_check
        %p243 = pneg %p69
      $region30: #{wave_u_net_forward.11} parent=27 // pred_check_branch
        %245 = sbr.rel (%p243) target = $region32
      $region31: #{wave_u_net_forward.11} parent=27 // pred_region
        %p246 = scmp.lt.s32.totalorder %s21, 1
        %s247 = scalar_select %p246, %s21, 1
        %p248 = scmp.lt.s32.totalorder %s22, 0
        %s249 = scalar_select %p248, %s22, 0
        %s250 = sadd.s32 %s249, %s247
        %s251 = smul.addr %s250, 4
        %s252 = scalar_lea.vmem %s1, %s251
      $region32: #{wave_u_net_forward.11} parent=27 // pred_fallthru
        _
      // Predicated region
      $region33: #{wave_u_net_forward.11} parent=27 // pred_check
        %p253 = pneg %p97
      $region34: #{wave_u_net_forward.11} parent=27 // pred_check_branch
        %255 = sbr.rel (%p253) target = $region36
      $region35: #{wave_u_net_forward.11} parent=27 // pred_region
        %p256 = scmp.lt.s32.totalorder %s21, 1
        %s257 = scalar_select %p256, %s21, 1
        %p258 = scmp.lt.s32.totalorder %s22, 0
        %s259 = scalar_select %p258, %s22, 0
        %s260 = sadd.s32 %s259, %s257
        %s261 = smul.addr %s260, 4
        %s262 = scalar_lea.vmem %s2, %s261
      $region36: #{wave_u_net_forward.11} parent=27 // pred_fallthru
        _
      // Predicated region
      $region37: #{wave_u_net_forward.11} parent=27 // pred_check
        %p263 = pneg %p125
      $region38: #{wave_u_net_forward.11} parent=27 // pred_check_branch
        %265 = sbr.rel (%p263) target = $region40
      $region39: #{wave_u_net_forward.11} parent=27 // pred_region
        %p266 = scmp.lt.s32.totalorder %s21, 1
        %s267 = scalar_select %p266, %s21, 1
        %p268 = scmp.lt.s32.totalorder %s22, 0
        %s269 = scalar_select %p268, %s22, 0
        %s270 = sadd.s32 %s269, %s267
        %s271 = smul.addr %s270, 4
        %s272 = scalar_lea.vmem %s3, %s271
      $region40: #{wave_u_net_forward.11} parent=27 // pred_fallthru
        _
    $region28: #{wave_u_net_forward.11} parent=5 // pred_fallthru
      _
    %p273 = scmp.le.s32.totalorder 1, %s14
    %p274 = scmp.lt.s32.totalorder %s14, 3
    %p275 = pnand %p273, %p274
    %p276 = pneg %p275
    // Predicated region
    $region41: #{wave_u_net_forward.11} parent=5 // pred_check
      _
    $region42: #{wave_u_net_forward.11} parent=5 // pred_check_branch
      %278 = sbr.rel (%p275) target = $region44
    $region43: #{wave_u_net_forward.11} parent=5 // pred_region
      %s279 = ssub.s32 %s14, 1
      %p280 = pneg %p47
      %p281 = pneg %p44
      %p282 = scmp.lt.s32.totalorder %s23, 1
      %s283 = scalar_select %p282, %s23, 1
      %p284 = scmp.lt.s32.totalorder %s24, 0
      %s285 = scalar_select %p284, %s24, 0
      %s286 = sadd.s32 %s285, %s283
      %s287 = smul.addr %s286, 4
      %s288 = scalar_lea.vmem %s1, %s287
      %p289 = pneg %p75
      %p290 = pneg %p72
      %p291 = scmp.lt.s32.totalorder %s23, 1
      %s292 = scalar_select %p291, %s23, 1
      %p293 = scmp.lt.s32.totalorder %s24, 0
      %s294 = scalar_select %p293, %s24, 0
      %s295 = sadd.s32 %s294, %s292
      %s296 = smul.addr %s295, 4
      %s297 = scalar_lea.vmem %s2, %s296
      %p298 = pneg %p103
      %p299 = pneg %p100
      %p300 = scmp.lt.s32.totalorder %s23, 1
      %s301 = scalar_select %p300, %s23, 1
      %p302 = scmp.lt.s32.totalorder %s24, 0
      %s303 = scalar_select %p302, %s24, 0
      %s304 = sadd.s32 %s303, %s301
      %s305 = smul.addr %s304, 4
      %s306 = scalar_lea.vmem %s3, %s305
      %p307 = pneg %p131
      %p308 = pneg %p128
      %p309 = pneg %p152
      %p310 = pneg %p149
      %p311 = pneg %p173
      %p312 = pneg %p170
      %p313 = pneg %p194
      %p314 = pneg %p191
      %p315 = pneg %p215
      %p316 = pneg %p212
      %p317 = scmp.lt.s32.totalorder %s23, 1
      %s318 = scalar_select %p317, %s23, 1
      %p319 = scmp.lt.s32.totalorder %s24, 0
      %s320 = scalar_select %p319, %s24, 0
      %s321 = sadd.s32 %s320, %s318
      %s322 = smul.addr %s321, 4
      %s323 = scalar_lea.vmem %s1, %s322
      %p324 = scmp.lt.s32.totalorder %s23, 1
      %s325 = scalar_select %p324, %s23, 1
      %p326 = scmp.lt.s32.totalorder %s24, 0
      %s327 = scalar_select %p326, %s24, 0
      %s328 = sadd.s32 %s327, %s325
      %s329 = smul.addr %s328, 4
      %s330 = scalar_lea.vmem %s2, %s329
      %p331 = scmp.lt.s32.totalorder %s23, 1
      %s332 = scalar_select %p331, %s23, 1
      %p333 = scmp.lt.s32.totalorder %s24, 0
      %s334 = scalar_select %p333, %s24, 0
      %s335 = sadd.s32 %s334, %s332
      %s336 = smul.addr %s335, 4
      %s337 = scalar_lea.vmem %s3, %s336
      %p338 = scmp.eq.s32.totalorder %s23, 0
      %p339 = scmp.eq.s32.totalorder %s24, 0
      %p340 = pnand %p338, %p339
      %p341 = pneg %p340
      // Predicated region
      $region45: #{wave_u_net_forward.11} parent=43 // pred_check
        _
      $region46: #{wave_u_net_forward.11} parent=43 // pred_check_branch
        %343 = sbr.rel (%p340) target = $region48
      $region47: #{wave_u_net_forward.11} parent=43 // pred_region
        %vm344 = vcmask 7168
        %345 = vst.msk [vmem:[#allocation2] sm:$0xff] %vm344, 0.0
        %346 = vst.msk [vmem:[#allocation3] sm:$0xff] %vm344, 0.0
      $region48: #{wave_u_net_forward.11} parent=43 // pred_fallthru
        _
      %v347 = vld [vmem:[%s330] sm:$0xf]
      %v348 = vld [vmem:[%s323] sm:$0xf]
      %v349 = vld [vmem:[%s337] sm:$0xf]
      %351 = vrot.lane.b32.xlu0 %v348, 7
      %v352 = vpop.permute.xlu0 %351
      %355 = vrot.lane.b32.xlu0 %v349, 15
      %v356 = vpop.permute.xlu0 %355
      %vm358 = vcmask 56320
      %v359 = vsel %vm358, %v347, %v352
      %vm360 = vcmask 121856
      %v361 = vsel %vm360, %v359, %v356
      %v362 = vld [vmem:[%s0] sm:$0xff]
      %s363 = scalar_lea.vmem %s0, 8
      %v364 = vld [vmem:[%s363] sm:$0xff]
      %366 = vrot.lane.b32.xlu0 %v361, 127
      %v367 = vpop.permute.xlu0 %366
      %vm368 = vcmask 31744
      %v370 = vsel %vm368, %v364, 0
      %vm372 = vcmask 1043456
      %v373 = vsel %vm372, %v367, 0
      %375 = vmatprep.subr.mxu0 0.0
      %376 = vmatpush1.msra.mxu0 0.0
      %377 = vmatprep.subr.mxu0 0.0
      %378 = vmatpush1.msra.mxu0 0.0
      %379 = vmatprep.subr.mxu0 0.0
      %380 = vmatpush1.msra.mxu0 0.0
      %381 = vmatprep.subr.mxu0 0.0
      %382 = vmatpush1.msra.mxu0 0.0
      %383 = vmatprep.subr.mxu0 0.0
      %384 = vmatpush1.msra.mxu0 0.0
      %385 = vmatprep.subr.mxu0 0.0
      %386 = vmatpush1.msra.mxu0 0.0
      %387 = vmatprep.subr.mxu0 0.0
      %388 = vmatpush1.msra.mxu0 0.0
      %389 = vmatprep.subr.mxu0 0.0
      %390 = vmatpush1.msra.mxu0 0.0
      %391 = vmatprep.subr.mxu0 0.0
      %392 = vmatpush1.msra.mxu0 0.0
      %393 = vmatprep.subr.mxu0 0.0
      %394 = vmatpush1.msra.mxu0 0.0
      %395 = vmatprep.subr.mxu0 0.0
      %396 = vmatpush1.msra.mxu0 0.0
      %397 = vmatprep.subr.mxu0 0.0
      %398 = vmatpush1.msra.mxu0 0.0
      %399 = vmatprep.subr.mxu0 0.0
      %400 = vmatpush1.msra.mxu0 0.0
      %401 = vmatprep.subr.mxu0 0.0
      %402 = vmatpush1.msra.mxu0 0.0
      %403 = vmatprep.subr.mxu0 0.0
      %404 = vmatpush1.msra.mxu0 0.0
      %405 = vmatprep.subr.mxu0 0.0
      %406 = vmatpush1.msra.mxu0 %v373
      %407 = vmatprep.subr.mxu0 0.0
      %408 = vmatpush2.msra.mxu0 0.0
      %409 = vmatprep.subr.mxu0 0.0
      %410 = vmatpush2.msra.mxu0 0.0
      %411 = vmatprep.subr.mxu0 0.0
      %412 = vmatpush2.msra.mxu0 0.0
      %413 = vmatprep.subr.mxu0 0.0
      %414 = vmatpush2.msra.mxu0 0.0
      %415 = vmatprep.subr.mxu0 0.0
      %416 = vmatpush2.msra.mxu0 0.0
      %417 = vmatprep.subr.mxu0 0.0
      %418 = vmatpush2.msra.mxu0 0.0
      %419 = vmatprep.subr.mxu0 0.0
      %420 = vmatpush2.msra.mxu0 0.0
      %421 = vmatprep.subr.mxu0 0.0
      %422 = vmatpush2.msra.mxu0 0.0
      %423 = vmatprep.subr.mxu0 0.0
      %424 = vmatpush2.msra.mxu0 0.0
      %425 = vmatprep.subr.mxu0 0.0
      %426 = vmatpush2.msra.mxu0 0.0
      %427 = vmatprep.subr.mxu0 0.0
      %428 = vmatpush2.msra.mxu0 0.0
      %429 = vmatprep.subr.mxu0 0.0
      %430 = vmatpush2.msra.mxu0 0.0
      %431 = vmatprep.subr.mxu0 0.0
      %432 = vmatpush2.msra.mxu0 0.0
      %433 = vmatprep.subr.mxu0 0.0
      %434 = vmatpush2.msra.mxu0 0.0
      %435 = vmatprep.subr.mxu0 0.0
      %436 = vmatpush2.msra.mxu0 0.0
      %437 = vmatprep.subr.mxu0 0.0
      %438 = vmatpush2.msra.mxu0 0.0
      %439 = vmatprep.mubr.f32.mxu0 0.0
      %440 = vmatmul.mubr.f32.gmra.mxu0 %v370
      %v441 = vpop.f32.mrf.mxu0
      %v442 = vadd.f32 0.0, %v441
      %v443 = vpop.f32.mrf.mxu0
      %444 = vdwg.mxu0
      %v446 = vsel %vm368, %v362, 0
      %v448 = vsel %vm372, %v361, 0
      %450 = vmatprep.subr.mxu0 0.0
      %451 = vmatpush1.msra.mxu0 0.0
      %452 = vmatprep.subr.mxu0 0.0
      %453 = vmatpush1.msra.mxu0 0.0
      %454 = vmatprep.subr.mxu0 0.0
      %455 = vmatpush1.msra.mxu0 0.0
      %456 = vmatprep.subr.mxu0 0.0
      %457 = vmatpush1.msra.mxu0 0.0
      %458 = vmatprep.subr.mxu0 0.0
      %459 = vmatpush1.msra.mxu0 0.0
      %460 = vmatprep.subr.mxu0 0.0
      %461 = vmatpush1.msra.mxu0 0.0
      %462 = vmatprep.subr.mxu0 0.0
      %463 = vmatpush1.msra.mxu0 0.0
      %464 = vmatprep.subr.mxu0 0.0
      %465 = vmatpush1.msra.mxu0 0.0
      %466 = vmatprep.subr.mxu0 0.0
      %467 = vmatpush1.msra.mxu0 0.0
      %468 = vmatprep.subr.mxu0 0.0
      %469 = vmatpush1.msra.mxu0 0.0
      %470 = vmatprep.subr.mxu0 0.0
      %471 = vmatpush1.msra.mxu0 0.0
      %472 = vmatprep.subr.mxu0 0.0
      %473 = vmatpush1.msra.mxu0 0.0
      %474 = vmatprep.subr.mxu0 0.0
      %475 = vmatpush1.msra.mxu0 0.0
      %476 = vmatprep.subr.mxu0 0.0
      %477 = vmatpush1.msra.mxu0 0.0
      %478 = vmatprep.subr.mxu0 0.0
      %479 = vmatpush1.msra.mxu0 0.0
      %480 = vmatprep.subr.mxu0 0.0
      %481 = vmatpush1.msra.mxu0 %v448
      %482 = vmatprep.subr.mxu0 0.0
      %483 = vmatpush2.msra.mxu0 0.0
      %484 = vmatprep.subr.mxu0 0.0
      %485 = vmatpush2.msra.mxu0 0.0
      %486 = vmatprep.subr.mxu0 0.0
      %487 = vmatpush2.msra.mxu0 0.0
      %488 = vmatprep.subr.mxu0 0.0
      %489 = vmatpush2.msra.mxu0 0.0
      %490 = vmatprep.subr.mxu0 0.0
      %491 = vmatpush2.msra.mxu0 0.0
      %492 = vmatprep.subr.mxu0 0.0
      %493 = vmatpush2.msra.mxu0 0.0
      %494 = vmatprep.subr.mxu0 0.0
      %495 = vmatpush2.msra.mxu0 0.0
      %496 = vmatprep.subr.mxu0 0.0
      %497 = vmatpush2.msra.mxu0 0.0
      %498 = vmatprep.subr.mxu0 0.0
      %499 = vmatpush2.msra.mxu0 0.0
      %500 = vmatprep.subr.mxu0 0.0
      %501 = vmatpush2.msra.mxu0 0.0
      %502 = vmatprep.subr.mxu0 0.0
      %503 = vmatpush2.msra.mxu0 0.0
      %504 = vmatprep.subr.mxu0 0.0
      %505 = vmatpush2.msra.mxu0 0.0
      %506 = vmatprep.subr.mxu0 0.0
      %507 = vmatpush2.msra.mxu0 0.0
      %508 = vmatprep.subr.mxu0 0.0
      %509 = vmatpush2.msra.mxu0 0.0
      %510 = vmatprep.subr.mxu0 0.0
      %511 = vmatpush2.msra.mxu0 0.0
      %512 = vmatprep.subr.mxu0 0.0
      %513 = vmatpush2.msra.mxu0 0.0
      %514 = vmatprep.mubr.f32.mxu0 0.0
      %515 = vmatmul.mubr.f32.gmra.mxu0 %v446
      %v516 = vpop.f32.mrf.mxu0
      %v517 = vadd.f32 %v442, %v516
      %v518 = vpop.f32.mrf.mxu0
      %519 = vdwg.mxu0
      %s520 = scalar_lea.vmem %s0, 16
      %v521 = vld [vmem:[%s520] sm:$0xff]
      %522 = vrot.lane.b32.xlu0 %v361, 126
      %v523 = vpop.permute.xlu0 %522
      %v525 = vsel %vm368, %v521, 0
      %v527 = vsel %vm372, %v523, 0
      %529 = vmatprep.subr.mxu0 0.0
      %530 = vmatpush1.msra.mxu0 0.0
      %531 = vmatprep.subr.mxu0 0.0
      %532 = vmatpush1.msra.mxu0 0.0
      %533 = vmatprep.subr.mxu0 0.0
      %534 = vmatpush1.msra.mxu0 0.0
      %535 = vmatprep.subr.mxu0 0.0
      %536 = vmatpush1.msra.mxu0 0.0
      %537 = vmatprep.subr.mxu0 0.0
      %538 = vmatpush1.msra.mxu0 0.0
      %539 = vmatprep.subr.mxu0 0.0
      %540 = vmatpush1.msra.mxu0 0.0
      %541 = vmatprep.subr.mxu0 0.0
      %542 = vmatpush1.msra.mxu0 0.0
      %543 = vmatprep.subr.mxu0 0.0
      %544 = vmatpush1.msra.mxu0 0.0
      %545 = vmatprep.subr.mxu0 0.0
      %546 = vmatpush1.msra.mxu0 0.0
      %547 = vmatprep.subr.mxu0 0.0
      %548 = vmatpush1.msra.mxu0 0.0
      %549 = vmatprep.subr.mxu0 0.0
      %550 = vmatpush1.msra.mxu0 0.0
      %551 = vmatprep.subr.mxu0 0.0
      %552 = vmatpush1.msra.mxu0 0.0
      %553 = vmatprep.subr.mxu0 0.0
      %554 = vmatpush1.msra.mxu0 0.0
      %555 = vmatprep.subr.mxu0 0.0
      %556 = vmatpush1.msra.mxu0 0.0
      %557 = vmatprep.subr.mxu0 0.0
      %558 = vmatpush1.msra.mxu0 0.0
      %559 = vmatprep.subr.mxu0 0.0
      %560 = vmatpush1.msra.mxu0 %v527
      %561 = vmatprep.subr.mxu0 0.0
      %562 = vmatpush2.msra.mxu0 0.0
      %563 = vmatprep.subr.mxu0 0.0
      %564 = vmatpush2.msra.mxu0 0.0
      %565 = vmatprep.subr.mxu0 0.0
      %566 = vmatpush2.msra.mxu0 0.0
      %567 = vmatprep.subr.mxu0 0.0
      %568 = vmatpush2.msra.mxu0 0.0
      %569 = vmatprep.subr.mxu0 0.0
      %570 = vmatpush2.msra.mxu0 0.0
      %571 = vmatprep.subr.mxu0 0.0
      %572 = vmatpush2.msra.mxu0 0.0
      %573 = vmatprep.subr.mxu0 0.0
      %574 = vmatpush2.msra.mxu0 0.0
      %575 = vmatprep.subr.mxu0 0.0
      %576 = vmatpush2.msra.mxu0 0.0
      %577 = vmatprep.subr.mxu0 0.0
      %578 = vmatpush2.msra.mxu0 0.0
      %579 = vmatprep.subr.mxu0 0.0
      %580 = vmatpush2.msra.mxu0 0.0
      %581 = vmatprep.subr.mxu0 0.0
      %582 = vmatpush2.msra.mxu0 0.0
      %583 = vmatprep.subr.mxu0 0.0
      %584 = vmatpush2.msra.mxu0 0.0
      %585 = vmatprep.subr.mxu0 0.0
      %586 = vmatpush2.msra.mxu0 0.0
      %587 = vmatprep.subr.mxu0 0.0
      %588 = vmatpush2.msra.mxu0 0.0
      %589 = vmatprep.subr.mxu0 0.0
      %590 = vmatpush2.msra.mxu0 0.0
      %591 = vmatprep.subr.mxu0 0.0
      %592 = vmatpush2.msra.mxu0 0.0
      %593 = vmatprep.mubr.f32.mxu0 0.0
      %594 = vmatmul.mubr.f32.gmra.mxu0 %v525
      %v595 = vpop.f32.mrf.mxu0
      %v596 = vadd.f32 0.0, %v595
      %v597 = vpop.f32.mrf.mxu0
      %598 = vdwg.mxu0
      %v599 = vadd.f32 %v517, %v596
      %s600 = scalar_lea.vmem %s0, 24
      %v601 = vld [vmem:[%s600] sm:$0xff]
      %602 = vrot.lane.b32.xlu0 %v361, 125
      %v603 = vpop.permute.xlu0 %602
      %v605 = vsel %vm368, %v601, 0
      %v607 = vsel %vm372, %v603, 0
      %609 = vmatprep.subr.mxu0 0.0
      %610 = vmatpush1.msra.mxu0 0.0
      %611 = vmatprep.subr.mxu0 0.0
      %612 = vmatpush1.msra.mxu0 0.0
      %613 = vmatprep.subr.mxu0 0.0
      %614 = vmatpush1.msra.mxu0 0.0
      %615 = vmatprep.subr.mxu0 0.0
      %616 = vmatpush1.msra.mxu0 0.0
      %617 = vmatprep.subr.mxu0 0.0
      %618 = vmatpush1.msra.mxu0 0.0
      %619 = vmatprep.subr.mxu0 0.0
      %620 = vmatpush1.msra.mxu0 0.0
      %621 = vmatprep.subr.mxu0 0.0
      %622 = vmatpush1.msra.mxu0 0.0
      %623 = vmatprep.subr.mxu0 0.0
      %624 = vmatpush1.msra.mxu0 0.0
      %625 = vmatprep.subr.mxu0 0.0
      %626 = vmatpush1.msra.mxu0 0.0
      %627 = vmatprep.subr.mxu0 0.0
      %628 = vmatpush1.msra.mxu0 0.0
      %629 = vmatprep.subr.mxu0 0.0
      %630 = vmatpush1.msra.mxu0 0.0
      %631 = vmatprep.subr.mxu0 0.0
      %632 = vmatpush1.msra.mxu0 0.0
      %633 = vmatprep.subr.mxu0 0.0
      %634 = vmatpush1.msra.mxu0 0.0
      %635 = vmatprep.subr.mxu0 0.0
      %636 = vmatpush1.msra.mxu0 0.0
      %637 = vmatprep.subr.mxu0 0.0
      %638 = vmatpush1.msra.mxu0 0.0
      %639 = vmatprep.subr.mxu0 0.0
      %640 = vmatpush1.msra.mxu0 %v607
      %641 = vmatprep.subr.mxu0 0.0
      %642 = vmatpush2.msra.mxu0 0.0
      %643 = vmatprep.subr.mxu0 0.0
      %644 = vmatpush2.msra.mxu0 0.0
      %645 = vmatprep.subr.mxu0 0.0
      %646 = vmatpush2.msra.mxu0 0.0
      %647 = vmatprep.subr.mxu0 0.0
      %648 = vmatpush2.msra.mxu0 0.0
      %649 = vmatprep.subr.mxu0 0.0
      %650 = vmatpush2.msra.mxu0 0.0
      %651 = vmatprep.subr.mxu0 0.0
      %652 = vmatpush2.msra.mxu0 0.0
      %653 = vmatprep.subr.mxu0 0.0
      %654 = vmatpush2.msra.mxu0 0.0
      %655 = vmatprep.subr.mxu0 0.0
      %656 = vmatpush2.msra.mxu0 0.0
      %657 = vmatprep.subr.mxu0 0.0
      %658 = vmatpush2.msra.mxu0 0.0
      %659 = vmatprep.subr.mxu0 0.0
      %660 = vmatpush2.msra.mxu0 0.0
      %661 = vmatprep.subr.mxu0 0.0
      %662 = vmatpush2.msra.mxu0 0.0
      %663 = vmatprep.subr.mxu0 0.0
      %664 = vmatpush2.msra.mxu0 0.0
      %665 = vmatprep.subr.mxu0 0.0
      %666 = vmatpush2.msra.mxu0 0.0
      %667 = vmatprep.subr.mxu0 0.0
      %668 = vmatpush2.msra.mxu0 0.0
      %669 = vmatprep.subr.mxu0 0.0
      %670 = vmatpush2.msra.mxu0 0.0
      %671 = vmatprep.subr.mxu0 0.0
      %672 = vmatpush2.msra.mxu0 0.0
      %673 = vmatprep.mubr.f32.mxu0 0.0
      %674 = vmatmul.mubr.f32.gmra.mxu0 %v605
      %v675 = vpop.f32.mrf.mxu0
      %v676 = vadd.f32 0.0, %v675
      %v677 = vpop.f32.mrf.mxu0
      %678 = vdwg.mxu0
      %v679 = vadd.f32 %v599, %v676
      %s680 = scalar_lea.vmem %s0, 32
      %v681 = vld [vmem:[%s680] sm:$0xff]
      %682 = vrot.lane.b32.xlu0 %v361, 124
      %v683 = vpop.permute.xlu0 %682
      %v685 = vsel %vm368, %v681, 0
      %v687 = vsel %vm372, %v683, 0
      %689 = vmatprep.subr.mxu0 0.0
      %690 = vmatpush1.msra.mxu0 0.0
      %691 = vmatprep.subr.mxu0 0.0
      %692 = vmatpush1.msra.mxu0 0.0
      %693 = vmatprep.subr.mxu0 0.0
      %694 = vmatpush1.msra.mxu0 0.0
      %695 = vmatprep.subr.mxu0 0.0
      %696 = vmatpush1.msra.mxu0 0.0
      %697 = vmatprep.subr.mxu0 0.0
      %698 = vmatpush1.msra.mxu0 0.0
      %699 = vmatprep.subr.mxu0 0.0
      %700 = vmatpush1.msra.mxu0 0.0
      %701 = vmatprep.subr.mxu0 0.0
      %702 = vmatpush1.msra.mxu0 0.0
      %703 = vmatprep.subr.mxu0 0.0
      %704 = vmatpush1.msra.mxu0 0.0
      %705 = vmatprep.subr.mxu0 0.0
      %706 = vmatpush1.msra.mxu0 0.0
      %707 = vmatprep.subr.mxu0 0.0
      %708 = vmatpush1.msra.mxu0 0.0
      %709 = vmatprep.subr.mxu0 0.0
      %710 = vmatpush1.msra.mxu0 0.0
      %711 = vmatprep.subr.mxu0 0.0
      %712 = vmatpush1.msra.mxu0 0.0
      %713 = vmatprep.subr.mxu0 0.0
      %714 = vmatpush1.msra.mxu0 0.0
      %715 = vmatprep.subr.mxu0 0.0
      %716 = vmatpush1.msra.mxu0 0.0
      %717 = vmatprep.subr.mxu0 0.0
      %718 = vmatpush1.msra.mxu0 0.0
      %719 = vmatprep.subr.mxu0 0.0
      %720 = vmatpush1.msra.mxu0 %v687
      %721 = vmatprep.subr.mxu0 0.0
      %722 = vmatpush2.msra.mxu0 0.0
      %723 = vmatprep.subr.mxu0 0.0
      %724 = vmatpush2.msra.mxu0 0.0
      %725 = vmatprep.subr.mxu0 0.0
      %726 = vmatpush2.msra.mxu0 0.0
      %727 = vmatprep.subr.mxu0 0.0
      %728 = vmatpush2.msra.mxu0 0.0
      %729 = vmatprep.subr.mxu0 0.0
      %730 = vmatpush2.msra.mxu0 0.0
      %731 = vmatprep.subr.mxu0 0.0
      %732 = vmatpush2.msra.mxu0 0.0
      %733 = vmatprep.subr.mxu0 0.0
      %734 = vmatpush2.msra.mxu0 0.0
      %735 = vmatprep.subr.mxu0 0.0
      %736 = vmatpush2.msra.mxu0 0.0
      %737 = vmatprep.subr.mxu0 0.0
      %738 = vmatpush2.msra.mxu0 0.0
      %739 = vmatprep.subr.mxu0 0.0
      %740 = vmatpush2.msra.mxu0 0.0
      %741 = vmatprep.subr.mxu0 0.0
      %742 = vmatpush2.msra.mxu0 0.0
      %743 = vmatprep.subr.mxu0 0.0
      %744 = vmatpush2.msra.mxu0 0.0
      %745 = vmatprep.subr.mxu0 0.0
      %746 = vmatpush2.msra.mxu0 0.0
      %747 = vmatprep.subr.mxu0 0.0
      %748 = vmatpush2.msra.mxu0 0.0
      %749 = vmatprep.subr.mxu0 0.0
      %750 = vmatpush2.msra.mxu0 0.0
      %751 = vmatprep.subr.mxu0 0.0
      %752 = vmatpush2.msra.mxu0 0.0
      %753 = vmatprep.mubr.f32.mxu0 0.0
      %754 = vmatmul.mubr.f32.gmra.mxu0 %v685
      %v755 = vpop.f32.mrf.mxu0
      %v756 = vadd.f32 0.0, %v755
      %v757 = vpop.f32.mrf.mxu0
      %758 = vdwg.mxu0
      %v759 = vadd.f32 %v679, %v756
      %s760 = scalar_lea.vmem %s0, 40
      %v761 = vld [vmem:[%s760] sm:$0xff]
      %762 = vrot.lane.b32.xlu0 %v361, 123
      %v763 = vpop.permute.xlu0 %762
      %v765 = vsel %vm368, %v761, 0
      %v767 = vsel %vm372, %v763, 0
      %769 = vmatprep.subr.mxu0 0.0
      %770 = vmatpush1.msra.mxu0 0.0
      %771 = vmatprep.subr.mxu0 0.0
      %772 = vmatpush1.msra.mxu0 0.0
      %773 = vmatprep.subr.mxu0 0.0
      %774 = vmatpush1.msra.mxu0 0.0
      %775 = vmatprep.subr.mxu0 0.0
      %776 = vmatpush1.msra.mxu0 0.0
      %777 = vmatprep.subr.mxu0 0.0
      %778 = vmatpush1.msra.mxu0 0.0
      %779 = vmatprep.subr.mxu0 0.0
      %780 = vmatpush1.msra.mxu0 0.0
      %781 = vmatprep.subr.mxu0 0.0
      %782 = vmatpush1.msra.mxu0 0.0
      %783 = vmatprep.subr.mxu0 0.0
      %784 = vmatpush1.msra.mxu0 0.0
      %785 = vmatprep.subr.mxu0 0.0
      %786 = vmatpush1.msra.mxu0 0.0
      %787 = vmatprep.subr.mxu0 0.0
      %788 = vmatpush1.msra.mxu0 0.0
      %789 = vmatprep.subr.mxu0 0.0
      %790 = vmatpush1.msra.mxu0 0.0
      %791 = vmatprep.subr.mxu0 0.0
      %792 = vmatpush1.msra.mxu0 0.0
      %793 = vmatprep.subr.mxu0 0.0
      %794 = vmatpush1.msra.mxu0 0.0
      %795 = vmatprep.subr.mxu0 0.0
      %796 = vmatpush1.msra.mxu0 0.0
      %797 = vmatprep.subr.mxu0 0.0
      %798 = vmatpush1.msra.mxu0 0.0
      %799 = vmatprep.subr.mxu0 0.0
      %800 = vmatpush1.msra.mxu0 %v767
      %801 = vmatprep.subr.mxu0 0.0
      %802 = vmatpush2.msra.mxu0 0.0
      %803 = vmatprep.subr.mxu0 0.0
      %804 = vmatpush2.msra.mxu0 0.0
      %805 = vmatprep.subr.mxu0 0.0
      %806 = vmatpush2.msra.mxu0 0.0
      %807 = vmatprep.subr.mxu0 0.0
      %808 = vmatpush2.msra.mxu0 0.0
      %809 = vmatprep.subr.mxu0 0.0
      %810 = vmatpush2.msra.mxu0 0.0
      %811 = vmatprep.subr.mxu0 0.0
      %812 = vmatpush2.msra.mxu0 0.0
      %813 = vmatprep.subr.mxu0 0.0
      %814 = vmatpush2.msra.mxu0 0.0
      %815 = vmatprep.subr.mxu0 0.0
      %816 = vmatpush2.msra.mxu0 0.0
      %817 = vmatprep.subr.mxu0 0.0
      %818 = vmatpush2.msra.mxu0 0.0
      %819 = vmatprep.subr.mxu0 0.0
      %820 = vmatpush2.msra.mxu0 0.0
      %821 = vmatprep.subr.mxu0 0.0
      %822 = vmatpush2.msra.mxu0 0.0
      %823 = vmatprep.subr.mxu0 0.0
      %824 = vmatpush2.msra.mxu0 0.0
      %825 = vmatprep.subr.mxu0 0.0
      %826 = vmatpush2.msra.mxu0 0.0
      %827 = vmatprep.subr.mxu0 0.0
      %828 = vmatpush2.msra.mxu0 0.0
      %829 = vmatprep.subr.mxu0 0.0
      %830 = vmatpush2.msra.mxu0 0.0
      %831 = vmatprep.subr.mxu0 0.0
      %832 = vmatpush2.msra.mxu0 0.0
      %833 = vmatprep.mubr.f32.mxu0 0.0
      %834 = vmatmul.mubr.f32.gmra.mxu0 %v765
      %v835 = vpop.f32.mrf.mxu0
      %v836 = vadd.f32 0.0, %v835
      %v837 = vpop.f32.mrf.mxu0
      %838 = vdwg.mxu0
      %v839 = vadd.f32 %v759, %v836
      %s840 = scalar_lea.vmem %s0, 48
      %v841 = vld [vmem:[%s840] sm:$0xff]
      %842 = vrot.lane.b32.xlu0 %v361, 122
      %v843 = vpop.permute.xlu0 %842
      %v845 = vsel %vm368, %v841, 0
      %v847 = vsel %vm372, %v843, 0
      %849 = vmatprep.subr.mxu0 0.0
      %850 = vmatpush1.msra.mxu0 0.0
      %851 = vmatprep.subr.mxu0 0.0
      %852 = vmatpush1.msra.mxu0 0.0
      %853 = vmatprep.subr.mxu0 0.0
      %854 = vmatpush1.msra.mxu0 0.0
      %855 = vmatprep.subr.mxu0 0.0
      %856 = vmatpush1.msra.mxu0 0.0
      %857 = vmatprep.subr.mxu0 0.0
      %858 = vmatpush1.msra.mxu0 0.0
      %859 = vmatprep.subr.mxu0 0.0
      %860 = vmatpush1.msra.mxu0 0.0
      %861 = vmatprep.subr.mxu0 0.0
      %862 = vmatpush1.msra.mxu0 0.0
      %863 = vmatprep.subr.mxu0 0.0
      %864 = vmatpush1.msra.mxu0 0.0
      %865 = vmatprep.subr.mxu0 0.0
      %866 = vmatpush1.msra.mxu0 0.0
      %867 = vmatprep.subr.mxu0 0.0
      %868 = vmatpush1.msra.mxu0 0.0
      %869 = vmatprep.subr.mxu0 0.0
      %870 = vmatpush1.msra.mxu0 0.0
      %871 = vmatprep.subr.mxu0 0.0
      %872 = vmatpush1.msra.mxu0 0.0
      %873 = vmatprep.subr.mxu0 0.0
      %874 = vmatpush1.msra.mxu0 0.0
      %875 = vmatprep.subr.mxu0 0.0
      %876 = vmatpush1.msra.mxu0 0.0
      %877 = vmatprep.subr.mxu0 0.0
      %878 = vmatpush1.msra.mxu0 0.0
      %879 = vmatprep.subr.mxu0 0.0
      %880 = vmatpush1.msra.mxu0 %v847
      %881 = vmatprep.subr.mxu0 0.0
      %882 = vmatpush2.msra.mxu0 0.0
      %883 = vmatprep.subr.mxu0 0.0
      %884 = vmatpush2.msra.mxu0 0.0
      %885 = vmatprep.subr.mxu0 0.0
      %886 = vmatpush2.msra.mxu0 0.0
      %887 = vmatprep.subr.mxu0 0.0
      %888 = vmatpush2.msra.mxu0 0.0
      %889 = vmatprep.subr.mxu0 0.0
      %890 = vmatpush2.msra.mxu0 0.0
      %891 = vmatprep.subr.mxu0 0.0
      %892 = vmatpush2.msra.mxu0 0.0
      %893 = vmatprep.subr.mxu0 0.0
      %894 = vmatpush2.msra.mxu0 0.0
      %895 = vmatprep.subr.mxu0 0.0
      %896 = vmatpush2.msra.mxu0 0.0
      %897 = vmatprep.subr.mxu0 0.0
      %898 = vmatpush2.msra.mxu0 0.0
      %899 = vmatprep.subr.mxu0 0.0
      %900 = vmatpush2.msra.mxu0 0.0
      %901 = vmatprep.subr.mxu0 0.0
      %902 = vmatpush2.msra.mxu0 0.0
      %903 = vmatprep.subr.mxu0 0.0
      %904 = vmatpush2.msra.mxu0 0.0
      %905 = vmatprep.subr.mxu0 0.0
      %906 = vmatpush2.msra.mxu0 0.0
      %907 = vmatprep.subr.mxu0 0.0
      %908 = vmatpush2.msra.mxu0 0.0
      %909 = vmatprep.subr.mxu0 0.0
      %910 = vmatpush2.msra.mxu0 0.0
      %911 = vmatprep.subr.mxu0 0.0
      %912 = vmatpush2.msra.mxu0 0.0
      %913 = vmatprep.mubr.f32.mxu0 0.0
      %914 = vmatmul.mubr.f32.gmra.mxu0 %v845
      %v915 = vpop.f32.mrf.mxu0
      %v916 = vadd.f32 0.0, %v915
      %v917 = vpop.f32.mrf.mxu0
      %918 = vdwg.mxu0
      %v919 = vadd.f32 %v839, %v916
      %s920 = scalar_lea.vmem %s0, 56
      %v921 = vld [vmem:[%s920] sm:$0xff]
      %922 = vrot.lane.b32.xlu0 %v361, 121
      %v923 = vpop.permute.xlu0 %922
      %v925 = vsel %vm368, %v921, 0
      %v927 = vsel %vm372, %v923, 0
      %929 = vmatprep.subr.mxu0 0.0
      %930 = vmatpush1.msra.mxu0 0.0
      %931 = vmatprep.subr.mxu0 0.0
      %932 = vmatpush1.msra.mxu0 0.0
      %933 = vmatprep.subr.mxu0 0.0
      %934 = vmatpush1.msra.mxu0 0.0
      %935 = vmatprep.subr.mxu0 0.0
      %936 = vmatpush1.msra.mxu0 0.0
      %937 = vmatprep.subr.mxu0 0.0
      %938 = vmatpush1.msra.mxu0 0.0
      %939 = vmatprep.subr.mxu0 0.0
      %940 = vmatpush1.msra.mxu0 0.0
      %941 = vmatprep.subr.mxu0 0.0
      %942 = vmatpush1.msra.mxu0 0.0
      %943 = vmatprep.subr.mxu0 0.0
      %944 = vmatpush1.msra.mxu0 0.0
      %945 = vmatprep.subr.mxu0 0.0
      %946 = vmatpush1.msra.mxu0 0.0
      %947 = vmatprep.subr.mxu0 0.0
      %948 = vmatpush1.msra.mxu0 0.0
      %949 = vmatprep.subr.mxu0 0.0
      %950 = vmatpush1.msra.mxu0 0.0
      %951 = vmatprep.subr.mxu0 0.0
      %952 = vmatpush1.msra.mxu0 0.0
      %953 = vmatprep.subr.mxu0 0.0
      %954 = vmatpush1.msra.mxu0 0.0
      %955 = vmatprep.subr.mxu0 0.0
      %956 = vmatpush1.msra.mxu0 0.0
      %957 = vmatprep.subr.mxu0 0.0
      %958 = vmatpush1.msra.mxu0 0.0
      %959 = vmatprep.subr.mxu0 0.0
      %960 = vmatpush1.msra.mxu0 %v927
      %961 = vmatprep.subr.mxu0 0.0
      %962 = vmatpush2.msra.mxu0 0.0
      %963 = vmatprep.subr.mxu0 0.0
      %964 = vmatpush2.msra.mxu0 0.0
      %965 = vmatprep.subr.mxu0 0.0
      %966 = vmatpush2.msra.mxu0 0.0
      %967 = vmatprep.subr.mxu0 0.0
      %968 = vmatpush2.msra.mxu0 0.0
      %969 = vmatprep.subr.mxu0 0.0
      %970 = vmatpush2.msra.mxu0 0.0
      %971 = vmatprep.subr.mxu0 0.0
      %972 = vmatpush2.msra.mxu0 0.0
      %973 = vmatprep.subr.mxu0 0.0
      %974 = vmatpush2.msra.mxu0 0.0
      %975 = vmatprep.subr.mxu0 0.0
      %976 = vmatpush2.msra.mxu0 0.0
      %977 = vmatprep.subr.mxu0 0.0
      %978 = vmatpush2.msra.mxu0 0.0
      %979 = vmatprep.subr.mxu0 0.0
      %980 = vmatpush2.msra.mxu0 0.0
      %981 = vmatprep.subr.mxu0 0.0
      %982 = vmatpush2.msra.mxu0 0.0
      %983 = vmatprep.subr.mxu0 0.0
      %984 = vmatpush2.msra.mxu0 0.0
      %985 = vmatprep.subr.mxu0 0.0
      %986 = vmatpush2.msra.mxu0 0.0
      %987 = vmatprep.subr.mxu0 0.0
      %988 = vmatpush2.msra.mxu0 0.0
      %989 = vmatprep.subr.mxu0 0.0
      %990 = vmatpush2.msra.mxu0 0.0
      %991 = vmatprep.subr.mxu0 0.0
      %992 = vmatpush2.msra.mxu0 0.0
      %993 = vmatprep.mubr.f32.mxu0 0.0
      %994 = vmatmul.mubr.f32.gmra.mxu0 %v925
      %v995 = vpop.f32.mrf.mxu0
      %v996 = vadd.f32 0.0, %v995
      %v997 = vpop.f32.mrf.mxu0
      %998 = vdwg.mxu0
      %v999 = vadd.f32 %v919, %v996
      %s1000 = scalar_lea.vmem %s0, 64
      %v1001 = vld [vmem:[%s1000] sm:$0xff]
      %1002 = vrot.lane.b32.xlu0 %v361, 120
      %v1003 = vpop.permute.xlu0 %1002
      %v1005 = vsel %vm368, %v1001, 0
      %v1007 = vsel %vm372, %v1003, 0
      %1009 = vmatprep.subr.mxu0 0.0
      %1010 = vmatpush1.msra.mxu0 0.0
      %1011 = vmatprep.subr.mxu0 0.0
      %1012 = vmatpush1.msra.mxu0 0.0
      %1013 = vmatprep.subr.mxu0 0.0
      %1014 = vmatpush1.msra.mxu0 0.0
      %1015 = vmatprep.subr.mxu0 0.0
      %1016 = vmatpush1.msra.mxu0 0.0
      %1017 = vmatprep.subr.mxu0 0.0
      %1018 = vmatpush1.msra.mxu0 0.0
      %1019 = vmatprep.subr.mxu0 0.0
      %1020 = vmatpush1.msra.mxu0 0.0
      %1021 = vmatprep.subr.mxu0 0.0
      %1022 = vmatpush1.msra.mxu0 0.0
      %1023 = vmatprep.subr.mxu0 0.0
      %1024 = vmatpush1.msra.mxu0 0.0
      %1025 = vmatprep.subr.mxu0 0.0
      %1026 = vmatpush1.msra.mxu0 0.0
      %1027 = vmatprep.subr.mxu0 0.0
      %1028 = vmatpush1.msra.mxu0 0.0
      %1029 = vmatprep.subr.mxu0 0.0
      %1030 = vmatpush1.msra.mxu0 0.0
      %1031 = vmatprep.subr.mxu0 0.0
      %1032 = vmatpush1.msra.mxu0 0.0
      %1033 = vmatprep.subr.mxu0 0.0
      %1034 = vmatpush1.msra.mxu0 0.0
      %1035 = vmatprep.subr.mxu0 0.0
      %1036 = vmatpush1.msra.mxu0 0.0
      %1037 = vmatprep.subr.mxu0 0.0
      %1038 = vmatpush1.msra.mxu0 0.0
      %1039 = vmatprep.subr.mxu0 0.0
      %1040 = vmatpush1.msra.mxu0 %v1007
      %1041 = vmatprep.subr.mxu0 0.0
      %1042 = vmatpush2.msra.mxu0 0.0
      %1043 = vmatprep.subr.mxu0 0.0
      %1044 = vmatpush2.msra.mxu0 0.0
      %1045 = vmatprep.subr.mxu0 0.0
      %1046 = vmatpush2.msra.mxu0 0.0
      %1047 = vmatprep.subr.mxu0 0.0
      %1048 = vmatpush2.msra.mxu0 0.0
      %1049 = vmatprep.subr.mxu0 0.0
      %1050 = vmatpush2.msra.mxu0 0.0
      %1051 = vmatprep.subr.mxu0 0.0
      %1052 = vmatpush2.msra.mxu0 0.0
      %1053 = vmatprep.subr.mxu0 0.0
      %1054 = vmatpush2.msra.mxu0 0.0
      %1055 = vmatprep.subr.mxu0 0.0
      %1056 = vmatpush2.msra.mxu0 0.0
      %1057 = vmatprep.subr.mxu0 0.0
      %1058 = vmatpush2.msra.mxu0 0.0
      %1059 = vmatprep.subr.mxu0 0.0
      %1060 = vmatpush2.msra.mxu0 0.0
      %1061 = vmatprep.subr.mxu0 0.0
      %1062 = vmatpush2.msra.mxu0 0.0
      %1063 = vmatprep.subr.mxu0 0.0
      %1064 = vmatpush2.msra.mxu0 0.0
      %1065 = vmatprep.subr.mxu0 0.0
      %1066 = vmatpush2.msra.mxu0 0.0
      %1067 = vmatprep.subr.mxu0 0.0
      %1068 = vmatpush2.msra.mxu0 0.0
      %1069 = vmatprep.subr.mxu0 0.0
      %1070 = vmatpush2.msra.mxu0 0.0
      %1071 = vmatprep.subr.mxu0 0.0
      %1072 = vmatpush2.msra.mxu0 0.0
      %1073 = vmatprep.mubr.f32.mxu0 0.0
      %1074 = vmatmul.mubr.f32.gmra.mxu0 %v1005
      %v1075 = vpop.f32.mrf.mxu0
      %v1076 = vadd.f32 0.0, %v1075
      %v1077 = vpop.f32.mrf.mxu0
      %1078 = vdwg.mxu0
      %v1079 = vadd.f32 %v999, %v1076
      %s1080 = scalar_lea.vmem %s0, 72
      %v1081 = vld [vmem:[%s1080] sm:$0xff]
      %1082 = vrot.lane.b32.xlu0 %v361, 119
      %v1083 = vpop.permute.xlu0 %1082
      %v1085 = vsel %vm368, %v1081, 0
      %v1087 = vsel %vm372, %v1083, 0
      %1089 = vmatprep.subr.mxu0 0.0
      %1090 = vmatpush1.msra.mxu0 0.0
      %1091 = vmatprep.subr.mxu0 0.0
      %1092 = vmatpush1.msra.mxu0 0.0
      %1093 = vmatprep.subr.mxu0 0.0
      %1094 = vmatpush1.msra.mxu0 0.0
      %1095 = vmatprep.subr.mxu0 0.0
      %1096 = vmatpush1.msra.mxu0 0.0
      %1097 = vmatprep.subr.mxu0 0.0
      %1098 = vmatpush1.msra.mxu0 0.0
      %1099 = vmatprep.subr.mxu0 0.0
      %1100 = vmatpush1.msra.mxu0 0.0
      %1101 = vmatprep.subr.mxu0 0.0
      %1102 = vmatpush1.msra.mxu0 0.0
      %1103 = vmatprep.subr.mxu0 0.0
      %1104 = vmatpush1.msra.mxu0 0.0
      %1105 = vmatprep.subr.mxu0 0.0
      %1106 = vmatpush1.msra.mxu0 0.0
      %1107 = vmatprep.subr.mxu0 0.0
      %1108 = vmatpush1.msra.mxu0 0.0
      %1109 = vmatprep.subr.mxu0 0.0
      %1110 = vmatpush1.msra.mxu0 0.0
      %1111 = vmatprep.subr.mxu0 0.0
      %1112 = vmatpush1.msra.mxu0 0.0
      %1113 = vmatprep.subr.mxu0 0.0
      %1114 = vmatpush1.msra.mxu0 0.0
      %1115 = vmatprep.subr.mxu0 0.0
      %1116 = vmatpush1.msra.mxu0 0.0
      %1117 = vmatprep.subr.mxu0 0.0
      %1118 = vmatpush1.msra.mxu0 0.0
      %1119 = vmatprep.subr.mxu0 0.0
      %1120 = vmatpush1.msra.mxu0 %v1087
      %1121 = vmatprep.subr.mxu0 0.0
      %1122 = vmatpush2.msra.mxu0 0.0
      %1123 = vmatprep.subr.mxu0 0.0
      %1124 = vmatpush2.msra.mxu0 0.0
      %1125 = vmatprep.subr.mxu0 0.0
      %1126 = vmatpush2.msra.mxu0 0.0
      %1127 = vmatprep.subr.mxu0 0.0
      %1128 = vmatpush2.msra.mxu0 0.0
      %1129 = vmatprep.subr.mxu0 0.0
      %1130 = vmatpush2.msra.mxu0 0.0
      %1131 = vmatprep.subr.mxu0 0.0
      %1132 = vmatpush2.msra.mxu0 0.0
      %1133 = vmatprep.subr.mxu0 0.0
      %1134 = vmatpush2.msra.mxu0 0.0
      %1135 = vmatprep.subr.mxu0 0.0
      %1136 = vmatpush2.msra.mxu0 0.0
      %1137 = vmatprep.subr.mxu0 0.0
      %1138 = vmatpush2.msra.mxu0 0.0
      %1139 = vmatprep.subr.mxu0 0.0
      %1140 = vmatpush2.msra.mxu0 0.0
      %1141 = vmatprep.subr.mxu0 0.0
      %1142 = vmatpush2.msra.mxu0 0.0
      %1143 = vmatprep.subr.mxu0 0.0
      %1144 = vmatpush2.msra.mxu0 0.0
      %1145 = vmatprep.subr.mxu0 0.0
      %1146 = vmatpush2.msra.mxu0 0.0
      %1147 = vmatprep.subr.mxu0 0.0
      %1148 = vmatpush2.msra.mxu0 0.0
      %1149 = vmatprep.subr.mxu0 0.0
      %1150 = vmatpush2.msra.mxu0 0.0
      %1151 = vmatprep.subr.mxu0 0.0
      %1152 = vmatpush2.msra.mxu0 0.0
      %1153 = vmatprep.mubr.f32.mxu0 0.0
      %1154 = vmatmul.mubr.f32.gmra.mxu0 %v1085
      %v1155 = vpop.f32.mrf.mxu0
      %v1156 = vadd.f32 0.0, %v1155
      %v1157 = vpop.f32.mrf.mxu0
      %1158 = vdwg.mxu0
      %v1159 = vadd.f32 %v1079, %v1156
      %s1160 = scalar_lea.vmem %s0, 80
      %v1161 = vld [vmem:[%s1160] sm:$0xff]
      %1162 = vrot.lane.b32.xlu0 %v361, 118
      %v1163 = vpop.permute.xlu0 %1162
      %v1165 = vsel %vm368, %v1161, 0
      %v1167 = vsel %vm372, %v1163, 0
      %1169 = vmatprep.subr.mxu0 0.0
      %1170 = vmatpush1.msra.mxu0 0.0
      %1171 = vmatprep.subr.mxu0 0.0
      %1172 = vmatpush1.msra.mxu0 0.0
      %1173 = vmatprep.subr.mxu0 0.0
      %1174 = vmatpush1.msra.mxu0 0.0
      %1175 = vmatprep.subr.mxu0 0.0
      %1176 = vmatpush1.msra.mxu0 0.0
      %1177 = vmatprep.subr.mxu0 0.0
      %1178 = vmatpush1.msra.mxu0 0.0
      %1179 = vmatprep.subr.mxu0 0.0
      %1180 = vmatpush1.msra.mxu0 0.0
      %1181 = vmatprep.subr.mxu0 0.0
      %1182 = vmatpush1.msra.mxu0 0.0
      %1183 = vmatprep.subr.mxu0 0.0
      %1184 = vmatpush1.msra.mxu0 0.0
      %1185 = vmatprep.subr.mxu0 0.0
      %1186 = vmatpush1.msra.mxu0 0.0
      %1187 = vmatprep.subr.mxu0 0.0
      %1188 = vmatpush1.msra.mxu0 0.0
      %1189 = vmatprep.subr.mxu0 0.0
      %1190 = vmatpush1.msra.mxu0 0.0
      %1191 = vmatprep.subr.mxu0 0.0
      %1192 = vmatpush1.msra.mxu0 0.0
      %1193 = vmatprep.subr.mxu0 0.0
      %1194 = vmatpush1.msra.mxu0 0.0
      %1195 = vmatprep.subr.mxu0 0.0
      %1196 = vmatpush1.msra.mxu0 0.0
      %1197 = vmatprep.subr.mxu0 0.0
      %1198 = vmatpush1.msra.mxu0 0.0
      %1199 = vmatprep.subr.mxu0 0.0
      %1200 = vmatpush1.msra.mxu0 %v1167
      %1201 = vmatprep.subr.mxu0 0.0
      %1202 = vmatpush2.msra.mxu0 0.0
      %1203 = vmatprep.subr.mxu0 0.0
      %1204 = vmatpush2.msra.mxu0 0.0
      %1205 = vmatprep.subr.mxu0 0.0
      %1206 = vmatpush2.msra.mxu0 0.0
      %1207 = vmatprep.subr.mxu0 0.0
      %1208 = vmatpush2.msra.mxu0 0.0
      %1209 = vmatprep.subr.mxu0 0.0
      %1210 = vmatpush2.msra.mxu0 0.0
      %1211 = vmatprep.subr.mxu0 0.0
      %1212 = vmatpush2.msra.mxu0 0.0
      %1213 = vmatprep.subr.mxu0 0.0
      %1214 = vmatpush2.msra.mxu0 0.0
      %1215 = vmatprep.subr.mxu0 0.0
      %1216 = vmatpush2.msra.mxu0 0.0
      %1217 = vmatprep.subr.mxu0 0.0
      %1218 = vmatpush2.msra.mxu0 0.0
      %1219 = vmatprep.subr.mxu0 0.0
      %1220 = vmatpush2.msra.mxu0 0.0
      %1221 = vmatprep.subr.mxu0 0.0
      %1222 = vmatpush2.msra.mxu0 0.0
      %1223 = vmatprep.subr.mxu0 0.0
      %1224 = vmatpush2.msra.mxu0 0.0
      %1225 = vmatprep.subr.mxu0 0.0
      %1226 = vmatpush2.msra.mxu0 0.0
      %1227 = vmatprep.subr.mxu0 0.0
      %1228 = vmatpush2.msra.mxu0 0.0
      %1229 = vmatprep.subr.mxu0 0.0
      %1230 = vmatpush2.msra.mxu0 0.0
      %1231 = vmatprep.subr.mxu0 0.0
      %1232 = vmatpush2.msra.mxu0 0.0
      %1233 = vmatprep.mubr.f32.mxu0 0.0
      %1234 = vmatmul.mubr.f32.gmra.mxu0 %v1165
      %v1235 = vpop.f32.mrf.mxu0
      %v1236 = vadd.f32 0.0, %v1235
      %v1237 = vpop.f32.mrf.mxu0
      %1238 = vdwg.mxu0
      %v1239 = vadd.f32 %v1159, %v1236
      %s1240 = scalar_lea.vmem %s0, 88
      %v1241 = vld [vmem:[%s1240] sm:$0xff]
      %1242 = vrot.lane.b32.xlu0 %v361, 117
      %v1243 = vpop.permute.xlu0 %1242
      %v1245 = vsel %vm368, %v1241, 0
      %v1247 = vsel %vm372, %v1243, 0
      %1249 = vmatprep.subr.mxu0 0.0
      %1250 = vmatpush1.msra.mxu0 0.0
      %1251 = vmatprep.subr.mxu0 0.0
      %1252 = vmatpush1.msra.mxu0 0.0
      %1253 = vmatprep.subr.mxu0 0.0
      %1254 = vmatpush1.msra.mxu0 0.0
      %1255 = vmatprep.subr.mxu0 0.0
      %1256 = vmatpush1.msra.mxu0 0.0
      %1257 = vmatprep.subr.mxu0 0.0
      %1258 = vmatpush1.msra.mxu0 0.0
      %1259 = vmatprep.subr.mxu0 0.0
      %1260 = vmatpush1.msra.mxu0 0.0
      %1261 = vmatprep.subr.mxu0 0.0
      %1262 = vmatpush1.msra.mxu0 0.0
      %1263 = vmatprep.subr.mxu0 0.0
      %1264 = vmatpush1.msra.mxu0 0.0
      %1265 = vmatprep.subr.mxu0 0.0
      %1266 = vmatpush1.msra.mxu0 0.0
      %1267 = vmatprep.subr.mxu0 0.0
      %1268 = vmatpush1.msra.mxu0 0.0
      %1269 = vmatprep.subr.mxu0 0.0
      %1270 = vmatpush1.msra.mxu0 0.0
      %1271 = vmatprep.subr.mxu0 0.0
      %1272 = vmatpush1.msra.mxu0 0.0
      %1273 = vmatprep.subr.mxu0 0.0
      %1274 = vmatpush1.msra.mxu0 0.0
      %1275 = vmatprep.subr.mxu0 0.0
      %1276 = vmatpush1.msra.mxu0 0.0
      %1277 = vmatprep.subr.mxu0 0.0
      %1278 = vmatpush1.msra.mxu0 0.0
      %1279 = vmatprep.subr.mxu0 0.0
      %1280 = vmatpush1.msra.mxu0 %v1247
      %1281 = vmatprep.subr.mxu0 0.0
      %1282 = vmatpush2.msra.mxu0 0.0
      %1283 = vmatprep.subr.mxu0 0.0
      %1284 = vmatpush2.msra.mxu0 0.0
      %1285 = vmatprep.subr.mxu0 0.0
      %1286 = vmatpush2.msra.mxu0 0.0
      %1287 = vmatprep.subr.mxu0 0.0
      %1288 = vmatpush2.msra.mxu0 0.0
      %1289 = vmatprep.subr.mxu0 0.0
      %1290 = vmatpush2.msra.mxu0 0.0
      %1291 = vmatprep.subr.mxu0 0.0
      %1292 = vmatpush2.msra.mxu0 0.0
      %1293 = vmatprep.subr.mxu0 0.0
      %1294 = vmatpush2.msra.mxu0 0.0
      %1295 = vmatprep.subr.mxu0 0.0
      %1296 = vmatpush2.msra.mxu0 0.0
      %1297 = vmatprep.subr.mxu0 0.0
      %1298 = vmatpush2.msra.mxu0 0.0
      %1299 = vmatprep.subr.mxu0 0.0
      %1300 = vmatpush2.msra.mxu0 0.0
      %1301 = vmatprep.subr.mxu0 0.0
      %1302 = vmatpush2.msra.mxu0 0.0
      %1303 = vmatprep.subr.mxu0 0.0
      %1304 = vmatpush2.msra.mxu0 0.0
      %1305 = vmatprep.subr.mxu0 0.0
      %1306 = vmatpush2.msra.mxu0 0.0
      %1307 = vmatprep.subr.mxu0 0.0
      %1308 = vmatpush2.msra.mxu0 0.0
      %1309 = vmatprep.subr.mxu0 0.0
      %1310 = vmatpush2.msra.mxu0 0.0
      %1311 = vmatprep.subr.mxu0 0.0
      %1312 = vmatpush2.msra.mxu0 0.0
      %1313 = vmatprep.mubr.f32.mxu0 0.0
      %1314 = vmatmul.mubr.f32.gmra.mxu0 %v1245
      %v1315 = vpop.f32.mrf.mxu0
      %v1316 = vadd.f32 0.0, %v1315
      %v1317 = vpop.f32.mrf.mxu0
      %1318 = vdwg.mxu0
      %v1319 = vadd.f32 %v1239, %v1316
      %s1320 = scalar_lea.vmem %s0, 96
      %v1321 = vld [vmem:[%s1320] sm:$0xff]
      %1322 = vrot.lane.b32.xlu0 %v361, 116
      %v1323 = vpop.permute.xlu0 %1322
      %v1325 = vsel %vm368, %v1321, 0
      %v1327 = vsel %vm372, %v1323, 0
      %1329 = vmatprep.subr.mxu0 0.0
      %1330 = vmatpush1.msra.mxu0 0.0
      %1331 = vmatprep.subr.mxu0 0.0
      %1332 = vmatpush1.msra.mxu0 0.0
      %1333 = vmatprep.subr.mxu0 0.0
      %1334 = vmatpush1.msra.mxu0 0.0
      %1335 = vmatprep.subr.mxu0 0.0
      %1336 = vmatpush1.msra.mxu0 0.0
      %1337 = vmatprep.subr.mxu0 0.0
      %1338 = vmatpush1.msra.mxu0 0.0
      %1339 = vmatprep.subr.mxu0 0.0
      %1340 = vmatpush1.msra.mxu0 0.0
      %1341 = vmatprep.subr.mxu0 0.0
      %1342 = vmatpush1.msra.mxu0 0.0
      %1343 = vmatprep.subr.mxu0 0.0
      %1344 = vmatpush1.msra.mxu0 0.0
      %1345 = vmatprep.subr.mxu0 0.0
      %1346 = vmatpush1.msra.mxu0 0.0
      %1347 = vmatprep.subr.mxu0 0.0
      %1348 = vmatpush1.msra.mxu0 0.0
      %1349 = vmatprep.subr.mxu0 0.0
      %1350 = vmatpush1.msra.mxu0 0.0
      %1351 = vmatprep.subr.mxu0 0.0
      %1352 = vmatpush1.msra.mxu0 0.0
      %1353 = vmatprep.subr.mxu0 0.0
      %1354 = vmatpush1.msra.mxu0 0.0
      %1355 = vmatprep.subr.mxu0 0.0
      %1356 = vmatpush1.msra.mxu0 0.0
      %1357 = vmatprep.subr.mxu0 0.0
      %1358 = vmatpush1.msra.mxu0 0.0
      %1359 = vmatprep.subr.mxu0 0.0
      %1360 = vmatpush1.msra.mxu0 %v1327
      %1361 = vmatprep.subr.mxu0 0.0
      %1362 = vmatpush2.msra.mxu0 0.0
      %1363 = vmatprep.subr.mxu0 0.0
      %1364 = vmatpush2.msra.mxu0 0.0
      %1365 = vmatprep.subr.mxu0 0.0
      %1366 = vmatpush2.msra.mxu0 0.0
      %1367 = vmatprep.subr.mxu0 0.0
      %1368 = vmatpush2.msra.mxu0 0.0
      %1369 = vmatprep.subr.mxu0 0.0
      %1370 = vmatpush2.msra.mxu0 0.0
      %1371 = vmatprep.subr.mxu0 0.0
      %1372 = vmatpush2.msra.mxu0 0.0
      %1373 = vmatprep.subr.mxu0 0.0
      %1374 = vmatpush2.msra.mxu0 0.0
      %1375 = vmatprep.subr.mxu0 0.0
      %1376 = vmatpush2.msra.mxu0 0.0
      %1377 = vmatprep.subr.mxu0 0.0
      %1378 = vmatpush2.msra.mxu0 0.0
      %1379 = vmatprep.subr.mxu0 0.0
      %1380 = vmatpush2.msra.mxu0 0.0
      %1381 = vmatprep.subr.mxu0 0.0
      %1382 = vmatpush2.msra.mxu0 0.0
      %1383 = vmatprep.subr.mxu0 0.0
      %1384 = vmatpush2.msra.mxu0 0.0
      %1385 = vmatprep.subr.mxu0 0.0
      %1386 = vmatpush2.msra.mxu0 0.0
      %1387 = vmatprep.subr.mxu0 0.0
      %1388 = vmatpush2.msra.mxu0 0.0
      %1389 = vmatprep.subr.mxu0 0.0
      %1390 = vmatpush2.msra.mxu0 0.0
      %1391 = vmatprep.subr.mxu0 0.0
      %1392 = vmatpush2.msra.mxu0 0.0
      %1393 = vmatprep.mubr.f32.mxu0 0.0
      %1394 = vmatmul.mubr.f32.gmra.mxu0 %v1325
      %v1395 = vpop.f32.mrf.mxu0
      %v1396 = vadd.f32 0.0, %v1395
      %v1397 = vpop.f32.mrf.mxu0
      %1398 = vdwg.mxu0
      %v1399 = vadd.f32 %v1319, %v1396
      %s1400 = scalar_lea.vmem %s0, 104
      %v1401 = vld [vmem:[%s1400] sm:$0xff]
      %1402 = vrot.lane.b32.xlu0 %v361, 115
      %v1403 = vpop.permute.xlu0 %1402
      %v1405 = vsel %vm368, %v1401, 0
      %v1407 = vsel %vm372, %v1403, 0
      %1409 = vmatprep.subr.mxu0 0.0
      %1410 = vmatpush1.msra.mxu0 0.0
      %1411 = vmatprep.subr.mxu0 0.0
      %1412 = vmatpush1.msra.mxu0 0.0
      %1413 = vmatprep.subr.mxu0 0.0
      %1414 = vmatpush1.msra.mxu0 0.0
      %1415 = vmatprep.subr.mxu0 0.0
      %1416 = vmatpush1.msra.mxu0 0.0
      %1417 = vmatprep.subr.mxu0 0.0
      %1418 = vmatpush1.msra.mxu0 0.0
      %1419 = vmatprep.subr.mxu0 0.0
      %1420 = vmatpush1.msra.mxu0 0.0
      %1421 = vmatprep.subr.mxu0 0.0
      %1422 = vmatpush1.msra.mxu0 0.0
      %1423 = vmatprep.subr.mxu0 0.0
      %1424 = vmatpush1.msra.mxu0 0.0
      %1425 = vmatprep.subr.mxu0 0.0
      %1426 = vmatpush1.msra.mxu0 0.0
      %1427 = vmatprep.subr.mxu0 0.0
      %1428 = vmatpush1.msra.mxu0 0.0
      %1429 = vmatprep.subr.mxu0 0.0
      %1430 = vmatpush1.msra.mxu0 0.0
      %1431 = vmatprep.subr.mxu0 0.0
      %1432 = vmatpush1.msra.mxu0 0.0
      %1433 = vmatprep.subr.mxu0 0.0
      %1434 = vmatpush1.msra.mxu0 0.0
      %1435 = vmatprep.subr.mxu0 0.0
      %1436 = vmatpush1.msra.mxu0 0.0
      %1437 = vmatprep.subr.mxu0 0.0
      %1438 = vmatpush1.msra.mxu0 0.0
      %1439 = vmatprep.subr.mxu0 0.0
      %1440 = vmatpush1.msra.mxu0 %v1407
      %1441 = vmatprep.subr.mxu0 0.0
      %1442 = vmatpush2.msra.mxu0 0.0
      %1443 = vmatprep.subr.mxu0 0.0
      %1444 = vmatpush2.msra.mxu0 0.0
      %1445 = vmatprep.subr.mxu0 0.0
      %1446 = vmatpush2.msra.mxu0 0.0
      %1447 = vmatprep.subr.mxu0 0.0
      %1448 = vmatpush2.msra.mxu0 0.0
      %1449 = vmatprep.subr.mxu0 0.0
      %1450 = vmatpush2.msra.mxu0 0.0
      %1451 = vmatprep.subr.mxu0 0.0
      %1452 = vmatpush2.msra.mxu0 0.0
      %1453 = vmatprep.subr.mxu0 0.0
      %1454 = vmatpush2.msra.mxu0 0.0
      %1455 = vmatprep.subr.mxu0 0.0
      %1456 = vmatpush2.msra.mxu0 0.0
      %1457 = vmatprep.subr.mxu0 0.0
      %1458 = vmatpush2.msra.mxu0 0.0
      %1459 = vmatprep.subr.mxu0 0.0
      %1460 = vmatpush2.msra.mxu0 0.0
      %1461 = vmatprep.subr.mxu0 0.0
      %1462 = vmatpush2.msra.mxu0 0.0
      %1463 = vmatprep.subr.mxu0 0.0
      %1464 = vmatpush2.msra.mxu0 0.0
      %1465 = vmatprep.subr.mxu0 0.0
      %1466 = vmatpush2.msra.mxu0 0.0
      %1467 = vmatprep.subr.mxu0 0.0
      %1468 = vmatpush2.msra.mxu0 0.0
      %1469 = vmatprep.subr.mxu0 0.0
      %1470 = vmatpush2.msra.mxu0 0.0
      %1471 = vmatprep.subr.mxu0 0.0
      %1472 = vmatpush2.msra.mxu0 0.0
      %1473 = vmatprep.mubr.f32.mxu0 0.0
      %1474 = vmatmul.mubr.f32.gmra.mxu0 %v1405
      %v1475 = vpop.f32.mrf.mxu0
      %v1476 = vadd.f32 0.0, %v1475
      %v1477 = vpop.f32.mrf.mxu0
      %1478 = vdwg.mxu0
      %v1479 = vadd.f32 %v1399, %v1476
      %s1480 = scalar_lea.vmem %s0, 112
      %v1481 = vld [vmem:[%s1480] sm:$0xff]
      %1482 = vrot.lane.b32.xlu0 %v361, 114
      %v1483 = vpop.permute.xlu0 %1482
      %v1485 = vsel %vm368, %v1481, 0
      %v1487 = vsel %vm372, %v1483, 0
      %1489 = vmatprep.subr.mxu0 0.0
      %1490 = vmatpush1.msra.mxu0 0.0
      %1491 = vmatprep.subr.mxu0 0.0
      %1492 = vmatpush1.msra.mxu0 0.0
      %1493 = vmatprep.subr.mxu0 0.0
      %1494 = vmatpush1.msra.mxu0 0.0
      %1495 = vmatprep.subr.mxu0 0.0
      %1496 = vmatpush1.msra.mxu0 0.0
      %1497 = vmatprep.subr.mxu0 0.0
      %1498 = vmatpush1.msra.mxu0 0.0
      %1499 = vmatprep.subr.mxu0 0.0
      %1500 = vmatpush1.msra.mxu0 0.0
      %1501 = vmatprep.subr.mxu0 0.0
      %1502 = vmatpush1.msra.mxu0 0.0
      %1503 = vmatprep.subr.mxu0 0.0
      %1504 = vmatpush1.msra.mxu0 0.0
      %1505 = vmatprep.subr.mxu0 0.0
      %1506 = vmatpush1.msra.mxu0 0.0
      %1507 = vmatprep.subr.mxu0 0.0
      %1508 = vmatpush1.msra.mxu0 0.0
      %1509 = vmatprep.subr.mxu0 0.0
      %1510 = vmatpush1.msra.mxu0 0.0
      %1511 = vmatprep.subr.mxu0 0.0
      %1512 = vmatpush1.msra.mxu0 0.0
      %1513 = vmatprep.subr.mxu0 0.0
      %1514 = vmatpush1.msra.mxu0 0.0
      %1515 = vmatprep.subr.mxu0 0.0
      %1516 = vmatpush1.msra.mxu0 0.0
      %1517 = vmatprep.subr.mxu0 0.0
      %1518 = vmatpush1.msra.mxu0 0.0
      %1519 = vmatprep.subr.mxu0 0.0
      %1520 = vmatpush1.msra.mxu0 %v1487
      %1521 = vmatprep.subr.mxu0 0.0
      %1522 = vmatpush2.msra.mxu0 0.0
      %1523 = vmatprep.subr.mxu0 0.0
      %1524 = vmatpush2.msra.mxu0 0.0
      %1525 = vmatprep.subr.mxu0 0.0
      %1526 = vmatpush2.msra.mxu0 0.0
      %1527 = vmatprep.subr.mxu0 0.0
      %1528 = vmatpush2.msra.mxu0 0.0
      %1529 = vmatprep.subr.mxu0 0.0
      %1530 = vmatpush2.msra.mxu0 0.0
      %1531 = vmatprep.subr.mxu0 0.0
      %1532 = vmatpush2.msra.mxu0 0.0
      %1533 = vmatprep.subr.mxu0 0.0
      %1534 = vmatpush2.msra.mxu0 0.0
      %1535 = vmatprep.subr.mxu0 0.0
      %1536 = vmatpush2.msra.mxu0 0.0
      %1537 = vmatprep.subr.mxu0 0.0
      %1538 = vmatpush2.msra.mxu0 0.0
      %1539 = vmatprep.subr.mxu0 0.0
      %1540 = vmatpush2.msra.mxu0 0.0
      %1541 = vmatprep.subr.mxu0 0.0
      %1542 = vmatpush2.msra.mxu0 0.0
      %1543 = vmatprep.subr.mxu0 0.0
      %1544 = vmatpush2.msra.mxu0 0.0
      %1545 = vmatprep.subr.mxu0 0.0
      %1546 = vmatpush2.msra.mxu0 0.0
      %1547 = vmatprep.subr.mxu0 0.0
      %1548 = vmatpush2.msra.mxu0 0.0
      %1549 = vmatprep.subr.mxu0 0.0
      %1550 = vmatpush2.msra.mxu0 0.0
      %1551 = vmatprep.subr.mxu0 0.0
      %1552 = vmatpush2.msra.mxu0 0.0
      %1553 = vmatprep.mubr.f32.mxu0 0.0
      %1554 = vmatmul.mubr.f32.gmra.mxu0 %v1485
      %v1555 = vpop.f32.mrf.mxu0
      %v1556 = vadd.f32 0.0, %v1555
      %v1557 = vpop.f32.mrf.mxu0
      %1558 = vdwg.mxu0
      %v1559 = vadd.f32 %v1479, %v1556
      %vm1560 = vcmask 64512
      %v1561 = vsel %vm1560, %v1559, 0.0
      %1562 = vadd.xlane.f32.xlu0 %v1561
      %v1563 = vpop.xlane.xlu0 %1562
      %v1564 = vmul.f32 %v1563, 0.125
      %v1565 = vsub.f32 %v1559, %v1564
      %v1566 = vmul.f32 %v1565, %v1565
      %v1567 = vsel %vm1560, %v1566, 0.0
      %1568 = vadd.xlane.f32.xlu0 %v1567
      %v1569 = vpop.xlane.xlu0 %1568
      %s1570 = sadd.s32 %s23, %s24
      %s1571 = smul.u32 %s1570, 8
      %s1572 = scvt.s32.f32 %s1571
      %s1573 = sadd.f32 %s1572, 8.0
      %v1574 = vld [vmem:[#allocation2] sm:$0xff]
      %v1575 = vsub.f32 %v1564, %v1574
      %v1576 = vstv %s1573
      %v1577 = vrcp.pop %v1576
      %s1578 = vtos %v1577
      %s1579 = smul.f32 8.0, %s1578
      %v1580 = vstv %s1579
      %v1581 = vmul.f32 %v1575, %v1580
      %v1582 = vadd.f32 %v1574, %v1581
      %vm1583 = vcmask 7168
      %1584 = vst.msk [vmem:[#allocation2] sm:$0xff] %vm1583, %v1582
      %v1585 = vld [vmem:[#allocation3] sm:$0xff]
      %v1586 = vadd.f32 %v1585, %v1569
      %v1587 = vmul.f32 %v1575, %v1575
      %s1588 = smul.f32 %s1572, 8.0
      %v1589 = vstv %s1573
      %v1590 = vrcp.pop %v1589
      %s1591 = vtos %v1590
      %s1592 = smul.f32 %s1588, %s1591
      %v1593 = vstv %s1592
      %v1594 = vmul.f32 %v1587, %v1593
      %v1595 = vadd.f32 %v1586, %v1594
      %1596 = vst.msk [vmem:[#allocation3] sm:$0xff] %vm1583, %v1595
      %p1597 = scmp.eq.s32.totalorder %s23, 1
      %p1598 = pnand %p1597, %p339
      %p1599 = pneg %p1598
      // Predicated region
      $region49: #{wave_u_net_forward.11} parent=43 // pred_check
        _
      $region50: #{wave_u_net_forward.11} parent=43 // pred_check_branch
        %1601 = sbr.rel (%p1598) target = $region52
      $region51: #{wave_u_net_forward.11} parent=43 // pred_region
        %v1602 = vld [vmem:[#allocation2] sm:$0xff]
        %v1603 = vld [vmem:[#allocation3] sm:$0xff]
        %v1604 = vmul.f32 %v1603, 0.0625
        %v1605 = vadd.f32 %v1604, 1e-05
        %v1606 = vrsqrt.pop %v1605
        %v1607 = vld [vmem:[%s4] sm:$0xff]
        %v1608 = vmul.f32 %v1607, %v1606
        %1609 = vst.msk [vmem:[%s6] sm:$0xff] %vm1583, %v1608
        %v1610 = vld [vmem:[%s5] sm:$0xff]
        %v1611 = vmul.f32 %v1602, %v1608
        %v1612 = vsub.f32 %v1610, %v1611
        %1613 = vst.msk [vmem:[%s7] sm:$0xff] %vm1583, %v1612
      $region52: #{wave_u_net_forward.11} parent=43 // pred_fallthru
        _
      // Predicated region
      $region53: #{wave_u_net_forward.11} parent=43 // pred_check
        %p1614 = pneg %p191
      $region54: #{wave_u_net_forward.11} parent=43 // pred_check_branch
        %1616 = sbr.rel (%p1614) target = $region56
      $region55: #{wave_u_net_forward.11} parent=43 // pred_region
        _
      $region56: #{wave_u_net_forward.11} parent=43 // pred_fallthru
        _
      // Predicated region
      $region57: #{wave_u_net_forward.11} parent=43 // pred_check
        %p1617 = pneg %p212
      $region58: #{wave_u_net_forward.11} parent=43 // pred_check_branch
        %1619 = sbr.rel (%p1617) target = $region60
      $region59: #{wave_u_net_forward.11} parent=43 // pred_region
        _
      $region60: #{wave_u_net_forward.11} parent=43 // pred_fallthru
        _
      // Predicated region
      $region61: #{wave_u_net_forward.11} parent=43 // pred_check
        %p1620 = pneg %p191
      $region62: #{wave_u_net_forward.11} parent=43 // pred_check_branch
        %1622 = sbr.rel (%p1620) target = $region64
      $region63: #{wave_u_net_forward.11} parent=43 // pred_region
        _
      $region64: #{wave_u_net_forward.11} parent=43 // pred_fallthru
        _
      // Predicated region
      $region65: #{wave_u_net_forward.11} parent=43 // pred_check
        %p1623 = pneg %p212
      $region66: #{wave_u_net_forward.11} parent=43 // pred_check_branch
        %1625 = sbr.rel (%p1623) target = $region68
      $region67: #{wave_u_net_forward.11} parent=43 // pred_region
        _
      $region68: #{wave_u_net_forward.11} parent=43 // pred_fallthru
        _
    $region44: #{wave_u_net_forward.11} parent=5 // pred_fallthru
      _
    %p1626 = scmp.le.s32.totalorder 2, %s14
    // Predicated region
    $region69: #{wave_u_net_forward.11} parent=5 // pred_check
      %p1627 = pneg %p1626
    $region70: #{wave_u_net_forward.11} parent=5 // pred_check_branch
      %1629 = sbr.rel (%p1627) target = $region72
    $region71: #{wave_u_net_forward.11} parent=5 // pred_region
      %s1630 = ssub.s32 %s14, 2
    $region72: #{wave_u_net_forward.11} parent=5 // pred_fallthru
      _
  $region6: #{wave_u_net_forward.11} parent=0 // loop_footer
    %s18 = sadd.s32 1, %s14
  $region7: #{wave_u_net_forward.11} parent=0 // loop_footer_branch
    %13 = sbr.rel target = $region3
  $region8: #{wave_u_net_forward.11} parent=0 // loop_exit
    _

// kernel: wave_u_net_forward.13
$region0: #{wave_u_net_forward.13}
  #allocation0 [shape = 'u32[]', space=smem, size = 0x4, offset = 0x4, fixed_abs, tag = 'smem constant byte address 0x4 - core index']
  #allocation1 [shape = 'u32[144,128]{1,0:T(1,128)}', space=vmem, size = 0x12000, scoped, tag = 'internal scratch']
  #allocation2 [shape = 'f32[8,1]{1,0:T(8,128)}', space=vmem, size = 0x1000, scoped, tag = 'scratch operand']
  #allocation3 [shape = 'f32[8,1]{1,0:T(8,128)}', space=vmem, size = 0x1000, scoped, tag = 'scratch operand']
  %s0 = inlined_call_operand.vmem [shape: f32[5,8,16], index: 0, kind: input, shape index: {}]
  %s1 = inlined_call_operand.vmem [shape: f32[2,16,8], index: 1, kind: input, shape index: {}]
  %s2 = inlined_call_operand.vmem [shape: f32[2,1,16,2], index: 2, kind: input, shape index: {}, may-alias: {2,3}]
  %s3 = inlined_call_operand.vmem [shape: f32[2,1,16,2], index: 3, kind: input, shape index: {}, may-alias: {2,3}]
  %s4 = inlined_call_operand.vmem [shape: f32[8,1], index: 4, kind: input, shape index: {}]
  %s5 = inlined_call_operand.vmem [shape: f32[8,1], index: 5, kind: input, shape index: {}]
  %s6 = inlined_call_operand.vmem [shape: f32[8,1], index: 6, kind: output, shape index: {0}]
  %s7 = inlined_call_operand.vmem [shape: f32[8,1], index: 7, kind: output, shape index: {1}]
  %8 = xla_tuple %s6, %s7
  %s9 = sld [smem:[#allocation0]]
  $region73: #{wave_u_net_forward.13} parent=0
    _
  %s11 = ssub.s32 1, %s9
  %s12 = scalar_select 0, %s11, %s9
  loop: start=0, step=1, limit=4
  $region2: #{wave_u_net_forward.13} parent=0 // loop_pre_header
    _
  $region3: #{wave_u_net_forward.13} parent=0 // loop_header
    %s14 = sphi 0, %s18
    %p15 = scmp.ge.s32.totalorder %s14, 4
    %s21 = sphi 0, %s33
    %s22 = sphi 0, %s29
    %s23 = sphi 0, %s21
    %s24 = sphi 0, %s22
    %s25 = sphi 0, %s23
    %s26 = sphi 0, %s24
    %s34 = sphi 0, %s34
    %s36 = sphi 0, %s34
    %s37 = sphi 0, %s36
    %s51 = sphi 0, %s37
    %s59 = sphi 0, %s61
    %s62 = sphi 0, %s59
    %s63 = sphi 0, %s62
    %s79 = sphi 0, %s63
    %s87 = sphi 0, %s89
    %s90 = sphi 0, %s87
    %s91 = sphi 0, %s90
    %s107 = sphi 0, %s91
    %s115 = sphi 0, %s117
    %s118 = sphi 0, %s115
    %s119 = sphi 0, %s118
    %s135 = sphi 0, %s119
    %s139 = sphi 0, %s139
    %s141 = sphi 0, %s139
    %s142 = sphi 0, %s141
    %s156 = sphi 0, %s142
    %s160 = sphi 0, %s160
    %s162 = sphi 0, %s160
    %s163 = sphi 0, %s162
    %s177 = sphi 0, %s163
    %s181 = sphi 0, %s181
    %s183 = sphi 0, %s181
    %s184 = sphi 0, %s183
    %s198 = sphi 0, %s184
    %s202 = sphi 0, %s202
    %s204 = sphi 0, %s202
    %s205 = sphi 0, %s204
    %s219 = sphi 0, %s205
  $region4: #{wave_u_net_forward.13} parent=0 // loop_header_branch
    %17 = sbr.rel (%p15) target = $region8
  $region5: #{wave_u_net_forward.13} parent=0 // loop_body
    %s19 = ssub.s32 %s14, 1
    %s20 = ssub.s32 %s14, 2
    %s27 = sadd.s32 1, %s22
    %p28 = scmp.ge.s32.totalorder %s27, 1
    %s29 = scalar_select %p28, 0, %s27
    %s30 = sadd.s32 1, %s21
    %s31 = scalar_select %p28, %s30, %s21
    %p32 = scmp.ge.s32.totalorder %s31, 2
    %s33 = scalar_select %p32, 0, %s31
    %s35 = sadd.s32 %s34, 1
    %p38 = scmp.eq.s32.totalorder %s14, 1
    %p39 = scmp.ne.s32.totalorder %s34, %s36
    %p40 = scmp.eq.s32.totalorder %s14, 0
    %p41 = por %p39, %p40
    %p42 = scmp.ne.s32.totalorder %s34, %s36
    %p43 = scmp.eq.s32.totalorder %s19, 1
    %p44 = por %p42, %p43
    %p45 = scmp.ne.s32.totalorder %s36, %s37
    %p46 = scmp.eq.s32.totalorder %s19, 0
    %p47 = por %p45, %p46
    %p48 = scmp.ne.s32.totalorder %s36, %s37
    %p49 = scmp.eq.s32.totalorder %s20, 1
    %p50 = por %p48, %p49
    %p52 = scmp.ne.s32.totalorder %s37, %s51
    %p53 = scmp.eq.s32.totalorder %s20, 0
    %p54 = por %p52, %p53
    %s55 = ssub.s32 %s21, %s33
    %s56 = ssub.s32 %s22, %s29
    %s57 = sor.u32 %s55, %s56
    %p58 = scmp.eq.s32.totalorder %s57, 0
    %s60 = sadd.s32 %s59, 1
    %s61 = scalar_select %p58, %s59, %s60
    %p64 = pneg %p58
    %p65 = scmp.eq.s32.totalorder %s14, 1
    %p66 = por %p64, %p65
    %p67 = scmp.ne.s32.totalorder %s59, %s62
    %p68 = scmp.eq.s32.totalorder %s14, 0
    %p69 = por %p67, %p68
    %p70 = scmp.ne.s32.totalorder %s59, %s62
    %p71 = scmp.eq.s32.totalorder %s19, 1
    %p72 = por %p70, %p71
    %p73 = scmp.ne.s32.totalorder %s62, %s63
    %p74 = scmp.eq.s32.totalorder %s19, 0
    %p75 = por %p73, %p74
    %p76 = scmp.ne.s32.totalorder %s62, %s63
    %p77 = scmp.eq.s32.totalorder %s20, 1
    %p78 = por %p76, %p77
    %p80 = scmp.ne.s32.totalorder %s63, %s79
    %p81 = scmp.eq.s32.totalorder %s20, 0
    %p82 = por %p80, %p81
    %s83 = ssub.s32 %s21, %s33
    %s84 = ssub.s32 %s22, %s29
    %s85 = sor.u32 %s83, %s84
    %p86 = scmp.eq.s32.totalorder %s85, 0
    %s88 = sadd.s32 %s87, 1
    %s89 = scalar_select %p86, %s87, %s88
    %p92 = pneg %p86
    %p93 = scmp.eq.s32.totalorder %s14, 1
    %p94 = por %p92, %p93
    %p95 = scmp.ne.s32.totalorder %s87, %s90
    %p96 = scmp.eq.s32.totalorder %s14, 0
    %p97 = por %p95, %p96
    %p98 = scmp.ne.s32.totalorder %s87, %s90
    %p99 = scmp.eq.s32.totalorder %s19, 1
    %p100 = por %p98, %p99
    %p101 = scmp.ne.s32.totalorder %s90, %s91
    %p102 = scmp.eq.s32.totalorder %s19, 0
    %p103 = por %p101, %p102
    %p104 = scmp.ne.s32.totalorder %s90, %s91
    %p105 = scmp.eq.s32.totalorder %s20, 1
    %p106 = por %p104, %p105
    %p108 = scmp.ne.s32.totalorder %s91, %s107
    %p109 = scmp.eq.s32.totalorder %s20, 0
    %p110 = por %p108, %p109
    %s111 = ssub.s32 %s21, %s33
    %s112 = ssub.s32 %s22, %s29
    %s113 = sor.u32 %s111, %s112
    %p114 = scmp.eq.s32.totalorder %s113, 0
    %s116 = sadd.s32 %s115, 1
    %s117 = scalar_select %p114, %s115, %s116
    %p120 = pneg %p114
    %p121 = scmp.eq.s32.totalorder %s14, 1
    %p122 = por %p120, %p121
    %p123 = scmp.ne.s32.totalorder %s115, %s118
    %p124 = scmp.eq.s32.totalorder %s14, 0
    %p125 = por %p123, %p124
    %p126 = scmp.ne.s32.totalorder %s115, %s118
    %p127 = scmp.eq.s32.totalorder %s19, 1
    %p128 = por %p126, %p127
    %p129 = scmp.ne.s32.totalorder %s118, %s119
    %p130 = scmp.eq.s32.totalorder %s19, 0
    %p131 = por %p129, %p130
    %p132 = scmp.ne.s32.totalorder %s118, %s119
    %p133 = scmp.eq.s32.totalorder %s20, 1
    %p134 = por %p132, %p133
    %p136 = scmp.ne.s32.totalorder %s119, %s135
    %p137 = scmp.eq.s32.totalorder %s20, 0
    %p138 = por %p136, %p137
    %s140 = sadd.s32 %s139, 1
    %p143 = scmp.eq.s32.totalorder %s14, 1
    %p144 = scmp.ne.s32.totalorder %s139, %s141
    %p145 = scmp.eq.s32.totalorder %s14, 0
    %p146 = por %p144, %p145
    %p147 = scmp.ne.s32.totalorder %s139, %s141
    %p148 = scmp.eq.s32.totalorder %s19, 1
    %p149 = por %p147, %p148
    %p150 = scmp.ne.s32.totalorder %s141, %s142
    %p151 = scmp.eq.s32.totalorder %s19, 0
    %p152 = por %p150, %p151
    %p153 = scmp.ne.s32.totalorder %s141, %s142
    %p154 = scmp.eq.s32.totalorder %s20, 1
    %p155 = por %p153, %p154
    %p157 = scmp.ne.s32.totalorder %s142, %s156
    %p158 = scmp.eq.s32.totalorder %s20, 0
    %p159 = por %p157, %p158
    %s161 = sadd.s32 %s160, 1
    %p164 = scmp.eq.s32.totalorder %s14, 1
    %p165 = scmp.ne.s32.totalorder %s160, %s162
    %p166 = scmp.eq.s32.totalorder %s14, 0
    %p167 = por %p165, %p166
    %p168 = scmp.ne.s32.totalorder %s160, %s162
    %p169 = scmp.eq.s32.totalorder %s19, 1
    %p170 = por %p168, %p169
    %p171 = scmp.ne.s32.totalorder %s162, %s163
    %p172 = scmp.eq.s32.totalorder %s19, 0
    %p173 = por %p171, %p172
    %p174 = scmp.ne.s32.totalorder %s162, %s163
    %p175 = scmp.eq.s32.totalorder %s20, 1
    %p176 = por %p174, %p175
    %p178 = scmp.ne.s32.totalorder %s163, %s177
    %p179 = scmp.eq.s32.totalorder %s20, 0
    %p180 = por %p178, %p179
    %s182 = sadd.s32 %s181, 1
    %p185 = scmp.eq.s32.totalorder %s14, 1
    %p186 = scmp.ne.s32.totalorder %s181, %s183
    %p187 = scmp.eq.s32.totalorder %s14, 0
    %p188 = por %p186, %p187
    %p189 = scmp.ne.s32.totalorder %s181, %s183
    %p190 = scmp.eq.s32.totalorder %s19, 1
    %p191 = por %p189, %p190
    %p192 = scmp.ne.s32.totalorder %s183, %s184
    %p193 = scmp.eq.s32.totalorder %s19, 0
    %p194 = por %p192, %p193
    %p195 = scmp.ne.s32.totalorder %s183, %s184
    %p196 = scmp.eq.s32.totalorder %s20, 1
    %p197 = por %p195, %p196
    %p199 = scmp.ne.s32.totalorder %s184, %s198
    %p200 = scmp.eq.s32.totalorder %s20, 0
    %p201 = por %p199, %p200
    %s203 = sadd.s32 %s202, 1
    %p206 = scmp.eq.s32.totalorder %s14, 1
    %p207 = scmp.ne.s32.totalorder %s202, %s204
    %p208 = scmp.eq.s32.totalorder %s14, 0
    %p209 = por %p207, %p208
    %p210 = scmp.ne.s32.totalorder %s202, %s204
    %p211 = scmp.eq.s32.totalorder %s19, 1
    %p212 = por %p210, %p211
    %p213 = scmp.ne.s32.totalorder %s204, %s205
    %p214 = scmp.eq.s32.totalorder %s19, 0
    %p215 = por %p213, %p214
    %p216 = scmp.ne.s32.totalorder %s204, %s205
    %p217 = scmp.eq.s32.totalorder %s20, 1
    %p218 = por %p216, %p217
    %p220 = scmp.ne.s32.totalorder %s205, %s219
    %p221 = scmp.eq.s32.totalorder %s20, 0
    %p222 = por %p220, %p221
    %p223 = scmp.le.s32.totalorder 1, %s14
    %p224 = scmp.lt.s32.totalorder %s14, 3
    %p225 = pnand %p223, %p224
    %p226 = pneg %p225
    // Predicated region
    $region9: #{wave_u_net_forward.13} parent=5 // pred_check
      _
    $region10: #{wave_u_net_forward.13} parent=5 // pred_check_branch
      %228 = sbr.rel (%p225) target = $region12
    $region11: #{wave_u_net_forward.13} parent=5 // pred_region
      %s229 = ssub.s32 %s14, 1
      // Predicated region
      $region13: #{wave_u_net_forward.13} parent=11 // pred_check
        %p230 = pneg %p47
      $region14: #{wave_u_net_forward.13} parent=11 // pred_check_branch
        %232 = sbr.rel (%p230) target = $region16
      $region15: #{wave_u_net_forward.13} parent=11 // pred_region
        _
      $region16: #{wave_u_net_forward.13} parent=11 // pred_fallthru
        _
      // Predicated region
      $region17: #{wave_u_net_forward.13} parent=11 // pred_check
        %p233 = pneg %p152
      $region18: #{wave_u_net_forward.13} parent=11 // pred_check_branch
        %235 = sbr.rel (%p233) target = $region20
      $region19: #{wave_u_net_forward.13} parent=11 // pred_region
        _
      $region20: #{wave_u_net_forward.13} parent=11 // pred_fallthru
        _
      // Predicated region
      $region21: #{wave_u_net_forward.13} parent=11 // pred_check
        %p236 = pneg %p173
      $region22: #{wave_u_net_forward.13} parent=11 // pred_check_branch
        %238 = sbr.rel (%p236) target = $region24
      $region23: #{wave_u_net_forward.13} parent=11 // pred_region
        _
      $region24: #{wave_u_net_forward.13} parent=11 // pred_fallthru
        _
    $region12: #{wave_u_net_forward.13} parent=5 // pred_fallthru
      _
    %p239 = scmp.lt.s32.totalorder %s14, 2
    // Predicated region
    $region25: #{wave_u_net_forward.13} parent=5 // pred_check
      %p240 = pneg %p239
    $region26: #{wave_u_net_forward.13} parent=5 // pred_check_branch
      %242 = sbr.rel (%p240) target = $region28
    $region27: #{wave_u_net_forward.13} parent=5 // pred_region
      // Predicated region
      $region29: #{wave_u_net_forward.13} parent=27 // pred_check
        %p243 = pneg %p69
      $region30: #{wave_u_net_forward.13} parent=27 // pred_check_branch
        %245 = sbr.rel (%p243) target = $region32
      $region31: #{wave_u_net_forward.13} parent=27 // pred_region
        %p246 = scmp.lt.s32.totalorder %s21, 1
        %s247 = scalar_select %p246, %s21, 1
        %p248 = scmp.lt.s32.totalorder %s22, 0
        %s249 = scalar_select %p248, %s22, 0
        %s250 = smul.addr %s247, 2
        %s251 = sadd.s32 %s249, %s250
        %s252 = smul.addr %s251, 8
        %s253 = scalar_lea.vmem %s1, %s252
      $region32: #{wave_u_net_forward.13} parent=27 // pred_fallthru
        _
      // Predicated region
      $region33: #{wave_u_net_forward.13} parent=27 // pred_check
        %p254 = pneg %p97
      $region34: #{wave_u_net_forward.13} parent=27 // pred_check_branch
        %256 = sbr.rel (%p254) target = $region36
      $region35: #{wave_u_net_forward.13} parent=27 // pred_region
        %p257 = scmp.lt.s32.totalorder %s21, 1
        %s258 = scalar_select %p257, %s21, 1
        %p259 = scmp.lt.s32.totalorder %s22, 0
        %s260 = scalar_select %p259, %s22, 0
        %s261 = smul.addr %s260, 2
        %s262 = smul.addr %s258, 2
        %s263 = sadd.s32 %s261, %s262
        %s264 = smul.addr %s263, 8
        %s265 = scalar_lea.vmem %s2, %s264
      $region36: #{wave_u_net_forward.13} parent=27 // pred_fallthru
        _
      // Predicated region
      $region37: #{wave_u_net_forward.13} parent=27 // pred_check
        %p266 = pneg %p125
      $region38: #{wave_u_net_forward.13} parent=27 // pred_check_branch
        %268 = sbr.rel (%p266) target = $region40
      $region39: #{wave_u_net_forward.13} parent=27 // pred_region
        %p269 = scmp.lt.s32.totalorder %s21, 1
        %s270 = scalar_select %p269, %s21, 1
        %p271 = scmp.lt.s32.totalorder %s22, 0
        %s272 = scalar_select %p271, %s22, 0
        %s273 = smul.addr %s272, 2
        %s274 = smul.addr %s270, 2
        %s275 = sadd.s32 %s273, %s274
        %s276 = smul.addr %s275, 8
        %s277 = scalar_lea.vmem %s3, %s276
      $region40: #{wave_u_net_forward.13} parent=27 // pred_fallthru
        _
    $region28: #{wave_u_net_forward.13} parent=5 // pred_fallthru
      _
    %p278 = scmp.le.s32.totalorder 1, %s14
    %p279 = scmp.lt.s32.totalorder %s14, 3
    %p280 = pnand %p278, %p279
    %p281 = pneg %p280
    // Predicated region
    $region41: #{wave_u_net_forward.13} parent=5 // pred_check
      _
    $region42: #{wave_u_net_forward.13} parent=5 // pred_check_branch
      %283 = sbr.rel (%p280) target = $region44
    $region43: #{wave_u_net_forward.13} parent=5 // pred_region
      %s284 = ssub.s32 %s14, 1
      %p285 = pneg %p47
      %p286 = pneg %p44
      %p287 = scmp.lt.s32.totalorder %s23, 1
      %s288 = scalar_select %p287, %s23, 1
      %p289 = scmp.lt.s32.totalorder %s24, 0
      %s290 = scalar_select %p289, %s24, 0
      %s291 = smul.addr %s288, 2
      %s292 = sadd.s32 %s290, %s291
      %s293 = smul.addr %s292, 8
      %s294 = scalar_lea.vmem %s1, %s293
      %p295 = pneg %p75
      %p296 = pneg %p72
      %p297 = scmp.lt.s32.totalorder %s23, 1
      %s298 = scalar_select %p297, %s23, 1
      %p299 = scmp.lt.s32.totalorder %s24, 0
      %s300 = scalar_select %p299, %s24, 0
      %s301 = smul.addr %s300, 2
      %s302 = smul.addr %s298, 2
      %s303 = sadd.s32 %s301, %s302
      %s304 = smul.addr %s303, 8
      %s305 = scalar_lea.vmem %s2, %s304
      %p306 = pneg %p103
      %p307 = pneg %p100
      %p308 = scmp.lt.s32.totalorder %s23, 1
      %s309 = scalar_select %p308, %s23, 1
      %p310 = scmp.lt.s32.totalorder %s24, 0
      %s311 = scalar_select %p310, %s24, 0
      %s312 = smul.addr %s311, 2
      %s313 = smul.addr %s309, 2
      %s314 = sadd.s32 %s312, %s313
      %s315 = smul.addr %s314, 8
      %s316 = scalar_lea.vmem %s3, %s315
      %p317 = pneg %p131
      %p318 = pneg %p128
      %p319 = pneg %p152
      %p320 = pneg %p149
      %p321 = pneg %p173
      %p322 = pneg %p170
      %p323 = pneg %p194
      %p324 = pneg %p191
      %p325 = pneg %p215
      %p326 = pneg %p212
      %p327 = scmp.lt.s32.totalorder %s23, 1
      %s328 = scalar_select %p327, %s23, 1
      %p329 = scmp.lt.s32.totalorder %s24, 0
      %s330 = scalar_select %p329, %s24, 0
      %s331 = smul.addr %s328, 2
      %s332 = sadd.s32 %s330, %s331
      %s333 = smul.addr %s332, 8
      %s334 = scalar_lea.vmem %s1, %s333
      %p335 = scmp.lt.s32.totalorder %s23, 1
      %s336 = scalar_select %p335, %s23, 1
      %p337 = scmp.lt.s32.totalorder %s24, 0
      %s338 = scalar_select %p337, %s24, 0
      %s339 = smul.addr %s338, 2
      %s340 = smul.addr %s336, 2
      %s341 = sadd.s32 %s339, %s340
      %s342 = smul.addr %s341, 8
      %s343 = scalar_lea.vmem %s2, %s342
      %p344 = scmp.lt.s32.totalorder %s23, 1
      %s345 = scalar_select %p344, %s23, 1
      %p346 = scmp.lt.s32.totalorder %s24, 0
      %s347 = scalar_select %p346, %s24, 0
      %s348 = smul.addr %s347, 2
      %s349 = smul.addr %s345, 2
      %s350 = sadd.s32 %s348, %s349
      %s351 = smul.addr %s350, 8
      %s352 = scalar_lea.vmem %s3, %s351
      %p353 = scmp.eq.s32.totalorder %s23, 0
      %p354 = scmp.eq.s32.totalorder %s24, 0
      %p355 = pnand %p353, %p354
      %p356 = pneg %p355
      // Predicated region
      $region45: #{wave_u_net_forward.13} parent=43 // pred_check
        _
      $region46: #{wave_u_net_forward.13} parent=43 // pred_check_branch
        %358 = sbr.rel (%p355) target = $region48
      $region47: #{wave_u_net_forward.13} parent=43 // pred_region
        %vm359 = vcmask 7168
        %360 = vst.msk [vmem:[#allocation2] sm:$0xff] %vm359, 0.0
        %361 = vst.msk [vmem:[#allocation3] sm:$0xff] %vm359, 0.0
      $region48: #{wave_u_net_forward.13} parent=43 // pred_fallthru
        _
      %v362 = vld [vmem:[%s343] sm:$0xff]
      %v363 = vld [vmem:[%s343 + $0x8] sm:$0xff]
      %v364 = vld [vmem:[%s334] sm:$0xff]
      %v365 = vld [vmem:[%s334 + $0x8] sm:$0xff]
      %v366 = vld [vmem:[%s352] sm:$0xff]
      %v367 = vld [vmem:[%s352 + $0x8] sm:$0xff]
      %370 = vrot.lane.b32.xlu0 %v364, 2
      %v371 = vpop.permute.xlu0 %370
      %372 = vrot.lane.b32.xlu0 %v365, 2
      %v373 = vpop.permute.xlu0 %372
      %378 = vrot.lane.b32.xlu0 %v366, 10
      %v379 = vpop.permute.xlu0 %378
      %380 = vrot.lane.b32.xlu0 %v367, 10
      %v381 = vpop.permute.xlu0 %380
      %vm384 = vcmask 15360
      %v385 = vsel %vm384, %v362, %v371
      %v386 = vsel %vm384, %v363, %v373
      %vm387 = vcmask 80896
      %v388 = vsel %vm387, %v385, %v379
      %v389 = vsel %vm387, %v386, %v381
      %v390 = vld [vmem:[%s0] sm:$0xff]
      %s391 = scalar_lea.vmem %s0, 8
      %v392 = vld [vmem:[%s391] sm:$0xff]
      %395 = vrot.lane.b32.xlu0 %v388, 127
      %v396 = vpop.permute.xlu0 %395
      %397 = vrot.lane.b32.xlu0 %v389, 127
      %v398 = vpop.permute.xlu0 %397
      %vm401 = vcmask 130048
      %v403 = vsel %vm401, %v392, 0
      %405 = vmatprep.subr.mxu0 0.0
      %406 = vmatpush1.msra.mxu0 0.0
      %407 = vmatprep.subr.mxu0 0.0
      %408 = vmatpush1.msra.mxu0 0.0
      %409 = vmatprep.subr.mxu0 0.0
      %410 = vmatpush1.msra.mxu0 0.0
      %411 = vmatprep.subr.mxu0 0.0
      %412 = vmatpush1.msra.mxu0 0.0
      %413 = vmatprep.subr.mxu0 0.0
      %414 = vmatpush1.msra.mxu0 0.0
      %415 = vmatprep.subr.mxu0 0.0
      %416 = vmatpush1.msra.mxu0 0.0
      %417 = vmatprep.subr.mxu0 0.0
      %418 = vmatpush1.msra.mxu0 0.0
      %419 = vmatprep.subr.mxu0 0.0
      %420 = vmatpush1.msra.mxu0 0.0
      %421 = vmatprep.subr.mxu0 0.0
      %422 = vmatpush1.msra.mxu0 0.0
      %423 = vmatprep.subr.mxu0 0.0
      %424 = vmatpush1.msra.mxu0 0.0
      %425 = vmatprep.subr.mxu0 0.0
      %426 = vmatpush1.msra.mxu0 0.0
      %427 = vmatprep.subr.mxu0 0.0
      %428 = vmatpush1.msra.mxu0 0.0
      %429 = vmatprep.subr.mxu0 0.0
      %430 = vmatpush1.msra.mxu0 0.0
      %431 = vmatprep.subr.mxu0 0.0
      %432 = vmatpush1.msra.mxu0 0.0
      %433 = vmatprep.subr.mxu0 0.0
      %434 = vmatpush1.msra.mxu0 %v398
      %435 = vmatprep.subr.mxu0 0.0
      %436 = vmatpush1.msra.mxu0 %v396
      %437 = vmatprep.subr.mxu0 0.0
      %438 = vmatpush2.msra.mxu0 0.0
      %439 = vmatprep.subr.mxu0 0.0
      %440 = vmatpush2.msra.mxu0 0.0
      %441 = vmatprep.subr.mxu0 0.0
      %442 = vmatpush2.msra.mxu0 0.0
      %443 = vmatprep.subr.mxu0 0.0
      %444 = vmatpush2.msra.mxu0 0.0
      %445 = vmatprep.subr.mxu0 0.0
      %446 = vmatpush2.msra.mxu0 0.0
      %447 = vmatprep.subr.mxu0 0.0
      %448 = vmatpush2.msra.mxu0 0.0
      %449 = vmatprep.subr.mxu0 0.0
      %450 = vmatpush2.msra.mxu0 0.0
      %451 = vmatprep.subr.mxu0 0.0
      %452 = vmatpush2.msra.mxu0 0.0
      %453 = vmatprep.subr.mxu0 0.0
      %454 = vmatpush2.msra.mxu0 0.0
      %455 = vmatprep.subr.mxu0 0.0
      %456 = vmatpush2.msra.mxu0 0.0
      %457 = vmatprep.subr.mxu0 0.0
      %458 = vmatpush2.msra.mxu0 0.0
      %459 = vmatprep.subr.mxu0 0.0
      %460 = vmatpush2.msra.mxu0 0.0
      %461 = vmatprep.subr.mxu0 0.0
      %462 = vmatpush2.msra.mxu0 0.0
      %463 = vmatprep.subr.mxu0 0.0
      %464 = vmatpush2.msra.mxu0 0.0
      %465 = vmatprep.subr.mxu0 0.0
      %466 = vmatpush2.msra.mxu0 0.0
      %467 = vmatprep.subr.mxu0 0.0
      %468 = vmatpush2.msra.mxu0 0.0
      %469 = vmatprep.mubr.f32.mxu0 0.0
      %470 = vmatmul.mubr.f32.gmra.mxu0 %v403
      %v471 = vpop.f32.mrf.mxu0
      %v472 = vadd.f32 0.0, %v471
      %v473 = vpop.f32.mrf.mxu0
      %474 = vdwg.mxu0
      %v476 = vsel %vm401, %v390, 0
      %478 = vmatprep.subr.mxu0 0.0
      %479 = vmatpush1.msra.mxu0 0.0
      %480 = vmatprep.subr.mxu0 0.0
      %481 = vmatpush1.msra.mxu0 0.0
      %482 = vmatprep.subr.mxu0 0.0
      %483 = vmatpush1.msra.mxu0 0.0
      %484 = vmatprep.subr.mxu0 0.0
      %485 = vmatpush1.msra.mxu0 0.0
      %486 = vmatprep.subr.mxu0 0.0
      %487 = vmatpush1.msra.mxu0 0.0
      %488 = vmatprep.subr.mxu0 0.0
      %489 = vmatpush1.msra.mxu0 0.0
      %490 = vmatprep.subr.mxu0 0.0
      %491 = vmatpush1.msra.mxu0 0.0
      %492 = vmatprep.subr.mxu0 0.0
      %493 = vmatpush1.msra.mxu0 0.0
      %494 = vmatprep.subr.mxu0 0.0
      %495 = vmatpush1.msra.mxu0 0.0
      %496 = vmatprep.subr.mxu0 0.0
      %497 = vmatpush1.msra.mxu0 0.0
      %498 = vmatprep.subr.mxu0 0.0
      %499 = vmatpush1.msra.mxu0 0.0
      %500 = vmatprep.subr.mxu0 0.0
      %501 = vmatpush1.msra.mxu0 0.0
      %502 = vmatprep.subr.mxu0 0.0
      %503 = vmatpush1.msra.mxu0 0.0
      %504 = vmatprep.subr.mxu0 0.0
      %505 = vmatpush1.msra.mxu0 0.0
      %506 = vmatprep.subr.mxu0 0.0
      %507 = vmatpush1.msra.mxu0 %v389
      %508 = vmatprep.subr.mxu0 0.0
      %509 = vmatpush1.msra.mxu0 %v388
      %510 = vmatprep.subr.mxu0 0.0
      %511 = vmatpush2.msra.mxu0 0.0
      %512 = vmatprep.subr.mxu0 0.0
      %513 = vmatpush2.msra.mxu0 0.0
      %514 = vmatprep.subr.mxu0 0.0
      %515 = vmatpush2.msra.mxu0 0.0
      %516 = vmatprep.subr.mxu0 0.0
      %517 = vmatpush2.msra.mxu0 0.0
      %518 = vmatprep.subr.mxu0 0.0
      %519 = vmatpush2.msra.mxu0 0.0
      %520 = vmatprep.subr.mxu0 0.0
      %521 = vmatpush2.msra.mxu0 0.0
      %522 = vmatprep.subr.mxu0 0.0
      %523 = vmatpush2.msra.mxu0 0.0
      %524 = vmatprep.subr.mxu0 0.0
      %525 = vmatpush2.msra.mxu0 0.0
      %526 = vmatprep.subr.mxu0 0.0
      %527 = vmatpush2.msra.mxu0 0.0
      %528 = vmatprep.subr.mxu0 0.0
      %529 = vmatpush2.msra.mxu0 0.0
      %530 = vmatprep.subr.mxu0 0.0
      %531 = vmatpush2.msra.mxu0 0.0
      %532 = vmatprep.subr.mxu0 0.0
      %533 = vmatpush2.msra.mxu0 0.0
      %534 = vmatprep.subr.mxu0 0.0
      %535 = vmatpush2.msra.mxu0 0.0
      %536 = vmatprep.subr.mxu0 0.0
      %537 = vmatpush2.msra.mxu0 0.0
      %538 = vmatprep.subr.mxu0 0.0
      %539 = vmatpush2.msra.mxu0 0.0
      %540 = vmatprep.subr.mxu0 0.0
      %541 = vmatpush2.msra.mxu0 0.0
      %542 = vmatprep.mubr.f32.mxu0 0.0
      %543 = vmatmul.mubr.f32.gmra.mxu0 %v476
      %v544 = vpop.f32.mrf.mxu0
      %v545 = vadd.f32 %v472, %v544
      %v546 = vpop.f32.mrf.mxu0
      %547 = vdwg.mxu0
      %s548 = scalar_lea.vmem %s0, 16
      %v549 = vld [vmem:[%s548] sm:$0xff]
      %550 = vrot.lane.b32.xlu0 %v388, 126
      %v551 = vpop.permute.xlu0 %550
      %552 = vrot.lane.b32.xlu0 %v389, 126
      %v553 = vpop.permute.xlu0 %552
      %v557 = vsel %vm401, %v549, 0
      %559 = vmatprep.subr.mxu0 0.0
      %560 = vmatpush1.msra.mxu0 0.0
      %561 = vmatprep.subr.mxu0 0.0
      %562 = vmatpush1.msra.mxu0 0.0
      %563 = vmatprep.subr.mxu0 0.0
      %564 = vmatpush1.msra.mxu0 0.0
      %565 = vmatprep.subr.mxu0 0.0
      %566 = vmatpush1.msra.mxu0 0.0
      %567 = vmatprep.subr.mxu0 0.0
      %568 = vmatpush1.msra.mxu0 0.0
      %569 = vmatprep.subr.mxu0 0.0
      %570 = vmatpush1.msra.mxu0 0.0
      %571 = vmatprep.subr.mxu0 0.0
      %572 = vmatpush1.msra.mxu0 0.0
      %573 = vmatprep.subr.mxu0 0.0
      %574 = vmatpush1.msra.mxu0 0.0
      %575 = vmatprep.subr.mxu0 0.0
      %576 = vmatpush1.msra.mxu0 0.0
      %577 = vmatprep.subr.mxu0 0.0
      %578 = vmatpush1.msra.mxu0 0.0
      %579 = vmatprep.subr.mxu0 0.0
      %580 = vmatpush1.msra.mxu0 0.0
      %581 = vmatprep.subr.mxu0 0.0
      %582 = vmatpush1.msra.mxu0 0.0
      %583 = vmatprep.subr.mxu0 0.0
      %584 = vmatpush1.msra.mxu0 0.0
      %585 = vmatprep.subr.mxu0 0.0
      %586 = vmatpush1.msra.mxu0 0.0
      %587 = vmatprep.subr.mxu0 0.0
      %588 = vmatpush1.msra.mxu0 %v553
      %589 = vmatprep.subr.mxu0 0.0
      %590 = vmatpush1.msra.mxu0 %v551
      %591 = vmatprep.subr.mxu0 0.0
      %592 = vmatpush2.msra.mxu0 0.0
      %593 = vmatprep.subr.mxu0 0.0
      %594 = vmatpush2.msra.mxu0 0.0
      %595 = vmatprep.subr.mxu0 0.0
      %596 = vmatpush2.msra.mxu0 0.0
      %597 = vmatprep.subr.mxu0 0.0
      %598 = vmatpush2.msra.mxu0 0.0
      %599 = vmatprep.subr.mxu0 0.0
      %600 = vmatpush2.msra.mxu0 0.0
      %601 = vmatprep.subr.mxu0 0.0
      %602 = vmatpush2.msra.mxu0 0.0
      %603 = vmatprep.subr.mxu0 0.0
      %604 = vmatpush2.msra.mxu0 0.0
      %605 = vmatprep.subr.mxu0 0.0
      %606 = vmatpush2.msra.mxu0 0.0
      %607 = vmatprep.subr.mxu0 0.0
      %608 = vmatpush2.msra.mxu0 0.0
      %609 = vmatprep.subr.mxu0 0.0
      %610 = vmatpush2.msra.mxu0 0.0
      %611 = vmatprep.subr.mxu0 0.0
      %612 = vmatpush2.msra.mxu0 0.0
      %613 = vmatprep.subr.mxu0 0.0
      %614 = vmatpush2.msra.mxu0 0.0
      %615 = vmatprep.subr.mxu0 0.0
      %616 = vmatpush2.msra.mxu0 0.0
      %617 = vmatprep.subr.mxu0 0.0
      %618 = vmatpush2.msra.mxu0 0.0
      %619 = vmatprep.subr.mxu0 0.0
      %620 = vmatpush2.msra.mxu0 0.0
      %621 = vmatprep.subr.mxu0 0.0
      %622 = vmatpush2.msra.mxu0 0.0
      %623 = vmatprep.mubr.f32.mxu0 0.0
      %624 = vmatmul.mubr.f32.gmra.mxu0 %v557
      %v625 = vpop.f32.mrf.mxu0
      %v626 = vadd.f32 0.0, %v625
      %v627 = vpop.f32.mrf.mxu0
      %628 = vdwg.mxu0
      %v629 = vadd.f32 %v545, %v626
      %s630 = scalar_lea.vmem %s0, 24
      %v631 = vld [vmem:[%s630] sm:$0xff]
      %632 = vrot.lane.b32.xlu0 %v388, 125
      %v633 = vpop.permute.xlu0 %632
      %634 = vrot.lane.b32.xlu0 %v389, 125
      %v635 = vpop.permute.xlu0 %634
      %v639 = vsel %vm401, %v631, 0
      %641 = vmatprep.subr.mxu0 0.0
      %642 = vmatpush1.msra.mxu0 0.0
      %643 = vmatprep.subr.mxu0 0.0
      %644 = vmatpush1.msra.mxu0 0.0
      %645 = vmatprep.subr.mxu0 0.0
      %646 = vmatpush1.msra.mxu0 0.0
      %647 = vmatprep.subr.mxu0 0.0
      %648 = vmatpush1.msra.mxu0 0.0
      %649 = vmatprep.subr.mxu0 0.0
      %650 = vmatpush1.msra.mxu0 0.0
      %651 = vmatprep.subr.mxu0 0.0
      %652 = vmatpush1.msra.mxu0 0.0
      %653 = vmatprep.subr.mxu0 0.0
      %654 = vmatpush1.msra.mxu0 0.0
      %655 = vmatprep.subr.mxu0 0.0
      %656 = vmatpush1.msra.mxu0 0.0
      %657 = vmatprep.subr.mxu0 0.0
      %658 = vmatpush1.msra.mxu0 0.0
      %659 = vmatprep.subr.mxu0 0.0
      %660 = vmatpush1.msra.mxu0 0.0
      %661 = vmatprep.subr.mxu0 0.0
      %662 = vmatpush1.msra.mxu0 0.0
      %663 = vmatprep.subr.mxu0 0.0
      %664 = vmatpush1.msra.mxu0 0.0
      %665 = vmatprep.subr.mxu0 0.0
      %666 = vmatpush1.msra.mxu0 0.0
      %667 = vmatprep.subr.mxu0 0.0
      %668 = vmatpush1.msra.mxu0 0.0
      %669 = vmatprep.subr.mxu0 0.0
      %670 = vmatpush1.msra.mxu0 %v635
      %671 = vmatprep.subr.mxu0 0.0
      %672 = vmatpush1.msra.mxu0 %v633
      %673 = vmatprep.subr.mxu0 0.0
      %674 = vmatpush2.msra.mxu0 0.0
      %675 = vmatprep.subr.mxu0 0.0
      %676 = vmatpush2.msra.mxu0 0.0
      %677 = vmatprep.subr.mxu0 0.0
      %678 = vmatpush2.msra.mxu0 0.0
      %679 = vmatprep.subr.mxu0 0.0
      %680 = vmatpush2.msra.mxu0 0.0
      %681 = vmatprep.subr.mxu0 0.0
      %682 = vmatpush2.msra.mxu0 0.0
      %683 = vmatprep.subr.mxu0 0.0
      %684 = vmatpush2.msra.mxu0 0.0
      %685 = vmatprep.subr.mxu0 0.0
      %686 = vmatpush2.msra.mxu0 0.0
      %687 = vmatprep.subr.mxu0 0.0
      %688 = vmatpush2.msra.mxu0 0.0
      %689 = vmatprep.subr.mxu0 0.0
      %690 = vmatpush2.msra.mxu0 0.0
      %691 = vmatprep.subr.mxu0 0.0
      %692 = vmatpush2.msra.mxu0 0.0
      %693 = vmatprep.subr.mxu0 0.0
      %694 = vmatpush2.msra.mxu0 0.0
      %695 = vmatprep.subr.mxu0 0.0
      %696 = vmatpush2.msra.mxu0 0.0
      %697 = vmatprep.subr.mxu0 0.0
      %698 = vmatpush2.msra.mxu0 0.0
      %699 = vmatprep.subr.mxu0 0.0
      %700 = vmatpush2.msra.mxu0 0.0
      %701 = vmatprep.subr.mxu0 0.0
      %702 = vmatpush2.msra.mxu0 0.0
      %703 = vmatprep.subr.mxu0 0.0
      %704 = vmatpush2.msra.mxu0 0.0
      %705 = vmatprep.mubr.f32.mxu0 0.0
      %706 = vmatmul.mubr.f32.gmra.mxu0 %v639
      %v707 = vpop.f32.mrf.mxu0
      %v708 = vadd.f32 0.0, %v707
      %v709 = vpop.f32.mrf.mxu0
      %710 = vdwg.mxu0
      %v711 = vadd.f32 %v629, %v708
      %s712 = scalar_lea.vmem %s0, 32
      %v713 = vld [vmem:[%s712] sm:$0xff]
      %714 = vrot.lane.b32.xlu0 %v388, 124
      %v715 = vpop.permute.xlu0 %714
      %716 = vrot.lane.b32.xlu0 %v389, 124
      %v717 = vpop.permute.xlu0 %716
      %v721 = vsel %vm401, %v713, 0
      %723 = vmatprep.subr.mxu0 0.0
      %724 = vmatpush1.msra.mxu0 0.0
      %725 = vmatprep.subr.mxu0 0.0
      %726 = vmatpush1.msra.mxu0 0.0
      %727 = vmatprep.subr.mxu0 0.0
      %728 = vmatpush1.msra.mxu0 0.0
      %729 = vmatprep.subr.mxu0 0.0
      %730 = vmatpush1.msra.mxu0 0.0
      %731 = vmatprep.subr.mxu0 0.0
      %732 = vmatpush1.msra.mxu0 0.0
      %733 = vmatprep.subr.mxu0 0.0
      %734 = vmatpush1.msra.mxu0 0.0
      %735 = vmatprep.subr.mxu0 0.0
      %736 = vmatpush1.msra.mxu0 0.0
      %737 = vmatprep.subr.mxu0 0.0
      %738 = vmatpush1.msra.mxu0 0.0
      %739 = vmatprep.subr.mxu0 0.0
      %740 = vmatpush1.msra.mxu0 0.0
      %741 = vmatprep.subr.mxu0 0.0
      %742 = vmatpush1.msra.mxu0 0.0
      %743 = vmatprep.subr.mxu0 0.0
      %744 = vmatpush1.msra.mxu0 0.0
      %745 = vmatprep.subr.mxu0 0.0
      %746 = vmatpush1.msra.mxu0 0.0
      %747 = vmatprep.subr.mxu0 0.0
      %748 = vmatpush1.msra.mxu0 0.0
      %749 = vmatprep.subr.mxu0 0.0
      %750 = vmatpush1.msra.mxu0 0.0
      %751 = vmatprep.subr.mxu0 0.0
      %752 = vmatpush1.msra.mxu0 %v717
      %753 = vmatprep.subr.mxu0 0.0
      %754 = vmatpush1.msra.mxu0 %v715
      %755 = vmatprep.subr.mxu0 0.0
      %756 = vmatpush2.msra.mxu0 0.0
      %757 = vmatprep.subr.mxu0 0.0
      %758 = vmatpush2.msra.mxu0 0.0
      %759 = vmatprep.subr.mxu0 0.0
      %760 = vmatpush2.msra.mxu0 0.0
      %761 = vmatprep.subr.mxu0 0.0
      %762 = vmatpush2.msra.mxu0 0.0
      %763 = vmatprep.subr.mxu0 0.0
      %764 = vmatpush2.msra.mxu0 0.0
      %765 = vmatprep.subr.mxu0 0.0
      %766 = vmatpush2.msra.mxu0 0.0
      %767 = vmatprep.subr.mxu0 0.0
      %768 = vmatpush2.msra.mxu0 0.0
      %769 = vmatprep.subr.mxu0 0.0
      %770 = vmatpush2.msra.mxu0 0.0
      %771 = vmatprep.subr.mxu0 0.0
      %772 = vmatpush2.msra.mxu0 0.0
      %773 = vmatprep.subr.mxu0 0.0
      %774 = vmatpush2.msra.mxu0 0.0
      %775 = vmatprep.subr.mxu0 0.0
      %776 = vmatpush2.msra.mxu0 0.0
      %777 = vmatprep.subr.mxu0 0.0
      %778 = vmatpush2.msra.mxu0 0.0
      %779 = vmatprep.subr.mxu0 0.0
      %780 = vmatpush2.msra.mxu0 0.0
      %781 = vmatprep.subr.mxu0 0.0
      %782 = vmatpush2.msra.mxu0 0.0
      %783 = vmatprep.subr.mxu0 0.0
      %784 = vmatpush2.msra.mxu0 0.0
      %785 = vmatprep.subr.mxu0 0.0
      %786 = vmatpush2.msra.mxu0 0.0
      %787 = vmatprep.mubr.f32.mxu0 0.0
      %788 = vmatmul.mubr.f32.gmra.mxu0 %v721
      %v789 = vpop.f32.mrf.mxu0
      %v790 = vadd.f32 0.0, %v789
      %v791 = vpop.f32.mrf.mxu0
      %792 = vdwg.mxu0
      %v793 = vadd.f32 %v711, %v790
      %vm794 = vcmask 64512
      %v795 = vsel %vm794, %v793, 0.0
      %796 = vadd.xlane.f32.xlu0 %v795
      %v797 = vpop.xlane.xlu0 %796
      %v798 = vmul.f32 %v797, 0.125
      %v799 = vsub.f32 %v793, %v798
      %v800 = vmul.f32 %v799, %v799
      %v801 = vsel %vm794, %v800, 0.0
      %802 = vadd.xlane.f32.xlu0 %v801
      %v803 = vpop.xlane.xlu0 %802
      %s804 = sadd.s32 %s23, %s24
      %s805 = smul.u32 %s804, 8
      %s806 = scvt.s32.f32 %s805
      %s807 = sadd.f32 %s806, 8.0
      %v808 = vld [vmem:[#allocation2] sm:$0xff]
      %v809 = vsub.f32 %v798, %v808
      %v810 = vstv %s807
      %v811 = vrcp.pop %v810
      %s812 = vtos %v811
      %s813 = smul.f32 8.0, %s812
      %v814 = vstv %s813
      %v815 = vmul.f32 %v809, %v814
      %v816 = vadd.f32 %v808, %v815
      %vm817 = vcmask 7168
      %818 = vst.msk [vmem:[#allocation2] sm:$0xff] %vm817, %v816
      %v819 = vld [vmem:[#allocation3] sm:$0xff]
      %v820 = vadd.f32 %v819, %v803
      %v821 = vmul.f32 %v809, %v809
      %s822 = smul.f32 %s806, 8.0
      %v823 = vstv %s807
      %v824 = vrcp.pop %v823
      %s825 = vtos %v824
      %s826 = smul.f32 %s822, %s825
      %v827 = vstv %s826
      %v828 = vmul.f32 %v821, %v827
      %v829 = vadd.f32 %v820, %v828
      %830 = vst.msk [vmem:[#allocation3] sm:$0xff] %vm817, %v829
      %p831 = scmp.eq.s32.totalorder %s23, 1
      %p832 = pnand %p831, %p354
      %p833 = pneg %p832
      // Predicated region
      $region49: #{wave_u_net_forward.13} parent=43 // pred_check
        _
      $region50: #{wave_u_net_forward.13} parent=43 // pred_check_branch
        %835 = sbr.rel (%p832) target = $region52
      $region51: #{wave_u_net_forward.13} parent=43 // pred_region
        %v836 = vld [vmem:[#allocation2] sm:$0xff]
        %v837 = vld [vmem:[#allocation3] sm:$0xff]
        %v838 = vmul.f32 %v837, 0.0625
        %v839 = vadd.f32 %v838, 1e-05
        %v840 = vrsqrt.pop %v839
        %v841 = vld [vmem:[%s4] sm:$0xff]
        %v842 = vmul.f32 %v841, %v840
        %843 = vst.msk [vmem:[%s6] sm:$0xff] %vm817, %v842
        %v844 = vld [vmem:[%s5] sm:$0xff]
        %v845 = vmul.f32 %v836, %v842
        %v846 = vsub.f32 %v844, %v845
        %847 = vst.msk [vmem:[%s7] sm:$0xff] %vm817, %v846
      $region52: #{wave_u_net_forward.13} parent=43 // pred_fallthru
        _
      // Predicated region
      $region53: #{wave_u_net_forward.13} parent=43 // pred_check
        %p848 = pneg %p191
      $region54: #{wave_u_net_forward.13} parent=43 // pred_check_branch
        %850 = sbr.rel (%p848) target = $region56
      $region55: #{wave_u_net_forward.13} parent=43 // pred_region
        _
      $region56: #{wave_u_net_forward.13} parent=43 // pred_fallthru
        _
      // Predicated region
      $region57: #{wave_u_net_forward.13} parent=43 // pred_check
        %p851 = pneg %p212
      $region58: #{wave_u_net_forward.13} parent=43 // pred_check_branch
        %853 = sbr.rel (%p851) target = $region60
      $region59: #{wave_u_net_forward.13} parent=43 // pred_region
        _
      $region60: #{wave_u_net_forward.13} parent=43 // pred_fallthru
        _
      // Predicated region
      $region61: #{wave_u_net_forward.13} parent=43 // pred_check
        %p854 = pneg %p191
      $region62: #{wave_u_net_forward.13} parent=43 // pred_check_branch
        %856 = sbr.rel (%p854) target = $region64
      $region63: #{wave_u_net_forward.13} parent=43 // pred_region
        _
      $region64: #{wave_u_net_forward.13} parent=43 // pred_fallthru
        _
      // Predicated region
      $region65: #{wave_u_net_forward.13} parent=43 // pred_check
        %p857 = pneg %p212
      $region66: #{wave_u_net_forward.13} parent=43 // pred_check_branch
        %859 = sbr.rel (%p857) target = $region68
      $region67: #{wave_u_net_forward.13} parent=43 // pred_region
        _
      $region68: #{wave_u_net_forward.13} parent=43 // pred_fallthru
        _
    $region44: #{wave_u_net_forward.13} parent=5 // pred_fallthru
      _
    %p860 = scmp.le.s32.totalorder 2, %s14
    // Predicated region
    $region69: #{wave_u_net_forward.13} parent=5 // pred_check
      %p861 = pneg %p860
    $region70: #{wave_u_net_forward.13} parent=5 // pred_check_branch
      %863 = sbr.rel (%p861) target = $region72
    $region71: #{wave_u_net_forward.13} parent=5 // pred_region
      %s864 = ssub.s32 %s14, 2
    $region72: #{wave_u_net_forward.13} parent=5 // pred_fallthru
      _
  $region6: #{wave_u_net_forward.13} parent=0 // loop_footer
    %s18 = sadd.s32 1, %s14
  $region7: #{wave_u_net_forward.13} parent=0 // loop_footer_branch
    %13 = sbr.rel target = $region3
  $region8: #{wave_u_net_forward.13} parent=0 // loop_exit
    _

// kernel: wave_u_net_forward.14
$region0: #{wave_u_net_forward.14}
  #allocation0 [shape = 'u32[]', space=smem, size = 0x4, offset = 0x4, fixed_abs, tag = 'smem constant byte address 0x4 - core index']
  #allocation1 [shape = 'u32[144,128]{1,0:T(1,128)}', space=vmem, size = 0x12000, scoped, tag = 'internal scratch']
  %s0 = inlined_call_operand.vmem [shape: f32[5,8,16], index: 0, kind: input, shape index: {}]
  %s1 = inlined_call_operand.vmem [shape: f32[2,16,8], index: 1, kind: input, shape index: {}]
  %s2 = inlined_call_operand.vmem [shape: f32[2,1,16,2], index: 2, kind: input, shape index: {}, may-alias: {2,3}]
  %s3 = inlined_call_operand.vmem [shape: f32[2,1,16,2], index: 3, kind: input, shape index: {}, may-alias: {2,3}]
  %s4 = inlined_call_operand.vmem [shape: f32[8,1], index: 4, kind: input, shape index: {}]
  %s5 = inlined_call_operand.vmem [shape: f32[8,1], index: 5, kind: input, shape index: {}]
  %s6 = inlined_call_operand.vmem [shape: f32[2,8,8], index: 6, kind: output, shape index: {}]
  %s7 = sld [smem:[#allocation0]]
  $region57: #{wave_u_net_forward.14} parent=0
    _
  %s9 = ssub.s32 1, %s7
  %s10 = scalar_select 0, %s9, %s7
  loop: start=0, step=1, limit=4
  $region2: #{wave_u_net_forward.14} parent=0 // loop_pre_header
    _
  $region3: #{wave_u_net_forward.14} parent=0 // loop_header
    %s12 = sphi 0, %s16
    %p13 = scmp.ge.s32.totalorder %s12, 4
    %s19 = sphi 0, %s31
    %s20 = sphi 0, %s27
    %s21 = sphi 0, %s19
    %s22 = sphi 0, %s20
    %s23 = sphi 0, %s21
    %s24 = sphi 0, %s22
    %s32 = sphi 0, %s32
    %s34 = sphi 0, %s32
    %s35 = sphi 0, %s34
    %s49 = sphi 0, %s35
    %s57 = sphi 0, %s59
    %s60 = sphi 0, %s57
    %s61 = sphi 0, %s60
    %s77 = sphi 0, %s61
    %s85 = sphi 0, %s87
    %s88 = sphi 0, %s85
    %s89 = sphi 0, %s88
    %s105 = sphi 0, %s89
    %s113 = sphi 0, %s115
    %s116 = sphi 0, %s113
    %s117 = sphi 0, %s116
    %s133 = sphi 0, %s117
    %s137 = sphi 0, %s137
    %s139 = sphi 0, %s137
    %s140 = sphi 0, %s139
    %s154 = sphi 0, %s140
    %s158 = sphi 0, %s158
    %s160 = sphi 0, %s158
    %s161 = sphi 0, %s160
    %s175 = sphi 0, %s161
    %s183 = sphi 0, %s185
    %s186 = sphi 0, %s183
    %s187 = sphi 0, %s186
    %s203 = sphi 0, %s187
  $region4: #{wave_u_net_forward.14} parent=0 // loop_header_branch
    %15 = sbr.rel (%p13) target = $region8
  $region5: #{wave_u_net_forward.14} parent=0 // loop_body
    %s17 = ssub.s32 %s12, 1
    %s18 = ssub.s32 %s12, 2
    %s25 = sadd.s32 1, %s20
    %p26 = scmp.ge.s32.totalorder %s25, 1
    %s27 = scalar_select %p26, 0, %s25
    %s28 = sadd.s32 1, %s19
    %s29 = scalar_select %p26, %s28, %s19
    %p30 = scmp.ge.s32.totalorder %s29, 2
    %s31 = scalar_select %p30, 0, %s29
    %s33 = sadd.s32 %s32, 1
    %p36 = scmp.eq.s32.totalorder %s12, 1
    %p37 = scmp.ne.s32.totalorder %s32, %s34
    %p38 = scmp.eq.s32.totalorder %s12, 0
    %p39 = por %p37, %p38
    %p40 = scmp.ne.s32.totalorder %s32, %s34
    %p41 = scmp.eq.s32.totalorder %s17, 1
    %p42 = por %p40, %p41
    %p43 = scmp.ne.s32.totalorder %s34, %s35
    %p44 = scmp.eq.s32.totalorder %s17, 0
    %p45 = por %p43, %p44
    %p46 = scmp.ne.s32.totalorder %s34, %s35
    %p47 = scmp.eq.s32.totalorder %s18, 1
    %p48 = por %p46, %p47
    %p50 = scmp.ne.s32.totalorder %s35, %s49
    %p51 = scmp.eq.s32.totalorder %s18, 0
    %p52 = por %p50, %p51
    %s53 = ssub.s32 %s19, %s31
    %s54 = ssub.s32 %s20, %s27
    %s55 = sor.u32 %s53, %s54
    %p56 = scmp.eq.s32.totalorder %s55, 0
    %s58 = sadd.s32 %s57, 1
    %s59 = scalar_select %p56, %s57, %s58
    %p62 = pneg %p56
    %p63 = scmp.eq.s32.totalorder %s12, 1
    %p64 = por %p62, %p63
    %p65 = scmp.ne.s32.totalorder %s57, %s60
    %p66 = scmp.eq.s32.totalorder %s12, 0
    %p67 = por %p65, %p66
    %p68 = scmp.ne.s32.totalorder %s57, %s60
    %p69 = scmp.eq.s32.totalorder %s17, 1
    %p70 = por %p68, %p69
    %p71 = scmp.ne.s32.totalorder %s60, %s61
    %p72 = scmp.eq.s32.totalorder %s17, 0
    %p73 = por %p71, %p72
    %p74 = scmp.ne.s32.totalorder %s60, %s61
    %p75 = scmp.eq.s32.totalorder %s18, 1
    %p76 = por %p74, %p75
    %p78 = scmp.ne.s32.totalorder %s61, %s77
    %p79 = scmp.eq.s32.totalorder %s18, 0
    %p80 = por %p78, %p79
    %s81 = ssub.s32 %s19, %s31
    %s82 = ssub.s32 %s20, %s27
    %s83 = sor.u32 %s81, %s82
    %p84 = scmp.eq.s32.totalorder %s83, 0
    %s86 = sadd.s32 %s85, 1
    %s87 = scalar_select %p84, %s85, %s86
    %p90 = pneg %p84
    %p91 = scmp.eq.s32.totalorder %s12, 1
    %p92 = por %p90, %p91
    %p93 = scmp.ne.s32.totalorder %s85, %s88
    %p94 = scmp.eq.s32.totalorder %s12, 0
    %p95 = por %p93, %p94
    %p96 = scmp.ne.s32.totalorder %s85, %s88
    %p97 = scmp.eq.s32.totalorder %s17, 1
    %p98 = por %p96, %p97
    %p99 = scmp.ne.s32.totalorder %s88, %s89
    %p100 = scmp.eq.s32.totalorder %s17, 0
    %p101 = por %p99, %p100
    %p102 = scmp.ne.s32.totalorder %s88, %s89
    %p103 = scmp.eq.s32.totalorder %s18, 1
    %p104 = por %p102, %p103
    %p106 = scmp.ne.s32.totalorder %s89, %s105
    %p107 = scmp.eq.s32.totalorder %s18, 0
    %p108 = por %p106, %p107
    %s109 = ssub.s32 %s19, %s31
    %s110 = ssub.s32 %s20, %s27
    %s111 = sor.u32 %s109, %s110
    %p112 = scmp.eq.s32.totalorder %s111, 0
    %s114 = sadd.s32 %s113, 1
    %s115 = scalar_select %p112, %s113, %s114
    %p118 = pneg %p112
    %p119 = scmp.eq.s32.totalorder %s12, 1
    %p120 = por %p118, %p119
    %p121 = scmp.ne.s32.totalorder %s113, %s116
    %p122 = scmp.eq.s32.totalorder %s12, 0
    %p123 = por %p121, %p122
    %p124 = scmp.ne.s32.totalorder %s113, %s116
    %p125 = scmp.eq.s32.totalorder %s17, 1
    %p126 = por %p124, %p125
    %p127 = scmp.ne.s32.totalorder %s116, %s117
    %p128 = scmp.eq.s32.totalorder %s17, 0
    %p129 = por %p127, %p128
    %p130 = scmp.ne.s32.totalorder %s116, %s117
    %p131 = scmp.eq.s32.totalorder %s18, 1
    %p132 = por %p130, %p131
    %p134 = scmp.ne.s32.totalorder %s117, %s133
    %p135 = scmp.eq.s32.totalorder %s18, 0
    %p136 = por %p134, %p135
    %s138 = sadd.s32 %s137, 1
    %p141 = scmp.eq.s32.totalorder %s12, 1
    %p142 = scmp.ne.s32.totalorder %s137, %s139
    %p143 = scmp.eq.s32.totalorder %s12, 0
    %p144 = por %p142, %p143
    %p145 = scmp.ne.s32.totalorder %s137, %s139
    %p146 = scmp.eq.s32.totalorder %s17, 1
    %p147 = por %p145, %p146
    %p148 = scmp.ne.s32.totalorder %s139, %s140
    %p149 = scmp.eq.s32.totalorder %s17, 0
    %p150 = por %p148, %p149
    %p151 = scmp.ne.s32.totalorder %s139, %s140
    %p152 = scmp.eq.s32.totalorder %s18, 1
    %p153 = por %p151, %p152
    %p155 = scmp.ne.s32.totalorder %s140, %s154
    %p156 = scmp.eq.s32.totalorder %s18, 0
    %p157 = por %p155, %p156
    %s159 = sadd.s32 %s158, 1
    %p162 = scmp.eq.s32.totalorder %s12, 1
    %p163 = scmp.ne.s32.totalorder %s158, %s160
    %p164 = scmp.eq.s32.totalorder %s12, 0
    %p165 = por %p163, %p164
    %p166 = scmp.ne.s32.totalorder %s158, %s160
    %p167 = scmp.eq.s32.totalorder %s17, 1
    %p168 = por %p166, %p167
    %p169 = scmp.ne.s32.totalorder %s160, %s161
    %p170 = scmp.eq.s32.totalorder %s17, 0
    %p171 = por %p169, %p170
    %p172 = scmp.ne.s32.totalorder %s160, %s161
    %p173 = scmp.eq.s32.totalorder %s18, 1
    %p174 = por %p172, %p173
    %p176 = scmp.ne.s32.totalorder %s161, %s175
    %p177 = scmp.eq.s32.totalorder %s18, 0
    %p178 = por %p176, %p177
    %s179 = ssub.s32 %s19, %s31
    %s180 = ssub.s32 %s20, %s27
    %s181 = sor.u32 %s179, %s180
    %p182 = scmp.eq.s32.totalorder %s181, 0
    %s184 = sadd.s32 %s183, 1
    %s185 = scalar_select %p182, %s183, %s184
    %p188 = pneg %p182
    %p189 = scmp.eq.s32.totalorder %s12, 1
    %p190 = por %p188, %p189
    %p191 = scmp.ne.s32.totalorder %s183, %s186
    %p192 = scmp.eq.s32.totalorder %s12, 0
    %p193 = por %p191, %p192
    %p194 = scmp.ne.s32.totalorder %s183, %s186
    %p195 = scmp.eq.s32.totalorder %s17, 1
    %p196 = por %p194, %p195
    %p197 = scmp.ne.s32.totalorder %s186, %s187
    %p198 = scmp.eq.s32.totalorder %s17, 0
    %p199 = por %p197, %p198
    %p200 = scmp.ne.s32.totalorder %s186, %s187
    %p201 = scmp.eq.s32.totalorder %s18, 1
    %p202 = por %p200, %p201
    %p204 = scmp.ne.s32.totalorder %s187, %s203
    %p205 = scmp.eq.s32.totalorder %s18, 0
    %p206 = por %p204, %p205
    %p207 = scmp.le.s32.totalorder 1, %s12
    %p208 = scmp.lt.s32.totalorder %s12, 3
    %p209 = pnand %p207, %p208
    %p210 = pneg %p209
    // Predicated region
    $region9: #{wave_u_net_forward.14} parent=5 // pred_check
      _
    $region10: #{wave_u_net_forward.14} parent=5 // pred_check_branch
      %212 = sbr.rel (%p209) target = $region12
    $region11: #{wave_u_net_forward.14} parent=5 // pred_region
      %s213 = ssub.s32 %s12, 1
      // Predicated region
      $region13: #{wave_u_net_forward.14} parent=11 // pred_check
        %p214 = pneg %p45
      $region14: #{wave_u_net_forward.14} parent=11 // pred_check_branch
        %216 = sbr.rel (%p214) target = $region16
      $region15: #{wave_u_net_forward.14} parent=11 // pred_region
        _
      $region16: #{wave_u_net_forward.14} parent=11 // pred_fallthru
        _
      // Predicated region
      $region17: #{wave_u_net_forward.14} parent=11 // pred_check
        %p217 = pneg %p150
      $region18: #{wave_u_net_forward.14} parent=11 // pred_check_branch
        %219 = sbr.rel (%p217) target = $region20
      $region19: #{wave_u_net_forward.14} parent=11 // pred_region
        _
      $region20: #{wave_u_net_forward.14} parent=11 // pred_fallthru
        _
      // Predicated region
      $region21: #{wave_u_net_forward.14} parent=11 // pred_check
        %p220 = pneg %p171
      $region22: #{wave_u_net_forward.14} parent=11 // pred_check_branch
        %222 = sbr.rel (%p220) target = $region24
      $region23: #{wave_u_net_forward.14} parent=11 // pred_region
        _
      $region24: #{wave_u_net_forward.14} parent=11 // pred_fallthru
        _
    $region12: #{wave_u_net_forward.14} parent=5 // pred_fallthru
      _
    %p223 = scmp.lt.s32.totalorder %s12, 2
    // Predicated region
    $region25: #{wave_u_net_forward.14} parent=5 // pred_check
      %p224 = pneg %p223
    $region26: #{wave_u_net_forward.14} parent=5 // pred_check_branch
      %226 = sbr.rel (%p224) target = $region28
    $region27: #{wave_u_net_forward.14} parent=5 // pred_region
      // Predicated region
      $region29: #{wave_u_net_forward.14} parent=27 // pred_check
        %p227 = pneg %p67
      $region30: #{wave_u_net_forward.14} parent=27 // pred_check_branch
        %229 = sbr.rel (%p227) target = $region32
      $region31: #{wave_u_net_forward.14} parent=27 // pred_region
        %p230 = scmp.lt.s32.totalorder %s19, 1
        %s231 = scalar_select %p230, %s19, 1
        %p232 = scmp.lt.s32.totalorder %s20, 0
        %s233 = scalar_select %p232, %s20, 0
        %s234 = smul.addr %s231, 2
        %s235 = sadd.s32 %s233, %s234
        %s236 = smul.addr %s235, 8
        %s237 = scalar_lea.vmem %s1, %s236
      $region32: #{wave_u_net_forward.14} parent=27 // pred_fallthru
        _
      // Predicated region
      $region33: #{wave_u_net_forward.14} parent=27 // pred_check
        %p238 = pneg %p95
      $region34: #{wave_u_net_forward.14} parent=27 // pred_check_branch
        %240 = sbr.rel (%p238) target = $region36
      $region35: #{wave_u_net_forward.14} parent=27 // pred_region
        %p241 = scmp.lt.s32.totalorder %s19, 1
        %s242 = scalar_select %p241, %s19, 1
        %p243 = scmp.lt.s32.totalorder %s20, 0
        %s244 = scalar_select %p243, %s20, 0
        %s245 = smul.addr %s244, 2
        %s246 = smul.addr %s242, 2
        %s247 = sadd.s32 %s245, %s246
        %s248 = smul.addr %s247, 8
        %s249 = scalar_lea.vmem %s2, %s248
      $region36: #{wave_u_net_forward.14} parent=27 // pred_fallthru
        _
      // Predicated region
      $region37: #{wave_u_net_forward.14} parent=27 // pred_check
        %p250 = pneg %p123
      $region38: #{wave_u_net_forward.14} parent=27 // pred_check_branch
        %252 = sbr.rel (%p250) target = $region40
      $region39: #{wave_u_net_forward.14} parent=27 // pred_region
        %p253 = scmp.lt.s32.totalorder %s19, 1
        %s254 = scalar_select %p253, %s19, 1
        %p255 = scmp.lt.s32.totalorder %s20, 0
        %s256 = scalar_select %p255, %s20, 0
        %s257 = smul.addr %s256, 2
        %s258 = smul.addr %s254, 2
        %s259 = sadd.s32 %s257, %s258
        %s260 = smul.addr %s259, 8
        %s261 = scalar_lea.vmem %s3, %s260
      $region40: #{wave_u_net_forward.14} parent=27 // pred_fallthru
        _
    $region28: #{wave_u_net_forward.14} parent=5 // pred_fallthru
      _
    %p262 = scmp.le.s32.totalorder 1, %s12
    %p263 = scmp.lt.s32.totalorder %s12, 3
    %p264 = pnand %p262, %p263
    %p265 = pneg %p264
    // Predicated region
    $region41: #{wave_u_net_forward.14} parent=5 // pred_check
      _
    $region42: #{wave_u_net_forward.14} parent=5 // pred_check_branch
      %267 = sbr.rel (%p264) target = $region44
    $region43: #{wave_u_net_forward.14} parent=5 // pred_region
      %s268 = ssub.s32 %s12, 1
      %p269 = pneg %p45
      %p270 = pneg %p42
      %p271 = scmp.lt.s32.totalorder %s21, 1
      %s272 = scalar_select %p271, %s21, 1
      %p273 = scmp.lt.s32.totalorder %s22, 0
      %s274 = scalar_select %p273, %s22, 0
      %s275 = smul.addr %s272, 2
      %s276 = sadd.s32 %s274, %s275
      %s277 = smul.addr %s276, 8
      %s278 = scalar_lea.vmem %s1, %s277
      %p279 = pneg %p73
      %p280 = pneg %p70
      %p281 = scmp.lt.s32.totalorder %s21, 1
      %s282 = scalar_select %p281, %s21, 1
      %p283 = scmp.lt.s32.totalorder %s22, 0
      %s284 = scalar_select %p283, %s22, 0
      %s285 = smul.addr %s284, 2
      %s286 = smul.addr %s282, 2
      %s287 = sadd.s32 %s285, %s286
      %s288 = smul.addr %s287, 8
      %s289 = scalar_lea.vmem %s2, %s288
      %p290 = pneg %p101
      %p291 = pneg %p98
      %p292 = scmp.lt.s32.totalorder %s21, 1
      %s293 = scalar_select %p292, %s21, 1
      %p294 = scmp.lt.s32.totalorder %s22, 0
      %s295 = scalar_select %p294, %s22, 0
      %s296 = smul.addr %s295, 2
      %s297 = smul.addr %s293, 2
      %s298 = sadd.s32 %s296, %s297
      %s299 = smul.addr %s298, 8
      %s300 = scalar_lea.vmem %s3, %s299
      %p301 = pneg %p129
      %p302 = pneg %p126
      %p303 = pneg %p150
      %p304 = pneg %p147
      %p305 = pneg %p171
      %p306 = pneg %p168
      %p307 = pneg %p199
      %p308 = pneg %p196
      %p309 = scmp.lt.s32.totalorder %s21, 1
      %s310 = scalar_select %p309, %s21, 1
      %p311 = scmp.lt.s32.totalorder %s22, 0
      %s312 = scalar_select %p311, %s22, 0
      %s313 = sadd.s32 %s312, %s310
      %s314 = smul.addr %s313, 8
      %s315 = scalar_lea.vmem %s6, %s314
      %p316 = scmp.lt.s32.totalorder %s21, 1
      %s317 = scalar_select %p316, %s21, 1
      %p318 = scmp.lt.s32.totalorder %s22, 0
      %s319 = scalar_select %p318, %s22, 0
      %s320 = smul.addr %s317, 2
      %s321 = sadd.s32 %s319, %s320
      %s322 = smul.addr %s321, 8
      %s323 = scalar_lea.vmem %s1, %s322
      %p324 = scmp.lt.s32.totalorder %s21, 1
      %s325 = scalar_select %p324, %s21, 1
      %p326 = scmp.lt.s32.totalorder %s22, 0
      %s327 = scalar_select %p326, %s22, 0
      %s328 = smul.addr %s327, 2
      %s329 = smul.addr %s325, 2
      %s330 = sadd.s32 %s328, %s329
      %s331 = smul.addr %s330, 8
      %s332 = scalar_lea.vmem %s2, %s331
      %p333 = scmp.lt.s32.totalorder %s21, 1
      %s334 = scalar_select %p333, %s21, 1
      %p335 = scmp.lt.s32.totalorder %s22, 0
      %s336 = scalar_select %p335, %s22, 0
      %s337 = smul.addr %s336, 2
      %s338 = smul.addr %s334, 2
      %s339 = sadd.s32 %s337, %s338
      %s340 = smul.addr %s339, 8
      %s341 = scalar_lea.vmem %s3, %s340
      %p342 = scmp.lt.s32.totalorder %s21, 1
      %s343 = scalar_select %p342, %s21, 1
      %p344 = scmp.lt.s32.totalorder %s22, 0
      %s345 = scalar_select %p344, %s22, 0
      %s346 = sadd.s32 %s345, %s343
      %s347 = smul.addr %s346, 8
      %s348 = scalar_lea.vmem %s6, %s347
      %v349 = vld [vmem:[%s332] sm:$0xff]
      %v350 = vld [vmem:[%s332 + $0x8] sm:$0xff]
      %v351 = vld [vmem:[%s323] sm:$0xff]
      %v352 = vld [vmem:[%s323 + $0x8] sm:$0xff]
      %v353 = vld [vmem:[%s341] sm:$0xff]
      %v354 = vld [vmem:[%s341 + $0x8] sm:$0xff]
      %357 = vrot.lane.b32.xlu0 %v351, 2
      %v358 = vpop.permute.xlu0 %357
      %359 = vrot.lane.b32.xlu0 %v352, 2
      %v360 = vpop.permute.xlu0 %359
      %365 = vrot.lane.b32.xlu0 %v353, 10
      %v366 = vpop.permute.xlu0 %365
      %367 = vrot.lane.b32.xlu0 %v354, 10
      %v368 = vpop.permute.xlu0 %367
      %vm371 = vcmask 15360
      %v372 = vsel %vm371, %v349, %v358
      %v373 = vsel %vm371, %v350, %v360
      %vm374 = vcmask 80896
      %v375 = vsel %vm374, %v372, %v366
      %v376 = vsel %vm374, %v373, %v368
      %v377 = vld [vmem:[%s0] sm:$0xff]
      %s378 = scalar_lea.vmem %s0, 8
      %v379 = vld [vmem:[%s378] sm:$0xff]
      %382 = vrot.lane.b32.xlu0 %v375, 127
      %v383 = vpop.permute.xlu0 %382
      %384 = vrot.lane.b32.xlu0 %v376, 127
      %v385 = vpop.permute.xlu0 %384
      %vm388 = vcmask 130048
      %v390 = vsel %vm388, %v379, 0
      %392 = vmatprep.subr.mxu0 0.0
      %393 = vmatpush1.msra.mxu0 0.0
      %394 = vmatprep.subr.mxu0 0.0
      %395 = vmatpush1.msra.mxu0 0.0
      %396 = vmatprep.subr.mxu0 0.0
      %397 = vmatpush1.msra.mxu0 0.0
      %398 = vmatprep.subr.mxu0 0.0
      %399 = vmatpush1.msra.mxu0 0.0
      %400 = vmatprep.subr.mxu0 0.0
      %401 = vmatpush1.msra.mxu0 0.0
      %402 = vmatprep.subr.mxu0 0.0
      %403 = vmatpush1.msra.mxu0 0.0
      %404 = vmatprep.subr.mxu0 0.0
      %405 = vmatpush1.msra.mxu0 0.0
      %406 = vmatprep.subr.mxu0 0.0
      %407 = vmatpush1.msra.mxu0 0.0
      %408 = vmatprep.subr.mxu0 0.0
      %409 = vmatpush1.msra.mxu0 0.0
      %410 = vmatprep.subr.mxu0 0.0
      %411 = vmatpush1.msra.mxu0 0.0
      %412 = vmatprep.subr.mxu0 0.0
      %413 = vmatpush1.msra.mxu0 0.0
      %414 = vmatprep.subr.mxu0 0.0
      %415 = vmatpush1.msra.mxu0 0.0
      %416 = vmatprep.subr.mxu0 0.0
      %417 = vmatpush1.msra.mxu0 0.0
      %418 = vmatprep.subr.mxu0 0.0
      %419 = vmatpush1.msra.mxu0 0.0
      %420 = vmatprep.subr.mxu0 0.0
      %421 = vmatpush1.msra.mxu0 %v385
      %422 = vmatprep.subr.mxu0 0.0
      %423 = vmatpush1.msra.mxu0 %v383
      %424 = vmatprep.subr.mxu0 0.0
      %425 = vmatpush2.msra.mxu0 0.0
      %426 = vmatprep.subr.mxu0 0.0
      %427 = vmatpush2.msra.mxu0 0.0
      %428 = vmatprep.subr.mxu0 0.0
      %429 = vmatpush2.msra.mxu0 0.0
      %430 = vmatprep.subr.mxu0 0.0
      %431 = vmatpush2.msra.mxu0 0.0
      %432 = vmatprep.subr.mxu0 0.0
      %433 = vmatpush2.msra.mxu0 0.0
      %434 = vmatprep.subr.mxu0 0.0
      %435 = vmatpush2.msra.mxu0 0.0
      %436 = vmatprep.subr.mxu0 0.0
      %437 = vmatpush2.msra.mxu0 0.0
      %438 = vmatprep.subr.mxu0 0.0
      %439 = vmatpush2.msra.mxu0 0.0
      %440 = vmatprep.subr.mxu0 0.0
      %441 = vmatpush2.msra.mxu0 0.0
      %442 = vmatprep.subr.mxu0 0.0
      %443 = vmatpush2.msra.mxu0 0.0
      %444 = vmatprep.subr.mxu0 0.0
      %445 = vmatpush2.msra.mxu0 0.0
      %446 = vmatprep.subr.mxu0 0.0
      %447 = vmatpush2.msra.mxu0 0.0
      %448 = vmatprep.subr.mxu0 0.0
      %449 = vmatpush2.msra.mxu0 0.0
      %450 = vmatprep.subr.mxu0 0.0
      %451 = vmatpush2.msra.mxu0 0.0
      %452 = vmatprep.subr.mxu0 0.0
      %453 = vmatpush2.msra.mxu0 0.0
      %454 = vmatprep.subr.mxu0 0.0
      %455 = vmatpush2.msra.mxu0 0.0
      %456 = vmatprep.mubr.f32.mxu0 0.0
      %457 = vmatmul.mubr.f32.gmra.mxu0 %v390
      %v458 = vpop.f32.mrf.mxu0
      %v459 = vadd.f32 0.0, %v458
      %v460 = vpop.f32.mrf.mxu0
      %461 = vdwg.mxu0
      %v463 = vsel %vm388, %v377, 0
      %465 = vmatprep.subr.mxu0 0.0
      %466 = vmatpush1.msra.mxu0 0.0
      %467 = vmatprep.subr.mxu0 0.0
      %468 = vmatpush1.msra.mxu0 0.0
      %469 = vmatprep.subr.mxu0 0.0
      %470 = vmatpush1.msra.mxu0 0.0
      %471 = vmatprep.subr.mxu0 0.0
      %472 = vmatpush1.msra.mxu0 0.0
      %473 = vmatprep.subr.mxu0 0.0
      %474 = vmatpush1.msra.mxu0 0.0
      %475 = vmatprep.subr.mxu0 0.0
      %476 = vmatpush1.msra.mxu0 0.0
      %477 = vmatprep.subr.mxu0 0.0
      %478 = vmatpush1.msra.mxu0 0.0
      %479 = vmatprep.subr.mxu0 0.0
      %480 = vmatpush1.msra.mxu0 0.0
      %481 = vmatprep.subr.mxu0 0.0
      %482 = vmatpush1.msra.mxu0 0.0
      %483 = vmatprep.subr.mxu0 0.0
      %484 = vmatpush1.msra.mxu0 0.0
      %485 = vmatprep.subr.mxu0 0.0
      %486 = vmatpush1.msra.mxu0 0.0
      %487 = vmatprep.subr.mxu0 0.0
      %488 = vmatpush1.msra.mxu0 0.0
      %489 = vmatprep.subr.mxu0 0.0
      %490 = vmatpush1.msra.mxu0 0.0
      %491 = vmatprep.subr.mxu0 0.0
      %492 = vmatpush1.msra.mxu0 0.0
      %493 = vmatprep.subr.mxu0 0.0
      %494 = vmatpush1.msra.mxu0 %v376
      %495 = vmatprep.subr.mxu0 0.0
      %496 = vmatpush1.msra.mxu0 %v375
      %497 = vmatprep.subr.mxu0 0.0
      %498 = vmatpush2.msra.mxu0 0.0
      %499 = vmatprep.subr.mxu0 0.0
      %500 = vmatpush2.msra.mxu0 0.0
      %501 = vmatprep.subr.mxu0 0.0
      %502 = vmatpush2.msra.mxu0 0.0
      %503 = vmatprep.subr.mxu0 0.0
      %504 = vmatpush2.msra.mxu0 0.0
      %505 = vmatprep.subr.mxu0 0.0
      %506 = vmatpush2.msra.mxu0 0.0
      %507 = vmatprep.subr.mxu0 0.0
      %508 = vmatpush2.msra.mxu0 0.0
      %509 = vmatprep.subr.mxu0 0.0
      %510 = vmatpush2.msra.mxu0 0.0
      %511 = vmatprep.subr.mxu0 0.0
      %512 = vmatpush2.msra.mxu0 0.0
      %513 = vmatprep.subr.mxu0 0.0
      %514 = vmatpush2.msra.mxu0 0.0
      %515 = vmatprep.subr.mxu0 0.0
      %516 = vmatpush2.msra.mxu0 0.0
      %517 = vmatprep.subr.mxu0 0.0
      %518 = vmatpush2.msra.mxu0 0.0
      %519 = vmatprep.subr.mxu0 0.0
      %520 = vmatpush2.msra.mxu0 0.0
      %521 = vmatprep.subr.mxu0 0.0
      %522 = vmatpush2.msra.mxu0 0.0
      %523 = vmatprep.subr.mxu0 0.0
      %524 = vmatpush2.msra.mxu0 0.0
      %525 = vmatprep.subr.mxu0 0.0
      %526 = vmatpush2.msra.mxu0 0.0
      %527 = vmatprep.subr.mxu0 0.0
      %528 = vmatpush2.msra.mxu0 0.0
      %529 = vmatprep.mubr.f32.mxu0 0.0
      %530 = vmatmul.mubr.f32.gmra.mxu0 %v463
      %v531 = vpop.f32.mrf.mxu0
      %v532 = vadd.f32 %v459, %v531
      %v533 = vpop.f32.mrf.mxu0
      %534 = vdwg.mxu0
      %s535 = scalar_lea.vmem %s0, 16
      %v536 = vld [vmem:[%s535] sm:$0xff]
      %537 = vrot.lane.b32.xlu0 %v375, 126
      %v538 = vpop.permute.xlu0 %537
      %539 = vrot.lane.b32.xlu0 %v376, 126
      %v540 = vpop.permute.xlu0 %539
      %v544 = vsel %vm388, %v536, 0
      %546 = vmatprep.subr.mxu0 0.0
      %547 = vmatpush1.msra.mxu0 0.0
      %548 = vmatprep.subr.mxu0 0.0
      %549 = vmatpush1.msra.mxu0 0.0
      %550 = vmatprep.subr.mxu0 0.0
      %551 = vmatpush1.msra.mxu0 0.0
      %552 = vmatprep.subr.mxu0 0.0
      %553 = vmatpush1.msra.mxu0 0.0
      %554 = vmatprep.subr.mxu0 0.0
      %555 = vmatpush1.msra.mxu0 0.0
      %556 = vmatprep.subr.mxu0 0.0
      %557 = vmatpush1.msra.mxu0 0.0
      %558 = vmatprep.subr.mxu0 0.0
      %559 = vmatpush1.msra.mxu0 0.0
      %560 = vmatprep.subr.mxu0 0.0
      %561 = vmatpush1.msra.mxu0 0.0
      %562 = vmatprep.subr.mxu0 0.0
      %563 = vmatpush1.msra.mxu0 0.0
      %564 = vmatprep.subr.mxu0 0.0
      %565 = vmatpush1.msra.mxu0 0.0
      %566 = vmatprep.subr.mxu0 0.0
      %567 = vmatpush1.msra.mxu0 0.0
      %568 = vmatprep.subr.mxu0 0.0
      %569 = vmatpush1.msra.mxu0 0.0
      %570 = vmatprep.subr.mxu0 0.0
      %571 = vmatpush1.msra.mxu0 0.0
      %572 = vmatprep.subr.mxu0 0.0
      %573 = vmatpush1.msra.mxu0 0.0
      %574 = vmatprep.subr.mxu0 0.0
      %575 = vmatpush1.msra.mxu0 %v540
      %576 = vmatprep.subr.mxu0 0.0
      %577 = vmatpush1.msra.mxu0 %v538
      %578 = vmatprep.subr.mxu0 0.0
      %579 = vmatpush2.msra.mxu0 0.0
      %580 = vmatprep.subr.mxu0 0.0
      %581 = vmatpush2.msra.mxu0 0.0
      %582 = vmatprep.subr.mxu0 0.0
      %583 = vmatpush2.msra.mxu0 0.0
      %584 = vmatprep.subr.mxu0 0.0
      %585 = vmatpush2.msra.mxu0 0.0
      %586 = vmatprep.subr.mxu0 0.0
      %587 = vmatpush2.msra.mxu0 0.0
      %588 = vmatprep.subr.mxu0 0.0
      %589 = vmatpush2.msra.mxu0 0.0
      %590 = vmatprep.subr.mxu0 0.0
      %591 = vmatpush2.msra.mxu0 0.0
      %592 = vmatprep.subr.mxu0 0.0
      %593 = vmatpush2.msra.mxu0 0.0
      %594 = vmatprep.subr.mxu0 0.0
      %595 = vmatpush2.msra.mxu0 0.0
      %596 = vmatprep.subr.mxu0 0.0
      %597 = vmatpush2.msra.mxu0 0.0
      %598 = vmatprep.subr.mxu0 0.0
      %599 = vmatpush2.msra.mxu0 0.0
      %600 = vmatprep.subr.mxu0 0.0
      %601 = vmatpush2.msra.mxu0 0.0
      %602 = vmatprep.subr.mxu0 0.0
      %603 = vmatpush2.msra.mxu0 0.0
      %604 = vmatprep.subr.mxu0 0.0
      %605 = vmatpush2.msra.mxu0 0.0
      %606 = vmatprep.subr.mxu0 0.0
      %607 = vmatpush2.msra.mxu0 0.0
      %608 = vmatprep.subr.mxu0 0.0
      %609 = vmatpush2.msra.mxu0 0.0
      %610 = vmatprep.mubr.f32.mxu0 0.0
      %611 = vmatmul.mubr.f32.gmra.mxu0 %v544
      %v612 = vpop.f32.mrf.mxu0
      %v613 = vadd.f32 0.0, %v612
      %v614 = vpop.f32.mrf.mxu0
      %615 = vdwg.mxu0
      %v616 = vadd.f32 %v532, %v613
      %s617 = scalar_lea.vmem %s0, 24
      %v618 = vld [vmem:[%s617] sm:$0xff]
      %619 = vrot.lane.b32.xlu0 %v375, 125
      %v620 = vpop.permute.xlu0 %619
      %621 = vrot.lane.b32.xlu0 %v376, 125
      %v622 = vpop.permute.xlu0 %621
      %v626 = vsel %vm388, %v618, 0
      %628 = vmatprep.subr.mxu0 0.0
      %629 = vmatpush1.msra.mxu0 0.0
      %630 = vmatprep.subr.mxu0 0.0
      %631 = vmatpush1.msra.mxu0 0.0
      %632 = vmatprep.subr.mxu0 0.0
      %633 = vmatpush1.msra.mxu0 0.0
      %634 = vmatprep.subr.mxu0 0.0
      %635 = vmatpush1.msra.mxu0 0.0
      %636 = vmatprep.subr.mxu0 0.0
      %637 = vmatpush1.msra.mxu0 0.0
      %638 = vmatprep.subr.mxu0 0.0
      %639 = vmatpush1.msra.mxu0 0.0
      %640 = vmatprep.subr.mxu0 0.0
      %641 = vmatpush1.msra.mxu0 0.0
      %642 = vmatprep.subr.mxu0 0.0
      %643 = vmatpush1.msra.mxu0 0.0
      %644 = vmatprep.subr.mxu0 0.0
      %645 = vmatpush1.msra.mxu0 0.0
      %646 = vmatprep.subr.mxu0 0.0
      %647 = vmatpush1.msra.mxu0 0.0
      %648 = vmatprep.subr.mxu0 0.0
      %649 = vmatpush1.msra.mxu0 0.0
      %650 = vmatprep.subr.mxu0 0.0
      %651 = vmatpush1.msra.mxu0 0.0
      %652 = vmatprep.subr.mxu0 0.0
      %653 = vmatpush1.msra.mxu0 0.0
      %654 = vmatprep.subr.mxu0 0.0
      %655 = vmatpush1.msra.mxu0 0.0
      %656 = vmatprep.subr.mxu0 0.0
      %657 = vmatpush1.msra.mxu0 %v622
      %658 = vmatprep.subr.mxu0 0.0
      %659 = vmatpush1.msra.mxu0 %v620
      %660 = vmatprep.subr.mxu0 0.0
      %661 = vmatpush2.msra.mxu0 0.0
      %662 = vmatprep.subr.mxu0 0.0
      %663 = vmatpush2.msra.mxu0 0.0
      %664 = vmatprep.subr.mxu0 0.0
      %665 = vmatpush2.msra.mxu0 0.0
      %666 = vmatprep.subr.mxu0 0.0
      %667 = vmatpush2.msra.mxu0 0.0
      %668 = vmatprep.subr.mxu0 0.0
      %669 = vmatpush2.msra.mxu0 0.0
      %670 = vmatprep.subr.mxu0 0.0
      %671 = vmatpush2.msra.mxu0 0.0
      %672 = vmatprep.subr.mxu0 0.0
      %673 = vmatpush2.msra.mxu0 0.0
      %674 = vmatprep.subr.mxu0 0.0
      %675 = vmatpush2.msra.mxu0 0.0
      %676 = vmatprep.subr.mxu0 0.0
      %677 = vmatpush2.msra.mxu0 0.0
      %678 = vmatprep.subr.mxu0 0.0
      %679 = vmatpush2.msra.mxu0 0.0
      %680 = vmatprep.subr.mxu0 0.0
      %681 = vmatpush2.msra.mxu0 0.0
      %682 = vmatprep.subr.mxu0 0.0
      %683 = vmatpush2.msra.mxu0 0.0
      %684 = vmatprep.subr.mxu0 0.0
      %685 = vmatpush2.msra.mxu0 0.0
      %686 = vmatprep.subr.mxu0 0.0
      %687 = vmatpush2.msra.mxu0 0.0
      %688 = vmatprep.subr.mxu0 0.0
      %689 = vmatpush2.msra.mxu0 0.0
      %690 = vmatprep.subr.mxu0 0.0
      %691 = vmatpush2.msra.mxu0 0.0
      %692 = vmatprep.mubr.f32.mxu0 0.0
      %693 = vmatmul.mubr.f32.gmra.mxu0 %v626
      %v694 = vpop.f32.mrf.mxu0
      %v695 = vadd.f32 0.0, %v694
      %v696 = vpop.f32.mrf.mxu0
      %697 = vdwg.mxu0
      %v698 = vadd.f32 %v616, %v695
      %s699 = scalar_lea.vmem %s0, 32
      %v700 = vld [vmem:[%s699] sm:$0xff]
      %701 = vrot.lane.b32.xlu0 %v375, 124
      %v702 = vpop.permute.xlu0 %701
      %703 = vrot.lane.b32.xlu0 %v376, 124
      %v704 = vpop.permute.xlu0 %703
      %v708 = vsel %vm388, %v700, 0
      %710 = vmatprep.subr.mxu0 0.0
      %711 = vmatpush1.msra.mxu0 0.0
      %712 = vmatprep.subr.mxu0 0.0
      %713 = vmatpush1.msra.mxu0 0.0
      %714 = vmatprep.subr.mxu0 0.0
      %715 = vmatpush1.msra.mxu0 0.0
      %716 = vmatprep.subr.mxu0 0.0
      %717 = vmatpush1.msra.mxu0 0.0
      %718 = vmatprep.subr.mxu0 0.0
      %719 = vmatpush1.msra.mxu0 0.0
      %720 = vmatprep.subr.mxu0 0.0
      %721 = vmatpush1.msra.mxu0 0.0
      %722 = vmatprep.subr.mxu0 0.0
      %723 = vmatpush1.msra.mxu0 0.0
      %724 = vmatprep.subr.mxu0 0.0
      %725 = vmatpush1.msra.mxu0 0.0
      %726 = vmatprep.subr.mxu0 0.0
      %727 = vmatpush1.msra.mxu0 0.0
      %728 = vmatprep.subr.mxu0 0.0
      %729 = vmatpush1.msra.mxu0 0.0
      %730 = vmatprep.subr.mxu0 0.0
      %731 = vmatpush1.msra.mxu0 0.0
      %732 = vmatprep.subr.mxu0 0.0
      %733 = vmatpush1.msra.mxu0 0.0
      %734 = vmatprep.subr.mxu0 0.0
      %735 = vmatpush1.msra.mxu0 0.0
      %736 = vmatprep.subr.mxu0 0.0
      %737 = vmatpush1.msra.mxu0 0.0
      %738 = vmatprep.subr.mxu0 0.0
      %739 = vmatpush1.msra.mxu0 %v704
      %740 = vmatprep.subr.mxu0 0.0
      %741 = vmatpush1.msra.mxu0 %v702
      %742 = vmatprep.subr.mxu0 0.0
      %743 = vmatpush2.msra.mxu0 0.0
      %744 = vmatprep.subr.mxu0 0.0
      %745 = vmatpush2.msra.mxu0 0.0
      %746 = vmatprep.subr.mxu0 0.0
      %747 = vmatpush2.msra.mxu0 0.0
      %748 = vmatprep.subr.mxu0 0.0
      %749 = vmatpush2.msra.mxu0 0.0
      %750 = vmatprep.subr.mxu0 0.0
      %751 = vmatpush2.msra.mxu0 0.0
      %752 = vmatprep.subr.mxu0 0.0
      %753 = vmatpush2.msra.mxu0 0.0
      %754 = vmatprep.subr.mxu0 0.0
      %755 = vmatpush2.msra.mxu0 0.0
      %756 = vmatprep.subr.mxu0 0.0
      %757 = vmatpush2.msra.mxu0 0.0
      %758 = vmatprep.subr.mxu0 0.0
      %759 = vmatpush2.msra.mxu0 0.0
      %760 = vmatprep.subr.mxu0 0.0
      %761 = vmatpush2.msra.mxu0 0.0
      %762 = vmatprep.subr.mxu0 0.0
      %763 = vmatpush2.msra.mxu0 0.0
      %764 = vmatprep.subr.mxu0 0.0
      %765 = vmatpush2.msra.mxu0 0.0
      %766 = vmatprep.subr.mxu0 0.0
      %767 = vmatpush2.msra.mxu0 0.0
      %768 = vmatprep.subr.mxu0 0.0
      %769 = vmatpush2.msra.mxu0 0.0
      %770 = vmatprep.subr.mxu0 0.0
      %771 = vmatpush2.msra.mxu0 0.0
      %772 = vmatprep.subr.mxu0 0.0
      %773 = vmatpush2.msra.mxu0 0.0
      %774 = vmatprep.mubr.f32.mxu0 0.0
      %775 = vmatmul.mubr.f32.gmra.mxu0 %v708
      %v776 = vpop.f32.mrf.mxu0
      %v777 = vadd.f32 0.0, %v776
      %v778 = vpop.f32.mrf.mxu0
      %779 = vdwg.mxu0
      %v780 = vadd.f32 %v698, %v777
      %v781 = vld [vmem:[%s4] sm:$0xff]
      %783 = vset.pattern.permute.xlu0 0
      %784 = vperm.xlu0 %783, %v781
      %v785 = vpop.permute.xlu0 %784
      %v787 = vmul.f32 %v780, %v785
      %v788 = vld [vmem:[%s5] sm:$0xff]
      %790 = vset.pattern.permute.xlu0 0
      %791 = vperm.xlu0 %790, %v788
      %v792 = vpop.permute.xlu0 %791
      %v794 = vadd.f32 %v787, %v792
      %vm795 = vcmp.ge.f32.partialorder %v794, 0.0
      %v796 = vmul.f32 %v794, 0.1
      %v797 = vsel %vm795, %v794, %v796
      %vm798 = vcmask 64512
      %799 = vst.msk [vmem:[%s348] sm:$0xff] %vm798, %v797
      %p800 = scmp.lt.s32.totalorder %s21, 1
      %s801 = scalar_select %p800, %s21, 1
      %p802 = scmp.lt.s32.totalorder %s22, 0
      %s803 = scalar_select %p802, %s22, 0
      %s804 = sadd.s32 %s803, %s801
      %s805 = smul.addr %s804, 8
      %s806 = scalar_lea.vmem %s6, %s805
      // Predicated region
      $region45: #{wave_u_net_forward.14} parent=43 // pred_check
        %p807 = pneg %p196
      $region46: #{wave_u_net_forward.14} parent=43 // pred_check_branch
        %809 = sbr.rel (%p807) target = $region48
      $region47: #{wave_u_net_forward.14} parent=43 // pred_region
        _
      $region48: #{wave_u_net_forward.14} parent=43 // pred_fallthru
        _
    $region44: #{wave_u_net_forward.14} parent=5 // pred_fallthru
      _
    %p810 = scmp.le.s32.totalorder 2, %s12
    // Predicated region
    $region49: #{wave_u_net_forward.14} parent=5 // pred_check
      %p811 = pneg %p810
    $region50: #{wave_u_net_forward.14} parent=5 // pred_check_branch
      %813 = sbr.rel (%p811) target = $region52
    $region51: #{wave_u_net_forward.14} parent=5 // pred_region
      %s814 = ssub.s32 %s12, 2
      // Predicated region
      $region53: #{wave_u_net_forward.14} parent=51 // pred_check
        %p815 = pneg %p202
      $region54: #{wave_u_net_forward.14} parent=51 // pred_check_branch
        %817 = sbr.rel (%p815) target = $region56
      $region55: #{wave_u_net_forward.14} parent=51 // pred_region
        %p818 = scmp.lt.s32.totalorder %s23, 1
        %s819 = scalar_select %p818, %s23, 1
        %p820 = scmp.lt.s32.totalorder %s24, 0
        %s821 = scalar_select %p820, %s24, 0
        %s822 = sadd.s32 %s821, %s819
        %s823 = smul.addr %s822, 8
        %s824 = scalar_lea.vmem %s6, %s823
      $region56: #{wave_u_net_forward.14} parent=51 // pred_fallthru
        _
    $region52: #{wave_u_net_forward.14} parent=5 // pred_fallthru
      _
  $region6: #{wave_u_net_forward.14} parent=0 // loop_footer
    %s16 = sadd.s32 1, %s12
  $region7: #{wave_u_net_forward.14} parent=0 // loop_footer_branch
    %11 = sbr.rel target = $region3
  $region8: #{wave_u_net_forward.14} parent=0 // loop_exit
    _

// kernel: wave_u_net_forward.15
$region0: #{wave_u_net_forward.15}
  #allocation0 [shape = 'u32[]', space=smem, size = 0x4, offset = 0x4, fixed_abs, tag = 'smem constant byte address 0x4 - core index']
  #allocation1 [shape = 'u32[144,128]{1,0:T(1,128)}', space=vmem, size = 0x12000, scoped, tag = 'internal scratch']
  #allocation2 [shape = 'f32[4,1]{1,0:T(4,128)}', space=vmem, size = 0x800, scoped, tag = 'scratch operand']
  #allocation3 [shape = 'f32[4,1]{1,0:T(4,128)}', space=vmem, size = 0x800, scoped, tag = 'scratch operand']
  %s0 = inlined_call_operand.vmem [shape: f32[5,4,12], index: 0, kind: input, shape index: {}]
  %s1 = inlined_call_operand.vmem [shape: f32[2,12,16], index: 1, kind: input, shape index: {}]
  %s2 = inlined_call_operand.vmem [shape: f32[2,1,12,2], index: 2, kind: input, shape index: {}, may-alias: {2,3}]
  %s3 = inlined_call_operand.vmem [shape: f32[2,1,12,2], index: 3, kind: input, shape index: {}, may-alias: {2,3}]
  %s4 = inlined_call_operand.vmem [shape: f32[4,1], index: 4, kind: input, shape index: {}]
  %s5 = inlined_call_operand.vmem [shape: f32[4,1], index: 5, kind: input, shape index: {}]
  %s6 = inlined_call_operand.vmem [shape: f32[4,1], index: 6, kind: output, shape index: {0}]
  %s7 = inlined_call_operand.vmem [shape: f32[4,1], index: 7, kind: output, shape index: {1}]
  %8 = xla_tuple %s6, %s7
  %s9 = sld [smem:[#allocation0]]
  $region73: #{wave_u_net_forward.15} parent=0
    _
  %s11 = ssub.s32 1, %s9
  %s12 = scalar_select 0, %s11, %s9
  loop: start=0, step=1, limit=4
  $region2: #{wave_u_net_forward.15} parent=0 // loop_pre_header
    _
  $region3: #{wave_u_net_forward.15} parent=0 // loop_header
    %s14 = sphi 0, %s18
    %p15 = scmp.ge.s32.totalorder %s14, 4
    %s21 = sphi 0, %s33
    %s22 = sphi 0, %s29
    %s23 = sphi 0, %s21
    %s24 = sphi 0, %s22
    %s25 = sphi 0, %s23
    %s26 = sphi 0, %s24
    %s34 = sphi 0, %s34
    %s36 = sphi 0, %s34
    %s37 = sphi 0, %s36
    %s51 = sphi 0, %s37
    %s59 = sphi 0, %s61
    %s62 = sphi 0, %s59
    %s63 = sphi 0, %s62
    %s79 = sphi 0, %s63
    %s87 = sphi 0, %s89
    %s90 = sphi 0, %s87
    %s91 = sphi 0, %s90
    %s107 = sphi 0, %s91
    %s115 = sphi 0, %s117
    %s118 = sphi 0, %s115
    %s119 = sphi 0, %s118
    %s135 = sphi 0, %s119
    %s139 = sphi 0, %s139
    %s141 = sphi 0, %s139
    %s142 = sphi 0, %s141
    %s156 = sphi 0, %s142
    %s160 = sphi 0, %s160
    %s162 = sphi 0, %s160
    %s163 = sphi 0, %s162
    %s177 = sphi 0, %s163
    %s181 = sphi 0, %s181
    %s183 = sphi 0, %s181
    %s184 = sphi 0, %s183
    %s198 = sphi 0, %s184
    %s202 = sphi 0, %s202
    %s204 = sphi 0, %s202
    %s205 = sphi 0, %s204
    %s219 = sphi 0, %s205
  $region4: #{wave_u_net_forward.15} parent=0 // loop_header_branch
    %17 = sbr.rel (%p15) target = $region8
  $region5: #{wave_u_net_forward.15} parent=0 // loop_body
    %s19 = ssub.s32 %s14, 1
    %s20 = ssub.s32 %s14, 2
    %s27 = sadd.s32 1, %s22
    %p28 = scmp.ge.s32.totalorder %s27, 1
    %s29 = scalar_select %p28, 0, %s27
    %s30 = sadd.s32 1, %s21
    %s31 = scalar_select %p28, %s30, %s21
    %p32 = scmp.ge.s32.totalorder %s31, 2
    %s33 = scalar_select %p32, 0, %s31
    %s35 = sadd.s32 %s34, 1
    %p38 = scmp.eq.s32.totalorder %s14, 1
    %p39 = scmp.ne.s32.totalorder %s34, %s36
    %p40 = scmp.eq.s32.totalorder %s14, 0
    %p41 = por %p39, %p40
    %p42 = scmp.ne.s32.totalorder %s34, %s36
    %p43 = scmp.eq.s32.totalorder %s19, 1
    %p44 = por %p42, %p43
    %p45 = scmp.ne.s32.totalorder %s36, %s37
    %p46 = scmp.eq.s32.totalorder %s19, 0
    %p47 = por %p45, %p46
    %p48 = scmp.ne.s32.totalorder %s36, %s37
    %p49 = scmp.eq.s32.totalorder %s20, 1
    %p50 = por %p48, %p49
    %p52 = scmp.ne.s32.totalorder %s37, %s51
    %p53 = scmp.eq.s32.totalorder %s20, 0
    %p54 = por %p52, %p53
    %s55 = ssub.s32 %s21, %s33
    %s56 = ssub.s32 %s22, %s29
    %s57 = sor.u32 %s55, %s56
    %p58 = scmp.eq.s32.totalorder %s57, 0
    %s60 = sadd.s32 %s59, 1
    %s61 = scalar_select %p58, %s59, %s60
    %p64 = pneg %p58
    %p65 = scmp.eq.s32.totalorder %s14, 1
    %p66 = por %p64, %p65
    %p67 = scmp.ne.s32.totalorder %s59, %s62
    %p68 = scmp.eq.s32.totalorder %s14, 0
    %p69 = por %p67, %p68
    %p70 = scmp.ne.s32.totalorder %s59, %s62
    %p71 = scmp.eq.s32.totalorder %s19, 1
    %p72 = por %p70, %p71
    %p73 = scmp.ne.s32.totalorder %s62, %s63
    %p74 = scmp.eq.s32.totalorder %s19, 0
    %p75 = por %p73, %p74
    %p76 = scmp.ne.s32.totalorder %s62, %s63
    %p77 = scmp.eq.s32.totalorder %s20, 1
    %p78 = por %p76, %p77
    %p80 = scmp.ne.s32.totalorder %s63, %s79
    %p81 = scmp.eq.s32.totalorder %s20, 0
    %p82 = por %p80, %p81
    %s83 = ssub.s32 %s21, %s33
    %s84 = ssub.s32 %s22, %s29
    %s85 = sor.u32 %s83, %s84
    %p86 = scmp.eq.s32.totalorder %s85, 0
    %s88 = sadd.s32 %s87, 1
    %s89 = scalar_select %p86, %s87, %s88
    %p92 = pneg %p86
    %p93 = scmp.eq.s32.totalorder %s14, 1
    %p94 = por %p92, %p93
    %p95 = scmp.ne.s32.totalorder %s87, %s90
    %p96 = scmp.eq.s32.totalorder %s14, 0
    %p97 = por %p95, %p96
    %p98 = scmp.ne.s32.totalorder %s87, %s90
    %p99 = scmp.eq.s32.totalorder %s19, 1
    %p100 = por %p98, %p99
    %p101 = scmp.ne.s32.totalorder %s90, %s91
    %p102 = scmp.eq.s32.totalorder %s19, 0
    %p103 = por %p101, %p102
    %p104 = scmp.ne.s32.totalorder %s90, %s91
    %p105 = scmp.eq.s32.totalorder %s20, 1
    %p106 = por %p104, %p105
    %p108 = scmp.ne.s32.totalorder %s91, %s107
    %p109 = scmp.eq.s32.totalorder %s20, 0
    %p110 = por %p108, %p109
    %s111 = ssub.s32 %s21, %s33
    %s112 = ssub.s32 %s22, %s29
    %s113 = sor.u32 %s111, %s112
    %p114 = scmp.eq.s32.totalorder %s113, 0
    %s116 = sadd.s32 %s115, 1
    %s117 = scalar_select %p114, %s115, %s116
    %p120 = pneg %p114
    %p121 = scmp.eq.s32.totalorder %s14, 1
    %p122 = por %p120, %p121
    %p123 = scmp.ne.s32.totalorder %s115, %s118
    %p124 = scmp.eq.s32.totalorder %s14, 0
    %p125 = por %p123, %p124
    %p126 = scmp.ne.s32.totalorder %s115, %s118
    %p127 = scmp.eq.s32.totalorder %s19, 1
    %p128 = por %p126, %p127
    %p129 = scmp.ne.s32.totalorder %s118, %s119
    %p130 = scmp.eq.s32.totalorder %s19, 0
    %p131 = por %p129, %p130
    %p132 = scmp.ne.s32.totalorder %s118, %s119
    %p133 = scmp.eq.s32.totalorder %s20, 1
    %p134 = por %p132, %p133
    %p136 = scmp.ne.s32.totalorder %s119, %s135
    %p137 = scmp.eq.s32.totalorder %s20, 0
    %p138 = por %p136, %p137
    %s140 = sadd.s32 %s139, 1
    %p143 = scmp.eq.s32.totalorder %s14, 1
    %p144 = scmp.ne.s32.totalorder %s139, %s141
    %p145 = scmp.eq.s32.totalorder %s14, 0
    %p146 = por %p144, %p145
    %p147 = scmp.ne.s32.totalorder %s139, %s141
    %p148 = scmp.eq.s32.totalorder %s19, 1
    %p149 = por %p147, %p148
    %p150 = scmp.ne.s32.totalorder %s141, %s142
    %p151 = scmp.eq.s32.totalorder %s19, 0
    %p152 = por %p150, %p151
    %p153 = scmp.ne.s32.totalorder %s141, %s142
    %p154 = scmp.eq.s32.totalorder %s20, 1
    %p155 = por %p153, %p154
    %p157 = scmp.ne.s32.totalorder %s142, %s156
    %p158 = scmp.eq.s32.totalorder %s20, 0
    %p159 = por %p157, %p158
    %s161 = sadd.s32 %s160, 1
    %p164 = scmp.eq.s32.totalorder %s14, 1
    %p165 = scmp.ne.s32.totalorder %s160, %s162
    %p166 = scmp.eq.s32.totalorder %s14, 0
    %p167 = por %p165, %p166
    %p168 = scmp.ne.s32.totalorder %s160, %s162
    %p169 = scmp.eq.s32.totalorder %s19, 1
    %p170 = por %p168, %p169
    %p171 = scmp.ne.s32.totalorder %s162, %s163
    %p172 = scmp.eq.s32.totalorder %s19, 0
    %p173 = por %p171, %p172
    %p174 = scmp.ne.s32.totalorder %s162, %s163
    %p175 = scmp.eq.s32.totalorder %s20, 1
    %p176 = por %p174, %p175
    %p178 = scmp.ne.s32.totalorder %s163, %s177
    %p179 = scmp.eq.s32.totalorder %s20, 0
    %p180 = por %p178, %p179
    %s182 = sadd.s32 %s181, 1
    %p185 = scmp.eq.s32.totalorder %s14, 1
    %p186 = scmp.ne.s32.totalorder %s181, %s183
    %p187 = scmp.eq.s32.totalorder %s14, 0
    %p188 = por %p186, %p187
    %p189 = scmp.ne.s32.totalorder %s181, %s183
    %p190 = scmp.eq.s32.totalorder %s19, 1
    %p191 = por %p189, %p190
    %p192 = scmp.ne.s32.totalorder %s183, %s184
    %p193 = scmp.eq.s32.totalorder %s19, 0
    %p194 = por %p192, %p193
    %p195 = scmp.ne.s32.totalorder %s183, %s184
    %p196 = scmp.eq.s32.totalorder %s20, 1
    %p197 = por %p195, %p196
    %p199 = scmp.ne.s32.totalorder %s184, %s198
    %p200 = scmp.eq.s32.totalorder %s20, 0
    %p201 = por %p199, %p200
    %s203 = sadd.s32 %s202, 1
    %p206 = scmp.eq.s32.totalorder %s14, 1
    %p207 = scmp.ne.s32.totalorder %s202, %s204
    %p208 = scmp.eq.s32.totalorder %s14, 0
    %p209 = por %p207, %p208
    %p210 = scmp.ne.s32.totalorder %s202, %s204
    %p211 = scmp.eq.s32.totalorder %s19, 1
    %p212 = por %p210, %p211
    %p213 = scmp.ne.s32.totalorder %s204, %s205
    %p214 = scmp.eq.s32.totalorder %s19, 0
    %p215 = por %p213, %p214
    %p216 = scmp.ne.s32.totalorder %s204, %s205
    %p217 = scmp.eq.s32.totalorder %s20, 1
    %p218 = por %p216, %p217
    %p220 = scmp.ne.s32.totalorder %s205, %s219
    %p221 = scmp.eq.s32.totalorder %s20, 0
    %p222 = por %p220, %p221
    %p223 = scmp.le.s32.totalorder 1, %s14
    %p224 = scmp.lt.s32.totalorder %s14, 3
    %p225 = pnand %p223, %p224
    %p226 = pneg %p225
    // Predicated region
    $region9: #{wave_u_net_forward.15} parent=5 // pred_check
      _
    $region10: #{wave_u_net_forward.15} parent=5 // pred_check_branch
      %228 = sbr.rel (%p225) target = $region12
    $region11: #{wave_u_net_forward.15} parent=5 // pred_region
      %s229 = ssub.s32 %s14, 1
      // Predicated region
      $region13: #{wave_u_net_forward.15} parent=11 // pred_check
        %p230 = pneg %p47
      $region14: #{wave_u_net_forward.15} parent=11 // pred_check_branch
        %232 = sbr.rel (%p230) target = $region16
      $region15: #{wave_u_net_forward.15} parent=11 // pred_region
        _
      $region16: #{wave_u_net_forward.15} parent=11 // pred_fallthru
        _
      // Predicated region
      $region17: #{wave_u_net_forward.15} parent=11 // pred_check
        %p233 = pneg %p152
      $region18: #{wave_u_net_forward.15} parent=11 // pred_check_branch
        %235 = sbr.rel (%p233) target = $region20
      $region19: #{wave_u_net_forward.15} parent=11 // pred_region
        _
      $region20: #{wave_u_net_forward.15} parent=11 // pred_fallthru
        _
      // Predicated region
      $region21: #{wave_u_net_forward.15} parent=11 // pred_check
        %p236 = pneg %p173
      $region22: #{wave_u_net_forward.15} parent=11 // pred_check_branch
        %238 = sbr.rel (%p236) target = $region24
      $region23: #{wave_u_net_forward.15} parent=11 // pred_region
        _
      $region24: #{wave_u_net_forward.15} parent=11 // pred_fallthru
        _
    $region12: #{wave_u_net_forward.15} parent=5 // pred_fallthru
      _
    %p239 = scmp.lt.s32.totalorder %s14, 2
    // Predicated region
    $region25: #{wave_u_net_forward.15} parent=5 // pred_check
      %p240 = pneg %p239
    $region26: #{wave_u_net_forward.15} parent=5 // pred_check_branch
      %242 = sbr.rel (%p240) target = $region28
    $region27: #{wave_u_net_forward.15} parent=5 // pred_region
      // Predicated region
      $region29: #{wave_u_net_forward.15} parent=27 // pred_check
        %p243 = pneg %p69
      $region30: #{wave_u_net_forward.15} parent=27 // pred_check_branch
        %245 = sbr.rel (%p243) target = $region32
      $region31: #{wave_u_net_forward.15} parent=27 // pred_region
        %p246 = scmp.lt.s32.totalorder %s21, 1
        %s247 = scalar_select %p246, %s21, 1
        %p248 = scmp.lt.s32.totalorder %s22, 0
        %s249 = scalar_select %p248, %s22, 0
        %s250 = smul.addr %s247, 2
        %s251 = sadd.s32 %s249, %s250
        %s252 = smul.addr %s251, 8
        %s253 = scalar_lea.vmem %s1, %s252
      $region32: #{wave_u_net_forward.15} parent=27 // pred_fallthru
        _
      // Predicated region
      $region33: #{wave_u_net_forward.15} parent=27 // pred_check
        %p254 = pneg %p97
      $region34: #{wave_u_net_forward.15} parent=27 // pred_check_branch
        %256 = sbr.rel (%p254) target = $region36
      $region35: #{wave_u_net_forward.15} parent=27 // pred_region
        %p257 = scmp.lt.s32.totalorder %s21, 1
        %s258 = scalar_select %p257, %s21, 1
        %p259 = scmp.lt.s32.totalorder %s22, 0
        %s260 = scalar_select %p259, %s22, 0
        %s261 = smul.addr %s260, 2
        %s262 = smul.addr %s258, 2
        %s263 = sadd.s32 %s261, %s262
        %s264 = smul.addr %s263, 8
        %s265 = scalar_lea.vmem %s2, %s264
      $region36: #{wave_u_net_forward.15} parent=27 // pred_fallthru
        _
      // Predicated region
      $region37: #{wave_u_net_forward.15} parent=27 // pred_check
        %p266 = pneg %p125
      $region38: #{wave_u_net_forward.15} parent=27 // pred_check_branch
        %268 = sbr.rel (%p266) target = $region40
      $region39: #{wave_u_net_forward.15} parent=27 // pred_region
        %p269 = scmp.lt.s32.totalorder %s21, 1
        %s270 = scalar_select %p269, %s21, 1
        %p271 = scmp.lt.s32.totalorder %s22, 0
        %s272 = scalar_select %p271, %s22, 0
        %s273 = smul.addr %s272, 2
        %s274 = smul.addr %s270, 2
        %s275 = sadd.s32 %s273, %s274
        %s276 = smul.addr %s275, 8
        %s277 = scalar_lea.vmem %s3, %s276
      $region40: #{wave_u_net_forward.15} parent=27 // pred_fallthru
        _
    $region28: #{wave_u_net_forward.15} parent=5 // pred_fallthru
      _
    %p278 = scmp.le.s32.totalorder 1, %s14
    %p279 = scmp.lt.s32.totalorder %s14, 3
    %p280 = pnand %p278, %p279
    %p281 = pneg %p280
    // Predicated region
    $region41: #{wave_u_net_forward.15} parent=5 // pred_check
      _
    $region42: #{wave_u_net_forward.15} parent=5 // pred_check_branch
      %283 = sbr.rel (%p280) target = $region44
    $region43: #{wave_u_net_forward.15} parent=5 // pred_region
      %s284 = ssub.s32 %s14, 1
      %p285 = pneg %p47
      %p286 = pneg %p44
      %p287 = scmp.lt.s32.totalorder %s23, 1
      %s288 = scalar_select %p287, %s23, 1
      %p289 = scmp.lt.s32.totalorder %s24, 0
      %s290 = scalar_select %p289, %s24, 0
      %s291 = smul.addr %s288, 2
      %s292 = sadd.s32 %s290, %s291
      %s293 = smul.addr %s292, 8
      %s294 = scalar_lea.vmem %s1, %s293
      %p295 = pneg %p75
      %p296 = pneg %p72
      %p297 = scmp.lt.s32.totalorder %s23, 1
      %s298 = scalar_select %p297, %s23, 1
      %p299 = scmp.lt.s32.totalorder %s24, 0
      %s300 = scalar_select %p299, %s24, 0
      %s301 = smul.addr %s300, 2
      %s302 = smul.addr %s298, 2
      %s303 = sadd.s32 %s301, %s302
      %s304 = smul.addr %s303, 8
      %s305 = scalar_lea.vmem %s2, %s304
      %p306 = pneg %p103
      %p307 = pneg %p100
      %p308 = scmp.lt.s32.totalorder %s23, 1
      %s309 = scalar_select %p308, %s23, 1
      %p310 = scmp.lt.s32.totalorder %s24, 0
      %s311 = scalar_select %p310, %s24, 0
      %s312 = smul.addr %s311, 2
      %s313 = smul.addr %s309, 2
      %s314 = sadd.s32 %s312, %s313
      %s315 = smul.addr %s314, 8
      %s316 = scalar_lea.vmem %s3, %s315
      %p317 = pneg %p131
      %p318 = pneg %p128
      %p319 = pneg %p152
      %p320 = pneg %p149
      %p321 = pneg %p173
      %p322 = pneg %p170
      %p323 = pneg %p194
      %p324 = pneg %p191
      %p325 = pneg %p215
      %p326 = pneg %p212
      %p327 = scmp.lt.s32.totalorder %s23, 1
      %s328 = scalar_select %p327, %s23, 1
      %p329 = scmp.lt.s32.totalorder %s24, 0
      %s330 = scalar_select %p329, %s24, 0
      %s331 = smul.addr %s328, 2
      %s332 = sadd.s32 %s330, %s331
      %s333 = smul.addr %s332, 8
      %s334 = scalar_lea.vmem %s1, %s333
      %p335 = scmp.lt.s32.totalorder %s23, 1
      %s336 = scalar_select %p335, %s23, 1
      %p337 = scmp.lt.s32.totalorder %s24, 0
      %s338 = scalar_select %p337, %s24, 0
      %s339 = smul.addr %s338, 2
      %s340 = smul.addr %s336, 2
      %s341 = sadd.s32 %s339, %s340
      %s342 = smul.addr %s341, 8
      %s343 = scalar_lea.vmem %s2, %s342
      %p344 = scmp.lt.s32.totalorder %s23, 1
      %s345 = scalar_select %p344, %s23, 1
      %p346 = scmp.lt.s32.totalorder %s24, 0
      %s347 = scalar_select %p346, %s24, 0
      %s348 = smul.addr %s347, 2
      %s349 = smul.addr %s345, 2
      %s350 = sadd.s32 %s348, %s349
      %s351 = smul.addr %s350, 8
      %s352 = scalar_lea.vmem %s3, %s351
      %p353 = scmp.eq.s32.totalorder %s23, 0
      %p354 = scmp.eq.s32.totalorder %s24, 0
      %p355 = pnand %p353, %p354
      %p356 = pneg %p355
      // Predicated region
      $region45: #{wave_u_net_forward.15} parent=43 // pred_check
        _
      $region46: #{wave_u_net_forward.15} parent=43 // pred_check_branch
        %358 = sbr.rel (%p355) target = $region48
      $region47: #{wave_u_net_forward.15} parent=43 // pred_region
        %vm359 = vcmask 3072
        %360 = vst.msk [vmem:[#allocation2] sm:$0xf] %vm359, 0.0
        %361 = vst.msk [vmem:[#allocation3] sm:$0xf] %vm359, 0.0
      $region48: #{wave_u_net_forward.15} parent=43 // pred_fallthru
        _
      %v362 = vld [vmem:[%s343] sm:$0xff]
      %v363 = vld [vmem:[%s343 + $0x8] sm:$0xf]
      %v364 = vld [vmem:[%s334] sm:$0xff]
      %v365 = vld [vmem:[%s334 + $0x8] sm:$0xf]
      %v366 = vld [vmem:[%s352] sm:$0xff]
      %v367 = vld [vmem:[%s352 + $0x8] sm:$0xf]
      %370 = vrot.lane.b32.xlu0 %v364, 2
      %v371 = vpop.permute.xlu0 %370
      %372 = vrot.lane.b32.xlu0 %v365, 2
      %v373 = vpop.permute.xlu0 %372
      %378 = vrot.lane.b32.xlu0 %v366, 18
      %v379 = vpop.permute.xlu0 %378
      %380 = vrot.lane.b32.xlu0 %v367, 18
      %v381 = vpop.permute.xlu0 %380
      %vm384 = vcmask 15360
      %v385 = vsel %vm384, %v362, %v371
      %v386 = vsel %vm384, %v363, %v373
      %vm387 = vcmask 146432
      %v388 = vsel %vm387, %v385, %v379
      %v389 = vsel %vm387, %v386, %v381
      %v390 = vld [vmem:[%s0] sm:$0xf]
      %s391 = scalar_lea.vmem %s0, 4
      %v392 = vld [vmem:[%s391] sm:$0xf]
      %395 = vrot.lane.b32.xlu0 %v388, 127
      %v396 = vpop.permute.xlu0 %395
      %397 = vrot.lane.b32.xlu0 %v389, 127
      %v398 = vpop.permute.xlu0 %397
      %vm400 = vcmask 97280
      %v402 = vsel %vm400, %v392, 0
      %vm404 = vcmask 1043456
      %v405 = vsel %vm404, %v398, 0
      %407 = vmatprep.subr.mxu0 0.0
      %408 = vmatpush1.msra.mxu0 0.0
      %409 = vmatprep.subr.mxu0 0.0
      %410 = vmatpush1.msra.mxu0 0.0
      %411 = vmatprep.subr.mxu0 0.0
      %412 = vmatpush1.msra.mxu0 0.0
      %413 = vmatprep.subr.mxu0 0.0
      %414 = vmatpush1.msra.mxu0 0.0
      %415 = vmatprep.subr.mxu0 0.0
      %416 = vmatpush1.msra.mxu0 0.0
      %417 = vmatprep.subr.mxu0 0.0
      %418 = vmatpush1.msra.mxu0 0.0
      %419 = vmatprep.subr.mxu0 0.0
      %420 = vmatpush1.msra.mxu0 0.0
      %421 = vmatprep.subr.mxu0 0.0
      %422 = vmatpush1.msra.mxu0 0.0
      %423 = vmatprep.subr.mxu0 0.0
      %424 = vmatpush1.msra.mxu0 0.0
      %425 = vmatprep.subr.mxu0 0.0
      %426 = vmatpush1.msra.mxu0 0.0
      %427 = vmatprep.subr.mxu0 0.0
      %428 = vmatpush1.msra.mxu0 0.0
      %429 = vmatprep.subr.mxu0 0.0
      %430 = vmatpush1.msra.mxu0 0.0
      %431 = vmatprep.subr.mxu0 0.0
      %432 = vmatpush1.msra.mxu0 0.0
      %433 = vmatprep.subr.mxu0 0.0
      %434 = vmatpush1.msra.mxu0 0.0
      %435 = vmatprep.subr.mxu0 0.0
      %436 = vmatpush1.msra.mxu0 %v405
      %437 = vmatprep.subr.mxu0 0.0
      %438 = vmatpush1.msra.mxu0 %v396
      %439 = vmatprep.subr.mxu0 0.0
      %440 = vmatpush2.msra.mxu0 0.0
      %441 = vmatprep.subr.mxu0 0.0
      %442 = vmatpush2.msra.mxu0 0.0
      %443 = vmatprep.subr.mxu0 0.0
      %444 = vmatpush2.msra.mxu0 0.0
      %445 = vmatprep.subr.mxu0 0.0
      %446 = vmatpush2.msra.mxu0 0.0
      %447 = vmatprep.subr.mxu0 0.0
      %448 = vmatpush2.msra.mxu0 0.0
      %449 = vmatprep.subr.mxu0 0.0
      %450 = vmatpush2.msra.mxu0 0.0
      %451 = vmatprep.subr.mxu0 0.0
      %452 = vmatpush2.msra.mxu0 0.0
      %453 = vmatprep.subr.mxu0 0.0
      %454 = vmatpush2.msra.mxu0 0.0
      %455 = vmatprep.subr.mxu0 0.0
      %456 = vmatpush2.msra.mxu0 0.0
      %457 = vmatprep.subr.mxu0 0.0
      %458 = vmatpush2.msra.mxu0 0.0
      %459 = vmatprep.subr.mxu0 0.0
      %460 = vmatpush2.msra.mxu0 0.0
      %461 = vmatprep.subr.mxu0 0.0
      %462 = vmatpush2.msra.mxu0 0.0
      %463 = vmatprep.subr.mxu0 0.0
      %464 = vmatpush2.msra.mxu0 0.0
      %465 = vmatprep.subr.mxu0 0.0
      %466 = vmatpush2.msra.mxu0 0.0
      %467 = vmatprep.subr.mxu0 0.0
      %468 = vmatpush2.msra.mxu0 0.0
      %469 = vmatprep.subr.mxu0 0.0
      %470 = vmatpush2.msra.mxu0 0.0
      %471 = vmatprep.mubr.f32.mxu0 0.0
      %472 = vmatmul.mubr.f32.gmra.mxu0 %v402
      %v473 = vpop.f32.mrf.mxu0
      %v474 = vadd.f32 0.0, %v473
      %v475 = vpop.f32.mrf.mxu0
      %476 = vdwg.mxu0
      %v478 = vsel %vm400, %v390, 0
      %v480 = vsel %vm404, %v389, 0
      %482 = vmatprep.subr.mxu0 0.0
      %483 = vmatpush1.msra.mxu0 0.0
      %484 = vmatprep.subr.mxu0 0.0
      %485 = vmatpush1.msra.mxu0 0.0
      %486 = vmatprep.subr.mxu0 0.0
      %487 = vmatpush1.msra.mxu0 0.0
      %488 = vmatprep.subr.mxu0 0.0
      %489 = vmatpush1.msra.mxu0 0.0
      %490 = vmatprep.subr.mxu0 0.0
      %491 = vmatpush1.msra.mxu0 0.0
      %492 = vmatprep.subr.mxu0 0.0
      %493 = vmatpush1.msra.mxu0 0.0
      %494 = vmatprep.subr.mxu0 0.0
      %495 = vmatpush1.msra.mxu0 0.0
      %496 = vmatprep.subr.mxu0 0.0
      %497 = vmatpush1.msra.mxu0 0.0
      %498 = vmatprep.subr.mxu0 0.0
      %499 = vmatpush1.msra.mxu0 0.0
      %500 = vmatprep.subr.mxu0 0.0
      %501 = vmatpush1.msra.mxu0 0.0
      %502 = vmatprep.subr.mxu0 0.0
      %503 = vmatpush1.msra.mxu0 0.0
      %504 = vmatprep.subr.mxu0 0.0
      %505 = vmatpush1.msra.mxu0 0.0
      %506 = vmatprep.subr.mxu0 0.0
      %507 = vmatpush1.msra.mxu0 0.0
      %508 = vmatprep.subr.mxu0 0.0
      %509 = vmatpush1.msra.mxu0 0.0
      %510 = vmatprep.subr.mxu0 0.0
      %511 = vmatpush1.msra.mxu0 %v480
      %512 = vmatprep.subr.mxu0 0.0
      %513 = vmatpush1.msra.mxu0 %v388
      %514 = vmatprep.subr.mxu0 0.0
      %515 = vmatpush2.msra.mxu0 0.0
      %516 = vmatprep.subr.mxu0 0.0
      %517 = vmatpush2.msra.mxu0 0.0
      %518 = vmatprep.subr.mxu0 0.0
      %519 = vmatpush2.msra.mxu0 0.0
      %520 = vmatprep.subr.mxu0 0.0
      %521 = vmatpush2.msra.mxu0 0.0
      %522 = vmatprep.subr.mxu0 0.0
      %523 = vmatpush2.msra.mxu0 0.0
      %524 = vmatprep.subr.mxu0 0.0
      %525 = vmatpush2.msra.mxu0 0.0
      %526 = vmatprep.subr.mxu0 0.0
      %527 = vmatpush2.msra.mxu0 0.0
      %528 = vmatprep.subr.mxu0 0.0
      %529 = vmatpush2.msra.mxu0 0.0
      %530 = vmatprep.subr.mxu0 0.0
      %531 = vmatpush2.msra.mxu0 0.0
      %532 = vmatprep.subr.mxu0 0.0
      %533 = vmatpush2.msra.mxu0 0.0
      %534 = vmatprep.subr.mxu0 0.0
      %535 = vmatpush2.msra.mxu0 0.0
      %536 = vmatprep.subr.mxu0 0.0
      %537 = vmatpush2.msra.mxu0 0.0
      %538 = vmatprep.subr.mxu0 0.0
      %539 = vmatpush2.msra.mxu0 0.0
      %540 = vmatprep.subr.mxu0 0.0
      %541 = vmatpush2.msra.mxu0 0.0
      %542 = vmatprep.subr.mxu0 0.0
      %543 = vmatpush2.msra.mxu0 0.0
      %544 = vmatprep.subr.mxu0 0.0
      %545 = vmatpush2.msra.mxu0 0.0
      %546 = vmatprep.mubr.f32.mxu0 0.0
      %547 = vmatmul.mubr.f32.gmra.mxu0 %v478
      %v548 = vpop.f32.mrf.mxu0
      %v549 = vadd.f32 %v474, %v548
      %v550 = vpop.f32.mrf.mxu0
      %551 = vdwg.mxu0
      %s552 = scalar_lea.vmem %s0, 8
      %v553 = vld [vmem:[%s552] sm:$0xf]
      %554 = vrot.lane.b32.xlu0 %v388, 126
      %v555 = vpop.permute.xlu0 %554
      %556 = vrot.lane.b32.xlu0 %v389, 126
      %v557 = vpop.permute.xlu0 %556
      %v560 = vsel %vm400, %v553, 0
      %v562 = vsel %vm404, %v557, 0
      %564 = vmatprep.subr.mxu0 0.0
      %565 = vmatpush1.msra.mxu0 0.0
      %566 = vmatprep.subr.mxu0 0.0
      %567 = vmatpush1.msra.mxu0 0.0
      %568 = vmatprep.subr.mxu0 0.0
      %569 = vmatpush1.msra.mxu0 0.0
      %570 = vmatprep.subr.mxu0 0.0
      %571 = vmatpush1.msra.mxu0 0.0
      %572 = vmatprep.subr.mxu0 0.0
      %573 = vmatpush1.msra.mxu0 0.0
      %574 = vmatprep.subr.mxu0 0.0
      %575 = vmatpush1.msra.mxu0 0.0
      %576 = vmatprep.subr.mxu0 0.0
      %577 = vmatpush1.msra.mxu0 0.0
      %578 = vmatprep.subr.mxu0 0.0
      %579 = vmatpush1.msra.mxu0 0.0
      %580 = vmatprep.subr.mxu0 0.0
      %581 = vmatpush1.msra.mxu0 0.0
      %582 = vmatprep.subr.mxu0 0.0
      %583 = vmatpush1.msra.mxu0 0.0
      %584 = vmatprep.subr.mxu0 0.0
      %585 = vmatpush1.msra.mxu0 0.0
      %586 = vmatprep.subr.mxu0 0.0
      %587 = vmatpush1.msra.mxu0 0.0
      %588 = vmatprep.subr.mxu0 0.0
      %589 = vmatpush1.msra.mxu0 0.0
      %590 = vmatprep.subr.mxu0 0.0
      %591 = vmatpush1.msra.mxu0 0.0
      %592 = vmatprep.subr.mxu0 0.0
      %593 = vmatpush1.msra.mxu0 %v562
      %594 = vmatprep.subr.mxu0 0.0
      %595 = vmatpush1.msra.mxu0 %v555
      %596 = vmatprep.subr.mxu0 0.0
      %597 = vmatpush2.msra.mxu0 0.0
      %598 = vmatprep.subr.mxu0 0.0
      %599 = vmatpush2.msra.mxu0 0.0
      %600 = vmatprep.subr.mxu0 0.0
      %601 = vmatpush2.msra.mxu0 0.0
      %602 = vmatprep.subr.mxu0 0.0
      %603 = vmatpush2.msra.mxu0 0.0
      %604 = vmatprep.subr.mxu0 0.0
      %605 = vmatpush2.msra.mxu0 0.0
      %606 = vmatprep.subr.mxu0 0.0
      %607 = vmatpush2.msra.mxu0 0.0
      %608 = vmatprep.subr.mxu0 0.0
      %609 = vmatpush2.msra.mxu0 0.0
      %610 = vmatprep.subr.mxu0 0.0
      %611 = vmatpush2.msra.mxu0 0.0
      %612 = vmatprep.subr.mxu0 0.0
      %613 = vmatpush2.msra.mxu0 0.0
      %614 = vmatprep.subr.mxu0 0.0
      %615 = vmatpush2.msra.mxu0 0.0
      %616 = vmatprep.subr.mxu0 0.0
      %617 = vmatpush2.msra.mxu0 0.0
      %618 = vmatprep.subr.mxu0 0.0
      %619 = vmatpush2.msra.mxu0 0.0
      %620 = vmatprep.subr.mxu0 0.0
      %621 = vmatpush2.msra.mxu0 0.0
      %622 = vmatprep.subr.mxu0 0.0
      %623 = vmatpush2.msra.mxu0 0.0
      %624 = vmatprep.subr.mxu0 0.0
      %625 = vmatpush2.msra.mxu0 0.0
      %626 = vmatprep.subr.mxu0 0.0
      %627 = vmatpush2.msra.mxu0 0.0
      %628 = vmatprep.mubr.f32.mxu0 0.0
      %629 = vmatmul.mubr.f32.gmra.mxu0 %v560
      %v630 = vpop.f32.mrf.mxu0
      %v631 = vadd.f32 0.0, %v630
      %v632 = vpop.f32.mrf.mxu0
      %633 = vdwg.mxu0
      %v634 = vadd.f32 %v549, %v631
      %s635 = scalar_lea.vmem %s0, 12
      %v636 = vld [vmem:[%s635] sm:$0xf]
      %637 = vrot.lane.b32.xlu0 %v388, 125
      %v638 = vpop.permute.xlu0 %637
      %639 = vrot.lane.b32.xlu0 %v389, 125
      %v640 = vpop.permute.xlu0 %639
      %v643 = vsel %vm400, %v636, 0
      %v645 = vsel %vm404, %v640, 0
      %647 = vmatprep.subr.mxu0 0.0
      %648 = vmatpush1.msra.mxu0 0.0
      %649 = vmatprep.subr.mxu0 0.0
      %650 = vmatpush1.msra.mxu0 0.0
      %651 = vmatprep.subr.mxu0 0.0
      %652 = vmatpush1.msra.mxu0 0.0
      %653 = vmatprep.subr.mxu0 0.0
      %654 = vmatpush1.msra.mxu0 0.0
      %655 = vmatprep.subr.mxu0 0.0
      %656 = vmatpush1.msra.mxu0 0.0
      %657 = vmatprep.subr.mxu0 0.0
      %658 = vmatpush1.msra.mxu0 0.0
      %659 = vmatprep.subr.mxu0 0.0
      %660 = vmatpush1.msra.mxu0 0.0
      %661 = vmatprep.subr.mxu0 0.0
      %662 = vmatpush1.msra.mxu0 0.0
      %663 = vmatprep.subr.mxu0 0.0
      %664 = vmatpush1.msra.mxu0 0.0
      %665 = vmatprep.subr.mxu0 0.0
      %666 = vmatpush1.msra.mxu0 0.0
      %667 = vmatprep.subr.mxu0 0.0
      %668 = vmatpush1.msra.mxu0 0.0
      %669 = vmatprep.subr.mxu0 0.0
      %670 = vmatpush1.msra.mxu0 0.0
      %671 = vmatprep.subr.mxu0 0.0
      %672 = vmatpush1.msra.mxu0 0.0
      %673 = vmatprep.subr.mxu0 0.0
      %674 = vmatpush1.msra.mxu0 0.0
      %675 = vmatprep.subr.mxu0 0.0
      %676 = vmatpush1.msra.mxu0 %v645
      %677 = vmatprep.subr.mxu0 0.0
      %678 = vmatpush1.msra.mxu0 %v638
      %679 = vmatprep.subr.mxu0 0.0
      %680 = vmatpush2.msra.mxu0 0.0
      %681 = vmatprep.subr.mxu0 0.0
      %682 = vmatpush2.msra.mxu0 0.0
      %683 = vmatprep.subr.mxu0 0.0
      %684 = vmatpush2.msra.mxu0 0.0
      %685 = vmatprep.subr.mxu0 0.0
      %686 = vmatpush2.msra.mxu0 0.0
      %687 = vmatprep.subr.mxu0 0.0
      %688 = vmatpush2.msra.mxu0 0.0
      %689 = vmatprep.subr.mxu0 0.0
      %690 = vmatpush2.msra.mxu0 0.0
      %691 = vmatprep.subr.mxu0 0.0
      %692 = vmatpush2.msra.mxu0 0.0
      %693 = vmatprep.subr.mxu0 0.0
      %694 = vmatpush2.msra.mxu0 0.0
      %695 = vmatprep.subr.mxu0 0.0
      %696 = vmatpush2.msra.mxu0 0.0
      %697 = vmatprep.subr.mxu0 0.0
      %698 = vmatpush2.msra.mxu0 0.0
      %699 = vmatprep.subr.mxu0 0.0
      %700 = vmatpush2.msra.mxu0 0.0
      %701 = vmatprep.subr.mxu0 0.0
      %702 = vmatpush2.msra.mxu0 0.0
      %703 = vmatprep.subr.mxu0 0.0
      %704 = vmatpush2.msra.mxu0 0.0
      %705 = vmatprep.subr.mxu0 0.0
      %706 = vmatpush2.msra.mxu0 0.0
      %707 = vmatprep.subr.mxu0 0.0
      %708 = vmatpush2.msra.mxu0 0.0
      %709 = vmatprep.subr.mxu0 0.0
      %710 = vmatpush2.msra.mxu0 0.0
      %711 = vmatprep.mubr.f32.mxu0 0.0
      %712 = vmatmul.mubr.f32.gmra.mxu0 %v643
      %v713 = vpop.f32.mrf.mxu0
      %v714 = vadd.f32 0.0, %v713
      %v715 = vpop.f32.mrf.mxu0
      %716 = vdwg.mxu0
      %v717 = vadd.f32 %v634, %v714
      %s718 = scalar_lea.vmem %s0, 16
      %v719 = vld [vmem:[%s718] sm:$0xf]
      %720 = vrot.lane.b32.xlu0 %v388, 124
      %v721 = vpop.permute.xlu0 %720
      %722 = vrot.lane.b32.xlu0 %v389, 124
      %v723 = vpop.permute.xlu0 %722
      %v726 = vsel %vm400, %v719, 0
      %v728 = vsel %vm404, %v723, 0
      %730 = vmatprep.subr.mxu0 0.0
      %731 = vmatpush1.msra.mxu0 0.0
      %732 = vmatprep.subr.mxu0 0.0
      %733 = vmatpush1.msra.mxu0 0.0
      %734 = vmatprep.subr.mxu0 0.0
      %735 = vmatpush1.msra.mxu0 0.0
      %736 = vmatprep.subr.mxu0 0.0
      %737 = vmatpush1.msra.mxu0 0.0
      %738 = vmatprep.subr.mxu0 0.0
      %739 = vmatpush1.msra.mxu0 0.0
      %740 = vmatprep.subr.mxu0 0.0
      %741 = vmatpush1.msra.mxu0 0.0
      %742 = vmatprep.subr.mxu0 0.0
      %743 = vmatpush1.msra.mxu0 0.0
      %744 = vmatprep.subr.mxu0 0.0
      %745 = vmatpush1.msra.mxu0 0.0
      %746 = vmatprep.subr.mxu0 0.0
      %747 = vmatpush1.msra.mxu0 0.0
      %748 = vmatprep.subr.mxu0 0.0
      %749 = vmatpush1.msra.mxu0 0.0
      %750 = vmatprep.subr.mxu0 0.0
      %751 = vmatpush1.msra.mxu0 0.0
      %752 = vmatprep.subr.mxu0 0.0
      %753 = vmatpush1.msra.mxu0 0.0
      %754 = vmatprep.subr.mxu0 0.0
      %755 = vmatpush1.msra.mxu0 0.0
      %756 = vmatprep.subr.mxu0 0.0
      %757 = vmatpush1.msra.mxu0 0.0
      %758 = vmatprep.subr.mxu0 0.0
      %759 = vmatpush1.msra.mxu0 %v728
      %760 = vmatprep.subr.mxu0 0.0
      %761 = vmatpush1.msra.mxu0 %v721
      %762 = vmatprep.subr.mxu0 0.0
      %763 = vmatpush2.msra.mxu0 0.0
      %764 = vmatprep.subr.mxu0 0.0
      %765 = vmatpush2.msra.mxu0 0.0
      %766 = vmatprep.subr.mxu0 0.0
      %767 = vmatpush2.msra.mxu0 0.0
      %768 = vmatprep.subr.mxu0 0.0
      %769 = vmatpush2.msra.mxu0 0.0
      %770 = vmatprep.subr.mxu0 0.0
      %771 = vmatpush2.msra.mxu0 0.0
      %772 = vmatprep.subr.mxu0 0.0
      %773 = vmatpush2.msra.mxu0 0.0
      %774 = vmatprep.subr.mxu0 0.0
      %775 = vmatpush2.msra.mxu0 0.0
      %776 = vmatprep.subr.mxu0 0.0
      %777 = vmatpush2.msra.mxu0 0.0
      %778 = vmatprep.subr.mxu0 0.0
      %779 = vmatpush2.msra.mxu0 0.0
      %780 = vmatprep.subr.mxu0 0.0
      %781 = vmatpush2.msra.mxu0 0.0
      %782 = vmatprep.subr.mxu0 0.0
      %783 = vmatpush2.msra.mxu0 0.0
      %784 = vmatprep.subr.mxu0 0.0
      %785 = vmatpush2.msra.mxu0 0.0
      %786 = vmatprep.subr.mxu0 0.0
      %787 = vmatpush2.msra.mxu0 0.0
      %788 = vmatprep.subr.mxu0 0.0
      %789 = vmatpush2.msra.mxu0 0.0
      %790 = vmatprep.subr.mxu0 0.0
      %791 = vmatpush2.msra.mxu0 0.0
      %792 = vmatprep.subr.mxu0 0.0
      %793 = vmatpush2.msra.mxu0 0.0
      %794 = vmatprep.mubr.f32.mxu0 0.0
      %795 = vmatmul.mubr.f32.gmra.mxu0 %v726
      %v796 = vpop.f32.mrf.mxu0
      %v797 = vadd.f32 0.0, %v796
      %v798 = vpop.f32.mrf.mxu0
      %799 = vdwg.mxu0
      %v800 = vadd.f32 %v717, %v797
      %vm801 = vcmask 125952
      %v802 = vsel %vm801, %v800, 0.0
      %803 = vadd.xlane.f32.xlu0 %v802
      %v804 = vpop.xlane.xlu0 %803
      %v805 = vmul.f32 %v804, 0.0625
      %v806 = vsub.f32 %v800, %v805
      %v807 = vmul.f32 %v806, %v806
      %v808 = vsel %vm801, %v807, 0.0
      %809 = vadd.xlane.f32.xlu0 %v808
      %v810 = vpop.xlane.xlu0 %809
      %s811 = sadd.s32 %s23, %s24
      %s812 = smul.u32 %s811, 16
      %s813 = scvt.s32.f32 %s812
      %s814 = sadd.f32 %s813, 16.0
      %v815 = vld [vmem:[#allocation2] sm:$0xf]
      %v816 = vsub.f32 %v805, %v815
      %v817 = vstv %s814
      %v818 = vrcp.pop %v817
      %s819 = vtos %v818
      %s820 = smul.f32 16.0, %s819
      %v821 = vstv %s820
      %v822 = vmul.f32 %v816, %v821
      %v823 = vadd.f32 %v815, %v822
      %vm824 = vcmask 3072
      %825 = vst.msk [vmem:[#allocation2] sm:$0xf] %vm824, %v823
      %v826 = vld [vmem:[#allocation3] sm:$0xf]
      %v827 = vadd.f32 %v826, %v810
      %v828 = vmul.f32 %v816, %v816
      %s829 = smul.f32 %s813, 16.0
      %v830 = vstv %s814
      %v831 = vrcp.pop %v830
      %s832 = vtos %v831
      %s833 = smul.f32 %s829, %s832
      %v834 = vstv %s833
      %v835 = vmul.f32 %v828, %v834
      %v836 = vadd.f32 %v827, %v835
      %837 = vst.msk [vmem:[#allocation3] sm:$0xf] %vm824, %v836
      %p838 = scmp.eq.s32.totalorder %s23, 1
      %p839 = pnand %p838, %p354
      %p840 = pneg %p839
      // Predicated region
      $region49: #{wave_u_net_forward.15} parent=43 // pred_check
        _
      $region50: #{wave_u_net_forward.15} parent=43 // pred_check_branch
        %842 = sbr.rel (%p839) target = $region52
      $region51: #{wave_u_net_forward.15} parent=43 // pred_region
        %v843 = vld [vmem:[#allocation2] sm:$0xf]
        %v844 = vld [vmem:[#allocation3] sm:$0xf]
        %v845 = vmul.f32 %v844, 0.03125
        %v846 = vadd.f32 %v845, 1e-05
        %v847 = vrsqrt.pop %v846
        %v848 = vld [vmem:[%s4] sm:$0xf]
        %v849 = vmul.f32 %v848, %v847
        %850 = vst.msk [vmem:[%s6] sm:$0xf] %vm824, %v849
        %v851 = vld [vmem:[%s5] sm:$0xf]
        %v852 = vmul.f32 %v843, %v849
        %v853 = vsub.f32 %v851, %v852
        %854 = vst.msk [vmem:[%s7] sm:$0xf] %vm824, %v853
      $region52: #{wave_u_net_forward.15} parent=43 // pred_fallthru
        _
      // Predicated region
      $region53: #{wave_u_net_forward.15} parent=43 // pred_check
        %p855 = pneg %p191
      $region54: #{wave_u_net_forward.15} parent=43 // pred_check_branch
        %857 = sbr.rel (%p855) target = $region56
      $region55: #{wave_u_net_forward.15} parent=43 // pred_region
        _
      $region56: #{wave_u_net_forward.15} parent=43 // pred_fallthru
        _
      // Predicated region
      $region57: #{wave_u_net_forward.15} parent=43 // pred_check
        %p858 = pneg %p212
      $region58: #{wave_u_net_forward.15} parent=43 // pred_check_branch
        %860 = sbr.rel (%p858) target = $region60
      $region59: #{wave_u_net_forward.15} parent=43 // pred_region
        _
      $region60: #{wave_u_net_forward.15} parent=43 // pred_fallthru
        _
      // Predicated region
      $region61: #{wave_u_net_forward.15} parent=43 // pred_check
        %p861 = pneg %p191
      $region62: #{wave_u_net_forward.15} parent=43 // pred_check_branch
        %863 = sbr.rel (%p861) target = $region64
      $region63: #{wave_u_net_forward.15} parent=43 // pred_region
        _
      $region64: #{wave_u_net_forward.15} parent=43 // pred_fallthru
        _
      // Predicated region
      $region65: #{wave_u_net_forward.15} parent=43 // pred_check
        %p864 = pneg %p212
      $region66: #{wave_u_net_forward.15} parent=43 // pred_check_branch
        %866 = sbr.rel (%p864) target = $region68
      $region67: #{wave_u_net_forward.15} parent=43 // pred_region
        _
      $region68: #{wave_u_net_forward.15} parent=43 // pred_fallthru
        _
    $region44: #{wave_u_net_forward.15} parent=5 // pred_fallthru
      _
    %p867 = scmp.le.s32.totalorder 2, %s14
    // Predicated region
    $region69: #{wave_u_net_forward.15} parent=5 // pred_check
      %p868 = pneg %p867
    $region70: #{wave_u_net_forward.15} parent=5 // pred_check_branch
      %870 = sbr.rel (%p868) target = $region72
    $region71: #{wave_u_net_forward.15} parent=5 // pred_region
      %s871 = ssub.s32 %s14, 2
    $region72: #{wave_u_net_forward.15} parent=5 // pred_fallthru
      _
  $region6: #{wave_u_net_forward.15} parent=0 // loop_footer
    %s18 = sadd.s32 1, %s14
  $region7: #{wave_u_net_forward.15} parent=0 // loop_footer_branch
    %13 = sbr.rel target = $region3
  $region8: #{wave_u_net_forward.15} parent=0 // loop_exit
    _

// kernel: wave_u_net_forward.16
$region0: #{wave_u_net_forward.16}
  #allocation0 [shape = 'u32[]', space=smem, size = 0x4, offset = 0x4, fixed_abs, tag = 'smem constant byte address 0x4 - core index']
  #allocation1 [shape = 'u32[144,128]{1,0:T(1,128)}', space=vmem, size = 0x12000, scoped, tag = 'internal scratch']
  %s0 = inlined_call_operand.vmem [shape: f32[5,4,12], index: 0, kind: input, shape index: {}]
  %s1 = inlined_call_operand.vmem [shape: f32[2,12,16], index: 1, kind: input, shape index: {}]
  %s2 = inlined_call_operand.vmem [shape: f32[2,1,12,2], index: 2, kind: input, shape index: {}, may-alias: {2,3}]
  %s3 = inlined_call_operand.vmem [shape: f32[2,1,12,2], index: 3, kind: input, shape index: {}, may-alias: {2,3}]
  %s4 = inlined_call_operand.vmem [shape: f32[4,1], index: 4, kind: input, shape index: {}]
  %s5 = inlined_call_operand.vmem [shape: f32[4,1], index: 5, kind: input, shape index: {}]
  %s6 = inlined_call_operand.vmem [shape: f32[2,4,16], index: 6, kind: output, shape index: {}]
  %s7 = sld [smem:[#allocation0]]
  $region57: #{wave_u_net_forward.16} parent=0
    _
  %s9 = ssub.s32 1, %s7
  %s10 = scalar_select 0, %s9, %s7
  loop: start=0, step=1, limit=4
  $region2: #{wave_u_net_forward.16} parent=0 // loop_pre_header
    _
  $region3: #{wave_u_net_forward.16} parent=0 // loop_header
    %s12 = sphi 0, %s16
    %p13 = scmp.ge.s32.totalorder %s12, 4
    %s19 = sphi 0, %s31
    %s20 = sphi 0, %s27
    %s21 = sphi 0, %s19
    %s22 = sphi 0, %s20
    %s23 = sphi 0, %s21
    %s24 = sphi 0, %s22
    %s32 = sphi 0, %s32
    %s34 = sphi 0, %s32
    %s35 = sphi 0, %s34
    %s49 = sphi 0, %s35
    %s57 = sphi 0, %s59
    %s60 = sphi 0, %s57
    %s61 = sphi 0, %s60
    %s77 = sphi 0, %s61
    %s85 = sphi 0, %s87
    %s88 = sphi 0, %s85
    %s89 = sphi 0, %s88
    %s105 = sphi 0, %s89
    %s113 = sphi 0, %s115
    %s116 = sphi 0, %s113
    %s117 = sphi 0, %s116
    %s133 = sphi 0, %s117
    %s137 = sphi 0, %s137
    %s139 = sphi 0, %s137
    %s140 = sphi 0, %s139
    %s154 = sphi 0, %s140
    %s158 = sphi 0, %s158
    %s160 = sphi 0, %s158
    %s161 = sphi 0, %s160
    %s175 = sphi 0, %s161
    %s183 = sphi 0, %s185
    %s186 = sphi 0, %s183
    %s187 = sphi 0, %s186
    %s203 = sphi 0, %s187
  $region4: #{wave_u_net_forward.16} parent=0 // loop_header_branch
    %15 = sbr.rel (%p13) target = $region8
  $region5: #{wave_u_net_forward.16} parent=0 // loop_body
    %s17 = ssub.s32 %s12, 1
    %s18 = ssub.s32 %s12, 2
    %s25 = sadd.s32 1, %s20
    %p26 = scmp.ge.s32.totalorder %s25, 1
    %s27 = scalar_select %p26, 0, %s25
    %s28 = sadd.s32 1, %s19
    %s29 = scalar_select %p26, %s28, %s19
    %p30 = scmp.ge.s32.totalorder %s29, 2
    %s31 = scalar_select %p30, 0, %s29
    %s33 = sadd.s32 %s32, 1
    %p36 = scmp.eq.s32.totalorder %s12, 1
    %p37 = scmp.ne.s32.totalorder %s32, %s34
    %p38 = scmp.eq.s32.totalorder %s12, 0
    %p39 = por %p37, %p38
    %p40 = scmp.ne.s32.totalorder %s32, %s34
    %p41 = scmp.eq.s32.totalorder %s17, 1
    %p42 = por %p40, %p41
    %p43 = scmp.ne.s32.totalorder %s34, %s35
    %p44 = scmp.eq.s32.totalorder %s17, 0
    %p45 = por %p43, %p44
    %p46 = scmp.ne.s32.totalorder %s34, %s35
    %p47 = scmp.eq.s32.totalorder %s18, 1
    %p48 = por %p46, %p47
    %p50 = scmp.ne.s32.totalorder %s35, %s49
    %p51 = scmp.eq.s32.totalorder %s18, 0
    %p52 = por %p50, %p51
    %s53 = ssub.s32 %s19, %s31
    %s54 = ssub.s32 %s20, %s27
    %s55 = sor.u32 %s53, %s54
    %p56 = scmp.eq.s32.totalorder %s55, 0
    %s58 = sadd.s32 %s57, 1
    %s59 = scalar_select %p56, %s57, %s58
    %p62 = pneg %p56
    %p63 = scmp.eq.s32.totalorder %s12, 1
    %p64 = por %p62, %p63
    %p65 = scmp.ne.s32.totalorder %s57, %s60
    %p66 = scmp.eq.s32.totalorder %s12, 0
    %p67 = por %p65, %p66
    %p68 = scmp.ne.s32.totalorder %s57, %s60
    %p69 = scmp.eq.s32.totalorder %s17, 1
    %p70 = por %p68, %p69
    %p71 = scmp.ne.s32.totalorder %s60, %s61
    %p72 = scmp.eq.s32.totalorder %s17, 0
    %p73 = por %p71, %p72
    %p74 = scmp.ne.s32.totalorder %s60, %s61
    %p75 = scmp.eq.s32.totalorder %s18, 1
    %p76 = por %p74, %p75
    %p78 = scmp.ne.s32.totalorder %s61, %s77
    %p79 = scmp.eq.s32.totalorder %s18, 0
    %p80 = por %p78, %p79
    %s81 = ssub.s32 %s19, %s31
    %s82 = ssub.s32 %s20, %s27
    %s83 = sor.u32 %s81, %s82
    %p84 = scmp.eq.s32.totalorder %s83, 0
    %s86 = sadd.s32 %s85, 1
    %s87 = scalar_select %p84, %s85, %s86
    %p90 = pneg %p84
    %p91 = scmp.eq.s32.totalorder %s12, 1
    %p92 = por %p90, %p91
    %p93 = scmp.ne.s32.totalorder %s85, %s88
    %p94 = scmp.eq.s32.totalorder %s12, 0
    %p95 = por %p93, %p94
    %p96 = scmp.ne.s32.totalorder %s85, %s88
    %p97 = scmp.eq.s32.totalorder %s17, 1
    %p98 = por %p96, %p97
    %p99 = scmp.ne.s32.totalorder %s88, %s89
    %p100 = scmp.eq.s32.totalorder %s17, 0
    %p101 = por %p99, %p100
    %p102 = scmp.ne.s32.totalorder %s88, %s89
    %p103 = scmp.eq.s32.totalorder %s18, 1
    %p104 = por %p102, %p103
    %p106 = scmp.ne.s32.totalorder %s89, %s105
    %p107 = scmp.eq.s32.totalorder %s18, 0
    %p108 = por %p106, %p107
    %s109 = ssub.s32 %s19, %s31
    %s110 = ssub.s32 %s20, %s27
    %s111 = sor.u32 %s109, %s110
    %p112 = scmp.eq.s32.totalorder %s111, 0
    %s114 = sadd.s32 %s113, 1
    %s115 = scalar_select %p112, %s113, %s114
    %p118 = pneg %p112
    %p119 = scmp.eq.s32.totalorder %s12, 1
    %p120 = por %p118, %p119
    %p121 = scmp.ne.s32.totalorder %s113, %s116
    %p122 = scmp.eq.s32.totalorder %s12, 0
    %p123 = por %p121, %p122
    %p124 = scmp.ne.s32.totalorder %s113, %s116
    %p125 = scmp.eq.s32.totalorder %s17, 1
    %p126 = por %p124, %p125
    %p127 = scmp.ne.s32.totalorder %s116, %s117
    %p128 = scmp.eq.s32.totalorder %s17, 0
    %p129 = por %p127, %p128
    %p130 = scmp.ne.s32.totalorder %s116, %s117
    %p131 = scmp.eq.s32.totalorder %s18, 1
    %p132 = por %p130, %p131
    %p134 = scmp.ne.s32.totalorder %s117, %s133
    %p135 = scmp.eq.s32.totalorder %s18, 0
    %p136 = por %p134, %p135
    %s138 = sadd.s32 %s137, 1
    %p141 = scmp.eq.s32.totalorder %s12, 1
    %p142 = scmp.ne.s32.totalorder %s137, %s139
    %p143 = scmp.eq.s32.totalorder %s12, 0
    %p144 = por %p142, %p143
    %p145 = scmp.ne.s32.totalorder %s137, %s139
    %p146 = scmp.eq.s32.totalorder %s17, 1
    %p147 = por %p145, %p146
    %p148 = scmp.ne.s32.totalorder %s139, %s140
    %p149 = scmp.eq.s32.totalorder %s17, 0
    %p150 = por %p148, %p149
    %p151 = scmp.ne.s32.totalorder %s139, %s140
    %p152 = scmp.eq.s32.totalorder %s18, 1
    %p153 = por %p151, %p152
    %p155 = scmp.ne.s32.totalorder %s140, %s154
    %p156 = scmp.eq.s32.totalorder %s18, 0
    %p157 = por %p155, %p156
    %s159 = sadd.s32 %s158, 1
    %p162 = scmp.eq.s32.totalorder %s12, 1
    %p163 = scmp.ne.s32.totalorder %s158, %s160
    %p164 = scmp.eq.s32.totalorder %s12, 0
    %p165 = por %p163, %p164
    %p166 = scmp.ne.s32.totalorder %s158, %s160
    %p167 = scmp.eq.s32.totalorder %s17, 1
    %p168 = por %p166, %p167
    %p169 = scmp.ne.s32.totalorder %s160, %s161
    %p170 = scmp.eq.s32.totalorder %s17, 0
    %p171 = por %p169, %p170
    %p172 = scmp.ne.s32.totalorder %s160, %s161
    %p173 = scmp.eq.s32.totalorder %s18, 1
    %p174 = por %p172, %p173
    %p176 = scmp.ne.s32.totalorder %s161, %s175
    %p177 = scmp.eq.s32.totalorder %s18, 0
    %p178 = por %p176, %p177
    %s179 = ssub.s32 %s19, %s31
    %s180 = ssub.s32 %s20, %s27
    %s181 = sor.u32 %s179, %s180
    %p182 = scmp.eq.s32.totalorder %s181, 0
    %s184 = sadd.s32 %s183, 1
    %s185 = scalar_select %p182, %s183, %s184
    %p188 = pneg %p182
    %p189 = scmp.eq.s32.totalorder %s12, 1
    %p190 = por %p188, %p189
    %p191 = scmp.ne.s32.totalorder %s183, %s186
    %p192 = scmp.eq.s32.totalorder %s12, 0
    %p193 = por %p191, %p192
    %p194 = scmp.ne.s32.totalorder %s183, %s186
    %p195 = scmp.eq.s32.totalorder %s17, 1
    %p196 = por %p194, %p195
    %p197 = scmp.ne.s32.totalorder %s186, %s187
    %p198 = scmp.eq.s32.totalorder %s17, 0
    %p199 = por %p197, %p198
    %p200 = scmp.ne.s32.totalorder %s186, %s187
    %p201 = scmp.eq.s32.totalorder %s18, 1
    %p202 = por %p200, %p201
    %p204 = scmp.ne.s32.totalorder %s187, %s203
    %p205 = scmp.eq.s32.totalorder %s18, 0
    %p206 = por %p204, %p205
    %p207 = scmp.le.s32.totalorder 1, %s12
    %p208 = scmp.lt.s32.totalorder %s12, 3
    %p209 = pnand %p207, %p208
    %p210 = pneg %p209
    // Predicated region
    $region9: #{wave_u_net_forward.16} parent=5 // pred_check
      _
    $region10: #{wave_u_net_forward.16} parent=5 // pred_check_branch
      %212 = sbr.rel (%p209) target = $region12
    $region11: #{wave_u_net_forward.16} parent=5 // pred_region
      %s213 = ssub.s32 %s12, 1
      // Predicated region
      $region13: #{wave_u_net_forward.16} parent=11 // pred_check
        %p214 = pneg %p45
      $region14: #{wave_u_net_forward.16} parent=11 // pred_check_branch
        %216 = sbr.rel (%p214) target = $region16
      $region15: #{wave_u_net_forward.16} parent=11 // pred_region
        _
      $region16: #{wave_u_net_forward.16} parent=11 // pred_fallthru
        _
      // Predicated region
      $region17: #{wave_u_net_forward.16} parent=11 // pred_check
        %p217 = pneg %p150
      $region18: #{wave_u_net_forward.16} parent=11 // pred_check_branch
        %219 = sbr.rel (%p217) target = $region20
      $region19: #{wave_u_net_forward.16} parent=11 // pred_region
        _
      $region20: #{wave_u_net_forward.16} parent=11 // pred_fallthru
        _
      // Predicated region
      $region21: #{wave_u_net_forward.16} parent=11 // pred_check
        %p220 = pneg %p171
      $region22: #{wave_u_net_forward.16} parent=11 // pred_check_branch
        %222 = sbr.rel (%p220) target = $region24
      $region23: #{wave_u_net_forward.16} parent=11 // pred_region
        _
      $region24: #{wave_u_net_forward.16} parent=11 // pred_fallthru
        _
    $region12: #{wave_u_net_forward.16} parent=5 // pred_fallthru
      _
    %p223 = scmp.lt.s32.totalorder %s12, 2
    // Predicated region
    $region25: #{wave_u_net_forward.16} parent=5 // pred_check
      %p224 = pneg %p223
    $region26: #{wave_u_net_forward.16} parent=5 // pred_check_branch
      %226 = sbr.rel (%p224) target = $region28
    $region27: #{wave_u_net_forward.16} parent=5 // pred_region
      // Predicated region
      $region29: #{wave_u_net_forward.16} parent=27 // pred_check
        %p227 = pneg %p67
      $region30: #{wave_u_net_forward.16} parent=27 // pred_check_branch
        %229 = sbr.rel (%p227) target = $region32
      $region31: #{wave_u_net_forward.16} parent=27 // pred_region
        %p230 = scmp.lt.s32.totalorder %s19, 1
        %s231 = scalar_select %p230, %s19, 1
        %p232 = scmp.lt.s32.totalorder %s20, 0
        %s233 = scalar_select %p232, %s20, 0
        %s234 = smul.addr %s231, 2
        %s235 = sadd.s32 %s233, %s234
        %s236 = smul.addr %s235, 8
        %s237 = scalar_lea.vmem %s1, %s236
      $region32: #{wave_u_net_forward.16} parent=27 // pred_fallthru
        _
      // Predicated region
      $region33: #{wave_u_net_forward.16} parent=27 // pred_check
        %p238 = pneg %p95
      $region34: #{wave_u_net_forward.16} parent=27 // pred_check_branch
        %240 = sbr.rel (%p238) target = $region36
      $region35: #{wave_u_net_forward.16} parent=27 // pred_region
        %p241 = scmp.lt.s32.totalorder %s19, 1
        %s242 = scalar_select %p241, %s19, 1
        %p243 = scmp.lt.s32.totalorder %s20, 0
        %s244 = scalar_select %p243, %s20, 0
        %s245 = smul.addr %s244, 2
        %s246 = smul.addr %s242, 2
        %s247 = sadd.s32 %s245, %s246
        %s248 = smul.addr %s247, 8
        %s249 = scalar_lea.vmem %s2, %s248
      $region36: #{wave_u_net_forward.16} parent=27 // pred_fallthru
        _
      // Predicated region
      $region37: #{wave_u_net_forward.16} parent=27 // pred_check
        %p250 = pneg %p123
      $region38: #{wave_u_net_forward.16} parent=27 // pred_check_branch
        %252 = sbr.rel (%p250) target = $region40
      $region39: #{wave_u_net_forward.16} parent=27 // pred_region
        %p253 = scmp.lt.s32.totalorder %s19, 1
        %s254 = scalar_select %p253, %s19, 1
        %p255 = scmp.lt.s32.totalorder %s20, 0
        %s256 = scalar_select %p255, %s20, 0
        %s257 = smul.addr %s256, 2
        %s258 = smul.addr %s254, 2
        %s259 = sadd.s32 %s257, %s258
        %s260 = smul.addr %s259, 8
        %s261 = scalar_lea.vmem %s3, %s260
      $region40: #{wave_u_net_forward.16} parent=27 // pred_fallthru
        _
    $region28: #{wave_u_net_forward.16} parent=5 // pred_fallthru
      _
    %p262 = scmp.le.s32.totalorder 1, %s12
    %p263 = scmp.lt.s32.totalorder %s12, 3
    %p264 = pnand %p262, %p263
    %p265 = pneg %p264
    // Predicated region
    $region41: #{wave_u_net_forward.16} parent=5 // pred_check
      _
    $region42: #{wave_u_net_forward.16} parent=5 // pred_check_branch
      %267 = sbr.rel (%p264) target = $region44
    $region43: #{wave_u_net_forward.16} parent=5 // pred_region
      %s268 = ssub.s32 %s12, 1
      %p269 = pneg %p45
      %p270 = pneg %p42
      %p271 = scmp.lt.s32.totalorder %s21, 1
      %s272 = scalar_select %p271, %s21, 1
      %p273 = scmp.lt.s32.totalorder %s22, 0
      %s274 = scalar_select %p273, %s22, 0
      %s275 = smul.addr %s272, 2
      %s276 = sadd.s32 %s274, %s275
      %s277 = smul.addr %s276, 8
      %s278 = scalar_lea.vmem %s1, %s277
      %p279 = pneg %p73
      %p280 = pneg %p70
      %p281 = scmp.lt.s32.totalorder %s21, 1
      %s282 = scalar_select %p281, %s21, 1
      %p283 = scmp.lt.s32.totalorder %s22, 0
      %s284 = scalar_select %p283, %s22, 0
      %s285 = smul.addr %s284, 2
      %s286 = smul.addr %s282, 2
      %s287 = sadd.s32 %s285, %s286
      %s288 = smul.addr %s287, 8
      %s289 = scalar_lea.vmem %s2, %s288
      %p290 = pneg %p101
      %p291 = pneg %p98
      %p292 = scmp.lt.s32.totalorder %s21, 1
      %s293 = scalar_select %p292, %s21, 1
      %p294 = scmp.lt.s32.totalorder %s22, 0
      %s295 = scalar_select %p294, %s22, 0
      %s296 = smul.addr %s295, 2
      %s297 = smul.addr %s293, 2
      %s298 = sadd.s32 %s296, %s297
      %s299 = smul.addr %s298, 8
      %s300 = scalar_lea.vmem %s3, %s299
      %p301 = pneg %p129
      %p302 = pneg %p126
      %p303 = pneg %p150
      %p304 = pneg %p147
      %p305 = pneg %p171
      %p306 = pneg %p168
      %p307 = pneg %p199
      %p308 = pneg %p196
      %p309 = scmp.lt.s32.totalorder %s21, 1
      %s310 = scalar_select %p309, %s21, 1
      %p311 = scmp.lt.s32.totalorder %s22, 0
      %s312 = scalar_select %p311, %s22, 0
      %s313 = sadd.s32 %s312, %s310
      %s314 = smul.addr %s313, 4
      %s315 = scalar_lea.vmem %s6, %s314
      %p316 = scmp.lt.s32.totalorder %s21, 1
      %s317 = scalar_select %p316, %s21, 1
      %p318 = scmp.lt.s32.totalorder %s22, 0
      %s319 = scalar_select %p318, %s22, 0
      %s320 = smul.addr %s317, 2
      %s321 = sadd.s32 %s319, %s320
      %s322 = smul.addr %s321, 8
      %s323 = scalar_lea.vmem %s1, %s322
      %p324 = scmp.lt.s32.totalorder %s21, 1
      %s325 = scalar_select %p324, %s21, 1
      %p326 = scmp.lt.s32.totalorder %s22, 0
      %s327 = scalar_select %p326, %s22, 0
      %s328 = smul.addr %s327, 2
      %s329 = smul.addr %s325, 2
      %s330 = sadd.s32 %s328, %s329
      %s331 = smul.addr %s330, 8
      %s332 = scalar_lea.vmem %s2, %s331
      %p333 = scmp.lt.s32.totalorder %s21, 1
      %s334 = scalar_select %p333, %s21, 1
      %p335 = scmp.lt.s32.totalorder %s22, 0
      %s336 = scalar_select %p335, %s22, 0
      %s337 = smul.addr %s336, 2
      %s338 = smul.addr %s334, 2
      %s339 = sadd.s32 %s337, %s338
      %s340 = smul.addr %s339, 8
      %s341 = scalar_lea.vmem %s3, %s340
      %p342 = scmp.lt.s32.totalorder %s21, 1
      %s343 = scalar_select %p342, %s21, 1
      %p344 = scmp.lt.s32.totalorder %s22, 0
      %s345 = scalar_select %p344, %s22, 0
      %s346 = sadd.s32 %s345, %s343
      %s347 = smul.addr %s346, 4
      %s348 = scalar_lea.vmem %s6, %s347
      %v349 = vld [vmem:[%s332] sm:$0xff]
      %v350 = vld [vmem:[%s332 + $0x8] sm:$0xf]
      %v351 = vld [vmem:[%s323] sm:$0xff]
      %v352 = vld [vmem:[%s323 + $0x8] sm:$0xf]
      %v353 = vld [vmem:[%s341] sm:$0xff]
      %v354 = vld [vmem:[%s341 + $0x8] sm:$0xf]
      %357 = vrot.lane.b32.xlu0 %v351, 2
      %v358 = vpop.permute.xlu0 %357
      %359 = vrot.lane.b32.xlu0 %v352, 2
      %v360 = vpop.permute.xlu0 %359
      %365 = vrot.lane.b32.xlu0 %v353, 18
      %v366 = vpop.permute.xlu0 %365
      %367 = vrot.lane.b32.xlu0 %v354, 18
      %v368 = vpop.permute.xlu0 %367
      %vm371 = vcmask 15360
      %v372 = vsel %vm371, %v349, %v358
      %v373 = vsel %vm371, %v350, %v360
      %vm374 = vcmask 146432
      %v375 = vsel %vm374, %v372, %v366
      %v376 = vsel %vm374, %v373, %v368
      %v377 = vld [vmem:[%s0] sm:$0xf]
      %s378 = scalar_lea.vmem %s0, 4
      %v379 = vld [vmem:[%s378] sm:$0xf]
      %382 = vrot.lane.b32.xlu0 %v375, 127
      %v383 = vpop.permute.xlu0 %382
      %384 = vrot.lane.b32.xlu0 %v376, 127
      %v385 = vpop.permute.xlu0 %384
      %vm387 = vcmask 97280
      %v389 = vsel %vm387, %v379, 0
      %vm391 = vcmask 1043456
      %v392 = vsel %vm391, %v385, 0
      %394 = vmatprep.subr.mxu0 0.0
      %395 = vmatpush1.msra.mxu0 0.0
      %396 = vmatprep.subr.mxu0 0.0
      %397 = vmatpush1.msra.mxu0 0.0
      %398 = vmatprep.subr.mxu0 0.0
      %399 = vmatpush1.msra.mxu0 0.0
      %400 = vmatprep.subr.mxu0 0.0
      %401 = vmatpush1.msra.mxu0 0.0
      %402 = vmatprep.subr.mxu0 0.0
      %403 = vmatpush1.msra.mxu0 0.0
      %404 = vmatprep.subr.mxu0 0.0
      %405 = vmatpush1.msra.mxu0 0.0
      %406 = vmatprep.subr.mxu0 0.0
      %407 = vmatpush1.msra.mxu0 0.0
      %408 = vmatprep.subr.mxu0 0.0
      %409 = vmatpush1.msra.mxu0 0.0
      %410 = vmatprep.subr.mxu0 0.0
      %411 = vmatpush1.msra.mxu0 0.0
      %412 = vmatprep.subr.mxu0 0.0
      %413 = vmatpush1.msra.mxu0 0.0
      %414 = vmatprep.subr.mxu0 0.0
      %415 = vmatpush1.msra.mxu0 0.0
      %416 = vmatprep.subr.mxu0 0.0
      %417 = vmatpush1.msra.mxu0 0.0
      %418 = vmatprep.subr.mxu0 0.0
      %419 = vmatpush1.msra.mxu0 0.0
      %420 = vmatprep.subr.mxu0 0.0
      %421 = vmatpush1.msra.mxu0 0.0
      %422 = vmatprep.subr.mxu0 0.0
      %423 = vmatpush1.msra.mxu0 %v392
      %424 = vmatprep.subr.mxu0 0.0
      %425 = vmatpush1.msra.mxu0 %v383
      %426 = vmatprep.subr.mxu0 0.0
      %427 = vmatpush2.msra.mxu0 0.0
      %428 = vmatprep.subr.mxu0 0.0
      %429 = vmatpush2.msra.mxu0 0.0
      %430 = vmatprep.subr.mxu0 0.0
      %431 = vmatpush2.msra.mxu0 0.0
      %432 = vmatprep.subr.mxu0 0.0
      %433 = vmatpush2.msra.mxu0 0.0
      %434 = vmatprep.subr.mxu0 0.0
      %435 = vmatpush2.msra.mxu0 0.0
      %436 = vmatprep.subr.mxu0 0.0
      %437 = vmatpush2.msra.mxu0 0.0
      %438 = vmatprep.subr.mxu0 0.0
      %439 = vmatpush2.msra.mxu0 0.0
      %440 = vmatprep.subr.mxu0 0.0
      %441 = vmatpush2.msra.mxu0 0.0
      %442 = vmatprep.subr.mxu0 0.0
      %443 = vmatpush2.msra.mxu0 0.0
      %444 = vmatprep.subr.mxu0 0.0
      %445 = vmatpush2.msra.mxu0 0.0
      %446 = vmatprep.subr.mxu0 0.0
      %447 = vmatpush2.msra.mxu0 0.0
      %448 = vmatprep.subr.mxu0 0.0
      %449 = vmatpush2.msra.mxu0 0.0
      %450 = vmatprep.subr.mxu0 0.0
      %451 = vmatpush2.msra.mxu0 0.0
      %452 = vmatprep.subr.mxu0 0.0
      %453 = vmatpush2.msra.mxu0 0.0
      %454 = vmatprep.subr.mxu0 0.0
      %455 = vmatpush2.msra.mxu0 0.0
      %456 = vmatprep.subr.mxu0 0.0
      %457 = vmatpush2.msra.mxu0 0.0
      %458 = vmatprep.mubr.f32.mxu0 0.0
      %459 = vmatmul.mubr.f32.gmra.mxu0 %v389
      %v460 = vpop.f32.mrf.mxu0
      %v461 = vadd.f32 0.0, %v460
      %v462 = vpop.f32.mrf.mxu0
      %463 = vdwg.mxu0
      %v465 = vsel %vm387, %v377, 0
      %v467 = vsel %vm391, %v376, 0
      %469 = vmatprep.subr.mxu0 0.0
      %470 = vmatpush1.msra.mxu0 0.0
      %471 = vmatprep.subr.mxu0 0.0
      %472 = vmatpush1.msra.mxu0 0.0
      %473 = vmatprep.subr.mxu0 0.0
      %474 = vmatpush1.msra.mxu0 0.0
      %475 = vmatprep.subr.mxu0 0.0
      %476 = vmatpush1.msra.mxu0 0.0
      %477 = vmatprep.subr.mxu0 0.0
      %478 = vmatpush1.msra.mxu0 0.0
      %479 = vmatprep.subr.mxu0 0.0
      %480 = vmatpush1.msra.mxu0 0.0
      %481 = vmatprep.subr.mxu0 0.0
      %482 = vmatpush1.msra.mxu0 0.0
      %483 = vmatprep.subr.mxu0 0.0
      %484 = vmatpush1.msra.mxu0 0.0
      %485 = vmatprep.subr.mxu0 0.0
      %486 = vmatpush1.msra.mxu0 0.0
      %487 = vmatprep.subr.mxu0 0.0
      %488 = vmatpush1.msra.mxu0 0.0
      %489 = vmatprep.subr.mxu0 0.0
      %490 = vmatpush1.msra.mxu0 0.0
      %491 = vmatprep.subr.mxu0 0.0
      %492 = vmatpush1.msra.mxu0 0.0
      %493 = vmatprep.subr.mxu0 0.0
      %494 = vmatpush1.msra.mxu0 0.0
      %495 = vmatprep.subr.mxu0 0.0
      %496 = vmatpush1.msra.mxu0 0.0
      %497 = vmatprep.subr.mxu0 0.0
      %498 = vmatpush1.msra.mxu0 %v467
      %499 = vmatprep.subr.mxu0 0.0
      %500 = vmatpush1.msra.mxu0 %v375
      %501 = vmatprep.subr.mxu0 0.0
      %502 = vmatpush2.msra.mxu0 0.0
      %503 = vmatprep.subr.mxu0 0.0
      %504 = vmatpush2.msra.mxu0 0.0
      %505 = vmatprep.subr.mxu0 0.0
      %506 = vmatpush2.msra.mxu0 0.0
      %507 = vmatprep.subr.mxu0 0.0
      %508 = vmatpush2.msra.mxu0 0.0
      %509 = vmatprep.subr.mxu0 0.0
      %510 = vmatpush2.msra.mxu0 0.0
      %511 = vmatprep.subr.mxu0 0.0
      %512 = vmatpush2.msra.mxu0 0.0
      %513 = vmatprep.subr.mxu0 0.0
      %514 = vmatpush2.msra.mxu0 0.0
      %515 = vmatprep.subr.mxu0 0.0
      %516 = vmatpush2.msra.mxu0 0.0
      %517 = vmatprep.subr.mxu0 0.0
      %518 = vmatpush2.msra.mxu0 0.0
      %519 = vmatprep.subr.mxu0 0.0
      %520 = vmatpush2.msra.mxu0 0.0
      %521 = vmatprep.subr.mxu0 0.0
      %522 = vmatpush2.msra.mxu0 0.0
      %523 = vmatprep.subr.mxu0 0.0
      %524 = vmatpush2.msra.mxu0 0.0
      %525 = vmatprep.subr.mxu0 0.0
      %526 = vmatpush2.msra.mxu0 0.0
      %527 = vmatprep.subr.mxu0 0.0
      %528 = vmatpush2.msra.mxu0 0.0
      %529 = vmatprep.subr.mxu0 0.0
      %530 = vmatpush2.msra.mxu0 0.0
      %531 = vmatprep.subr.mxu0 0.0
      %532 = vmatpush2.msra.mxu0 0.0
      %533 = vmatprep.mubr.f32.mxu0 0.0
      %534 = vmatmul.mubr.f32.gmra.mxu0 %v465
      %v535 = vpop.f32.mrf.mxu0
      %v536 = vadd.f32 %v461, %v535
      %v537 = vpop.f32.mrf.mxu0
      %538 = vdwg.mxu0
      %s539 = scalar_lea.vmem %s0, 8
      %v540 = vld [vmem:[%s539] sm:$0xf]
      %541 = vrot.lane.b32.xlu0 %v375, 126
      %v542 = vpop.permute.xlu0 %541
      %543 = vrot.lane.b32.xlu0 %v376, 126
      %v544 = vpop.permute.xlu0 %543
      %v547 = vsel %vm387, %v540, 0
      %v549 = vsel %vm391, %v544, 0
      %551 = vmatprep.subr.mxu0 0.0
      %552 = vmatpush1.msra.mxu0 0.0
      %553 = vmatprep.subr.mxu0 0.0
      %554 = vmatpush1.msra.mxu0 0.0
      %555 = vmatprep.subr.mxu0 0.0
      %556 = vmatpush1.msra.mxu0 0.0
      %557 = vmatprep.subr.mxu0 0.0
      %558 = vmatpush1.msra.mxu0 0.0
      %559 = vmatprep.subr.mxu0 0.0
      %560 = vmatpush1.msra.mxu0 0.0
      %561 = vmatprep.subr.mxu0 0.0
      %562 = vmatpush1.msra.mxu0 0.0
      %563 = vmatprep.subr.mxu0 0.0
      %564 = vmatpush1.msra.mxu0 0.0
      %565 = vmatprep.subr.mxu0 0.0
      %566 = vmatpush1.msra.mxu0 0.0
      %567 = vmatprep.subr.mxu0 0.0
      %568 = vmatpush1.msra.mxu0 0.0
      %569 = vmatprep.subr.mxu0 0.0
      %570 = vmatpush1.msra.mxu0 0.0
      %571 = vmatprep.subr.mxu0 0.0
      %572 = vmatpush1.msra.mxu0 0.0
      %573 = vmatprep.subr.mxu0 0.0
      %574 = vmatpush1.msra.mxu0 0.0
      %575 = vmatprep.subr.mxu0 0.0
      %576 = vmatpush1.msra.mxu0 0.0
      %577 = vmatprep.subr.mxu0 0.0
      %578 = vmatpush1.msra.mxu0 0.0
      %579 = vmatprep.subr.mxu0 0.0
      %580 = vmatpush1.msra.mxu0 %v549
      %581 = vmatprep.subr.mxu0 0.0
      %582 = vmatpush1.msra.mxu0 %v542
      %583 = vmatprep.subr.mxu0 0.0
      %584 = vmatpush2.msra.mxu0 0.0
      %585 = vmatprep.subr.mxu0 0.0
      %586 = vmatpush2.msra.mxu0 0.0
      %587 = vmatprep.subr.mxu0 0.0
      %588 = vmatpush2.msra.mxu0 0.0
      %589 = vmatprep.subr.mxu0 0.0
      %590 = vmatpush2.msra.mxu0 0.0
      %591 = vmatprep.subr.mxu0 0.0
      %592 = vmatpush2.msra.mxu0 0.0
      %593 = vmatprep.subr.mxu0 0.0
      %594 = vmatpush2.msra.mxu0 0.0
      %595 = vmatprep.subr.mxu0 0.0
      %596 = vmatpush2.msra.mxu0 0.0
      %597 = vmatprep.subr.mxu0 0.0
      %598 = vmatpush2.msra.mxu0 0.0
      %599 = vmatprep.subr.mxu0 0.0
      %600 = vmatpush2.msra.mxu0 0.0
      %601 = vmatprep.subr.mxu0 0.0
      %602 = vmatpush2.msra.mxu0 0.0
      %603 = vmatprep.subr.mxu0 0.0
      %604 = vmatpush2.msra.mxu0 0.0
      %605 = vmatprep.subr.mxu0 0.0
      %606 = vmatpush2.msra.mxu0 0.0
      %607 = vmatprep.subr.mxu0 0.0
      %608 = vmatpush2.msra.mxu0 0.0
      %609 = vmatprep.subr.mxu0 0.0
      %610 = vmatpush2.msra.mxu0 0.0
      %611 = vmatprep.subr.mxu0 0.0
      %612 = vmatpush2.msra.mxu0 0.0
      %613 = vmatprep.subr.mxu0 0.0
      %614 = vmatpush2.msra.mxu0 0.0
      %615 = vmatprep.mubr.f32.mxu0 0.0
      %616 = vmatmul.mubr.f32.gmra.mxu0 %v547
      %v617 = vpop.f32.mrf.mxu0
      %v618 = vadd.f32 0.0, %v617
      %v619 = vpop.f32.mrf.mxu0
      %620 = vdwg.mxu0
      %v621 = vadd.f32 %v536, %v618
      %s622 = scalar_lea.vmem %s0, 12
      %v623 = vld [vmem:[%s622] sm:$0xf]
      %624 = vrot.lane.b32.xlu0 %v375, 125
      %v625 = vpop.permute.xlu0 %624
      %626 = vrot.lane.b32.xlu0 %v376, 125
      %v627 = vpop.permute.xlu0 %626
      %v630 = vsel %vm387, %v623, 0
      %v632 = vsel %vm391, %v627, 0
      %634 = vmatprep.subr.mxu0 0.0
      %635 = vmatpush1.msra.mxu0 0.0
      %636 = vmatprep.subr.mxu0 0.0
      %637 = vmatpush1.msra.mxu0 0.0
      %638 = vmatprep.subr.mxu0 0.0
      %639 = vmatpush1.msra.mxu0 0.0
      %640 = vmatprep.subr.mxu0 0.0
      %641 = vmatpush1.msra.mxu0 0.0
      %642 = vmatprep.subr.mxu0 0.0
      %643 = vmatpush1.msra.mxu0 0.0
      %644 = vmatprep.subr.mxu0 0.0
      %645 = vmatpush1.msra.mxu0 0.0
      %646 = vmatprep.subr.mxu0 0.0
      %647 = vmatpush1.msra.mxu0 0.0
      %648 = vmatprep.subr.mxu0 0.0
      %649 = vmatpush1.msra.mxu0 0.0
      %650 = vmatprep.subr.mxu0 0.0
      %651 = vmatpush1.msra.mxu0 0.0
      %652 = vmatprep.subr.mxu0 0.0
      %653 = vmatpush1.msra.mxu0 0.0
      %654 = vmatprep.subr.mxu0 0.0
      %655 = vmatpush1.msra.mxu0 0.0
      %656 = vmatprep.subr.mxu0 0.0
      %657 = vmatpush1.msra.mxu0 0.0
      %658 = vmatprep.subr.mxu0 0.0
      %659 = vmatpush1.msra.mxu0 0.0
      %660 = vmatprep.subr.mxu0 0.0
      %661 = vmatpush1.msra.mxu0 0.0
      %662 = vmatprep.subr.mxu0 0.0
      %663 = vmatpush1.msra.mxu0 %v632
      %664 = vmatprep.subr.mxu0 0.0
      %665 = vmatpush1.msra.mxu0 %v625
      %666 = vmatprep.subr.mxu0 0.0
      %667 = vmatpush2.msra.mxu0 0.0
      %668 = vmatprep.subr.mxu0 0.0
      %669 = vmatpush2.msra.mxu0 0.0
      %670 = vmatprep.subr.mxu0 0.0
      %671 = vmatpush2.msra.mxu0 0.0
      %672 = vmatprep.subr.mxu0 0.0
      %673 = vmatpush2.msra.mxu0 0.0
      %674 = vmatprep.subr.mxu0 0.0
      %675 = vmatpush2.msra.mxu0 0.0
      %676 = vmatprep.subr.mxu0 0.0
      %677 = vmatpush2.msra.mxu0 0.0
      %678 = vmatprep.subr.mxu0 0.0
      %679 = vmatpush2.msra.mxu0 0.0
      %680 = vmatprep.subr.mxu0 0.0
      %681 = vmatpush2.msra.mxu0 0.0
      %682 = vmatprep.subr.mxu0 0.0
      %683 = vmatpush2.msra.mxu0 0.0
      %684 = vmatprep.subr.mxu0 0.0
      %685 = vmatpush2.msra.mxu0 0.0
      %686 = vmatprep.subr.mxu0 0.0
      %687 = vmatpush2.msra.mxu0 0.0
      %688 = vmatprep.subr.mxu0 0.0
      %689 = vmatpush2.msra.mxu0 0.0
      %690 = vmatprep.subr.mxu0 0.0
      %691 = vmatpush2.msra.mxu0 0.0
      %692 = vmatprep.subr.mxu0 0.0
      %693 = vmatpush2.msra.mxu0 0.0
      %694 = vmatprep.subr.mxu0 0.0
      %695 = vmatpush2.msra.mxu0 0.0
      %696 = vmatprep.subr.mxu0 0.0
      %697 = vmatpush2.msra.mxu0 0.0
      %698 = vmatprep.mubr.f32.mxu0 0.0
      %699 = vmatmul.mubr.f32.gmra.mxu0 %v630
      %v700 = vpop.f32.mrf.mxu0
      %v701 = vadd.f32 0.0, %v700
      %v702 = vpop.f32.mrf.mxu0
      %703 = vdwg.mxu0
      %v704 = vadd.f32 %v621, %v701
      %s705 = scalar_lea.vmem %s0, 16
      %v706 = vld [vmem:[%s705] sm:$0xf]
      %707 = vrot.lane.b32.xlu0 %v375, 124
      %v708 = vpop.permute.xlu0 %707
      %709 = vrot.lane.b32.xlu0 %v376, 124
      %v710 = vpop.permute.xlu0 %709
      %v713 = vsel %vm387, %v706, 0
      %v715 = vsel %vm391, %v710, 0
      %717 = vmatprep.subr.mxu0 0.0
      %718 = vmatpush1.msra.mxu0 0.0
      %719 = vmatprep.subr.mxu0 0.0
      %720 = vmatpush1.msra.mxu0 0.0
      %721 = vmatprep.subr.mxu0 0.0
      %722 = vmatpush1.msra.mxu0 0.0
      %723 = vmatprep.subr.mxu0 0.0
      %724 = vmatpush1.msra.mxu0 0.0
      %725 = vmatprep.subr.mxu0 0.0
      %726 = vmatpush1.msra.mxu0 0.0
      %727 = vmatprep.subr.mxu0 0.0
      %728 = vmatpush1.msra.mxu0 0.0
      %729 = vmatprep.subr.mxu0 0.0
      %730 = vmatpush1.msra.mxu0 0.0
      %731 = vmatprep.subr.mxu0 0.0
      %732 = vmatpush1.msra.mxu0 0.0
      %733 = vmatprep.subr.mxu0 0.0
      %734 = vmatpush1.msra.mxu0 0.0
      %735 = vmatprep.subr.mxu0 0.0
      %736 = vmatpush1.msra.mxu0 0.0
      %737 = vmatprep.subr.mxu0 0.0
      %738 = vmatpush1.msra.mxu0 0.0
      %739 = vmatprep.subr.mxu0 0.0
      %740 = vmatpush1.msra.mxu0 0.0
      %741 = vmatprep.subr.mxu0 0.0
      %742 = vmatpush1.msra.mxu0 0.0
      %743 = vmatprep.subr.mxu0 0.0
      %744 = vmatpush1.msra.mxu0 0.0
      %745 = vmatprep.subr.mxu0 0.0
      %746 = vmatpush1.msra.mxu0 %v715
      %747 = vmatprep.subr.mxu0 0.0
      %748 = vmatpush1.msra.mxu0 %v708
      %749 = vmatprep.subr.mxu0 0.0
      %750 = vmatpush2.msra.mxu0 0.0
      %751 = vmatprep.subr.mxu0 0.0
      %752 = vmatpush2.msra.mxu0 0.0
      %753 = vmatprep.subr.mxu0 0.0
      %754 = vmatpush2.msra.mxu0 0.0
      %755 = vmatprep.subr.mxu0 0.0
      %756 = vmatpush2.msra.mxu0 0.0
      %757 = vmatprep.subr.mxu0 0.0
      %758 = vmatpush2.msra.mxu0 0.0
      %759 = vmatprep.subr.mxu0 0.0
      %760 = vmatpush2.msra.mxu0 0.0
      %761 = vmatprep.subr.mxu0 0.0
      %762 = vmatpush2.msra.mxu0 0.0
      %763 = vmatprep.subr.mxu0 0.0
      %764 = vmatpush2.msra.mxu0 0.0
      %765 = vmatprep.subr.mxu0 0.0
      %766 = vmatpush2.msra.mxu0 0.0
      %767 = vmatprep.subr.mxu0 0.0
      %768 = vmatpush2.msra.mxu0 0.0
      %769 = vmatprep.subr.mxu0 0.0
      %770 = vmatpush2.msra.mxu0 0.0
      %771 = vmatprep.subr.mxu0 0.0
      %772 = vmatpush2.msra.mxu0 0.0
      %773 = vmatprep.subr.mxu0 0.0
      %774 = vmatpush2.msra.mxu0 0.0
      %775 = vmatprep.subr.mxu0 0.0
      %776 = vmatpush2.msra.mxu0 0.0
      %777 = vmatprep.subr.mxu0 0.0
      %778 = vmatpush2.msra.mxu0 0.0
      %779 = vmatprep.subr.mxu0 0.0
      %780 = vmatpush2.msra.mxu0 0.0
      %781 = vmatprep.mubr.f32.mxu0 0.0
      %782 = vmatmul.mubr.f32.gmra.mxu0 %v713
      %v783 = vpop.f32.mrf.mxu0
      %v784 = vadd.f32 0.0, %v783
      %v785 = vpop.f32.mrf.mxu0
      %786 = vdwg.mxu0
      %v787 = vadd.f32 %v704, %v784
      %v788 = vld [vmem:[%s4] sm:$0xf]
      %790 = vset.pattern.permute.xlu0 0
      %791 = vperm.xlu0 %790, %v788
      %v792 = vpop.permute.xlu0 %791
      %v794 = vmul.f32 %v787, %v792
      %v795 = vld [vmem:[%s5] sm:$0xf]
      %797 = vset.pattern.permute.xlu0 0
      %798 = vperm.xlu0 %797, %v795
      %v799 = vpop.permute.xlu0 %798
      %v801 = vadd.f32 %v794, %v799
      %vm802 = vcmp.ge.f32.partialorder %v801, 0.0
      %v803 = vmul.f32 %v801, 0.1
      %v804 = vsel %vm802, %v801, %v803
      %vm805 = vcmask 125952
      %806 = vst.msk [vmem:[%s348] sm:$0xf] %vm805, %v804
      %p807 = scmp.lt.s32.totalorder %s21, 1
      %s808 = scalar_select %p807, %s21, 1
      %p809 = scmp.lt.s32.totalorder %s22, 0
      %s810 = scalar_select %p809, %s22, 0
      %s811 = sadd.s32 %s810, %s808
      %s812 = smul.addr %s811, 4
      %s813 = scalar_lea.vmem %s6, %s812
      // Predicated region
      $region45: #{wave_u_net_forward.16} parent=43 // pred_check
        %p814 = pneg %p196
      $region46: #{wave_u_net_forward.16} parent=43 // pred_check_branch
        %816 = sbr.rel (%p814) target = $region48
      $region47: #{wave_u_net_forward.16} parent=43 // pred_region
        _
      $region48: #{wave_u_net_forward.16} parent=43 // pred_fallthru
        _
    $region44: #{wave_u_net_forward.16} parent=5 // pred_fallthru
      _
    %p817 = scmp.le.s32.totalorder 2, %s12
    // Predicated region
    $region49: #{wave_u_net_forward.16} parent=5 // pred_check
      %p818 = pneg %p817
    $region50: #{wave_u_net_forward.16} parent=5 // pred_check_branch
      %820 = sbr.rel (%p818) target = $region52
    $region51: #{wave_u_net_forward.16} parent=5 // pred_region
      %s821 = ssub.s32 %s12, 2
      // Predicated region
      $region53: #{wave_u_net_forward.16} parent=51 // pred_check
        %p822 = pneg %p202
      $region54: #{wave_u_net_forward.16} parent=51 // pred_check_branch
        %824 = sbr.rel (%p822) target = $region56
      $region55: #{wave_u_net_forward.16} parent=51 // pred_region
        %p825 = scmp.lt.s32.totalorder %s23, 1
        %s826 = scalar_select %p825, %s23, 1
        %p827 = scmp.lt.s32.totalorder %s24, 0
        %s828 = scalar_select %p827, %s24, 0
        %s829 = sadd.s32 %s828, %s826
        %s830 = smul.addr %s829, 4
        %s831 = scalar_lea.vmem %s6, %s830
      $region56: #{wave_u_net_forward.16} parent=51 // pred_fallthru
        _
    $region52: #{wave_u_net_forward.16} parent=5 // pred_fallthru
      _
  $region6: #{wave_u_net_forward.16} parent=0 // loop_footer
    %s16 = sadd.s32 1, %s12
  $region7: #{wave_u_net_forward.16} parent=0 // loop_footer_branch
    %11 = sbr.rel target = $region3
  $region8: #{wave_u_net_forward.16} parent=0 // loop_exit
    _

// kernel: wave_u_net_forward.17
$region0: #{wave_u_net_forward.17}
  #allocation0 [shape = 'u32[]', space=smem, size = 0x4, offset = 0x4, fixed_abs, tag = 'smem constant byte address 0x4 - core index']
  #allocation1 [shape = 'u32[144,128]{1,0:T(1,128)}', space=vmem, size = 0x12000, scoped, tag = 'internal scratch']
  #allocation2 [shape = 'f32[1,1]{1,0:T(1,128)S(1)}', space=vmem, size = 0x200, scoped, tag = 'scoped memory for wave_u_net_forward.17']
  %s0 = inlined_call_operand.vmem [shape: f32[1,5], index: 0, kind: input, shape index: {}]
  %s1 = inlined_call_operand.<no memory space> [shape: f32[1,1], index: 1, kind: input, shape index: {}]
  %s2 = inlined_call_operand.vmem [shape: f32[2,5,16], index: 2, kind: input, shape index: {}]
  %s3 = inlined_call_operand.hbm [shape: f32[2,1,16], index: 3, kind: output, shape index: {}]
  %s4 = sld [smem:[#allocation0]]
  $region45: #{wave_u_net_forward.17} parent=0
    _
  %s6 = ssub.s32 1, %s4
  %s7 = scalar_select 0, %s6, %s4
  %v8 = vstv %s1
  %9 = vst [vmem:[#allocation2] sm:$0x1] %v8
  $region1: #{wave_u_net_forward.17} parent=0
    #allocation3 [shape = 'u8[1024]{0}', space=vmem, size = 0x400, scoped, tag = 'output window, operand 0']
    #allocation4 [shape = 's32[2]{0}', space=sflag, size = 0x8, scoped, tag = 'scoped memory for wave_u_net_forward.17']
    %10 = vsyncpa [#allocation4], 0
    %s11 = scalar_lea.sflag [#allocation4], 1
    %12 = vsyncpa %s11, 0
    loop: start=0, step=1, limit=4
    $region2: #{wave_u_net_forward.17} parent=1 // loop_pre_header
      _
    $region3: #{wave_u_net_forward.17} parent=1 // loop_header
      %s14 = sphi 0, %s18
      %p15 = scmp.ge.s32.totalorder %s14, 4
      %s21 = sphi 0, %s33
      %s22 = sphi 0, %s29
      %s23 = sphi 0, %s21
      %s24 = sphi 0, %s22
      %s25 = sphi 0, %s23
      %s26 = sphi 0, %s24
      %s34 = sphi 0, %s34
      %s36 = sphi 0, %s34
      %s37 = sphi 0, %s36
      %s51 = sphi 0, %s37
      %s55 = sphi 0, %s55
      %s57 = sphi 0, %s55
      %s58 = sphi 0, %s57
      %s72 = sphi 0, %s58
      %s80 = sphi 0, %s82
      %s83 = sphi 0, %s80
      %s84 = sphi 0, %s83
      %s100 = sphi 0, %s84
      %s108 = sphi 0, %s110
      %s111 = sphi 0, %s108
      %s112 = sphi 0, %s111
      %s128 = sphi 0, %s112
    $region4: #{wave_u_net_forward.17} parent=1 // loop_header_branch
      %17 = sbr.rel (%p15) target = $region8
    $region5: #{wave_u_net_forward.17} parent=1 // loop_body
      %s19 = ssub.s32 %s14, 1
      %s20 = ssub.s32 %s14, 2
      %s27 = sadd.s32 1, %s22
      %p28 = scmp.ge.s32.totalorder %s27, 1
      %s29 = scalar_select %p28, 0, %s27
      %s30 = sadd.s32 1, %s21
      %s31 = scalar_select %p28, %s30, %s21
      %p32 = scmp.ge.s32.totalorder %s31, 2
      %s33 = scalar_select %p32, 0, %s31
      %s35 = sadd.s32 %s34, 1
      %p38 = scmp.eq.s32.totalorder %s14, 1
      %p39 = scmp.ne.s32.totalorder %s34, %s36
      %p40 = scmp.eq.s32.totalorder %s14, 0
      %p41 = por %p39, %p40
      %p42 = scmp.ne.s32.totalorder %s34, %s36
      %p43 = scmp.eq.s32.totalorder %s19, 1
      %p44 = por %p42, %p43
      %p45 = scmp.ne.s32.totalorder %s36, %s37
      %p46 = scmp.eq.s32.totalorder %s19, 0
      %p47 = por %p45, %p46
      %p48 = scmp.ne.s32.totalorder %s36, %s37
      %p49 = scmp.eq.s32.totalorder %s20, 1
      %p50 = por %p48, %p49
      %p52 = scmp.ne.s32.totalorder %s37, %s51
      %p53 = scmp.eq.s32.totalorder %s20, 0
      %p54 = por %p52, %p53
      %s56 = sadd.s32 %s55, 1
      %p59 = scmp.eq.s32.totalorder %s14, 1
      %p60 = scmp.ne.s32.totalorder %s55, %s57
      %p61 = scmp.eq.s32.totalorder %s14, 0
      %p62 = por %p60, %p61
      %p63 = scmp.ne.s32.totalorder %s55, %s57
      %p64 = scmp.eq.s32.totalorder %s19, 1
      %p65 = por %p63, %p64
      %p66 = scmp.ne.s32.totalorder %s57, %s58
      %p67 = scmp.eq.s32.totalorder %s19, 0
      %p68 = por %p66, %p67
      %p69 = scmp.ne.s32.totalorder %s57, %s58
      %p70 = scmp.eq.s32.totalorder %s20, 1
      %p71 = por %p69, %p70
      %p73 = scmp.ne.s32.totalorder %s58, %s72
      %p74 = scmp.eq.s32.totalorder %s20, 0
      %p75 = por %p73, %p74
      %s76 = ssub.s32 %s21, %s33
      %s77 = ssub.s32 %s22, %s29
      %s78 = sor.u32 %s76, %s77
      %p79 = scmp.eq.s32.totalorder %s78, 0
      %s81 = sadd.s32 %s80, 1
      %s82 = scalar_select %p79, %s80, %s81
      %p85 = pneg %p79
      %p86 = scmp.eq.s32.totalorder %s14, 1
      %p87 = por %p85, %p86
      %p88 = scmp.ne.s32.totalorder %s80, %s83
      %p89 = scmp.eq.s32.totalorder %s14, 0
      %p90 = por %p88, %p89
      %p91 = scmp.ne.s32.totalorder %s80, %s83
      %p92 = scmp.eq.s32.totalorder %s19, 1
      %p93 = por %p91, %p92
      %p94 = scmp.ne.s32.totalorder %s83, %s84
      %p95 = scmp.eq.s32.totalorder %s19, 0
      %p96 = por %p94, %p95
      %p97 = scmp.ne.s32.totalorder %s83, %s84
      %p98 = scmp.eq.s32.totalorder %s20, 1
      %p99 = por %p97, %p98
      %p101 = scmp.ne.s32.totalorder %s84, %s100
      %p102 = scmp.eq.s32.totalorder %s20, 0
      %p103 = por %p101, %p102
      %s104 = ssub.s32 %s21, %s33
      %s105 = ssub.s32 %s22, %s29
      %s106 = sor.u32 %s104, %s105
      %p107 = scmp.eq.s32.totalorder %s106, 0
      %s109 = sadd.s32 %s108, 1
      %s110 = scalar_select %p107, %s108, %s109
      %p113 = pneg %p107
      %p114 = scmp.eq.s32.totalorder %s14, 1
      %p115 = por %p113, %p114
      %p116 = scmp.ne.s32.totalorder %s108, %s111
      %p117 = scmp.eq.s32.totalorder %s14, 0
      %p118 = por %p116, %p117
      %p119 = scmp.ne.s32.totalorder %s108, %s111
      %p120 = scmp.eq.s32.totalorder %s19, 1
      %p121 = por %p119, %p120
      %p122 = scmp.ne.s32.totalorder %s111, %s112
      %p123 = scmp.eq.s32.totalorder %s19, 0
      %p124 = por %p122, %p123
      %p125 = scmp.ne.s32.totalorder %s111, %s112
      %p126 = scmp.eq.s32.totalorder %s20, 1
      %p127 = por %p125, %p126
      %p129 = scmp.ne.s32.totalorder %s112, %s128
      %p130 = scmp.eq.s32.totalorder %s20, 0
      %p131 = por %p129, %p130
      %p132 = scmp.le.s32.totalorder 1, %s14
      %p133 = scmp.lt.s32.totalorder %s14, 3
      %p134 = pnand %p132, %p133
      %p135 = pneg %p134
      // Predicated region
      $region9: #{wave_u_net_forward.17} parent=5 // pred_check
        _
      $region10: #{wave_u_net_forward.17} parent=5 // pred_check_branch
        %137 = sbr.rel (%p134) target = $region12
      $region11: #{wave_u_net_forward.17} parent=5 // pred_region
        %s138 = ssub.s32 %s14, 1
        // Predicated region
        $region13: #{wave_u_net_forward.17} parent=11 // pred_check
          %p139 = pneg %p47
        $region14: #{wave_u_net_forward.17} parent=11 // pred_check_branch
          %141 = sbr.rel (%p139) target = $region16
        $region15: #{wave_u_net_forward.17} parent=11 // pred_region
          _
        $region16: #{wave_u_net_forward.17} parent=11 // pred_fallthru
          _
        // Predicated region
        $region17: #{wave_u_net_forward.17} parent=11 // pred_check
          %p142 = pneg %p68
        $region18: #{wave_u_net_forward.17} parent=11 // pred_check_branch
          %144 = sbr.rel (%p142) target = $region20
        $region19: #{wave_u_net_forward.17} parent=11 // pred_region
          _
        $region20: #{wave_u_net_forward.17} parent=11 // pred_fallthru
          _
      $region12: #{wave_u_net_forward.17} parent=5 // pred_fallthru
        _
      %p145 = scmp.lt.s32.totalorder %s14, 2
      // Predicated region
      $region21: #{wave_u_net_forward.17} parent=5 // pred_check
        %p146 = pneg %p145
      $region22: #{wave_u_net_forward.17} parent=5 // pred_check_branch
        %148 = sbr.rel (%p146) target = $region24
      $region23: #{wave_u_net_forward.17} parent=5 // pred_region
        // Predicated region
        $region25: #{wave_u_net_forward.17} parent=23 // pred_check
          %p149 = pneg %p90
        $region26: #{wave_u_net_forward.17} parent=23 // pred_check_branch
          %151 = sbr.rel (%p149) target = $region28
        $region27: #{wave_u_net_forward.17} parent=23 // pred_region
          %p152 = scmp.lt.s32.totalorder %s21, 1
          %s153 = scalar_select %p152, %s21, 1
          %p154 = scmp.lt.s32.totalorder %s22, 0
          %s155 = scalar_select %p154, %s22, 0
          %s156 = sadd.s32 %s155, %s153
          %s157 = smul.addr %s156, 8
          %s158 = scalar_lea.vmem %s2, %s157
        $region28: #{wave_u_net_forward.17} parent=23 // pred_fallthru
          _
      $region24: #{wave_u_net_forward.17} parent=5 // pred_fallthru
        _
      %p159 = scmp.le.s32.totalorder 1, %s14
      %p160 = scmp.lt.s32.totalorder %s14, 3
      %p161 = pnand %p159, %p160
      %p162 = pneg %p161
      // Predicated region
      $region29: #{wave_u_net_forward.17} parent=5 // pred_check
        _
      $region30: #{wave_u_net_forward.17} parent=5 // pred_check_branch
        %164 = sbr.rel (%p161) target = $region32
      $region31: #{wave_u_net_forward.17} parent=5 // pred_region
        %s165 = ssub.s32 %s14, 1
        %p166 = pneg %p47
        %p167 = pneg %p44
        %p168 = pneg %p68
        %p169 = pneg %p65
        %p170 = scmp.lt.s32.totalorder %s23, 1
        %s171 = scalar_select %p170, %s23, 1
        %p172 = scmp.lt.s32.totalorder %s24, 0
        %s173 = scalar_select %p172, %s24, 0
        %s174 = sadd.s32 %s173, %s171
        %s175 = smul.addr %s174, 8
        %s176 = scalar_lea.vmem %s2, %s175
        %p177 = pneg %p96
        %p178 = pneg %p93
        %p179 = pneg %p124
        %p180 = pneg %p121
        %s181 = sand.u32 %s111, 1
        %s182 = scalar_lea.sflag [#allocation4], %s181
        %s183 = sand.u32 %s111, 1
        %s184 = scalar_lea.vmem [#allocation3], %s183
        %p185 = scmp.lt.s32.totalorder %s23, 1
        %s186 = scalar_select %p185, %s23, 1
        %p187 = scmp.lt.s32.totalorder %s24, 0
        %s188 = scalar_select %p187, %s24, 0
        %s189 = sadd.s32 %s188, %s186
        %s190 = smul.addr %s189, 8
        %s191 = scalar_lea.vmem %s2, %s190
        %v192 = vld [vmem:[%s0] sm:$0x1]
        %v193 = vld [vmem:[%s191] sm:$0x1f]
        %v194 = vld [vmem:[#allocation2] sm:$0x1]
        %196 = vset.pattern.permute.xlu0 0
        %197 = vperm.xlu0 %196, %v194
        %v198 = vpop.permute.xlu0 %197
        %v200 = vlaneseq
        %v201 = vshrl.u32 %v200, 7
        %v202 = vsub.s32 0, %v201
        %v203 = vrot.slane %v198, %v202
        %vm204 = vcmask 39936
        %v206 = vsel %vm204, %v192, 0
        %vm208 = vcmask 1044480
        %v210 = vsel %vm208, %v193, 0
        %212 = vmatprep.subr.mxu0 0.0
        %213 = vmatpush1.msra.mxu0 0.0
        %214 = vmatprep.subr.mxu0 0.0
        %215 = vmatpush1.msra.mxu0 0.0
        %216 = vmatprep.subr.mxu0 0.0
        %217 = vmatpush1.msra.mxu0 0.0
        %218 = vmatprep.subr.mxu0 0.0
        %219 = vmatpush1.msra.mxu0 0.0
        %220 = vmatprep.subr.mxu0 0.0
        %221 = vmatpush1.msra.mxu0 0.0
        %222 = vmatprep.subr.mxu0 0.0
        %223 = vmatpush1.msra.mxu0 0.0
        %224 = vmatprep.subr.mxu0 0.0
        %225 = vmatpush1.msra.mxu0 0.0
        %226 = vmatprep.subr.mxu0 0.0
        %227 = vmatpush1.msra.mxu0 0.0
        %228 = vmatprep.subr.mxu0 0.0
        %229 = vmatpush1.msra.mxu0 0.0
        %230 = vmatprep.subr.mxu0 0.0
        %231 = vmatpush1.msra.mxu0 0.0
        %232 = vmatprep.subr.mxu0 0.0
        %233 = vmatpush1.msra.mxu0 0.0
        %234 = vmatprep.subr.mxu0 0.0
        %235 = vmatpush1.msra.mxu0 0.0
        %236 = vmatprep.subr.mxu0 0.0
        %237 = vmatpush1.msra.mxu0 0.0
        %238 = vmatprep.subr.mxu0 0.0
        %239 = vmatpush1.msra.mxu0 0.0
        %240 = vmatprep.subr.mxu0 0.0
        %241 = vmatpush1.msra.mxu0 0.0
        %242 = vmatprep.subr.mxu0 0.0
        %243 = vmatpush1.msra.mxu0 %v210
        %244 = vmatprep.subr.mxu0 0.0
        %245 = vmatpush2.msra.mxu0 0.0
        %246 = vmatprep.subr.mxu0 0.0
        %247 = vmatpush2.msra.mxu0 0.0
        %248 = vmatprep.subr.mxu0 0.0
        %249 = vmatpush2.msra.mxu0 0.0
        %250 = vmatprep.subr.mxu0 0.0
        %251 = vmatpush2.msra.mxu0 0.0
        %252 = vmatprep.subr.mxu0 0.0
        %253 = vmatpush2.msra.mxu0 0.0
        %254 = vmatprep.subr.mxu0 0.0
        %255 = vmatpush2.msra.mxu0 0.0
        %256 = vmatprep.subr.mxu0 0.0
        %257 = vmatpush2.msra.mxu0 0.0
        %258 = vmatprep.subr.mxu0 0.0
        %259 = vmatpush2.msra.mxu0 0.0
        %260 = vmatprep.subr.mxu0 0.0
        %261 = vmatpush2.msra.mxu0 0.0
        %262 = vmatprep.subr.mxu0 0.0
        %263 = vmatpush2.msra.mxu0 0.0
        %264 = vmatprep.subr.mxu0 0.0
        %265 = vmatpush2.msra.mxu0 0.0
        %266 = vmatprep.subr.mxu0 0.0
        %267 = vmatpush2.msra.mxu0 0.0
        %268 = vmatprep.subr.mxu0 0.0
        %269 = vmatpush2.msra.mxu0 0.0
        %270 = vmatprep.subr.mxu0 0.0
        %271 = vmatpush2.msra.mxu0 0.0
        %272 = vmatprep.subr.mxu0 0.0
        %273 = vmatpush2.msra.mxu0 0.0
        %274 = vmatprep.subr.mxu0 0.0
        %275 = vmatpush2.msra.mxu0 0.0
        %276 = vmatprep.mubr.f32.mxu0 0.0
        %277 = vmatmul.mubr.f32.gmra.mxu0 %v206
        %v278 = vpop.f32.mrf.mxu0
        %v279 = vadd.f32 %v203, %v278
        %v280 = vpop.f32.mrf.mxu0
        %281 = vdwg.mxu0
        %v282 = vtanh.pop %v279
        %vm283 = vcmask 122880
        %284 = vst.msk [vmem:[%s184] sm:$0x1] %vm283, %v282
        %s285 = sand.u32 %s111, 1
        %s286 = scalar_lea.sflag [#allocation4], %s285
        %s287 = sand.u32 %s111, 1
        %s288 = scalar_lea.vmem [#allocation3], %s287
        // Predicated region
        $region33: #{wave_u_net_forward.17} parent=31 // pred_check
          %p289 = pneg %p121
        $region34: #{wave_u_net_forward.17} parent=31 // pred_check_branch
          %291 = sbr.rel (%p289) target = $region36
        $region35: #{wave_u_net_forward.17} parent=31 // pred_region
          %s293 = ssub.s32 16, 16
          %294 = vsyncadd %s286, %s293
          %s295 = sadd.s32 %s24, %s23
          %s296 = smul.addr %s295, 16
          %s297 = scalar_lea.hbm %s3, %s296
          %s299 = sshll.u32 %s288, 4
          %s300 = int_to_ptr.vmem [resolvable:$true] %s299
          %302 = dma.vmem_to_hbm [thread:$0]  %s300, 16, %s297, %s286
        $region36: #{wave_u_net_forward.17} parent=31 // pred_fallthru
          _
      $region32: #{wave_u_net_forward.17} parent=5 // pred_fallthru
        _
      %p303 = scmp.le.s32.totalorder 2, %s14
      // Predicated region
      $region37: #{wave_u_net_forward.17} parent=5 // pred_check
        %p304 = pneg %p303
      $region38: #{wave_u_net_forward.17} parent=5 // pred_check_branch
        %306 = sbr.rel (%p304) target = $region40
      $region39: #{wave_u_net_forward.17} parent=5 // pred_region
        %s307 = ssub.s32 %s14, 2
        // Predicated region
        $region41: #{wave_u_net_forward.17} parent=39 // pred_check
          %p308 = pneg %p127
        $region42: #{wave_u_net_forward.17} parent=39 // pred_check_branch
          %310 = sbr.rel (%p308) target = $region44
        $region43: #{wave_u_net_forward.17} parent=39 // pred_region
          %s311 = sand.u32 %s112, 1
          %s312 = scalar_lea.sflag [#allocation4], %s311
          %s313 = sand.u32 %s112, 1
          %s314 = scalar_lea.vmem [#allocation3], %s313
          %315 = dma.done %s312, 16
        $region44: #{wave_u_net_forward.17} parent=39 // pred_fallthru
          _
      $region40: #{wave_u_net_forward.17} parent=5 // pred_fallthru
        _
    $region6: #{wave_u_net_forward.17} parent=1 // loop_footer
      %s18 = sadd.s32 1, %s14
    $region7: #{wave_u_net_forward.17} parent=1 // loop_footer_branch
      %13 = sbr.rel target = $region3
    $region8: #{wave_u_net_forward.17} parent=1 // loop_exit
      _
    %316 = vsyncpa [#allocation4], 1
    %s317 = scalar_lea.sflag [#allocation4], 1
    %318 = vsyncpa %s317, 1

</llo_original>
